<compile_context>
chip_gen: v7x
topology: tpu7x:2x2x1
jax: 0.10.0
libtpu: 0.0.40
codegen_flags: <defaults>
</compile_context>

<pallas_src>
import functools

import jax
import jax.numpy as jnp
from jax.experimental import pallas as pl
from jax.experimental.pallas import tpu as pltpu

EPS = 1e-5
TM = 512                       # output-row tile per grid step
VMEM_LIMIT = 48 * 1024 * 1024  # explicit ceiling; safe on v7x (64 MiB physical)


def _round_up(x, m):
    return (x + m - 1) // m * m


def _compiler_params(dims):
    return pltpu.CompilerParams(dimension_semantics=dims,
                                vmem_limit_bytes=VMEM_LIMIT)


# ----------------------------------------------------------------------------
# Pallas kernels
# ----------------------------------------------------------------------------
def _conv1_ds_kernel(p_ref, w1_ref, b1_ref, wd_ref, bd_ref, o1_ref, id_ref, *, cin):
    """Row-tile of: out1 = relu(patches @ W1 + b1); identity = centre @ Wd + bd."""
    p = p_ref[...]                                              # (tm, 9*cin) bf16
    acc1 = jnp.dot(p, w1_ref[...], preferred_element_type=jnp.float32)
    o1_ref[...] = jnp.maximum(acc1 + b1_ref[...], 0.0).astype(o1_ref.dtype)
    # centre of each 3x3 patch == the strided 1x1-downsample input.
    centre = p[:, 4 * cin:5 * cin]                              # (tm, cin)
    accd = jnp.dot(centre, wd_ref[...], preferred_element_type=jnp.float32)
    id_ref[...] = (accd + bd_ref[...]).astype(id_ref.dtype)


def _conv2_kernel(p_ref, w_ref, b_ref, r_ref, o_ref):
    """Row-tile of: out = relu(patches @ W + b + residual)."""
    acc = jnp.dot(p_ref[...], w_ref[...], preferred_element_type=jnp.float32)
    o_ref[...] = jnp.maximum(acc + b_ref[...] + r_ref[...], 0.0).astype(o_ref.dtype)


def _conv2_pool_kernel(p_ref, w_ref, b_ref, r_ref, o_ref, acc_ref, *, m_per, tm):
    """conv2 + residual + relu with the global average pool fused in."""
    m = pl.program_id(1)

    @pl.when(m == 0)
    def _():
        acc_ref[...] = jnp.zeros_like(acc_ref)

    out = jnp.dot(p_ref[0], w_ref[...], preferred_element_type=jnp.float32)
    out = jnp.maximum(out + b_ref[...] + r_ref[0], 0.0)         # (tm, C) f32
    rows = jax.lax.broadcasted_iota(jnp.int32, out.shape, 0) + m * tm
    out = jnp.where(rows < m_per, out, 0.0)                     # mask row padding
    acc_ref[...] = acc_ref[...] + jnp.sum(out, axis=0, keepdims=True)

    @pl.when(m == pl.num_programs(1) - 1)
    def _():
        o_ref[0] = acc_ref[...] * (1.0 / m_per)                 # (8, C), all rows equal


# ----------------------------------------------------------------------------
# pallas_call wrappers (tiling / padding)
# ----------------------------------------------------------------------------
def _row_tiling(m):
    tm = min(TM, _round_up(m, 8))
    return tm, _round_up(m, tm)


def _pad_rows(a, m_pad):
    if a.shape[0] == m_pad:
        return a
    return jnp.pad(a, [(0, m_pad - a.shape[0])] + [(0, 0)] * (a.ndim - 1))


def conv1_downsample(patches, w1, b1, wd, bd):
    """patches (M, 9*cin) bf16 -> (out1 (M,C) bf16, identity (M,C) f32)."""
    M, K = patches.shape
    cin = wd.shape[0]
    C = w1.shape[1]
    tm, m_pad = _row_tiling(M)
    p = _pad_rows(patches, m_pad)
    flops = 2 * m_pad * C * (K + cin)
    bytes_acc = p.size * 2 + w1.size * 2 + wd.size * 2 + 2 * C * 4 + m_pad * C * 6
    out1, ident = pl.pallas_call(
        functools.partial(_conv1_ds_kernel, cin=cin),
        out_shape=(jax.ShapeDtypeStruct((m_pad, C), jnp.bfloat16),
                   jax.ShapeDtypeStruct((m_pad, C), jnp.float32)),
        grid=(m_pad // tm,),
        in_specs=[
            pl.BlockSpec((tm, K), lambda i: (i, 0)),
            pl.BlockSpec((K, C), lambda i: (0, 0)),
            pl.BlockSpec((1, C), lambda i: (0, 0)),
            pl.BlockSpec((cin, C), lambda i: (0, 0)),
            pl.BlockSpec((1, C), lambda i: (0, 0)),
        ],
        out_specs=(pl.BlockSpec((tm, C), lambda i: (i, 0)),
                   pl.BlockSpec((tm, C), lambda i: (i, 0))),
        compiler_params=_compiler_params(("parallel",)),
        cost_estimate=pl.CostEstimate(flops=flops, transcendentals=0,
                                      bytes_accessed=bytes_acc),
    )(p, w1, b1, wd, bd)
    return out1[:M], ident[:M]


def conv2_residual(patches, w, b, residual):
    """relu(patches @ W + b + residual) -> (M, C) bf16."""
    M, K = patches.shape
    C = w.shape[1]
    tm, m_pad = _row_tiling(M)
    p = _pad_rows(patches, m_pad)
    r = _pad_rows(residual, m_pad)
    flops = 2 * m_pad * K * C
    bytes_acc = p.size * 2 + w.size * 2 + C * 4 + r.size * 4 + m_pad * C * 2
    out = pl.pallas_call(
        _conv2_kernel,
        out_shape=jax.ShapeDtypeStruct((m_pad, C), jnp.bfloat16),
        grid=(m_pad // tm,),
        in_specs=[
            pl.BlockSpec((tm, K), lambda i: (i, 0)),
            pl.BlockSpec((K, C), lambda i: (0, 0)),
            pl.BlockSpec((1, C), lambda i: (0, 0)),
            pl.BlockSpec((tm, C), lambda i: (i, 0)),
        ],
        out_specs=pl.BlockSpec((tm, C), lambda i: (i, 0)),
        compiler_params=_compiler_params(("parallel",)),
        cost_estimate=pl.CostEstimate(flops=flops, transcendentals=0,
                                      bytes_accessed=bytes_acc),
    )(p, w, b, r)
    return out[:M]


def conv2_residual_pool(patches, w, b, residual, n, m_per):
    """Fused conv2 + residual + relu + AdaptiveAvgPool2d((1,1)) -> (n, C) f32."""
    _, K = patches.shape
    C = w.shape[1]
    tm, m_pad = _row_tiling(m_per)
    p = patches.reshape(n, m_per, K)
    r = residual.reshape(n, m_per, C)
    if m_pad != m_per:
        p = jnp.pad(p, ((0, 0), (0, m_pad - m_per), (0, 0)))
        r = jnp.pad(r, ((0, 0), (0, m_pad - m_per), (0, 0)))
    flops = 2 * n * m_pad * K * C
    bytes_acc = p.size * 2 + w.size * 2 + C * 4 + r.size * 4 + n * 8 * C * 4
    out = pl.pallas_call(
        functools.partial(_conv2_pool_kernel, m_per=m_per, tm=tm),
        out_shape=jax.ShapeDtypeStruct((n, 8, C), jnp.float32),
        grid=(n, m_pad // tm),
        in_specs=[
            pl.BlockSpec((1, tm, K), lambda i, j: (i, j, 0)),
            pl.BlockSpec((K, C), lambda i, j: (0, 0)),
            pl.BlockSpec((1, C), lambda i, j: (0, 0)),
            pl.BlockSpec((1, tm, C), lambda i, j: (i, j, 0)),
        ],
        out_specs=pl.BlockSpec((1, 8, C), lambda i, j: (i, 0, 0)),
        scratch_shapes=[pltpu.VMEM((8, C), jnp.float32)],
        compiler_params=_compiler_params(("parallel", "arbitrary")),
        cost_estimate=pl.CostEstimate(flops=flops, transcendentals=0,
                                      bytes_accessed=bytes_acc),
    )(p, w, b, r)
    return out[:, 0, :]


# ----------------------------------------------------------------------------
# Plain-JAX glue: im2col, parameter construction (BN folded, channels padded)
# ----------------------------------------------------------------------------
def im2col_3x3(x, stride):
    """x (N,H,W,C) -> patches (N*Ho*Wo, 9*C); column order (kh, kw, cin)."""
    N, H, W, C = x.shape
    Ho = (H + 2 - 3) // stride + 1
    Wo = (W + 2 - 3) // stride + 1
    xp = jnp.pad(x, ((0, 0), (1, 1), (1, 1), (0, 0)))
    cols = []
    for kh in range(3):
        for kw in range(3):
            cols.append(xp[:, kh:kh + (Ho - 1) * stride + 1:stride,
                           kw:kw + (Wo - 1) * stride + 1:stride, :])
    patches = jnp.stack(cols, axis=3).reshape(N * Ho * Wo, 9 * C)
    return patches, (N, Ho, Wo)


def _init_bn(key, c):
    k1, k2, k3, k4 = jax.random.split(key, 4)
    gamma = jax.random.uniform(k1, (c,), minval=0.5, maxval=1.5, dtype=jnp.float32)
    beta = 0.1 * jax.random.normal(k2, (c,), dtype=jnp.float32)
    mean = 0.1 * jax.random.normal(k3, (c,), dtype=jnp.float32)
    var = jax.random.uniform(k4, (c,), minval=0.5, maxval=1.5, dtype=jnp.float32)
    scale = gamma / jnp.sqrt(var + EPS)
    return scale, beta - mean * scale


def _fold_pad(w_kkio, scale, bias, cin_carry, cout_pad):
    """Fold BN scale into the conv weight, zero-pad channels, emit matmul form."""
    kh, kw, ci, co = w_kkio.shape
    w = w_kkio * scale[None, None, None, :]
    w = jnp.pad(w, ((0, 0), (0, 0), (0, cin_carry - ci), (0, cout_pad - co)))
    w_mat = w.reshape(kh * kw * cin_carry, cout_pad).astype(jnp.bfloat16)
    b = jnp.pad(bias, (0, cout_pad - co)).reshape(1, cout_pad).astype(jnp.float32)
    return w_mat, b


def init_block_params(key, cin_real, cin_carry, cout_real):
    cout_pad = _round_up(cout_real, 128)
    ks = jax.random.split(key, 6)
    # PyTorch conv weight layout (Cout, Cin, KH, KW) -> (kh, kw, cin, cout).
    w1 = 0.05 * jax.random.normal(ks[0], (cout_real, cin_real, 3, 3), dtype=jnp.float32)
    w2 = 0.05 * jax.random.normal(ks[1], (cout_real, cout_real, 3, 3), dtype=jnp.float32)
    wd = 0.05 * jax.random.normal(ks[2], (cout_real, cin_real, 1, 1), dtype=jnp.float32)
    s1, b1 = _init_bn(ks[3], cout_real)
    s2, b2 = _init_bn(ks[4], cout_real)
    sd, bd = _init_bn(ks[5], cout_real)
    w1m, b1v = _fold_pad(jnp.transpose(w1, (2, 3, 1, 0)), s1, b1, cin_carry, cout_pad)
    w2m, b2v = _fold_pad(jnp.transpose(w2, (2, 3, 1, 0)), s2, b2, cout_pad, cout_pad)
    wdm, bdv = _fold_pad(jnp.transpose(wd, (2, 3, 1, 0)), sd, bd, cin_carry, cout_pad)
    return {"w1": w1m, "b1": b1v, "w2": w2m, "b2": b2v, "wd": wdm, "bd": bdv}


# ----------------------------------------------------------------------------
# Forward pass
# ----------------------------------------------------------------------------
def _block_front(x, p):
    """conv1(3x3,s=2)+bn1+relu and the 1x1 downsample+bn, in one fused kernel."""
    patches1, (N, Ho, Wo) = im2col_3x3(x, stride=2)
    out1, ident = conv1_downsample(patches1, p["w1"], p["b1"], p["wd"], p["bd"])
    C = p["w1"].shape[1]
    patches2, _ = im2col_3x3(out1.reshape(N, Ho, Wo, C), stride=1)
    return patches2, ident, (N, Ho, Wo, C)


def resnet_feature_extractor(x_nchw, params):
    # PyTorch NCHW input -> internal NHWC, bf16 MXU operands, in-channels -> x8.
    x = jnp.transpose(x_nchw, (0, 2, 3, 1)).astype(jnp.bfloat16)
    cin0 = x.shape[-1]
    x = jnp.pad(x, ((0, 0), (0, 0), (0, 0), (0, _round_up(cin0, 8) - cin0)))

    for name in ("layer1", "layer2"):
        p = params[name]
        patches2, ident, (N, Ho, Wo, C) = _block_front(x, p)
        out = conv2_residual(patches2, p["w2"], p["b2"], ident)
        x = out.reshape(N, Ho, Wo, C)

    p = params["layer3"]
    patches2, ident, (N, Ho, Wo, C) = _block_front(x, p)
    # conv2 + bn2 + residual + relu + AdaptiveAvgPool2d((1,1)) + flatten, fused.
    return conv2_residual_pool(patches2, p["w2"], p["b2"], ident, n=N, m_per=Ho * Wo)


# ----------------------------------------------------------------------------
if __name__ == "__main__":
    key = jax.random.PRNGKey(0)
    kx, k1, k2, k3 = jax.random.split(key, 4)

    params = {
        "layer1": init_block_params(k1, cin_real=3, cin_carry=8, cout_real=64),
        "layer2": init_block_params(k2, cin_real=64, cin_carry=128, cout_real=128),
        "layer3": init_block_params(k3, cin_real=128, cin_carry=128, cout_real=256),
    }

    # Small, module-consistent shapes: batch=2, in_channels=3, spatial=16x16 (NCHW).
    x = jax.random.normal(kx, (2, 3, 16, 16), dtype=jnp.float32)

    feat = jax.jit(resnet_feature_extractor)(x, params)
    feat = jax.block_until_ready(feat)
    assert feat.shape == (2, 256), feat.shape
    print("KERNEL_OK")
</pallas_src>

<mosaic_0001>
module attributes {stable_mosaic.version = 11 : i64} {
  func.func @_conv1_ds_kernel(%arg0: i32, %arg1: memref<128x72xbf16, #tpu.memory_space<vmem>>, %arg2: memref<72x128xbf16, #tpu.memory_space<vmem>>, %arg3: memref<1x128xf32, #tpu.memory_space<vmem>>, %arg4: memref<8x128xbf16, #tpu.memory_space<vmem>>, %arg5: memref<1x128xf32, #tpu.memory_space<vmem>>, %arg6: memref<128x128xbf16, #tpu.memory_space<vmem>>, %arg7: memref<128x128xf32, #tpu.memory_space<vmem>>) attributes {dimension_semantics = [#tpu.dimension_semantics<parallel>], iteration_bounds = array<i64: 1>, scalar_prefetch = 0 : i64, scratch_operands = 0 : i64, tpu.core_type = #tpu.core_type<tc>, window_params = [{transform_indices = @transform_0, window_bounds = array<i64: 128, 72>}, {pipeline_mode = #tpu.pipeline_mode<synchronous>, transform_indices = @transform_1, window_bounds = array<i64: 72, 128>}, {pipeline_mode = #tpu.pipeline_mode<synchronous>, transform_indices = @transform_2, window_bounds = array<i64: 1, 128>}, {pipeline_mode = #tpu.pipeline_mode<synchronous>, transform_indices = @transform_3, window_bounds = array<i64: 8, 128>}, {pipeline_mode = #tpu.pipeline_mode<synchronous>, transform_indices = @transform_4, window_bounds = array<i64: 1, 128>}, {transform_indices = @transform_5, window_bounds = array<i64: 128, 128>}, {transform_indices = @transform_6, window_bounds = array<i64: 128, 128>}]} {
    %c0 = arith.constant 0 : index
    %c0_0 = arith.constant 0 : index
    %0 = vector.load %arg1[%c0, %c0_0] : memref<128x72xbf16, #tpu.memory_space<vmem>>, vector<128x72xbf16>
    %c0_1 = arith.constant 0 : index
    %c0_2 = arith.constant 0 : index
    %1 = vector.load %arg2[%c0_1, %c0_2] : memref<72x128xbf16, #tpu.memory_space<vmem>>, vector<72x128xbf16>
    %cst = arith.constant dense<0.000000e+00> : vector<128x128xf32>
    %2 = tpu.matmul %0, %1, %cst {dimension_numbers = #tpu.dot_dimension_numbers<[1], [0], [0], [1], [0, 0, 1, 1], [], []>} : vector<128x72xbf16>, vector<72x128xbf16>, vector<128x128xf32> -> vector<128x128xf32>
    %c0_3 = arith.constant 0 : index
    %c0_4 = arith.constant 0 : index
    %3 = vector.load %arg3[%c0_3, %c0_4] : memref<1x128xf32, #tpu.memory_space<vmem>>, vector<1x128xf32>
    %4 = vector.broadcast %3 : vector<1x128xf32> to vector<128x128xf32>
    %5 = arith.addf %2, %4 : vector<128x128xf32>
    %cst_5 = arith.constant 0.000000e+00 : f32
    %6 = vector.broadcast %cst_5 : f32 to vector<128x128xf32>
    %7 = arith.maximumf %5, %6 : vector<128x128xf32>
    %8 = arith.truncf %7 : vector<128x128xf32> to vector<128x128xbf16>
    %c0_6 = arith.constant 0 : index
    %c0_7 = arith.constant 0 : index
    %9 = vector.load %arg6[%c0_6, %c0_7] : memref<128x128xbf16, #tpu.memory_space<vmem>>, vector<128x128xbf16>
    tpu.vector_store %arg6[%c0_6, %c0_7], %8 {strides = array<i32>} : memref<128x128xbf16, #tpu.memory_space<vmem>>, vector<128x128xbf16>,
    %10 = vector.extract_strided_slice %0 {offsets = [0, 32], sizes = [128, 8], strides = [1, 1]} : vector<128x72xbf16> to vector<128x8xbf16>
    %c0_8 = arith.constant 0 : index
    %c0_9 = arith.constant 0 : index
    %11 = vector.load %arg4[%c0_8, %c0_9] : memref<8x128xbf16, #tpu.memory_space<vmem>>, vector<8x128xbf16>
    %cst_10 = arith.constant dense<0.000000e+00> : vector<128x128xf32>
    %12 = tpu.matmul %10, %11, %cst_10 {dimension_numbers = #tpu.dot_dimension_numbers<[1], [0], [0], [1], [0, 0, 1, 1], [], []>} : vector<128x8xbf16>, vector<8x128xbf16>, vector<128x128xf32> -> vector<128x128xf32>
    %c0_11 = arith.constant 0 : index
    %c0_12 = arith.constant 0 : index
    %13 = vector.load %arg5[%c0_11, %c0_12] : memref<1x128xf32, #tpu.memory_space<vmem>>, vector<1x128xf32>
    %14 = vector.broadcast %13 : vector<1x128xf32> to vector<128x128xf32>
    %15 = arith.addf %12, %14 : vector<128x128xf32>
    %c0_13 = arith.constant 0 : index
    %c0_14 = arith.constant 0 : index
    %16 = vector.load %arg7[%c0_13, %c0_14] : memref<128x128xf32, #tpu.memory_space<vmem>>, vector<128x128xf32>
    tpu.vector_store %arg7[%c0_13, %c0_14], %15 {strides = array<i32>} : memref<128x128xf32, #tpu.memory_space<vmem>>, vector<128x128xf32>,
    return
  }
  func.func @transform_0(%arg0: i32) -> (i32, i32) {
    %c0_i32 = arith.constant 0 : i32
    %c0_i32_0 = arith.constant 0 : i32
    return %arg0, %c0_i32 : i32, i32
  }
  func.func @transform_1(%arg0: i32) -> (i32, i32) {
    %c0_i32 = arith.constant 0 : i32
    %c0_i32_0 = arith.constant 0 : i32
    %c0_i32_1 = arith.constant 0 : i32
    return %c0_i32, %c0_i32_0 : i32, i32
  }
  func.func @transform_2(%arg0: i32) -> (i32, i32) {
    %c0_i32 = arith.constant 0 : i32
    %c0_i32_0 = arith.constant 0 : i32
    %c0_i32_1 = arith.constant 0 : i32
    return %c0_i32, %c0_i32_0 : i32, i32
  }
  func.func @transform_3(%arg0: i32) -> (i32, i32) {
    %c0_i32 = arith.constant 0 : i32
    %c0_i32_0 = arith.constant 0 : i32
    %c0_i32_1 = arith.constant 0 : i32
    return %c0_i32, %c0_i32_0 : i32, i32
  }
  func.func @transform_4(%arg0: i32) -> (i32, i32) {
    %c0_i32 = arith.constant 0 : i32
    %c0_i32_0 = arith.constant 0 : i32
    %c0_i32_1 = arith.constant 0 : i32
    return %c0_i32, %c0_i32_0 : i32, i32
  }
  func.func @transform_5(%arg0: i32) -> (i32, i32) {
    %c0_i32 = arith.constant 0 : i32
    %c0_i32_0 = arith.constant 0 : i32
    return %arg0, %c0_i32 : i32, i32
  }
  func.func @transform_6(%arg0: i32) -> (i32, i32) {
    %c0_i32 = arith.constant 0 : i32
    %c0_i32_0 = arith.constant 0 : i32
    return %arg0, %c0_i32 : i32, i32
  }
}

module attributes {stable_mosaic.version = 11 : i64} {
  func.func @_conv2_kernel(%arg0: i32, %arg1: memref<128x1152xbf16, #tpu.memory_space<vmem>>, %arg2: memref<1152x128xbf16, #tpu.memory_space<vmem>>, %arg3: memref<1x128xf32, #tpu.memory_space<vmem>>, %arg4: memref<128x128xf32, #tpu.memory_space<vmem>>, %arg5: memref<128x128xbf16, #tpu.memory_space<vmem>>) attributes {dimension_semantics = [#tpu.dimension_semantics<parallel>], iteration_bounds = array<i64: 1>, scalar_prefetch = 0 : i64, scratch_operands = 0 : i64, tpu.core_type = #tpu.core_type<tc>, window_params = [{transform_indices = @transform_0, window_bounds = array<i64: 128, 1152>}, {pipeline_mode = #tpu.pipeline_mode<synchronous>, transform_indices = @transform_1, window_bounds = array<i64: 1152, 128>}, {pipeline_mode = #tpu.pipeline_mode<synchronous>, transform_indices = @transform_2, window_bounds = array<i64: 1, 128>}, {transform_indices = @transform_3, window_bounds = array<i64: 128, 128>}, {transform_indices = @transform_4, window_bounds = array<i64: 128, 128>}]} {
    %c0 = arith.constant 0 : index
    %c0_0 = arith.constant 0 : index
    %0 = vector.load %arg1[%c0, %c0_0] : memref<128x1152xbf16, #tpu.memory_space<vmem>>, vector<128x1152xbf16>
    %c0_1 = arith.constant 0 : index
    %c0_2 = arith.constant 0 : index
    %1 = vector.load %arg2[%c0_1, %c0_2] : memref<1152x128xbf16, #tpu.memory_space<vmem>>, vector<1152x128xbf16>
    %cst = arith.constant dense<0.000000e+00> : vector<128x128xf32>
    %2 = tpu.matmul %0, %1, %cst {dimension_numbers = #tpu.dot_dimension_numbers<[1], [0], [0], [1], [0, 0, 1, 1], [], []>} : vector<128x1152xbf16>, vector<1152x128xbf16>, vector<128x128xf32> -> vector<128x128xf32>
    %c0_3 = arith.constant 0 : index
    %c0_4 = arith.constant 0 : index
    %3 = vector.load %arg3[%c0_3, %c0_4] : memref<1x128xf32, #tpu.memory_space<vmem>>, vector<1x128xf32>
    %4 = vector.broadcast %3 : vector<1x128xf32> to vector<128x128xf32>
    %5 = arith.addf %2, %4 : vector<128x128xf32>
    %c0_5 = arith.constant 0 : index
    %c0_6 = arith.constant 0 : index
    %6 = vector.load %arg4[%c0_5, %c0_6] : memref<128x128xf32, #tpu.memory_space<vmem>>, vector<128x128xf32>
    %7 = arith.addf %5, %6 : vector<128x128xf32>
    %cst_7 = arith.constant 0.000000e+00 : f32
    %8 = vector.broadcast %cst_7 : f32 to vector<128x128xf32>
    %9 = arith.maximumf %7, %8 : vector<128x128xf32>
    %10 = arith.truncf %9 : vector<128x128xf32> to vector<128x128xbf16>
    %c0_8 = arith.constant 0 : index
    %c0_9 = arith.constant 0 : index
    %11 = vector.load %arg5[%c0_8, %c0_9] : memref<128x128xbf16, #tpu.memory_space<vmem>>, vector<128x128xbf16>
    tpu.vector_store %arg5[%c0_8, %c0_9], %10 {strides = array<i32>} : memref<128x128xbf16, #tpu.memory_space<vmem>>, vector<128x128xbf16>,
    return
  }
  func.func @transform_0(%arg0: i32) -> (i32, i32) {
    %c0_i32 = arith.constant 0 : i32
    %c0_i32_0 = arith.constant 0 : i32
    return %arg0, %c0_i32 : i32, i32
  }
  func.func @transform_1(%arg0: i32) -> (i32, i32) {
    %c0_i32 = arith.constant 0 : i32
    %c0_i32_0 = arith.constant 0 : i32
    %c0_i32_1 = arith.constant 0 : i32
    return %c0_i32, %c0_i32_0 : i32, i32
  }
  func.func @transform_2(%arg0: i32) -> (i32, i32) {
    %c0_i32 = arith.constant 0 : i32
    %c0_i32_0 = arith.constant 0 : i32
    %c0_i32_1 = arith.constant 0 : i32
    return %c0_i32, %c0_i32_0 : i32, i32
  }
  func.func @transform_3(%arg0: i32) -> (i32, i32) {
    %c0_i32 = arith.constant 0 : i32
    %c0_i32_0 = arith.constant 0 : i32
    return %arg0, %c0_i32 : i32, i32
  }
  func.func @transform_4(%arg0: i32) -> (i32, i32) {
    %c0_i32 = arith.constant 0 : i32
    %c0_i32_0 = arith.constant 0 : i32
    return %arg0, %c0_i32 : i32, i32
  }
}

module attributes {stable_mosaic.version = 11 : i64} {
  func.func @_conv1_ds_kernel(%arg0: i32, %arg1: memref<32x1152xbf16, #tpu.memory_space<vmem>>, %arg2: memref<1152x128xbf16, #tpu.memory_space<vmem>>, %arg3: memref<1x128xf32, #tpu.memory_space<vmem>>, %arg4: memref<128x128xbf16, #tpu.memory_space<vmem>>, %arg5: memref<1x128xf32, #tpu.memory_space<vmem>>, %arg6: memref<32x128xbf16, #tpu.memory_space<vmem>>, %arg7: memref<32x128xf32, #tpu.memory_space<vmem>>) attributes {dimension_semantics = [#tpu.dimension_semantics<parallel>], iteration_bounds = array<i64: 1>, scalar_prefetch = 0 : i64, scratch_operands = 0 : i64, tpu.core_type = #tpu.core_type<tc>, window_params = [{transform_indices = @transform_0, window_bounds = array<i64: 32, 1152>}, {pipeline_mode = #tpu.pipeline_mode<synchronous>, transform_indices = @transform_1, window_bounds = array<i64: 1152, 128>}, {pipeline_mode = #tpu.pipeline_mode<synchronous>, transform_indices = @transform_2, window_bounds = array<i64: 1, 128>}, {pipeline_mode = #tpu.pipeline_mode<synchronous>, transform_indices = @transform_3, window_bounds = array<i64: 128, 128>}, {pipeline_mode = #tpu.pipeline_mode<synchronous>, transform_indices = @transform_4, window_bounds = array<i64: 1, 128>}, {transform_indices = @transform_5, window_bounds = array<i64: 32, 128>}, {transform_indices = @transform_6, window_bounds = array<i64: 32, 128>}]} {
    %c0 = arith.constant 0 : index
    %c0_0 = arith.constant 0 : index
    %0 = vector.load %arg1[%c0, %c0_0] : memref<32x1152xbf16, #tpu.memory_space<vmem>>, vector<32x1152xbf16>
    %c0_1 = arith.constant 0 : index
    %c0_2 = arith.constant 0 : index
    %1 = vector.load %arg2[%c0_1, %c0_2] : memref<1152x128xbf16, #tpu.memory_space<vmem>>, vector<1152x128xbf16>
    %cst = arith.constant dense<0.000000e+00> : vector<32x128xf32>
    %2 = tpu.matmul %0, %1, %cst {dimension_numbers = #tpu.dot_dimension_numbers<[1], [0], [0], [1], [0, 0, 1, 1], [], []>} : vector<32x1152xbf16>, vector<1152x128xbf16>, vector<32x128xf32> -> vector<32x128xf32>
    %c0_3 = arith.constant 0 : index
    %c0_4 = arith.constant 0 : index
    %3 = vector.load %arg3[%c0_3, %c0_4] : memref<1x128xf32, #tpu.memory_space<vmem>>, vector<1x128xf32>
    %4 = vector.broadcast %3 : vector<1x128xf32> to vector<32x128xf32>
    %5 = arith.addf %2, %4 : vector<32x128xf32>
    %cst_5 = arith.constant 0.000000e+00 : f32
    %6 = vector.broadcast %cst_5 : f32 to vector<32x128xf32>
    %7 = arith.maximumf %5, %6 : vector<32x128xf32>
    %8 = arith.truncf %7 : vector<32x128xf32> to vector<32x128xbf16>
    %c0_6 = arith.constant 0 : index
    %c0_7 = arith.constant 0 : index
    %9 = vector.load %arg6[%c0_6, %c0_7] : memref<32x128xbf16, #tpu.memory_space<vmem>>, vector<32x128xbf16>
    tpu.vector_store %arg6[%c0_6, %c0_7], %8 {strides = array<i32>} : memref<32x128xbf16, #tpu.memory_space<vmem>>, vector<32x128xbf16>,
    %10 = vector.extract_strided_slice %0 {offsets = [0, 512], sizes = [32, 128], strides = [1, 1]} : vector<32x1152xbf16> to vector<32x128xbf16>
    %c0_8 = arith.constant 0 : index
    %c0_9 = arith.constant 0 : index
    %11 = vector.load %arg4[%c0_8, %c0_9] : memref<128x128xbf16, #tpu.memory_space<vmem>>, vector<128x128xbf16>
    %cst_10 = arith.constant dense<0.000000e+00> : vector<32x128xf32>
    %12 = tpu.matmul %10, %11, %cst_10 {dimension_numbers = #tpu.dot_dimension_numbers<[1], [0], [0], [1], [0, 0, 1, 1], [], []>} : vector<32x128xbf16>, vector<128x128xbf16>, vector<32x128xf32> -> vector<32x128xf32>
    %c0_11 = arith.constant 0 : index
    %c0_12 = arith.constant 0 : index
    %13 = vector.load %arg5[%c0_11, %c0_12] : memref<1x128xf32, #tpu.memory_space<vmem>>, vector<1x128xf32>
    %14 = vector.broadcast %13 : vector<1x128xf32> to vector<32x128xf32>
    %15 = arith.addf %12, %14 : vector<32x128xf32>
    %c0_13 = arith.constant 0 : index
    %c0_14 = arith.constant 0 : index
    %16 = vector.load %arg7[%c0_13, %c0_14] : memref<32x128xf32, #tpu.memory_space<vmem>>, vector<32x128xf32>
    tpu.vector_store %arg7[%c0_13, %c0_14], %15 {strides = array<i32>} : memref<32x128xf32, #tpu.memory_space<vmem>>, vector<32x128xf32>,
    return
  }
  func.func @transform_0(%arg0: i32) -> (i32, i32) {
    %c0_i32 = arith.constant 0 : i32
    %c0_i32_0 = arith.constant 0 : i32
    return %arg0, %c0_i32 : i32, i32
  }
  func.func @transform_1(%arg0: i32) -> (i32, i32) {
    %c0_i32 = arith.constant 0 : i32
    %c0_i32_0 = arith.constant 0 : i32
    %c0_i32_1 = arith.constant 0 : i32
    return %c0_i32, %c0_i32_0 : i32, i32
  }
  func.func @transform_2(%arg0: i32) -> (i32, i32) {
    %c0_i32 = arith.constant 0 : i32
    %c0_i32_0 = arith.constant 0 : i32
    %c0_i32_1 = arith.constant 0 : i32
    return %c0_i32, %c0_i32_0 : i32, i32
  }
  func.func @transform_3(%arg0: i32) -> (i32, i32) {
    %c0_i32 = arith.constant 0 : i32
    %c0_i32_0 = arith.constant 0 : i32
    %c0_i32_1 = arith.constant 0 : i32
    return %c0_i32, %c0_i32_0 : i32, i32
  }
  func.func @transform_4(%arg0: i32) -> (i32, i32) {
    %c0_i32 = arith.constant 0 : i32
    %c0_i32_0 = arith.constant 0 : i32
    %c0_i32_1 = arith.constant 0 : i32
    return %c0_i32, %c0_i32_0 : i32, i32
  }
  func.func @transform_5(%arg0: i32) -> (i32, i32) {
    %c0_i32 = arith.constant 0 : i32
    %c0_i32_0 = arith.constant 0 : i32
    return %arg0, %c0_i32 : i32, i32
  }
  func.func @transform_6(%arg0: i32) -> (i32, i32) {
    %c0_i32 = arith.constant 0 : i32
    %c0_i32_0 = arith.constant 0 : i32
    return %arg0, %c0_i32 : i32, i32
  }
}

module attributes {stable_mosaic.version = 11 : i64} {
  func.func @_conv2_kernel(%arg0: i32, %arg1: memref<32x1152xbf16, #tpu.memory_space<vmem>>, %arg2: memref<1152x128xbf16, #tpu.memory_space<vmem>>, %arg3: memref<1x128xf32, #tpu.memory_space<vmem>>, %arg4: memref<32x128xf32, #tpu.memory_space<vmem>>, %arg5: memref<32x128xbf16, #tpu.memory_space<vmem>>) attributes {dimension_semantics = [#tpu.dimension_semantics<parallel>], iteration_bounds = array<i64: 1>, scalar_prefetch = 0 : i64, scratch_operands = 0 : i64, tpu.core_type = #tpu.core_type<tc>, window_params = [{transform_indices = @transform_0, window_bounds = array<i64: 32, 1152>}, {pipeline_mode = #tpu.pipeline_mode<synchronous>, transform_indices = @transform_1, window_bounds = array<i64: 1152, 128>}, {pipeline_mode = #tpu.pipeline_mode<synchronous>, transform_indices = @transform_2, window_bounds = array<i64: 1, 128>}, {transform_indices = @transform_3, window_bounds = array<i64: 32, 128>}, {transform_indices = @transform_4, window_bounds = array<i64: 32, 128>}]} {
    %c0 = arith.constant 0 : index
    %c0_0 = arith.constant 0 : index
    %0 = vector.load %arg1[%c0, %c0_0] : memref<32x1152xbf16, #tpu.memory_space<vmem>>, vector<32x1152xbf16>
    %c0_1 = arith.constant 0 : index
    %c0_2 = arith.constant 0 : index
    %1 = vector.load %arg2[%c0_1, %c0_2] : memref<1152x128xbf16, #tpu.memory_space<vmem>>, vector<1152x128xbf16>
    %cst = arith.constant dense<0.000000e+00> : vector<32x128xf32>
    %2 = tpu.matmul %0, %1, %cst {dimension_numbers = #tpu.dot_dimension_numbers<[1], [0], [0], [1], [0, 0, 1, 1], [], []>} : vector<32x1152xbf16>, vector<1152x128xbf16>, vector<32x128xf32> -> vector<32x128xf32>
    %c0_3 = arith.constant 0 : index
    %c0_4 = arith.constant 0 : index
    %3 = vector.load %arg3[%c0_3, %c0_4] : memref<1x128xf32, #tpu.memory_space<vmem>>, vector<1x128xf32>
    %4 = vector.broadcast %3 : vector<1x128xf32> to vector<32x128xf32>
    %5 = arith.addf %2, %4 : vector<32x128xf32>
    %c0_5 = arith.constant 0 : index
    %c0_6 = arith.constant 0 : index
    %6 = vector.load %arg4[%c0_5, %c0_6] : memref<32x128xf32, #tpu.memory_space<vmem>>, vector<32x128xf32>
    %7 = arith.addf %5, %6 : vector<32x128xf32>
    %cst_7 = arith.constant 0.000000e+00 : f32
    %8 = vector.broadcast %cst_7 : f32 to vector<32x128xf32>
    %9 = arith.maximumf %7, %8 : vector<32x128xf32>
    %10 = arith.truncf %9 : vector<32x128xf32> to vector<32x128xbf16>
    %c0_8 = arith.constant 0 : index
    %c0_9 = arith.constant 0 : index
    %11 = vector.load %arg5[%c0_8, %c0_9] : memref<32x128xbf16, #tpu.memory_space<vmem>>, vector<32x128xbf16>
    tpu.vector_store %arg5[%c0_8, %c0_9], %10 {strides = array<i32>} : memref<32x128xbf16, #tpu.memory_space<vmem>>, vector<32x128xbf16>,
    return
  }
  func.func @transform_0(%arg0: i32) -> (i32, i32) {
    %c0_i32 = arith.constant 0 : i32
    %c0_i32_0 = arith.constant 0 : i32
    return %arg0, %c0_i32 : i32, i32
  }
  func.func @transform_1(%arg0: i32) -> (i32, i32) {
    %c0_i32 = arith.constant 0 : i32
    %c0_i32_0 = arith.constant 0 : i32
    %c0_i32_1 = arith.constant 0 : i32
    return %c0_i32, %c0_i32_0 : i32, i32
  }
  func.func @transform_2(%arg0: i32) -> (i32, i32) {
    %c0_i32 = arith.constant 0 : i32
    %c0_i32_0 = arith.constant 0 : i32
    %c0_i32_1 = arith.constant 0 : i32
    return %c0_i32, %c0_i32_0 : i32, i32
  }
  func.func @transform_3(%arg0: i32) -> (i32, i32) {
    %c0_i32 = arith.constant 0 : i32
    %c0_i32_0 = arith.constant 0 : i32
    return %arg0, %c0_i32 : i32, i32
  }
  func.func @transform_4(%arg0: i32) -> (i32, i32) {
    %c0_i32 = arith.constant 0 : i32
    %c0_i32_0 = arith.constant 0 : i32
    return %arg0, %c0_i32 : i32, i32
  }
}

module attributes {stable_mosaic.version = 11 : i64} {
  func.func @_conv1_ds_kernel(%arg0: i32, %arg1: memref<8x1152xbf16, #tpu.memory_space<vmem>>, %arg2: memref<1152x256xbf16, #tpu.memory_space<vmem>>, %arg3: memref<1x256xf32, #tpu.memory_space<vmem>>, %arg4: memref<128x256xbf16, #tpu.memory_space<vmem>>, %arg5: memref<1x256xf32, #tpu.memory_space<vmem>>, %arg6: memref<8x256xbf16, #tpu.memory_space<vmem>>, %arg7: memref<8x256xf32, #tpu.memory_space<vmem>>) attributes {dimension_semantics = [#tpu.dimension_semantics<parallel>], iteration_bounds = array<i64: 1>, scalar_prefetch = 0 : i64, scratch_operands = 0 : i64, tpu.core_type = #tpu.core_type<tc>, window_params = [{transform_indices = @transform_0, window_bounds = array<i64: 8, 1152>}, {pipeline_mode = #tpu.pipeline_mode<synchronous>, transform_indices = @transform_1, window_bounds = array<i64: 1152, 256>}, {pipeline_mode = #tpu.pipeline_mode<synchronous>, transform_indices = @transform_2, window_bounds = array<i64: 1, 256>}, {pipeline_mode = #tpu.pipeline_mode<synchronous>, transform_indices = @transform_3, window_bounds = array<i64: 128, 256>}, {pipeline_mode = #tpu.pipeline_mode<synchronous>, transform_indices = @transform_4, window_bounds = array<i64: 1, 256>}, {transform_indices = @transform_5, window_bounds = array<i64: 8, 256>}, {transform_indices = @transform_6, window_bounds = array<i64: 8, 256>}]} {
    %c0 = arith.constant 0 : index
    %c0_0 = arith.constant 0 : index
    %0 = vector.load %arg1[%c0, %c0_0] : memref<8x1152xbf16, #tpu.memory_space<vmem>>, vector<8x1152xbf16>
    %c0_1 = arith.constant 0 : index
    %c0_2 = arith.constant 0 : index
    %1 = vector.load %arg2[%c0_1, %c0_2] : memref<1152x256xbf16, #tpu.memory_space<vmem>>, vector<1152x256xbf16>
    %cst = arith.constant dense<0.000000e+00> : vector<8x256xf32>
    %2 = tpu.matmul %0, %1, %cst {dimension_numbers = #tpu.dot_dimension_numbers<[1], [0], [0], [1], [0, 0, 1, 1], [], []>} : vector<8x1152xbf16>, vector<1152x256xbf16>, vector<8x256xf32> -> vector<8x256xf32>
    %c0_3 = arith.constant 0 : index
    %c0_4 = arith.constant 0 : index
    %3 = vector.load %arg3[%c0_3, %c0_4] : memref<1x256xf32, #tpu.memory_space<vmem>>, vector<1x256xf32>
    %4 = vector.broadcast %3 : vector<1x256xf32> to vector<8x256xf32>
    %5 = arith.addf %2, %4 : vector<8x256xf32>
    %cst_5 = arith.constant 0.000000e+00 : f32
    %6 = vector.broadcast %cst_5 : f32 to vector<8x256xf32>
    %7 = arith.maximumf %5, %6 : vector<8x256xf32>
    %8 = arith.truncf %7 : vector<8x256xf32> to vector<8x256xbf16>
    %c0_6 = arith.constant 0 : index
    %c0_7 = arith.constant 0 : index
    %9 = vector.load %arg6[%c0_6, %c0_7] : memref<8x256xbf16, #tpu.memory_space<vmem>>, vector<8x256xbf16>
    tpu.vector_store %arg6[%c0_6, %c0_7], %8 {strides = array<i32>} : memref<8x256xbf16, #tpu.memory_space<vmem>>, vector<8x256xbf16>,
    %10 = vector.extract_strided_slice %0 {offsets = [0, 512], sizes = [8, 128], strides = [1, 1]} : vector<8x1152xbf16> to vector<8x128xbf16>
    %c0_8 = arith.constant 0 : index
    %c0_9 = arith.constant 0 : index
    %11 = vector.load %arg4[%c0_8, %c0_9] : memref<128x256xbf16, #tpu.memory_space<vmem>>, vector<128x256xbf16>
    %cst_10 = arith.constant dense<0.000000e+00> : vector<8x256xf32>
    %12 = tpu.matmul %10, %11, %cst_10 {dimension_numbers = #tpu.dot_dimension_numbers<[1], [0], [0], [1], [0, 0, 1, 1], [], []>} : vector<8x128xbf16>, vector<128x256xbf16>, vector<8x256xf32> -> vector<8x256xf32>
    %c0_11 = arith.constant 0 : index
    %c0_12 = arith.constant 0 : index
    %13 = vector.load %arg5[%c0_11, %c0_12] : memref<1x256xf32, #tpu.memory_space<vmem>>, vector<1x256xf32>
    %14 = vector.broadcast %13 : vector<1x256xf32> to vector<8x256xf32>
    %15 = arith.addf %12, %14 : vector<8x256xf32>
    %c0_13 = arith.constant 0 : index
    %c0_14 = arith.constant 0 : index
    %16 = vector.load %arg7[%c0_13, %c0_14] : memref<8x256xf32, #tpu.memory_space<vmem>>, vector<8x256xf32>
    tpu.vector_store %arg7[%c0_13, %c0_14], %15 {strides = array<i32>} : memref<8x256xf32, #tpu.memory_space<vmem>>, vector<8x256xf32>,
    return
  }
  func.func @transform_0(%arg0: i32) -> (i32, i32) {
    %c0_i32 = arith.constant 0 : i32
    %c0_i32_0 = arith.constant 0 : i32
    return %arg0, %c0_i32 : i32, i32
  }
  func.func @transform_1(%arg0: i32) -> (i32, i32) {
    %c0_i32 = arith.constant 0 : i32
    %c0_i32_0 = arith.constant 0 : i32
    %c0_i32_1 = arith.constant 0 : i32
    return %c0_i32, %c0_i32_0 : i32, i32
  }
  func.func @transform_2(%arg0: i32) -> (i32, i32) {
    %c0_i32 = arith.constant 0 : i32
    %c0_i32_0 = arith.constant 0 : i32
    %c0_i32_1 = arith.constant 0 : i32
    return %c0_i32, %c0_i32_0 : i32, i32
  }
  func.func @transform_3(%arg0: i32) -> (i32, i32) {
    %c0_i32 = arith.constant 0 : i32
    %c0_i32_0 = arith.constant 0 : i32
    %c0_i32_1 = arith.constant 0 : i32
    return %c0_i32, %c0_i32_0 : i32, i32
  }
  func.func @transform_4(%arg0: i32) -> (i32, i32) {
    %c0_i32 = arith.constant 0 : i32
    %c0_i32_0 = arith.constant 0 : i32
    %c0_i32_1 = arith.constant 0 : i32
    return %c0_i32, %c0_i32_0 : i32, i32
  }
  func.func @transform_5(%arg0: i32) -> (i32, i32) {
    %c0_i32 = arith.constant 0 : i32
    %c0_i32_0 = arith.constant 0 : i32
    return %arg0, %c0_i32 : i32, i32
  }
  func.func @transform_6(%arg0: i32) -> (i32, i32) {
    %c0_i32 = arith.constant 0 : i32
    %c0_i32_0 = arith.constant 0 : i32
    return %arg0, %c0_i32 : i32, i32
  }
}

module attributes {stable_mosaic.version = 11 : i64} {
  func.func @_conv2_pool_kernel(%arg0: i32, %arg1: i32, %arg2: memref<1x8x2304xbf16, #tpu.memory_space<vmem>>, %arg3: memref<2304x256xbf16, #tpu.memory_space<vmem>>, %arg4: memref<1x256xf32, #tpu.memory_space<vmem>>, %arg5: memref<1x8x256xf32, #tpu.memory_space<vmem>>, %arg6: memref<1x8x256xf32, #tpu.memory_space<vmem>>, %arg7: memref<8x256xf32, #tpu.memory_space<vmem>>) attributes {dimension_semantics = [#tpu.dimension_semantics<parallel>, #tpu.dimension_semantics<arbitrary>], iteration_bounds = array<i64: 2, 1>, scalar_prefetch = 0 : i64, scratch_operands = 1 : i64, tpu.core_type = #tpu.core_type<tc>, window_params = [{transform_indices = @transform_0, window_bounds = array<i64: 1, 8, 2304>}, {pipeline_mode = #tpu.pipeline_mode<synchronous>, transform_indices = @transform_1, window_bounds = array<i64: 2304, 256>}, {pipeline_mode = #tpu.pipeline_mode<synchronous>, transform_indices = @transform_2, window_bounds = array<i64: 1, 256>}, {transform_indices = @transform_3, window_bounds = array<i64: 1, 8, 256>}, {transform_indices = @transform_4, window_bounds = array<i64: 1, 8, 256>}]} {
    %c0_i32 = arith.constant 0 : i32
    %0 = arith.cmpi eq, %arg1, %c0_i32 : i32
    %1 = arith.extui %0 : i1 to i32
    %c0_i32_0 = arith.constant 0 : i32
    %2 = arith.cmpi ne, %1, %c0_i32_0 : i32
    scf.if %2 {
      %cst_19 = arith.constant 0.000000e+00 : f32
      %32 = vector.broadcast %cst_19 : f32 to vector<8x256xf32>
      %c0_20 = arith.constant 0 : index
      %c0_21 = arith.constant 0 : index
      %33 = vector.load %arg7[%c0_20, %c0_21] : memref<8x256xf32, #tpu.memory_space<vmem>>, vector<8x256xf32>
      tpu.vector_store %arg7[%c0_20, %c0_21], %32 {strides = array<i32>} : memref<8x256xf32, #tpu.memory_space<vmem>>, vector<8x256xf32>,
    } else {
    }
    %c0 = arith.constant 0 : index
    %c0_1 = arith.constant 0 : index
    %c0_2 = arith.constant 0 : index
    %3 = vector.load %arg2[%c0, %c0_1, %c0_2] : memref<1x8x2304xbf16, #tpu.memory_space<vmem>>, vector<1x8x2304xbf16>
    %4 = vector.shape_cast %3 : vector<1x8x2304xbf16> to vector<8x2304xbf16>
    %c0_3 = arith.constant 0 : index
    %c0_4 = arith.constant 0 : index
    %5 = vector.load %arg3[%c0_3, %c0_4] : memref<2304x256xbf16, #tpu.memory_space<vmem>>, vector<2304x256xbf16>
    %cst = arith.constant dense<0.000000e+00> : vector<8x256xf32>
    %6 = tpu.matmul %4, %5, %cst {dimension_numbers = #tpu.dot_dimension_numbers<[1], [0], [0], [1], [0, 0, 1, 1], [], []>} : vector<8x2304xbf16>, vector<2304x256xbf16>, vector<8x256xf32> -> vector<8x256xf32>
    %c0_5 = arith.constant 0 : index
    %c0_6 = arith.constant 0 : index
    %7 = vector.load %arg4[%c0_5, %c0_6] : memref<1x256xf32, #tpu.memory_space<vmem>>, vector<1x256xf32>
    %8 = vector.broadcast %7 : vector<1x256xf32> to vector<8x256xf32>
    %9 = arith.addf %6, %8 : vector<8x256xf32>
    %c0_7 = arith.constant 0 : index
    %c0_8 = arith.constant 0 : index
    %c0_9 = arith.constant 0 : index
    %10 = vector.load %arg5[%c0_7, %c0_8, %c0_9] : memref<1x8x256xf32, #tpu.memory_space<vmem>>, vector<1x8x256xf32>
    %11 = vector.shape_cast %10 : vector<1x8x256xf32> to vector<8x256xf32>
    %12 = arith.addf %9, %11 : vector<8x256xf32>
    %cst_10 = arith.constant 0.000000e+00 : f32
    %13 = vector.broadcast %cst_10 : f32 to vector<8x256xf32>
    %14 = arith.maximumf %12, %13 : vector<8x256xf32>
    %15 = tpu.iota {dimensions = array<i32: 0>} : vector<8x256xi32>
    %c8_i32 = arith.constant 8 : i32
    %16 = arith.muli %arg1, %c8_i32 : i32
    %17 = vector.broadcast %16 : i32 to vector<8x256xi32>
    %18 = arith.addi %15, %17 : vector<8x256xi32>
    %c4_i32 = arith.constant 4 : i32
    %19 = vector.broadcast %c4_i32 : i32 to vector<8x256xi32>
    %20 = arith.cmpi slt, %18, %19 : vector<8x256xi32>
    %cst_11 = arith.constant 0.000000e+00 : f32
    %21 = vector.broadcast %cst_11 : f32 to vector<8x256xf32>
    %22 = arith.select %20, %14, %21 : vector<8x256xi1>, vector<8x256xf32>
    %c0_12 = arith.constant 0 : index
    %c0_13 = arith.constant 0 : index
    %23 = vector.load %arg7[%c0_12, %c0_13] : memref<8x256xf32, #tpu.memory_space<vmem>>, vector<8x256xf32>
    %cst_14 = arith.constant dense<0.000000e+00> : vector<256xf32>
    %24 = vector.multi_reduction <add>, %22, %cst_14 [0] : vector<8x256xf32> to vector<256xf32>
    %25 = vector.shape_cast %24 : vector<256xf32> to vector<1x256xf32>
    %26 = vector.broadcast %25 : vector<1x256xf32> to vector<8x256xf32>
    %27 = arith.addf %23, %26 : vector<8x256xf32>
    %c0_15 = arith.constant 0 : index
    %c0_16 = arith.constant 0 : index
    %28 = vector.load %arg7[%c0_15, %c0_16] : memref<8x256xf32, #tpu.memory_space<vmem>>, vector<8x256xf32>
    tpu.vector_store %arg7[%c0_15, %c0_16], %27 {strides = array<i32>} : memref<8x256xf32, #tpu.memory_space<vmem>>, vector<8x256xf32>,
    %c0_i32_17 = arith.constant 0 : i32
    %29 = arith.cmpi eq, %arg1, %c0_i32_17 : i32
    %30 = arith.extui %29 : i1 to i32
    %c0_i32_18 = arith.constant 0 : i32
    %31 = arith.cmpi ne, %30, %c0_i32_18 : i32
    scf.if %31 {
      %c0_19 = arith.constant 0 : index
      %c0_20 = arith.constant 0 : index
      %32 = vector.load %arg7[%c0_19, %c0_20] : memref<8x256xf32, #tpu.memory_space<vmem>>, vector<8x256xf32>
      %cst_21 = arith.constant 2.500000e-01 : f32
      %33 = vector.broadcast %cst_21 : f32 to vector<8x256xf32>
      %34 = arith.mulf %32, %33 : vector<8x256xf32>
      %c0_22 = arith.constant 0 : index
      %c0_23 = arith.constant 0 : index
      %c0_24 = arith.constant 0 : index
      %35 = vector.load %arg6[%c0_22, %c0_23, %c0_24] : memref<1x8x256xf32, #tpu.memory_space<vmem>>, vector<1x8x256xf32>
      %36 = vector.shape_cast %35 : vector<1x8x256xf32> to vector<8x256xf32>
      %37 = vector.shape_cast %34 : vector<8x256xf32> to vector<1x8x256xf32>
      tpu.vector_store %arg6[%c0_22, %c0_23, %c0_24], %37 {strides = array<i32>} : memref<1x8x256xf32, #tpu.memory_space<vmem>>, vector<1x8x256xf32>,
    } else {
    }
    return
  }
  func.func @transform_0(%arg0: i32, %arg1: i32) -> (i32, i32, i32) {
    %c0_i32 = arith.constant 0 : i32
    %c0_i32_0 = arith.constant 0 : i32
    return %arg0, %arg1, %c0_i32 : i32, i32, i32
  }
  func.func @transform_1(%arg0: i32, %arg1: i32) -> (i32, i32) {
    %c0_i32 = arith.constant 0 : i32
    %c0_i32_0 = arith.constant 0 : i32
    %c0_i32_1 = arith.constant 0 : i32
    return %c0_i32, %c0_i32_0 : i32, i32
  }
  func.func @transform_2(%arg0: i32, %arg1: i32) -> (i32, i32) {
    %c0_i32 = arith.constant 0 : i32
    %c0_i32_0 = arith.constant 0 : i32
    %c0_i32_1 = arith.constant 0 : i32
    return %c0_i32, %c0_i32_0 : i32, i32
  }
  func.func @transform_3(%arg0: i32, %arg1: i32) -> (i32, i32, i32) {
    %c0_i32 = arith.constant 0 : i32
    %c0_i32_0 = arith.constant 0 : i32
    return %arg0, %arg1, %c0_i32 : i32, i32, i32
  }
  func.func @transform_4(%arg0: i32, %arg1: i32) -> (i32, i32, i32) {
    %c0_i32 = arith.constant 0 : i32
    %c0_i32_0 = arith.constant 0 : i32
    %c0_i32_1 = arith.constant 0 : i32
    return %arg0, %c0_i32, %c0_i32_0 : i32, i32, i32
  }
}

</mosaic_0001>

<llo_original>
// kernel: resnet_feature_extractor.6
$region0: #{resnet_feature_extractor.6}
  #allocation0 [shape = 'u32[]', space=smem, size = 0x4, offset = 0x4, fixed_abs, tag = 'smem constant byte address 0x4 - core index']
  #allocation1 [shape = 'u32[144,128]{1,0:T(1,128)}', space=vmem, size = 0x12000, scoped, tag = 'internal scratch']
  %s0 = inlined_call_operand.vmem [shape: bf16[128,72], index: 0, kind: input, shape index: {}]
  %s1 = inlined_call_operand.vmem [shape: bf16[72,128], index: 1, kind: input, shape index: {}]
  %s2 = inlined_call_operand.vmem [shape: f32[1,128], index: 2, kind: input, shape index: {}]
  %s3 = inlined_call_operand.vmem [shape: bf16[8,128], index: 3, kind: input, shape index: {}]
  %s4 = inlined_call_operand.vmem [shape: f32[1,128], index: 4, kind: input, shape index: {}]
  %s5 = inlined_call_operand.vmem [shape: bf16[128,128], index: 5, kind: output, shape index: {0}]
  %s6 = inlined_call_operand.vmem [shape: f32[128,128], index: 6, kind: output, shape index: {1}]
  %7 = xla_tuple %s5, %s6
  %s8 = sld [smem:[#allocation0]]
  $region38: #{resnet_feature_extractor.6} parent=0
    _
  %s10 = ssub.s32 1, %s8
  %s11 = scalar_select 0, %s10, %s8
  // Predicated region
  $region2: #{resnet_feature_extractor.6} parent=0 // pred_check
    _
  $region3: #{resnet_feature_extractor.6} parent=0 // pred_check_branch
    %13 = sbr.rel (0) target = $region5
  $region4: #{resnet_feature_extractor.6} parent=0 // pred_region
    _
  $region5: #{resnet_feature_extractor.6} parent=0 // pred_fallthru
    _
  // Predicated region
  $region6: #{resnet_feature_extractor.6} parent=0 // pred_check
    _
  $region7: #{resnet_feature_extractor.6} parent=0 // pred_check_branch
    %15 = sbr.rel (0) target = $region9
  $region8: #{resnet_feature_extractor.6} parent=0 // pred_region
    _
  $region9: #{resnet_feature_extractor.6} parent=0 // pred_fallthru
    _
  // Predicated region
  $region10: #{resnet_feature_extractor.6} parent=0 // pred_check
    _
  $region11: #{resnet_feature_extractor.6} parent=0 // pred_check_branch
    %17 = sbr.rel (0) target = $region13
  $region12: #{resnet_feature_extractor.6} parent=0 // pred_region
    _
  $region13: #{resnet_feature_extractor.6} parent=0 // pred_fallthru
    _
  // Predicated region
  $region14: #{resnet_feature_extractor.6} parent=0 // pred_check
    _
  $region15: #{resnet_feature_extractor.6} parent=0 // pred_check_branch
    %19 = sbr.rel (0) target = $region17
  $region16: #{resnet_feature_extractor.6} parent=0 // pred_region
    _
  $region17: #{resnet_feature_extractor.6} parent=0 // pred_fallthru
    _
  // Predicated region
  $region18: #{resnet_feature_extractor.6} parent=0 // pred_check
    _
  $region19: #{resnet_feature_extractor.6} parent=0 // pred_check_branch
    %21 = sbr.rel (0) target = $region21
  $region20: #{resnet_feature_extractor.6} parent=0 // pred_region
    _
  $region21: #{resnet_feature_extractor.6} parent=0 // pred_fallthru
    _
  %v23 = vld [vmem:[%s0] sm:$0xf]
  %v24 = vld [vmem:[%s0 + $0x4] sm:$0xf]
  %v25 = vld [vmem:[%s0 + $0x8] sm:$0xf]
  %v26 = vld [vmem:[%s0 + $0xc] sm:$0xf]
  %v27 = vld [vmem:[%s0 + $0x10] sm:$0xf]
  %v28 = vld [vmem:[%s0 + $0x14] sm:$0xf]
  %v29 = vld [vmem:[%s0 + $0x18] sm:$0xf]
  %v30 = vld [vmem:[%s0 + $0x1c] sm:$0xf]
  %v31 = vld [vmem:[%s0 + $0x20] sm:$0xf]
  %v32 = vld [vmem:[%s0 + $0x24] sm:$0xf]
  %v33 = vld [vmem:[%s0 + $0x28] sm:$0xf]
  %v34 = vld [vmem:[%s0 + $0x2c] sm:$0xf]
  %v35 = vld [vmem:[%s0 + $0x30] sm:$0xf]
  %v36 = vld [vmem:[%s0 + $0x34] sm:$0xf]
  %v37 = vld [vmem:[%s0 + $0x38] sm:$0xf]
  %v38 = vld [vmem:[%s0 + $0x3c] sm:$0xf]
  %v39 = vld [vmem:[%s1] sm:$0xf]
  %v40 = vld [vmem:[%s1 + $0x4] sm:$0xf]
  %v41 = vld [vmem:[%s1 + $0x8] sm:$0xf]
  %v42 = vld [vmem:[%s1 + $0xc] sm:$0xf]
  %v43 = vld [vmem:[%s1 + $0x10] sm:$0xf]
  %v44 = vld [vmem:[%s1 + $0x14] sm:$0xf]
  %v45 = vld [vmem:[%s1 + $0x18] sm:$0xf]
  %v46 = vld [vmem:[%s1 + $0x1c] sm:$0xf]
  %v47 = vld [vmem:[%s1 + $0x20] sm:$0xf]
  %v48 = vld [vmem:[%s2] sm:$0x1]
  %v50 = vlaneseq
  %v51 = vshrl.u32 %v50, 7
  %v52 = vsub.s32 0, %v51
  %v53 = vrot.slane %v48, %v52
  %v71 = vunpack.c.l.b16 %v23
  %v72 = vunpack.c.l.b16 %v24
  %v73 = vunpack.c.l.b16 %v25
  %v74 = vunpack.c.l.b16 %v26
  %v75 = vunpack.c.l.b16 %v27
  %v76 = vunpack.c.l.b16 %v28
  %v77 = vunpack.c.l.b16 %v29
  %v78 = vunpack.c.l.b16 %v30
  %v79 = vunpack.c.l.b16 %v31
  %v80 = vunpack.c.l.b16 %v32
  %v81 = vunpack.c.l.b16 %v33
  %v82 = vunpack.c.l.b16 %v34
  %v83 = vunpack.c.l.b16 %v35
  %v84 = vunpack.c.l.b16 %v36
  %v85 = vunpack.c.l.b16 %v37
  %v86 = vunpack.c.l.b16 %v38
  %v87 = vpack.c.b16 %v72, %v71
  %v88 = vpack.c.b16 %v74, %v73
  %v89 = vpack.c.b16 %v76, %v75
  %v90 = vpack.c.b16 %v78, %v77
  %v91 = vpack.c.b16 %v80, %v79
  %v92 = vpack.c.b16 %v82, %v81
  %v93 = vpack.c.b16 %v84, %v83
  %v94 = vpack.c.b16 %v86, %v85
  %v104 = vunpack.c.l.b16 %v39
  %v105 = vunpack.c.l.b16 %v40
  %v106 = vunpack.c.l.b16 %v41
  %v107 = vunpack.c.l.b16 %v42
  %v108 = vunpack.c.l.b16 %v43
  %v109 = vunpack.c.l.b16 %v44
  %v110 = vunpack.c.l.b16 %v45
  %v111 = vunpack.c.l.b16 %v46
  %v112 = vunpack.c.l.b16 %v47
  %v113 = vpack.c.b16 %v105, %v104
  %v114 = vpack.c.b16 %v107, %v106
  %v115 = vpack.c.b16 %v109, %v108
  %v116 = vpack.c.b16 %v111, %v110
  %v117 = vpack.c.b16 %v112, %v112
  %vm122 = vcmask 588800
  %v124 = vsel %vm122, %v87, 0
  %v127 = vsel %vm122, %v88, 0
  %v130 = vsel %vm122, %v89, 0
  %v133 = vsel %vm122, %v90, 0
  %v136 = vsel %vm122, %v91, 0
  %v139 = vsel %vm122, %v92, 0
  %v142 = vsel %vm122, %v93, 0
  %v145 = vsel %vm122, %v94, 0
  %vm147 = vcmask 1043456
  %v149 = vsel %vm147, %v117, 0
  %151 = vmatprep.subr.bf16.mxu0 0
  %152 = vmatpush1.bf16.msra.mxu0 %v113
  %153 = vmatprep.subr.bf16.mxu0 0
  %154 = vmatpush1.bf16.msra.mxu0 %v114
  %155 = vmatprep.subr.bf16.mxu0 0
  %156 = vmatpush1.bf16.msra.mxu0 %v115
  %157 = vmatprep.subr.bf16.mxu0 0
  %158 = vmatpush1.bf16.msra.mxu0 %v116
  %159 = vmatprep.subr.bf16.mxu0 0
  %160 = vmatpush1.bf16.msra.mxu0 %v149
  %161 = vmatprep.subr.bf16.mxu0 0
  %162 = vmatpush1.bf16.msra.mxu0 0
  %163 = vmatprep.subr.bf16.mxu0 0
  %164 = vmatpush1.bf16.msra.mxu0 0
  %165 = vmatprep.subr.bf16.mxu0 0
  %166 = vmatpush1.bf16.msra.mxu0 0
  %167 = vmatprep.subr.bf16.mxu0 0
  %168 = vmatpush1.bf16.msra.mxu0 0
  %169 = vmatprep.subr.bf16.mxu0 0
  %170 = vmatpush1.bf16.msra.mxu0 0
  %171 = vmatprep.subr.bf16.mxu0 0
  %172 = vmatpush1.bf16.msra.mxu0 0
  %173 = vmatprep.subr.bf16.mxu0 0
  %174 = vmatpush1.bf16.msra.mxu0 0
  %175 = vmatprep.subr.bf16.mxu0 0
  %176 = vmatpush1.bf16.msra.mxu0 0
  %177 = vmatprep.subr.bf16.mxu0 0
  %178 = vmatpush1.bf16.msra.mxu0 0
  %179 = vmatprep.subr.bf16.mxu0 0
  %180 = vmatpush1.bf16.msra.mxu0 0
  %181 = vmatprep.subr.bf16.mxu0 0
  %182 = vmatpush1.bf16.msra.mxu0 0
  %183 = vmatprep.mubr.bf16.mxu0 0
  %184 = vmatmul.mubr.bf16.gmra.mrb[0].mxu0 %v124
  %v185 = vpop.f32.mrb[0].mxu0
  %v186 = vadd.f32 %v53, %v185
  %v187 = vpop.f32.mrb[0].mxu0
  %v188 = vpop.f32.mrb[0].mxu0
  %v189 = vadd.f32 %v53, %v188
  %v190 = vpop.f32.mrb[0].mxu0
  %191 = vmatprep.mubr.bf16.mxu0 0
  %192 = vmatmul.mubr.bf16.gmra.mrb[0].mxu0 %v127
  %v193 = vpop.f32.mrb[0].mxu0
  %v194 = vadd.f32 %v53, %v193
  %v195 = vpop.f32.mrb[0].mxu0
  %v196 = vpop.f32.mrb[0].mxu0
  %v197 = vadd.f32 %v53, %v196
  %v198 = vpop.f32.mrb[0].mxu0
  %199 = vmatprep.mubr.bf16.mxu0 0
  %200 = vmatmul.mubr.bf16.gmra.mrb[0].mxu0 %v130
  %v201 = vpop.f32.mrb[0].mxu0
  %v202 = vadd.f32 %v53, %v201
  %v203 = vpop.f32.mrb[0].mxu0
  %v204 = vpop.f32.mrb[0].mxu0
  %v205 = vadd.f32 %v53, %v204
  %v206 = vpop.f32.mrb[0].mxu0
  %207 = vmatprep.mubr.bf16.mxu0 0
  %208 = vmatmul.mubr.bf16.gmra.mrb[0].mxu0 %v133
  %v209 = vpop.f32.mrb[0].mxu0
  %v210 = vadd.f32 %v53, %v209
  %v211 = vpop.f32.mrb[0].mxu0
  %v212 = vpop.f32.mrb[0].mxu0
  %v213 = vadd.f32 %v53, %v212
  %v214 = vpop.f32.mrb[0].mxu0
  %215 = vmatprep.mubr.bf16.mxu0 0
  %216 = vmatmul.mubr.bf16.gmra.mrb[0].mxu0 %v136
  %v217 = vpop.f32.mrb[0].mxu0
  %v218 = vadd.f32 %v53, %v217
  %v219 = vpop.f32.mrb[0].mxu0
  %v220 = vpop.f32.mrb[0].mxu0
  %v221 = vadd.f32 %v53, %v220
  %v222 = vpop.f32.mrb[0].mxu0
  %223 = vmatprep.mubr.bf16.mxu0 0
  %224 = vmatmul.mubr.bf16.gmra.mrb[0].mxu0 %v139
  %v225 = vpop.f32.mrb[0].mxu0
  %v226 = vadd.f32 %v53, %v225
  %v227 = vpop.f32.mrb[0].mxu0
  %v228 = vpop.f32.mrb[0].mxu0
  %v229 = vadd.f32 %v53, %v228
  %v230 = vpop.f32.mrb[0].mxu0
  %231 = vmatprep.mubr.bf16.mxu0 0
  %232 = vmatmul.mubr.bf16.gmra.mrb[0].mxu0 %v142
  %v233 = vpop.f32.mrb[0].mxu0
  %v234 = vadd.f32 %v53, %v233
  %v235 = vpop.f32.mrb[0].mxu0
  %v236 = vpop.f32.mrb[0].mxu0
  %v237 = vadd.f32 %v53, %v236
  %v238 = vpop.f32.mrb[0].mxu0
  %239 = vmatprep.mubr.bf16.mxu0 0
  %240 = vmatmul.mubr.bf16.gmra.mrb[0].mxu0 %v145
  %v241 = vpop.f32.mrb[0].mxu0
  %v242 = vadd.f32 %v53, %v241
  %v243 = vpop.f32.mrb[0].mxu0
  %v244 = vpop.f32.mrb[0].mxu0
  %v245 = vadd.f32 %v53, %v244
  %v246 = vpop.f32.mrb[0].mxu0
  %247 = vdwg.mxu0
  %v248 = vmax.f32 %v186, 0.0
  %v249 = vmax.f32 %v189, 0.0
  %v250 = vmax.f32 %v194, 0.0
  %v251 = vmax.f32 %v197, 0.0
  %v252 = vmax.f32 %v202, 0.0
  %v253 = vmax.f32 %v205, 0.0
  %v254 = vmax.f32 %v210, 0.0
  %v255 = vmax.f32 %v213, 0.0
  %v256 = vmax.f32 %v218, 0.0
  %v257 = vmax.f32 %v221, 0.0
  %v258 = vmax.f32 %v226, 0.0
  %v259 = vmax.f32 %v229, 0.0
  %v260 = vmax.f32 %v234, 0.0
  %v261 = vmax.f32 %v237, 0.0
  %v262 = vmax.f32 %v242, 0.0
  %v263 = vmax.f32 %v245, 0.0
  %v264 = vpack.c.bf16 %v249, %v248
  %v265 = vpack.c.bf16 %v251, %v250
  %v266 = vpack.c.bf16 %v253, %v252
  %v267 = vpack.c.bf16 %v255, %v254
  %v268 = vpack.c.bf16 %v257, %v256
  %v269 = vpack.c.bf16 %v259, %v258
  %v270 = vpack.c.bf16 %v261, %v260
  %v271 = vpack.c.bf16 %v263, %v262
  %v280 = vunpack.c.l.b16 %v264
  %v281 = vunpack.c.h.b16 %v264
  %v282 = vunpack.c.l.b16 %v265
  %v283 = vunpack.c.h.b16 %v265
  %v284 = vunpack.c.l.b16 %v266
  %v285 = vunpack.c.h.b16 %v266
  %v286 = vunpack.c.l.b16 %v267
  %v287 = vunpack.c.h.b16 %v267
  %v288 = vunpack.c.l.b16 %v268
  %v289 = vunpack.c.h.b16 %v268
  %v290 = vunpack.c.l.b16 %v269
  %v291 = vunpack.c.h.b16 %v269
  %v292 = vunpack.c.l.b16 %v270
  %v293 = vunpack.c.h.b16 %v270
  %v294 = vunpack.c.l.b16 %v271
  %v295 = vunpack.c.h.b16 %v271
  %v296 = vpack.c.b16 %v280, %v280
  %v297 = vpack.c.b16 %v281, %v281
  %v298 = vpack.c.b16 %v282, %v282
  %v299 = vpack.c.b16 %v283, %v283
  %v300 = vpack.c.b16 %v284, %v284
  %v301 = vpack.c.b16 %v285, %v285
  %v302 = vpack.c.b16 %v286, %v286
  %v303 = vpack.c.b16 %v287, %v287
  %v304 = vpack.c.b16 %v288, %v288
  %v305 = vpack.c.b16 %v289, %v289
  %v306 = vpack.c.b16 %v290, %v290
  %v307 = vpack.c.b16 %v291, %v291
  %v308 = vpack.c.b16 %v292, %v292
  %v309 = vpack.c.b16 %v293, %v293
  %v310 = vpack.c.b16 %v294, %v294
  %v311 = vpack.c.b16 %v295, %v295
  %328 = vst [vmem:[%s5] sm:$0xf] %v296
  %329 = vst [vmem:[%s5 + $0x4] sm:$0xf] %v297
  %330 = vst [vmem:[%s5 + $0x8] sm:$0xf] %v298
  %331 = vst [vmem:[%s5 + $0xc] sm:$0xf] %v299
  %332 = vst [vmem:[%s5 + $0x10] sm:$0xf] %v300
  %333 = vst [vmem:[%s5 + $0x14] sm:$0xf] %v301
  %334 = vst [vmem:[%s5 + $0x18] sm:$0xf] %v302
  %335 = vst [vmem:[%s5 + $0x1c] sm:$0xf] %v303
  %336 = vst [vmem:[%s5 + $0x20] sm:$0xf] %v304
  %337 = vst [vmem:[%s5 + $0x24] sm:$0xf] %v305
  %338 = vst [vmem:[%s5 + $0x28] sm:$0xf] %v306
  %339 = vst [vmem:[%s5 + $0x2c] sm:$0xf] %v307
  %340 = vst [vmem:[%s5 + $0x30] sm:$0xf] %v308
  %341 = vst [vmem:[%s5 + $0x34] sm:$0xf] %v309
  %342 = vst [vmem:[%s5 + $0x38] sm:$0xf] %v310
  %343 = vst [vmem:[%s5 + $0x3c] sm:$0xf] %v311
  %v344 = vld [vmem:[%s3] sm:$0xf]
  %v345 = vld [vmem:[%s4] sm:$0x1]
  %v347 = vlaneseq
  %v348 = vshrl.u32 %v347, 7
  %v349 = vsub.s32 0, %v348
  %v350 = vrot.slane %v345, %v349
  %352 = vrot.lane.b32.xlu0 %v87, 96
  %v353 = vpop.permute.xlu0 %352
  %354 = vrot.lane.b32.xlu0 %v88, 96
  %v355 = vpop.permute.xlu0 %354
  %356 = vrot.lane.b32.xlu0 %v89, 96
  %v357 = vpop.permute.xlu0 %356
  %358 = vrot.lane.b32.xlu0 %v90, 96
  %v359 = vpop.permute.xlu0 %358
  %360 = vrot.lane.b32.xlu0 %v91, 96
  %v361 = vpop.permute.xlu0 %360
  %362 = vrot.lane.b32.xlu0 %v92, 96
  %v363 = vpop.permute.xlu0 %362
  %364 = vrot.lane.b32.xlu0 %v93, 96
  %v365 = vpop.permute.xlu0 %364
  %366 = vrot.lane.b32.xlu0 %v94, 96
  %v367 = vpop.permute.xlu0 %366
  %vm368 = vcmask 64512
  %v370 = vsel %vm368, %v353, 0
  %v373 = vsel %vm368, %v355, 0
  %v376 = vsel %vm368, %v357, 0
  %v379 = vsel %vm368, %v359, 0
  %v382 = vsel %vm368, %v361, 0
  %v385 = vsel %vm368, %v363, 0
  %v388 = vsel %vm368, %v365, 0
  %v391 = vsel %vm368, %v367, 0
  %v394 = vsel %vm147, %v344, 0
  %396 = vmatprep.subr.bf16.mxu0 0
  %397 = vmatpush1.bf16.msra.mxu0 %v394
  %398 = vmatprep.subr.bf16.mxu0 0
  %399 = vmatpush1.bf16.msra.mxu0 0
  %400 = vmatprep.subr.bf16.mxu0 0
  %401 = vmatpush1.bf16.msra.mxu0 0
  %402 = vmatprep.subr.bf16.mxu0 0
  %403 = vmatpush1.bf16.msra.mxu0 0
  %404 = vmatprep.subr.bf16.mxu0 0
  %405 = vmatpush1.bf16.msra.mxu0 0
  %406 = vmatprep.subr.bf16.mxu0 0
  %407 = vmatpush1.bf16.msra.mxu0 0
  %408 = vmatprep.subr.bf16.mxu0 0
  %409 = vmatpush1.bf16.msra.mxu0 0
  %410 = vmatprep.subr.bf16.mxu0 0
  %411 = vmatpush1.bf16.msra.mxu0 0
  %412 = vmatprep.subr.bf16.mxu0 0
  %413 = vmatpush1.bf16.msra.mxu0 0
  %414 = vmatprep.subr.bf16.mxu0 0
  %415 = vmatpush1.bf16.msra.mxu0 0
  %416 = vmatprep.subr.bf16.mxu0 0
  %417 = vmatpush1.bf16.msra.mxu0 0
  %418 = vmatprep.subr.bf16.mxu0 0
  %419 = vmatpush1.bf16.msra.mxu0 0
  %420 = vmatprep.subr.bf16.mxu0 0
  %421 = vmatpush1.bf16.msra.mxu0 0
  %422 = vmatprep.subr.bf16.mxu0 0
  %423 = vmatpush1.bf16.msra.mxu0 0
  %424 = vmatprep.subr.bf16.mxu0 0
  %425 = vmatpush1.bf16.msra.mxu0 0
  %426 = vmatprep.subr.bf16.mxu0 0
  %427 = vmatpush1.bf16.msra.mxu0 0
  %428 = vmatprep.mubr.bf16.mxu0 0
  %429 = vmatmul.mubr.bf16.gmra.mrb[0].mxu0 %v370
  %v430 = vpop.f32.mrb[0].mxu0
  %v431 = vadd.f32 %v350, %v430
  %v432 = vpop.f32.mrb[0].mxu0
  %v433 = vpop.f32.mrb[0].mxu0
  %v434 = vadd.f32 %v350, %v433
  %v435 = vpop.f32.mrb[0].mxu0
  %436 = vmatprep.mubr.bf16.mxu0 0
  %437 = vmatmul.mubr.bf16.gmra.mrb[0].mxu0 %v373
  %v438 = vpop.f32.mrb[0].mxu0
  %v439 = vadd.f32 %v350, %v438
  %v440 = vpop.f32.mrb[0].mxu0
  %v441 = vpop.f32.mrb[0].mxu0
  %v442 = vadd.f32 %v350, %v441
  %v443 = vpop.f32.mrb[0].mxu0
  %444 = vmatprep.mubr.bf16.mxu0 0
  %445 = vmatmul.mubr.bf16.gmra.mrb[0].mxu0 %v376
  %v446 = vpop.f32.mrb[0].mxu0
  %v447 = vadd.f32 %v350, %v446
  %v448 = vpop.f32.mrb[0].mxu0
  %v449 = vpop.f32.mrb[0].mxu0
  %v450 = vadd.f32 %v350, %v449
  %v451 = vpop.f32.mrb[0].mxu0
  %452 = vmatprep.mubr.bf16.mxu0 0
  %453 = vmatmul.mubr.bf16.gmra.mrb[0].mxu0 %v379
  %v454 = vpop.f32.mrb[0].mxu0
  %v455 = vadd.f32 %v350, %v454
  %v456 = vpop.f32.mrb[0].mxu0
  %v457 = vpop.f32.mrb[0].mxu0
  %v458 = vadd.f32 %v350, %v457
  %v459 = vpop.f32.mrb[0].mxu0
  %460 = vmatprep.mubr.bf16.mxu0 0
  %461 = vmatmul.mubr.bf16.gmra.mrb[0].mxu0 %v382
  %v462 = vpop.f32.mrb[0].mxu0
  %v463 = vadd.f32 %v350, %v462
  %v464 = vpop.f32.mrb[0].mxu0
  %v465 = vpop.f32.mrb[0].mxu0
  %v466 = vadd.f32 %v350, %v465
  %v467 = vpop.f32.mrb[0].mxu0
  %468 = vmatprep.mubr.bf16.mxu0 0
  %469 = vmatmul.mubr.bf16.gmra.mrb[0].mxu0 %v385
  %v470 = vpop.f32.mrb[0].mxu0
  %v471 = vadd.f32 %v350, %v470
  %v472 = vpop.f32.mrb[0].mxu0
  %v473 = vpop.f32.mrb[0].mxu0
  %v474 = vadd.f32 %v350, %v473
  %v475 = vpop.f32.mrb[0].mxu0
  %476 = vmatprep.mubr.bf16.mxu0 0
  %477 = vmatmul.mubr.bf16.gmra.mrb[0].mxu0 %v388
  %v478 = vpop.f32.mrb[0].mxu0
  %v479 = vadd.f32 %v350, %v478
  %v480 = vpop.f32.mrb[0].mxu0
  %v481 = vpop.f32.mrb[0].mxu0
  %v482 = vadd.f32 %v350, %v481
  %v483 = vpop.f32.mrb[0].mxu0
  %484 = vmatprep.mubr.bf16.mxu0 0
  %485 = vmatmul.mubr.bf16.gmra.mrb[0].mxu0 %v391
  %v486 = vpop.f32.mrb[0].mxu0
  %v487 = vadd.f32 %v350, %v486
  %v488 = vpop.f32.mrb[0].mxu0
  %v489 = vpop.f32.mrb[0].mxu0
  %v490 = vadd.f32 %v350, %v489
  %v491 = vpop.f32.mrb[0].mxu0
  %492 = vdwg.mxu0
  %493 = vst [vmem:[%s6] sm:$0xff] %v431
  %494 = vst [vmem:[%s6 + $0x8] sm:$0xff] %v434
  %495 = vst [vmem:[%s6 + $0x10] sm:$0xff] %v439
  %496 = vst [vmem:[%s6 + $0x18] sm:$0xff] %v442
  %497 = vst [vmem:[%s6 + $0x20] sm:$0xff] %v447
  %498 = vst [vmem:[%s6 + $0x28] sm:$0xff] %v450
  %499 = vst [vmem:[%s6 + $0x30] sm:$0xff] %v455
  %500 = vst [vmem:[%s6 + $0x38] sm:$0xff] %v458
  %501 = vst [vmem:[%s6 + $0x40] sm:$0xff] %v463
  %502 = vst [vmem:[%s6 + $0x48] sm:$0xff] %v466
  %503 = vst [vmem:[%s6 + $0x50] sm:$0xff] %v471
  %504 = vst [vmem:[%s6 + $0x58] sm:$0xff] %v474
  %505 = vst [vmem:[%s6 + $0x60] sm:$0xff] %v479
  %506 = vst [vmem:[%s6 + $0x68] sm:$0xff] %v482
  %507 = vst [vmem:[%s6 + $0x70] sm:$0xff] %v487
  %508 = vst [vmem:[%s6 + $0x78] sm:$0xff] %v490
  // Predicated region
  $region22: #{resnet_feature_extractor.6} parent=0 // pred_check
    _
  $region23: #{resnet_feature_extractor.6} parent=0 // pred_check_branch
    %510 = sbr.rel (0) target = $region25
  $region24: #{resnet_feature_extractor.6} parent=0 // pred_region
    _
  $region25: #{resnet_feature_extractor.6} parent=0 // pred_fallthru
    _
  // Predicated region
  $region26: #{resnet_feature_extractor.6} parent=0 // pred_check
    _
  $region27: #{resnet_feature_extractor.6} parent=0 // pred_check_branch
    %512 = sbr.rel (0) target = $region29
  $region28: #{resnet_feature_extractor.6} parent=0 // pred_region
    _
  $region29: #{resnet_feature_extractor.6} parent=0 // pred_fallthru
    _
  // Predicated region
  $region30: #{resnet_feature_extractor.6} parent=0 // pred_check
    _
  $region31: #{resnet_feature_extractor.6} parent=0 // pred_check_branch
    %514 = sbr.rel (0) target = $region33
  $region32: #{resnet_feature_extractor.6} parent=0 // pred_region
    _
  $region33: #{resnet_feature_extractor.6} parent=0 // pred_fallthru
    _
  // Predicated region
  $region34: #{resnet_feature_extractor.6} parent=0 // pred_check
    _
  $region35: #{resnet_feature_extractor.6} parent=0 // pred_check_branch
    %516 = sbr.rel (0) target = $region37
  $region36: #{resnet_feature_extractor.6} parent=0 // pred_region
    _
  $region37: #{resnet_feature_extractor.6} parent=0 // pred_fallthru
    _

// kernel: resnet_feature_extractor.7
$region0: #{resnet_feature_extractor.7}
  #allocation0 [shape = 'u32[]', space=smem, size = 0x4, offset = 0x4, fixed_abs, tag = 'smem constant byte address 0x4 - core index']
  #allocation1 [shape = 'u32[144,128]{1,0:T(1,128)}', space=vmem, size = 0x12000, scoped, tag = 'internal scratch']
  %s0 = inlined_call_operand.vmem [shape: bf16[128,1152], index: 0, kind: input, shape index: {}]
  %s1 = inlined_call_operand.vmem [shape: bf16[1152,128], index: 1, kind: input, shape index: {}]
  %s2 = inlined_call_operand.vmem [shape: f32[1,128], index: 2, kind: input, shape index: {}]
  %s3 = inlined_call_operand.vmem [shape: f32[128,128], index: 3, kind: input, shape index: {}]
  %s4 = inlined_call_operand.vmem [shape: bf16[128,128], index: 4, kind: output, shape index: {}]
  %s5 = sld [smem:[#allocation0]]
  $region26: #{resnet_feature_extractor.7} parent=0
    _
  %s7 = ssub.s32 1, %s5
  %s8 = scalar_select 0, %s7, %s5
  // Predicated region
  $region2: #{resnet_feature_extractor.7} parent=0 // pred_check
    _
  $region3: #{resnet_feature_extractor.7} parent=0 // pred_check_branch
    %10 = sbr.rel (0) target = $region5
  $region4: #{resnet_feature_extractor.7} parent=0 // pred_region
    _
  $region5: #{resnet_feature_extractor.7} parent=0 // pred_fallthru
    _
  // Predicated region
  $region6: #{resnet_feature_extractor.7} parent=0 // pred_check
    _
  $region7: #{resnet_feature_extractor.7} parent=0 // pred_check_branch
    %12 = sbr.rel (0) target = $region9
  $region8: #{resnet_feature_extractor.7} parent=0 // pred_region
    _
  $region9: #{resnet_feature_extractor.7} parent=0 // pred_fallthru
    _
  // Predicated region
  $region10: #{resnet_feature_extractor.7} parent=0 // pred_check
    _
  $region11: #{resnet_feature_extractor.7} parent=0 // pred_check_branch
    %14 = sbr.rel (0) target = $region13
  $region12: #{resnet_feature_extractor.7} parent=0 // pred_region
    _
  $region13: #{resnet_feature_extractor.7} parent=0 // pred_fallthru
    _
  // Predicated region
  $region14: #{resnet_feature_extractor.7} parent=0 // pred_check
    _
  $region15: #{resnet_feature_extractor.7} parent=0 // pred_check_branch
    %16 = sbr.rel (0) target = $region17
  $region16: #{resnet_feature_extractor.7} parent=0 // pred_region
    _
  $region17: #{resnet_feature_extractor.7} parent=0 // pred_fallthru
    _
  %v18 = vld [vmem:[%s0] sm:$0xff]
  %v19 = vld [vmem:[%s0 + $0x8] sm:$0xff]
  %v20 = vld [vmem:[%s0 + $0x10] sm:$0xff]
  %v21 = vld [vmem:[%s0 + $0x18] sm:$0xff]
  %v22 = vld [vmem:[%s0 + $0x20] sm:$0xf]
  %v23 = vld [vmem:[%s0 + $0x24] sm:$0xff]
  %v24 = vld [vmem:[%s0 + $0x2c] sm:$0xff]
  %v25 = vld [vmem:[%s0 + $0x34] sm:$0xff]
  %v26 = vld [vmem:[%s0 + $0x3c] sm:$0xff]
  %v27 = vld [vmem:[%s0 + $0x44] sm:$0xf]
  %v28 = vld [vmem:[%s0 + $0x48] sm:$0xff]
  %v29 = vld [vmem:[%s0 + $0x50] sm:$0xff]
  %v30 = vld [vmem:[%s0 + $0x58] sm:$0xff]
  %v31 = vld [vmem:[%s0 + $0x60] sm:$0xff]
  %v32 = vld [vmem:[%s0 + $0x68] sm:$0xf]
  %v33 = vld [vmem:[%s0 + $0x6c] sm:$0xff]
  %v34 = vld [vmem:[%s0 + $0x74] sm:$0xff]
  %v35 = vld [vmem:[%s0 + $0x7c] sm:$0xff]
  %v36 = vld [vmem:[%s0 + $0x84] sm:$0xff]
  %v37 = vld [vmem:[%s0 + $0x8c] sm:$0xf]
  %v38 = vld [vmem:[%s0 + $0x90] sm:$0xff]
  %v39 = vld [vmem:[%s0 + $0x98] sm:$0xff]
  %v40 = vld [vmem:[%s0 + $0xa0] sm:$0xff]
  %v41 = vld [vmem:[%s0 + $0xa8] sm:$0xff]
  %v42 = vld [vmem:[%s0 + $0xb0] sm:$0xf]
  %v43 = vld [vmem:[%s0 + $0xb4] sm:$0xff]
  %v44 = vld [vmem:[%s0 + $0xbc] sm:$0xff]
  %v45 = vld [vmem:[%s0 + $0xc4] sm:$0xff]
  %v46 = vld [vmem:[%s0 + $0xcc] sm:$0xff]
  %v47 = vld [vmem:[%s0 + $0xd4] sm:$0xf]
  %v48 = vld [vmem:[%s0 + $0xd8] sm:$0xff]
  %v49 = vld [vmem:[%s0 + $0xe0] sm:$0xff]
  %v50 = vld [vmem:[%s0 + $0xe8] sm:$0xff]
  %v51 = vld [vmem:[%s0 + $0xf0] sm:$0xff]
  %v52 = vld [vmem:[%s0 + $0xf8] sm:$0xf]
  %v53 = vld [vmem:[%s0 + $0xfc] sm:$0xff]
  %v54 = vld [vmem:[%s0 + $0x104] sm:$0xff]
  %v55 = vld [vmem:[%s0 + $0x10c] sm:$0xff]
  %v56 = vld [vmem:[%s0 + $0x114] sm:$0xff]
  %v57 = vld [vmem:[%s0 + $0x11c] sm:$0xf]
  %v58 = vld [vmem:[%s0 + $0x120] sm:$0xff]
  %v59 = vld [vmem:[%s0 + $0x128] sm:$0xff]
  %v60 = vld [vmem:[%s0 + $0x130] sm:$0xff]
  %v61 = vld [vmem:[%s0 + $0x138] sm:$0xff]
  %v62 = vld [vmem:[%s0 + $0x140] sm:$0xf]
  %v63 = vld [vmem:[%s0 + $0x144] sm:$0xff]
  %v64 = vld [vmem:[%s0 + $0x14c] sm:$0xff]
  %v65 = vld [vmem:[%s0 + $0x154] sm:$0xff]
  %v66 = vld [vmem:[%s0 + $0x15c] sm:$0xff]
  %v67 = vld [vmem:[%s0 + $0x164] sm:$0xf]
  %v68 = vld [vmem:[%s0 + $0x168] sm:$0xff]
  %v69 = vld [vmem:[%s0 + $0x170] sm:$0xff]
  %v70 = vld [vmem:[%s0 + $0x178] sm:$0xff]
  %v71 = vld [vmem:[%s0 + $0x180] sm:$0xff]
  %v72 = vld [vmem:[%s0 + $0x188] sm:$0xf]
  %v73 = vld [vmem:[%s0 + $0x18c] sm:$0xff]
  %v74 = vld [vmem:[%s0 + $0x194] sm:$0xff]
  %v75 = vld [vmem:[%s0 + $0x19c] sm:$0xff]
  %v76 = vld [vmem:[%s0 + $0x1a4] sm:$0xff]
  %v77 = vld [vmem:[%s0 + $0x1ac] sm:$0xf]
  %v78 = vld [vmem:[%s0 + $0x1b0] sm:$0xff]
  %v79 = vld [vmem:[%s0 + $0x1b8] sm:$0xff]
  %v80 = vld [vmem:[%s0 + $0x1c0] sm:$0xff]
  %v81 = vld [vmem:[%s0 + $0x1c8] sm:$0xff]
  %v82 = vld [vmem:[%s0 + $0x1d0] sm:$0xf]
  %v83 = vld [vmem:[%s0 + $0x1d4] sm:$0xff]
  %v84 = vld [vmem:[%s0 + $0x1dc] sm:$0xff]
  %v85 = vld [vmem:[%s0 + $0x1e4] sm:$0xff]
  %v86 = vld [vmem:[%s0 + $0x1ec] sm:$0xff]
  %v87 = vld [vmem:[%s0 + $0x1f4] sm:$0xf]
  %v88 = vld [vmem:[%s0 + $0x1f8] sm:$0xff]
  %v89 = vld [vmem:[%s0 + $0x200] sm:$0xff]
  %v90 = vld [vmem:[%s0 + $0x208] sm:$0xff]
  %v91 = vld [vmem:[%s0 + $0x210] sm:$0xff]
  %v92 = vld [vmem:[%s0 + $0x218] sm:$0xf]
  %v93 = vld [vmem:[%s0 + $0x21c] sm:$0xff]
  %v94 = vld [vmem:[%s0 + $0x224] sm:$0xff]
  %v95 = vld [vmem:[%s0 + $0x22c] sm:$0xff]
  %v96 = vld [vmem:[%s0 + $0x234] sm:$0xff]
  %v97 = vld [vmem:[%s0 + $0x23c] sm:$0xf]
  %v98 = vld [vmem:[%s1] sm:$0xf]
  %v99 = vld [vmem:[%s1 + $0x4] sm:$0xf]
  %v100 = vld [vmem:[%s1 + $0x8] sm:$0xf]
  %v101 = vld [vmem:[%s1 + $0xc] sm:$0xf]
  %v102 = vld [vmem:[%s1 + $0x10] sm:$0xf]
  %v103 = vld [vmem:[%s1 + $0x14] sm:$0xf]
  %v104 = vld [vmem:[%s1 + $0x18] sm:$0xf]
  %v105 = vld [vmem:[%s1 + $0x1c] sm:$0xf]
  %v106 = vld [vmem:[%s1 + $0x20] sm:$0xf]
  %v107 = vld [vmem:[%s1 + $0x24] sm:$0xf]
  %v108 = vld [vmem:[%s1 + $0x28] sm:$0xf]
  %v109 = vld [vmem:[%s1 + $0x2c] sm:$0xf]
  %v110 = vld [vmem:[%s1 + $0x30] sm:$0xf]
  %v111 = vld [vmem:[%s1 + $0x34] sm:$0xf]
  %v112 = vld [vmem:[%s1 + $0x38] sm:$0xf]
  %v113 = vld [vmem:[%s1 + $0x3c] sm:$0xf]
  %v114 = vld [vmem:[%s1 + $0x40] sm:$0xf]
  %v115 = vld [vmem:[%s1 + $0x44] sm:$0xf]
  %v116 = vld [vmem:[%s1 + $0x48] sm:$0xf]
  %v117 = vld [vmem:[%s1 + $0x4c] sm:$0xf]
  %v118 = vld [vmem:[%s1 + $0x50] sm:$0xf]
  %v119 = vld [vmem:[%s1 + $0x54] sm:$0xf]
  %v120 = vld [vmem:[%s1 + $0x58] sm:$0xf]
  %v121 = vld [vmem:[%s1 + $0x5c] sm:$0xf]
  %v122 = vld [vmem:[%s1 + $0x60] sm:$0xf]
  %v123 = vld [vmem:[%s1 + $0x64] sm:$0xf]
  %v124 = vld [vmem:[%s1 + $0x68] sm:$0xf]
  %v125 = vld [vmem:[%s1 + $0x6c] sm:$0xf]
  %v126 = vld [vmem:[%s1 + $0x70] sm:$0xf]
  %v127 = vld [vmem:[%s1 + $0x74] sm:$0xf]
  %v128 = vld [vmem:[%s1 + $0x78] sm:$0xf]
  %v129 = vld [vmem:[%s1 + $0x7c] sm:$0xf]
  %v130 = vld [vmem:[%s1 + $0x80] sm:$0xf]
  %v131 = vld [vmem:[%s1 + $0x84] sm:$0xf]
  %v132 = vld [vmem:[%s1 + $0x88] sm:$0xf]
  %v133 = vld [vmem:[%s1 + $0x8c] sm:$0xf]
  %v134 = vld [vmem:[%s1 + $0x90] sm:$0xf]
  %v135 = vld [vmem:[%s1 + $0x94] sm:$0xf]
  %v136 = vld [vmem:[%s1 + $0x98] sm:$0xf]
  %v137 = vld [vmem:[%s1 + $0x9c] sm:$0xf]
  %v138 = vld [vmem:[%s1 + $0xa0] sm:$0xf]
  %v139 = vld [vmem:[%s1 + $0xa4] sm:$0xf]
  %v140 = vld [vmem:[%s1 + $0xa8] sm:$0xf]
  %v141 = vld [vmem:[%s1 + $0xac] sm:$0xf]
  %v142 = vld [vmem:[%s1 + $0xb0] sm:$0xf]
  %v143 = vld [vmem:[%s1 + $0xb4] sm:$0xf]
  %v144 = vld [vmem:[%s1 + $0xb8] sm:$0xf]
  %v145 = vld [vmem:[%s1 + $0xbc] sm:$0xf]
  %v146 = vld [vmem:[%s1 + $0xc0] sm:$0xf]
  %v147 = vld [vmem:[%s1 + $0xc4] sm:$0xf]
  %v148 = vld [vmem:[%s1 + $0xc8] sm:$0xf]
  %v149 = vld [vmem:[%s1 + $0xcc] sm:$0xf]
  %v150 = vld [vmem:[%s1 + $0xd0] sm:$0xf]
  %v151 = vld [vmem:[%s1 + $0xd4] sm:$0xf]
  %v152 = vld [vmem:[%s1 + $0xd8] sm:$0xf]
  %v153 = vld [vmem:[%s1 + $0xdc] sm:$0xf]
  %v154 = vld [vmem:[%s1 + $0xe0] sm:$0xf]
  %v155 = vld [vmem:[%s1 + $0xe4] sm:$0xf]
  %v156 = vld [vmem:[%s1 + $0xe8] sm:$0xf]
  %v157 = vld [vmem:[%s1 + $0xec] sm:$0xf]
  %v158 = vld [vmem:[%s1 + $0xf0] sm:$0xf]
  %v159 = vld [vmem:[%s1 + $0xf4] sm:$0xf]
  %v160 = vld [vmem:[%s1 + $0xf8] sm:$0xf]
  %v161 = vld [vmem:[%s1 + $0xfc] sm:$0xf]
  %v162 = vld [vmem:[%s1 + $0x100] sm:$0xf]
  %v163 = vld [vmem:[%s1 + $0x104] sm:$0xf]
  %v164 = vld [vmem:[%s1 + $0x108] sm:$0xf]
  %v165 = vld [vmem:[%s1 + $0x10c] sm:$0xf]
  %v166 = vld [vmem:[%s1 + $0x110] sm:$0xf]
  %v167 = vld [vmem:[%s1 + $0x114] sm:$0xf]
  %v168 = vld [vmem:[%s1 + $0x118] sm:$0xf]
  %v169 = vld [vmem:[%s1 + $0x11c] sm:$0xf]
  %v170 = vld [vmem:[%s1 + $0x120] sm:$0xf]
  %v171 = vld [vmem:[%s1 + $0x124] sm:$0xf]
  %v172 = vld [vmem:[%s1 + $0x128] sm:$0xf]
  %v173 = vld [vmem:[%s1 + $0x12c] sm:$0xf]
  %v174 = vld [vmem:[%s1 + $0x130] sm:$0xf]
  %v175 = vld [vmem:[%s1 + $0x134] sm:$0xf]
  %v176 = vld [vmem:[%s1 + $0x138] sm:$0xf]
  %v177 = vld [vmem:[%s1 + $0x13c] sm:$0xf]
  %v178 = vld [vmem:[%s1 + $0x140] sm:$0xf]
  %v179 = vld [vmem:[%s1 + $0x144] sm:$0xf]
  %v180 = vld [vmem:[%s1 + $0x148] sm:$0xf]
  %v181 = vld [vmem:[%s1 + $0x14c] sm:$0xf]
  %v182 = vld [vmem:[%s1 + $0x150] sm:$0xf]
  %v183 = vld [vmem:[%s1 + $0x154] sm:$0xf]
  %v184 = vld [vmem:[%s1 + $0x158] sm:$0xf]
  %v185 = vld [vmem:[%s1 + $0x15c] sm:$0xf]
  %v186 = vld [vmem:[%s1 + $0x160] sm:$0xf]
  %v187 = vld [vmem:[%s1 + $0x164] sm:$0xf]
  %v188 = vld [vmem:[%s1 + $0x168] sm:$0xf]
  %v189 = vld [vmem:[%s1 + $0x16c] sm:$0xf]
  %v190 = vld [vmem:[%s1 + $0x170] sm:$0xf]
  %v191 = vld [vmem:[%s1 + $0x174] sm:$0xf]
  %v192 = vld [vmem:[%s1 + $0x178] sm:$0xf]
  %v193 = vld [vmem:[%s1 + $0x17c] sm:$0xf]
  %v194 = vld [vmem:[%s1 + $0x180] sm:$0xf]
  %v195 = vld [vmem:[%s1 + $0x184] sm:$0xf]
  %v196 = vld [vmem:[%s1 + $0x188] sm:$0xf]
  %v197 = vld [vmem:[%s1 + $0x18c] sm:$0xf]
  %v198 = vld [vmem:[%s1 + $0x190] sm:$0xf]
  %v199 = vld [vmem:[%s1 + $0x194] sm:$0xf]
  %v200 = vld [vmem:[%s1 + $0x198] sm:$0xf]
  %v201 = vld [vmem:[%s1 + $0x19c] sm:$0xf]
  %v202 = vld [vmem:[%s1 + $0x1a0] sm:$0xf]
  %v203 = vld [vmem:[%s1 + $0x1a4] sm:$0xf]
  %v204 = vld [vmem:[%s1 + $0x1a8] sm:$0xf]
  %v205 = vld [vmem:[%s1 + $0x1ac] sm:$0xf]
  %v206 = vld [vmem:[%s1 + $0x1b0] sm:$0xf]
  %v207 = vld [vmem:[%s1 + $0x1b4] sm:$0xf]
  %v208 = vld [vmem:[%s1 + $0x1b8] sm:$0xf]
  %v209 = vld [vmem:[%s1 + $0x1bc] sm:$0xf]
  %v210 = vld [vmem:[%s1 + $0x1c0] sm:$0xf]
  %v211 = vld [vmem:[%s1 + $0x1c4] sm:$0xf]
  %v212 = vld [vmem:[%s1 + $0x1c8] sm:$0xf]
  %v213 = vld [vmem:[%s1 + $0x1cc] sm:$0xf]
  %v214 = vld [vmem:[%s1 + $0x1d0] sm:$0xf]
  %v215 = vld [vmem:[%s1 + $0x1d4] sm:$0xf]
  %v216 = vld [vmem:[%s1 + $0x1d8] sm:$0xf]
  %v217 = vld [vmem:[%s1 + $0x1dc] sm:$0xf]
  %v218 = vld [vmem:[%s1 + $0x1e0] sm:$0xf]
  %v219 = vld [vmem:[%s1 + $0x1e4] sm:$0xf]
  %v220 = vld [vmem:[%s1 + $0x1e8] sm:$0xf]
  %v221 = vld [vmem:[%s1 + $0x1ec] sm:$0xf]
  %v222 = vld [vmem:[%s1 + $0x1f0] sm:$0xf]
  %v223 = vld [vmem:[%s1 + $0x1f4] sm:$0xf]
  %v224 = vld [vmem:[%s1 + $0x1f8] sm:$0xf]
  %v225 = vld [vmem:[%s1 + $0x1fc] sm:$0xf]
  %v226 = vld [vmem:[%s1 + $0x200] sm:$0xf]
  %v227 = vld [vmem:[%s1 + $0x204] sm:$0xf]
  %v228 = vld [vmem:[%s1 + $0x208] sm:$0xf]
  %v229 = vld [vmem:[%s1 + $0x20c] sm:$0xf]
  %v230 = vld [vmem:[%s1 + $0x210] sm:$0xf]
  %v231 = vld [vmem:[%s1 + $0x214] sm:$0xf]
  %v232 = vld [vmem:[%s1 + $0x218] sm:$0xf]
  %v233 = vld [vmem:[%s1 + $0x21c] sm:$0xf]
  %v234 = vld [vmem:[%s1 + $0x220] sm:$0xf]
  %v235 = vld [vmem:[%s1 + $0x224] sm:$0xf]
  %v236 = vld [vmem:[%s1 + $0x228] sm:$0xf]
  %v237 = vld [vmem:[%s1 + $0x22c] sm:$0xf]
  %v238 = vld [vmem:[%s1 + $0x230] sm:$0xf]
  %v239 = vld [vmem:[%s1 + $0x234] sm:$0xf]
  %v240 = vld [vmem:[%s1 + $0x238] sm:$0xf]
  %v241 = vld [vmem:[%s1 + $0x23c] sm:$0xf]
  %v242 = vld [vmem:[%s2] sm:$0x1]
  %v244 = vlaneseq
  %v245 = vshrl.u32 %v244, 7
  %v246 = vsub.s32 0, %v245
  %v247 = vrot.slane %v242, %v246
  %v329 = vunpack.c.l.b16 %v18
  %v330 = vunpack.c.h.b16 %v18
  %v331 = vunpack.c.l.b16 %v19
  %v332 = vunpack.c.h.b16 %v19
  %v333 = vunpack.c.l.b16 %v20
  %v334 = vunpack.c.h.b16 %v20
  %v335 = vunpack.c.l.b16 %v21
  %v336 = vunpack.c.h.b16 %v21
  %v337 = vunpack.c.l.b16 %v22
  %v338 = vunpack.c.l.b16 %v23
  %v339 = vunpack.c.h.b16 %v23
  %v340 = vunpack.c.l.b16 %v24
  %v341 = vunpack.c.h.b16 %v24
  %v342 = vunpack.c.l.b16 %v25
  %v343 = vunpack.c.h.b16 %v25
  %v344 = vunpack.c.l.b16 %v26
  %v345 = vunpack.c.h.b16 %v26
  %v346 = vunpack.c.l.b16 %v27
  %v347 = vunpack.c.l.b16 %v28
  %v348 = vunpack.c.h.b16 %v28
  %v349 = vunpack.c.l.b16 %v29
  %v350 = vunpack.c.h.b16 %v29
  %v351 = vunpack.c.l.b16 %v30
  %v352 = vunpack.c.h.b16 %v30
  %v353 = vunpack.c.l.b16 %v31
  %v354 = vunpack.c.h.b16 %v31
  %v355 = vunpack.c.l.b16 %v32
  %v356 = vunpack.c.l.b16 %v33
  %v357 = vunpack.c.h.b16 %v33
  %v358 = vunpack.c.l.b16 %v34
  %v359 = vunpack.c.h.b16 %v34
  %v360 = vunpack.c.l.b16 %v35
  %v361 = vunpack.c.h.b16 %v35
  %v362 = vunpack.c.l.b16 %v36
  %v363 = vunpack.c.h.b16 %v36
  %v364 = vunpack.c.l.b16 %v37
  %v365 = vunpack.c.l.b16 %v38
  %v366 = vunpack.c.h.b16 %v38
  %v367 = vunpack.c.l.b16 %v39
  %v368 = vunpack.c.h.b16 %v39
  %v369 = vunpack.c.l.b16 %v40
  %v370 = vunpack.c.h.b16 %v40
  %v371 = vunpack.c.l.b16 %v41
  %v372 = vunpack.c.h.b16 %v41
  %v373 = vunpack.c.l.b16 %v42
  %v374 = vunpack.c.l.b16 %v43
  %v375 = vunpack.c.h.b16 %v43
  %v376 = vunpack.c.l.b16 %v44
  %v377 = vunpack.c.h.b16 %v44
  %v378 = vunpack.c.l.b16 %v45
  %v379 = vunpack.c.h.b16 %v45
  %v380 = vunpack.c.l.b16 %v46
  %v381 = vunpack.c.h.b16 %v46
  %v382 = vunpack.c.l.b16 %v47
  %v383 = vunpack.c.l.b16 %v48
  %v384 = vunpack.c.h.b16 %v48
  %v385 = vunpack.c.l.b16 %v49
  %v386 = vunpack.c.h.b16 %v49
  %v387 = vunpack.c.l.b16 %v50
  %v388 = vunpack.c.h.b16 %v50
  %v389 = vunpack.c.l.b16 %v51
  %v390 = vunpack.c.h.b16 %v51
  %v391 = vunpack.c.l.b16 %v52
  %v392 = vunpack.c.l.b16 %v53
  %v393 = vunpack.c.h.b16 %v53
  %v394 = vunpack.c.l.b16 %v54
  %v395 = vunpack.c.h.b16 %v54
  %v396 = vunpack.c.l.b16 %v55
  %v397 = vunpack.c.h.b16 %v55
  %v398 = vunpack.c.l.b16 %v56
  %v399 = vunpack.c.h.b16 %v56
  %v400 = vunpack.c.l.b16 %v57
  %v401 = vunpack.c.l.b16 %v58
  %v402 = vunpack.c.h.b16 %v58
  %v403 = vunpack.c.l.b16 %v59
  %v404 = vunpack.c.h.b16 %v59
  %v405 = vunpack.c.l.b16 %v60
  %v406 = vunpack.c.h.b16 %v60
  %v407 = vunpack.c.l.b16 %v61
  %v408 = vunpack.c.h.b16 %v61
  %v409 = vunpack.c.l.b16 %v62
  %v410 = vunpack.c.l.b16 %v63
  %v411 = vunpack.c.h.b16 %v63
  %v412 = vunpack.c.l.b16 %v64
  %v413 = vunpack.c.h.b16 %v64
  %v414 = vunpack.c.l.b16 %v65
  %v415 = vunpack.c.h.b16 %v65
  %v416 = vunpack.c.l.b16 %v66
  %v417 = vunpack.c.h.b16 %v66
  %v418 = vunpack.c.l.b16 %v67
  %v419 = vunpack.c.l.b16 %v68
  %v420 = vunpack.c.h.b16 %v68
  %v421 = vunpack.c.l.b16 %v69
  %v422 = vunpack.c.h.b16 %v69
  %v423 = vunpack.c.l.b16 %v70
  %v424 = vunpack.c.h.b16 %v70
  %v425 = vunpack.c.l.b16 %v71
  %v426 = vunpack.c.h.b16 %v71
  %v427 = vunpack.c.l.b16 %v72
  %v428 = vunpack.c.l.b16 %v73
  %v429 = vunpack.c.h.b16 %v73
  %v430 = vunpack.c.l.b16 %v74
  %v431 = vunpack.c.h.b16 %v74
  %v432 = vunpack.c.l.b16 %v75
  %v433 = vunpack.c.h.b16 %v75
  %v434 = vunpack.c.l.b16 %v76
  %v435 = vunpack.c.h.b16 %v76
  %v436 = vunpack.c.l.b16 %v77
  %v437 = vunpack.c.l.b16 %v78
  %v438 = vunpack.c.h.b16 %v78
  %v439 = vunpack.c.l.b16 %v79
  %v440 = vunpack.c.h.b16 %v79
  %v441 = vunpack.c.l.b16 %v80
  %v442 = vunpack.c.h.b16 %v80
  %v443 = vunpack.c.l.b16 %v81
  %v444 = vunpack.c.h.b16 %v81
  %v445 = vunpack.c.l.b16 %v82
  %v446 = vunpack.c.l.b16 %v83
  %v447 = vunpack.c.h.b16 %v83
  %v448 = vunpack.c.l.b16 %v84
  %v449 = vunpack.c.h.b16 %v84
  %v450 = vunpack.c.l.b16 %v85
  %v451 = vunpack.c.h.b16 %v85
  %v452 = vunpack.c.l.b16 %v86
  %v453 = vunpack.c.h.b16 %v86
  %v454 = vunpack.c.l.b16 %v87
  %v455 = vunpack.c.l.b16 %v88
  %v456 = vunpack.c.h.b16 %v88
  %v457 = vunpack.c.l.b16 %v89
  %v458 = vunpack.c.h.b16 %v89
  %v459 = vunpack.c.l.b16 %v90
  %v460 = vunpack.c.h.b16 %v90
  %v461 = vunpack.c.l.b16 %v91
  %v462 = vunpack.c.h.b16 %v91
  %v463 = vunpack.c.l.b16 %v92
  %v464 = vunpack.c.l.b16 %v93
  %v465 = vunpack.c.h.b16 %v93
  %v466 = vunpack.c.l.b16 %v94
  %v467 = vunpack.c.h.b16 %v94
  %v468 = vunpack.c.l.b16 %v95
  %v469 = vunpack.c.h.b16 %v95
  %v470 = vunpack.c.l.b16 %v96
  %v471 = vunpack.c.h.b16 %v96
  %v472 = vunpack.c.l.b16 %v97
  %v473 = vpack.c.b16 %v338, %v329
  %v474 = vpack.c.b16 %v339, %v330
  %v475 = vpack.c.b16 %v340, %v331
  %v476 = vpack.c.b16 %v341, %v332
  %v477 = vpack.c.b16 %v342, %v333
  %v478 = vpack.c.b16 %v343, %v334
  %v479 = vpack.c.b16 %v344, %v335
  %v480 = vpack.c.b16 %v345, %v336
  %v481 = vpack.c.b16 %v346, %v337
  %v482 = vpack.c.b16 %v356, %v347
  %v483 = vpack.c.b16 %v357, %v348
  %v484 = vpack.c.b16 %v358, %v349
  %v485 = vpack.c.b16 %v359, %v350
  %v486 = vpack.c.b16 %v360, %v351
  %v487 = vpack.c.b16 %v361, %v352
  %v488 = vpack.c.b16 %v362, %v353
  %v489 = vpack.c.b16 %v363, %v354
  %v490 = vpack.c.b16 %v364, %v355
  %v491 = vpack.c.b16 %v374, %v365
  %v492 = vpack.c.b16 %v375, %v366
  %v493 = vpack.c.b16 %v376, %v367
  %v494 = vpack.c.b16 %v377, %v368
  %v495 = vpack.c.b16 %v378, %v369
  %v496 = vpack.c.b16 %v379, %v370
  %v497 = vpack.c.b16 %v380, %v371
  %v498 = vpack.c.b16 %v381, %v372
  %v499 = vpack.c.b16 %v382, %v373
  %v500 = vpack.c.b16 %v392, %v383
  %v501 = vpack.c.b16 %v393, %v384
  %v502 = vpack.c.b16 %v394, %v385
  %v503 = vpack.c.b16 %v395, %v386
  %v504 = vpack.c.b16 %v396, %v387
  %v505 = vpack.c.b16 %v397, %v388
  %v506 = vpack.c.b16 %v398, %v389
  %v507 = vpack.c.b16 %v399, %v390
  %v508 = vpack.c.b16 %v400, %v391
  %v509 = vpack.c.b16 %v410, %v401
  %v510 = vpack.c.b16 %v411, %v402
  %v511 = vpack.c.b16 %v412, %v403
  %v512 = vpack.c.b16 %v413, %v404
  %v513 = vpack.c.b16 %v414, %v405
  %v514 = vpack.c.b16 %v415, %v406
  %v515 = vpack.c.b16 %v416, %v407
  %v516 = vpack.c.b16 %v417, %v408
  %v517 = vpack.c.b16 %v418, %v409
  %v518 = vpack.c.b16 %v428, %v419
  %v519 = vpack.c.b16 %v429, %v420
  %v520 = vpack.c.b16 %v430, %v421
  %v521 = vpack.c.b16 %v431, %v422
  %v522 = vpack.c.b16 %v432, %v423
  %v523 = vpack.c.b16 %v433, %v424
  %v524 = vpack.c.b16 %v434, %v425
  %v525 = vpack.c.b16 %v435, %v426
  %v526 = vpack.c.b16 %v436, %v427
  %v527 = vpack.c.b16 %v446, %v437
  %v528 = vpack.c.b16 %v447, %v438
  %v529 = vpack.c.b16 %v448, %v439
  %v530 = vpack.c.b16 %v449, %v440
  %v531 = vpack.c.b16 %v450, %v441
  %v532 = vpack.c.b16 %v451, %v442
  %v533 = vpack.c.b16 %v452, %v443
  %v534 = vpack.c.b16 %v453, %v444
  %v535 = vpack.c.b16 %v454, %v445
  %v536 = vpack.c.b16 %v464, %v455
  %v537 = vpack.c.b16 %v465, %v456
  %v538 = vpack.c.b16 %v466, %v457
  %v539 = vpack.c.b16 %v467, %v458
  %v540 = vpack.c.b16 %v468, %v459
  %v541 = vpack.c.b16 %v469, %v460
  %v542 = vpack.c.b16 %v470, %v461
  %v543 = vpack.c.b16 %v471, %v462
  %v544 = vpack.c.b16 %v472, %v463
  %v761 = vunpack.c.l.b16 %v98
  %v762 = vunpack.c.l.b16 %v99
  %v763 = vunpack.c.l.b16 %v100
  %v764 = vunpack.c.l.b16 %v101
  %v765 = vunpack.c.l.b16 %v102
  %v766 = vunpack.c.l.b16 %v103
  %v767 = vunpack.c.l.b16 %v104
  %v768 = vunpack.c.l.b16 %v105
  %v769 = vunpack.c.l.b16 %v106
  %v770 = vunpack.c.l.b16 %v107
  %v771 = vunpack.c.l.b16 %v108
  %v772 = vunpack.c.l.b16 %v109
  %v773 = vunpack.c.l.b16 %v110
  %v774 = vunpack.c.l.b16 %v111
  %v775 = vunpack.c.l.b16 %v112
  %v776 = vunpack.c.l.b16 %v113
  %v777 = vunpack.c.l.b16 %v114
  %v778 = vunpack.c.l.b16 %v115
  %v779 = vunpack.c.l.b16 %v116
  %v780 = vunpack.c.l.b16 %v117
  %v781 = vunpack.c.l.b16 %v118
  %v782 = vunpack.c.l.b16 %v119
  %v783 = vunpack.c.l.b16 %v120
  %v784 = vunpack.c.l.b16 %v121
  %v785 = vunpack.c.l.b16 %v122
  %v786 = vunpack.c.l.b16 %v123
  %v787 = vunpack.c.l.b16 %v124
  %v788 = vunpack.c.l.b16 %v125
  %v789 = vunpack.c.l.b16 %v126
  %v790 = vunpack.c.l.b16 %v127
  %v791 = vunpack.c.l.b16 %v128
  %v792 = vunpack.c.l.b16 %v129
  %v793 = vunpack.c.l.b16 %v130
  %v794 = vunpack.c.l.b16 %v131
  %v795 = vunpack.c.l.b16 %v132
  %v796 = vunpack.c.l.b16 %v133
  %v797 = vunpack.c.l.b16 %v134
  %v798 = vunpack.c.l.b16 %v135
  %v799 = vunpack.c.l.b16 %v136
  %v800 = vunpack.c.l.b16 %v137
  %v801 = vunpack.c.l.b16 %v138
  %v802 = vunpack.c.l.b16 %v139
  %v803 = vunpack.c.l.b16 %v140
  %v804 = vunpack.c.l.b16 %v141
  %v805 = vunpack.c.l.b16 %v142
  %v806 = vunpack.c.l.b16 %v143
  %v807 = vunpack.c.l.b16 %v144
  %v808 = vunpack.c.l.b16 %v145
  %v809 = vunpack.c.l.b16 %v146
  %v810 = vunpack.c.l.b16 %v147
  %v811 = vunpack.c.l.b16 %v148
  %v812 = vunpack.c.l.b16 %v149
  %v813 = vunpack.c.l.b16 %v150
  %v814 = vunpack.c.l.b16 %v151
  %v815 = vunpack.c.l.b16 %v152
  %v816 = vunpack.c.l.b16 %v153
  %v817 = vunpack.c.l.b16 %v154
  %v818 = vunpack.c.l.b16 %v155
  %v819 = vunpack.c.l.b16 %v156
  %v820 = vunpack.c.l.b16 %v157
  %v821 = vunpack.c.l.b16 %v158
  %v822 = vunpack.c.l.b16 %v159
  %v823 = vunpack.c.l.b16 %v160
  %v824 = vunpack.c.l.b16 %v161
  %v825 = vunpack.c.l.b16 %v162
  %v826 = vunpack.c.l.b16 %v163
  %v827 = vunpack.c.l.b16 %v164
  %v828 = vunpack.c.l.b16 %v165
  %v829 = vunpack.c.l.b16 %v166
  %v830 = vunpack.c.l.b16 %v167
  %v831 = vunpack.c.l.b16 %v168
  %v832 = vunpack.c.l.b16 %v169
  %v833 = vunpack.c.l.b16 %v170
  %v834 = vunpack.c.l.b16 %v171
  %v835 = vunpack.c.l.b16 %v172
  %v836 = vunpack.c.l.b16 %v173
  %v837 = vunpack.c.l.b16 %v174
  %v838 = vunpack.c.l.b16 %v175
  %v839 = vunpack.c.l.b16 %v176
  %v840 = vunpack.c.l.b16 %v177
  %v841 = vunpack.c.l.b16 %v178
  %v842 = vunpack.c.l.b16 %v179
  %v843 = vunpack.c.l.b16 %v180
  %v844 = vunpack.c.l.b16 %v181
  %v845 = vunpack.c.l.b16 %v182
  %v846 = vunpack.c.l.b16 %v183
  %v847 = vunpack.c.l.b16 %v184
  %v848 = vunpack.c.l.b16 %v185
  %v849 = vunpack.c.l.b16 %v186
  %v850 = vunpack.c.l.b16 %v187
  %v851 = vunpack.c.l.b16 %v188
  %v852 = vunpack.c.l.b16 %v189
  %v853 = vunpack.c.l.b16 %v190
  %v854 = vunpack.c.l.b16 %v191
  %v855 = vunpack.c.l.b16 %v192
  %v856 = vunpack.c.l.b16 %v193
  %v857 = vunpack.c.l.b16 %v194
  %v858 = vunpack.c.l.b16 %v195
  %v859 = vunpack.c.l.b16 %v196
  %v860 = vunpack.c.l.b16 %v197
  %v861 = vunpack.c.l.b16 %v198
  %v862 = vunpack.c.l.b16 %v199
  %v863 = vunpack.c.l.b16 %v200
  %v864 = vunpack.c.l.b16 %v201
  %v865 = vunpack.c.l.b16 %v202
  %v866 = vunpack.c.l.b16 %v203
  %v867 = vunpack.c.l.b16 %v204
  %v868 = vunpack.c.l.b16 %v205
  %v869 = vunpack.c.l.b16 %v206
  %v870 = vunpack.c.l.b16 %v207
  %v871 = vunpack.c.l.b16 %v208
  %v872 = vunpack.c.l.b16 %v209
  %v873 = vunpack.c.l.b16 %v210
  %v874 = vunpack.c.l.b16 %v211
  %v875 = vunpack.c.l.b16 %v212
  %v876 = vunpack.c.l.b16 %v213
  %v877 = vunpack.c.l.b16 %v214
  %v878 = vunpack.c.l.b16 %v215
  %v879 = vunpack.c.l.b16 %v216
  %v880 = vunpack.c.l.b16 %v217
  %v881 = vunpack.c.l.b16 %v218
  %v882 = vunpack.c.l.b16 %v219
  %v883 = vunpack.c.l.b16 %v220
  %v884 = vunpack.c.l.b16 %v221
  %v885 = vunpack.c.l.b16 %v222
  %v886 = vunpack.c.l.b16 %v223
  %v887 = vunpack.c.l.b16 %v224
  %v888 = vunpack.c.l.b16 %v225
  %v889 = vunpack.c.l.b16 %v226
  %v890 = vunpack.c.l.b16 %v227
  %v891 = vunpack.c.l.b16 %v228
  %v892 = vunpack.c.l.b16 %v229
  %v893 = vunpack.c.l.b16 %v230
  %v894 = vunpack.c.l.b16 %v231
  %v895 = vunpack.c.l.b16 %v232
  %v896 = vunpack.c.l.b16 %v233
  %v897 = vunpack.c.l.b16 %v234
  %v898 = vunpack.c.l.b16 %v235
  %v899 = vunpack.c.l.b16 %v236
  %v900 = vunpack.c.l.b16 %v237
  %v901 = vunpack.c.l.b16 %v238
  %v902 = vunpack.c.l.b16 %v239
  %v903 = vunpack.c.l.b16 %v240
  %v904 = vunpack.c.l.b16 %v241
  %v905 = vpack.c.b16 %v762, %v761
  %v906 = vpack.c.b16 %v764, %v763
  %v907 = vpack.c.b16 %v766, %v765
  %v908 = vpack.c.b16 %v768, %v767
  %v909 = vpack.c.b16 %v770, %v769
  %v910 = vpack.c.b16 %v772, %v771
  %v911 = vpack.c.b16 %v774, %v773
  %v912 = vpack.c.b16 %v776, %v775
  %v913 = vpack.c.b16 %v778, %v777
  %v914 = vpack.c.b16 %v780, %v779
  %v915 = vpack.c.b16 %v782, %v781
  %v916 = vpack.c.b16 %v784, %v783
  %v917 = vpack.c.b16 %v786, %v785
  %v918 = vpack.c.b16 %v788, %v787
  %v919 = vpack.c.b16 %v790, %v789
  %v920 = vpack.c.b16 %v792, %v791
  %v921 = vpack.c.b16 %v794, %v793
  %v922 = vpack.c.b16 %v796, %v795
  %v923 = vpack.c.b16 %v798, %v797
  %v924 = vpack.c.b16 %v800, %v799
  %v925 = vpack.c.b16 %v802, %v801
  %v926 = vpack.c.b16 %v804, %v803
  %v927 = vpack.c.b16 %v806, %v805
  %v928 = vpack.c.b16 %v808, %v807
  %v929 = vpack.c.b16 %v810, %v809
  %v930 = vpack.c.b16 %v812, %v811
  %v931 = vpack.c.b16 %v814, %v813
  %v932 = vpack.c.b16 %v816, %v815
  %v933 = vpack.c.b16 %v818, %v817
  %v934 = vpack.c.b16 %v820, %v819
  %v935 = vpack.c.b16 %v822, %v821
  %v936 = vpack.c.b16 %v824, %v823
  %v937 = vpack.c.b16 %v826, %v825
  %v938 = vpack.c.b16 %v828, %v827
  %v939 = vpack.c.b16 %v830, %v829
  %v940 = vpack.c.b16 %v832, %v831
  %v941 = vpack.c.b16 %v834, %v833
  %v942 = vpack.c.b16 %v836, %v835
  %v943 = vpack.c.b16 %v838, %v837
  %v944 = vpack.c.b16 %v840, %v839
  %v945 = vpack.c.b16 %v842, %v841
  %v946 = vpack.c.b16 %v844, %v843
  %v947 = vpack.c.b16 %v846, %v845
  %v948 = vpack.c.b16 %v848, %v847
  %v949 = vpack.c.b16 %v850, %v849
  %v950 = vpack.c.b16 %v852, %v851
  %v951 = vpack.c.b16 %v854, %v853
  %v952 = vpack.c.b16 %v856, %v855
  %v953 = vpack.c.b16 %v858, %v857
  %v954 = vpack.c.b16 %v860, %v859
  %v955 = vpack.c.b16 %v862, %v861
  %v956 = vpack.c.b16 %v864, %v863
  %v957 = vpack.c.b16 %v866, %v865
  %v958 = vpack.c.b16 %v868, %v867
  %v959 = vpack.c.b16 %v870, %v869
  %v960 = vpack.c.b16 %v872, %v871
  %v961 = vpack.c.b16 %v874, %v873
  %v962 = vpack.c.b16 %v876, %v875
  %v963 = vpack.c.b16 %v878, %v877
  %v964 = vpack.c.b16 %v880, %v879
  %v965 = vpack.c.b16 %v882, %v881
  %v966 = vpack.c.b16 %v884, %v883
  %v967 = vpack.c.b16 %v886, %v885
  %v968 = vpack.c.b16 %v888, %v887
  %v969 = vpack.c.b16 %v890, %v889
  %v970 = vpack.c.b16 %v892, %v891
  %v971 = vpack.c.b16 %v894, %v893
  %v972 = vpack.c.b16 %v896, %v895
  %v973 = vpack.c.b16 %v898, %v897
  %v974 = vpack.c.b16 %v900, %v899
  %v975 = vpack.c.b16 %v902, %v901
  %v976 = vpack.c.b16 %v904, %v903
  %1049 = vmatprep.subr.bf16.mxu0 0
  %1050 = vmatpush1.bf16.msra.mxu0 %v905
  %1051 = vmatprep.subr.bf16.mxu0 0
  %1052 = vmatpush1.bf16.msra.mxu0 %v906
  %1053 = vmatprep.subr.bf16.mxu0 0
  %1054 = vmatpush1.bf16.msra.mxu0 %v907
  %1055 = vmatprep.subr.bf16.mxu0 0
  %1056 = vmatpush1.bf16.msra.mxu0 %v908
  %1057 = vmatprep.subr.bf16.mxu0 0
  %1058 = vmatpush1.bf16.msra.mxu0 %v909
  %1059 = vmatprep.subr.bf16.mxu0 0
  %1060 = vmatpush1.bf16.msra.mxu0 %v910
  %1061 = vmatprep.subr.bf16.mxu0 0
  %1062 = vmatpush1.bf16.msra.mxu0 %v911
  %1063 = vmatprep.subr.bf16.mxu0 0
  %1064 = vmatpush1.bf16.msra.mxu0 %v912
  %1065 = vmatprep.subr.bf16.mxu0 0
  %1066 = vmatpush1.bf16.msra.mxu0 %v913
  %1067 = vmatprep.subr.bf16.mxu0 0
  %1068 = vmatpush1.bf16.msra.mxu0 %v914
  %1069 = vmatprep.subr.bf16.mxu0 0
  %1070 = vmatpush1.bf16.msra.mxu0 %v915
  %1071 = vmatprep.subr.bf16.mxu0 0
  %1072 = vmatpush1.bf16.msra.mxu0 %v916
  %1073 = vmatprep.subr.bf16.mxu0 0
  %1074 = vmatpush1.bf16.msra.mxu0 %v917
  %1075 = vmatprep.subr.bf16.mxu0 0
  %1076 = vmatpush1.bf16.msra.mxu0 %v918
  %1077 = vmatprep.subr.bf16.mxu0 0
  %1078 = vmatpush1.bf16.msra.mxu0 %v919
  %1079 = vmatprep.subr.bf16.mxu0 0
  %1080 = vmatpush1.bf16.msra.mxu0 %v920
  %1081 = vmatprep.mubr.bf16.mxu0 %v474
  %1082 = vmatmul.mubr.bf16.gmra.mrb[0].mxu0 %v473
  %v1083 = vpop.f32.mrb[0].mxu0
  %v1084 = vadd.f32 %v247, %v1083
  %v1085 = vpop.f32.mrb[0].mxu0
  %v1086 = vpop.f32.mrb[0].mxu0
  %v1087 = vadd.f32 %v247, %v1086
  %v1088 = vpop.f32.mrb[0].mxu0
  %1089 = vmatprep.mubr.bf16.mxu0 %v483
  %1090 = vmatmul.mubr.bf16.gmra.mrb[0].mxu0 %v482
  %v1091 = vpop.f32.mrb[0].mxu0
  %v1092 = vadd.f32 %v247, %v1091
  %v1093 = vpop.f32.mrb[0].mxu0
  %v1094 = vpop.f32.mrb[0].mxu0
  %v1095 = vadd.f32 %v247, %v1094
  %v1096 = vpop.f32.mrb[0].mxu0
  %1097 = vmatprep.mubr.bf16.mxu0 %v492
  %1098 = vmatmul.mubr.bf16.gmra.mrb[0].mxu0 %v491
  %v1099 = vpop.f32.mrb[0].mxu0
  %v1100 = vadd.f32 %v247, %v1099
  %v1101 = vpop.f32.mrb[0].mxu0
  %v1102 = vpop.f32.mrb[0].mxu0
  %v1103 = vadd.f32 %v247, %v1102
  %v1104 = vpop.f32.mrb[0].mxu0
  %1105 = vmatprep.mubr.bf16.mxu0 %v501
  %1106 = vmatmul.mubr.bf16.gmra.mrb[0].mxu0 %v500
  %v1107 = vpop.f32.mrb[0].mxu0
  %v1108 = vadd.f32 %v247, %v1107
  %v1109 = vpop.f32.mrb[0].mxu0
  %v1110 = vpop.f32.mrb[0].mxu0
  %v1111 = vadd.f32 %v247, %v1110
  %v1112 = vpop.f32.mrb[0].mxu0
  %1113 = vmatprep.mubr.bf16.mxu0 %v510
  %1114 = vmatmul.mubr.bf16.gmra.mrb[0].mxu0 %v509
  %v1115 = vpop.f32.mrb[0].mxu0
  %v1116 = vadd.f32 %v247, %v1115
  %v1117 = vpop.f32.mrb[0].mxu0
  %v1118 = vpop.f32.mrb[0].mxu0
  %v1119 = vadd.f32 %v247, %v1118
  %v1120 = vpop.f32.mrb[0].mxu0
  %1121 = vmatprep.mubr.bf16.mxu0 %v519
  %1122 = vmatmul.mubr.bf16.gmra.mrb[0].mxu0 %v518
  %v1123 = vpop.f32.mrb[0].mxu0
  %v1124 = vadd.f32 %v247, %v1123
  %v1125 = vpop.f32.mrb[0].mxu0
  %v1126 = vpop.f32.mrb[0].mxu0
  %v1127 = vadd.f32 %v247, %v1126
  %v1128 = vpop.f32.mrb[0].mxu0
  %1129 = vmatprep.mubr.bf16.mxu0 %v528
  %1130 = vmatmul.mubr.bf16.gmra.mrb[0].mxu0 %v527
  %v1131 = vpop.f32.mrb[0].mxu0
  %v1132 = vadd.f32 %v247, %v1131
  %v1133 = vpop.f32.mrb[0].mxu0
  %v1134 = vpop.f32.mrb[0].mxu0
  %v1135 = vadd.f32 %v247, %v1134
  %v1136 = vpop.f32.mrb[0].mxu0
  %1137 = vmatprep.mubr.bf16.mxu0 %v537
  %1138 = vmatmul.mubr.bf16.gmra.mrb[0].mxu0 %v536
  %v1139 = vpop.f32.mrb[0].mxu0
  %v1140 = vadd.f32 %v247, %v1139
  %v1141 = vpop.f32.mrb[0].mxu0
  %v1142 = vpop.f32.mrb[0].mxu0
  %v1143 = vadd.f32 %v247, %v1142
  %v1144 = vpop.f32.mrb[0].mxu0
  %1145 = vdwg.mxu0
  %1146 = vmatprep.subr.bf16.mxu0 0
  %1147 = vmatpush1.bf16.msra.mxu0 %v921
  %1148 = vmatprep.subr.bf16.mxu0 0
  %1149 = vmatpush1.bf16.msra.mxu0 %v922
  %1150 = vmatprep.subr.bf16.mxu0 0
  %1151 = vmatpush1.bf16.msra.mxu0 %v923
  %1152 = vmatprep.subr.bf16.mxu0 0
  %1153 = vmatpush1.bf16.msra.mxu0 %v924
  %1154 = vmatprep.subr.bf16.mxu0 0
  %1155 = vmatpush1.bf16.msra.mxu0 %v925
  %1156 = vmatprep.subr.bf16.mxu0 0
  %1157 = vmatpush1.bf16.msra.mxu0 %v926
  %1158 = vmatprep.subr.bf16.mxu0 0
  %1159 = vmatpush1.bf16.msra.mxu0 %v927
  %1160 = vmatprep.subr.bf16.mxu0 0
  %1161 = vmatpush1.bf16.msra.mxu0 %v928
  %1162 = vmatprep.subr.bf16.mxu0 0
  %1163 = vmatpush1.bf16.msra.mxu0 %v929
  %1164 = vmatprep.subr.bf16.mxu0 0
  %1165 = vmatpush1.bf16.msra.mxu0 %v930
  %1166 = vmatprep.subr.bf16.mxu0 0
  %1167 = vmatpush1.bf16.msra.mxu0 %v931
  %1168 = vmatprep.subr.bf16.mxu0 0
  %1169 = vmatpush1.bf16.msra.mxu0 %v932
  %1170 = vmatprep.subr.bf16.mxu0 0
  %1171 = vmatpush1.bf16.msra.mxu0 %v933
  %1172 = vmatprep.subr.bf16.mxu0 0
  %1173 = vmatpush1.bf16.msra.mxu0 %v934
  %1174 = vmatprep.subr.bf16.mxu0 0
  %1175 = vmatpush1.bf16.msra.mxu0 %v935
  %1176 = vmatprep.subr.bf16.mxu0 0
  %1177 = vmatpush1.bf16.msra.mxu0 %v936
  %1178 = vmatprep.mubr.bf16.mxu0 %v476
  %1179 = vmatmul.mubr.bf16.gmra.mrb[0].mxu0 %v475
  %v1180 = vpop.f32.mrb[0].mxu0
  %v1181 = vadd.f32 %v1084, %v1180
  %v1182 = vpop.f32.mrb[0].mxu0
  %v1183 = vpop.f32.mrb[0].mxu0
  %v1184 = vadd.f32 %v1087, %v1183
  %v1185 = vpop.f32.mrb[0].mxu0
  %1186 = vmatprep.mubr.bf16.mxu0 %v485
  %1187 = vmatmul.mubr.bf16.gmra.mrb[0].mxu0 %v484
  %v1188 = vpop.f32.mrb[0].mxu0
  %v1189 = vadd.f32 %v1092, %v1188
  %v1190 = vpop.f32.mrb[0].mxu0
  %v1191 = vpop.f32.mrb[0].mxu0
  %v1192 = vadd.f32 %v1095, %v1191
  %v1193 = vpop.f32.mrb[0].mxu0
  %1194 = vmatprep.mubr.bf16.mxu0 %v494
  %1195 = vmatmul.mubr.bf16.gmra.mrb[0].mxu0 %v493
  %v1196 = vpop.f32.mrb[0].mxu0
  %v1197 = vadd.f32 %v1100, %v1196
  %v1198 = vpop.f32.mrb[0].mxu0
  %v1199 = vpop.f32.mrb[0].mxu0
  %v1200 = vadd.f32 %v1103, %v1199
  %v1201 = vpop.f32.mrb[0].mxu0
  %1202 = vmatprep.mubr.bf16.mxu0 %v503
  %1203 = vmatmul.mubr.bf16.gmra.mrb[0].mxu0 %v502
  %v1204 = vpop.f32.mrb[0].mxu0
  %v1205 = vadd.f32 %v1108, %v1204
  %v1206 = vpop.f32.mrb[0].mxu0
  %v1207 = vpop.f32.mrb[0].mxu0
  %v1208 = vadd.f32 %v1111, %v1207
  %v1209 = vpop.f32.mrb[0].mxu0
  %1210 = vmatprep.mubr.bf16.mxu0 %v512
  %1211 = vmatmul.mubr.bf16.gmra.mrb[0].mxu0 %v511
  %v1212 = vpop.f32.mrb[0].mxu0
  %v1213 = vadd.f32 %v1116, %v1212
  %v1214 = vpop.f32.mrb[0].mxu0
  %v1215 = vpop.f32.mrb[0].mxu0
  %v1216 = vadd.f32 %v1119, %v1215
  %v1217 = vpop.f32.mrb[0].mxu0
  %1218 = vmatprep.mubr.bf16.mxu0 %v521
  %1219 = vmatmul.mubr.bf16.gmra.mrb[0].mxu0 %v520
  %v1220 = vpop.f32.mrb[0].mxu0
  %v1221 = vadd.f32 %v1124, %v1220
  %v1222 = vpop.f32.mrb[0].mxu0
  %v1223 = vpop.f32.mrb[0].mxu0
  %v1224 = vadd.f32 %v1127, %v1223
  %v1225 = vpop.f32.mrb[0].mxu0
  %1226 = vmatprep.mubr.bf16.mxu0 %v530
  %1227 = vmatmul.mubr.bf16.gmra.mrb[0].mxu0 %v529
  %v1228 = vpop.f32.mrb[0].mxu0
  %v1229 = vadd.f32 %v1132, %v1228
  %v1230 = vpop.f32.mrb[0].mxu0
  %v1231 = vpop.f32.mrb[0].mxu0
  %v1232 = vadd.f32 %v1135, %v1231
  %v1233 = vpop.f32.mrb[0].mxu0
  %1234 = vmatprep.mubr.bf16.mxu0 %v539
  %1235 = vmatmul.mubr.bf16.gmra.mrb[0].mxu0 %v538
  %v1236 = vpop.f32.mrb[0].mxu0
  %v1237 = vadd.f32 %v1140, %v1236
  %v1238 = vpop.f32.mrb[0].mxu0
  %v1239 = vpop.f32.mrb[0].mxu0
  %v1240 = vadd.f32 %v1143, %v1239
  %v1241 = vpop.f32.mrb[0].mxu0
  %1242 = vdwg.mxu0
  %1243 = vmatprep.subr.bf16.mxu0 0
  %1244 = vmatpush1.bf16.msra.mxu0 %v937
  %1245 = vmatprep.subr.bf16.mxu0 0
  %1246 = vmatpush1.bf16.msra.mxu0 %v938
  %1247 = vmatprep.subr.bf16.mxu0 0
  %1248 = vmatpush1.bf16.msra.mxu0 %v939
  %1249 = vmatprep.subr.bf16.mxu0 0
  %1250 = vmatpush1.bf16.msra.mxu0 %v940
  %1251 = vmatprep.subr.bf16.mxu0 0
  %1252 = vmatpush1.bf16.msra.mxu0 %v941
  %1253 = vmatprep.subr.bf16.mxu0 0
  %1254 = vmatpush1.bf16.msra.mxu0 %v942
  %1255 = vmatprep.subr.bf16.mxu0 0
  %1256 = vmatpush1.bf16.msra.mxu0 %v943
  %1257 = vmatprep.subr.bf16.mxu0 0
  %1258 = vmatpush1.bf16.msra.mxu0 %v944
  %1259 = vmatprep.subr.bf16.mxu0 0
  %1260 = vmatpush1.bf16.msra.mxu0 %v945
  %1261 = vmatprep.subr.bf16.mxu0 0
  %1262 = vmatpush1.bf16.msra.mxu0 %v946
  %1263 = vmatprep.subr.bf16.mxu0 0
  %1264 = vmatpush1.bf16.msra.mxu0 %v947
  %1265 = vmatprep.subr.bf16.mxu0 0
  %1266 = vmatpush1.bf16.msra.mxu0 %v948
  %1267 = vmatprep.subr.bf16.mxu0 0
  %1268 = vmatpush1.bf16.msra.mxu0 %v949
  %1269 = vmatprep.subr.bf16.mxu0 0
  %1270 = vmatpush1.bf16.msra.mxu0 %v950
  %1271 = vmatprep.subr.bf16.mxu0 0
  %1272 = vmatpush1.bf16.msra.mxu0 %v951
  %1273 = vmatprep.subr.bf16.mxu0 0
  %1274 = vmatpush1.bf16.msra.mxu0 %v952
  %1275 = vmatprep.mubr.bf16.mxu0 %v478
  %1276 = vmatmul.mubr.bf16.gmra.mrb[0].mxu0 %v477
  %v1277 = vpop.f32.mrb[0].mxu0
  %v1278 = vadd.f32 %v1181, %v1277
  %v1279 = vpop.f32.mrb[0].mxu0
  %v1280 = vpop.f32.mrb[0].mxu0
  %v1281 = vadd.f32 %v1184, %v1280
  %v1282 = vpop.f32.mrb[0].mxu0
  %1283 = vmatprep.mubr.bf16.mxu0 %v487
  %1284 = vmatmul.mubr.bf16.gmra.mrb[0].mxu0 %v486
  %v1285 = vpop.f32.mrb[0].mxu0
  %v1286 = vadd.f32 %v1189, %v1285
  %v1287 = vpop.f32.mrb[0].mxu0
  %v1288 = vpop.f32.mrb[0].mxu0
  %v1289 = vadd.f32 %v1192, %v1288
  %v1290 = vpop.f32.mrb[0].mxu0
  %1291 = vmatprep.mubr.bf16.mxu0 %v496
  %1292 = vmatmul.mubr.bf16.gmra.mrb[0].mxu0 %v495
  %v1293 = vpop.f32.mrb[0].mxu0
  %v1294 = vadd.f32 %v1197, %v1293
  %v1295 = vpop.f32.mrb[0].mxu0
  %v1296 = vpop.f32.mrb[0].mxu0
  %v1297 = vadd.f32 %v1200, %v1296
  %v1298 = vpop.f32.mrb[0].mxu0
  %1299 = vmatprep.mubr.bf16.mxu0 %v505
  %1300 = vmatmul.mubr.bf16.gmra.mrb[0].mxu0 %v504
  %v1301 = vpop.f32.mrb[0].mxu0
  %v1302 = vadd.f32 %v1205, %v1301
  %v1303 = vpop.f32.mrb[0].mxu0
  %v1304 = vpop.f32.mrb[0].mxu0
  %v1305 = vadd.f32 %v1208, %v1304
  %v1306 = vpop.f32.mrb[0].mxu0
  %1307 = vmatprep.mubr.bf16.mxu0 %v514
  %1308 = vmatmul.mubr.bf16.gmra.mrb[0].mxu0 %v513
  %v1309 = vpop.f32.mrb[0].mxu0
  %v1310 = vadd.f32 %v1213, %v1309
  %v1311 = vpop.f32.mrb[0].mxu0
  %v1312 = vpop.f32.mrb[0].mxu0
  %v1313 = vadd.f32 %v1216, %v1312
  %v1314 = vpop.f32.mrb[0].mxu0
  %1315 = vmatprep.mubr.bf16.mxu0 %v523
  %1316 = vmatmul.mubr.bf16.gmra.mrb[0].mxu0 %v522
  %v1317 = vpop.f32.mrb[0].mxu0
  %v1318 = vadd.f32 %v1221, %v1317
  %v1319 = vpop.f32.mrb[0].mxu0
  %v1320 = vpop.f32.mrb[0].mxu0
  %v1321 = vadd.f32 %v1224, %v1320
  %v1322 = vpop.f32.mrb[0].mxu0
  %1323 = vmatprep.mubr.bf16.mxu0 %v532
  %1324 = vmatmul.mubr.bf16.gmra.mrb[0].mxu0 %v531
  %v1325 = vpop.f32.mrb[0].mxu0
  %v1326 = vadd.f32 %v1229, %v1325
  %v1327 = vpop.f32.mrb[0].mxu0
  %v1328 = vpop.f32.mrb[0].mxu0
  %v1329 = vadd.f32 %v1232, %v1328
  %v1330 = vpop.f32.mrb[0].mxu0
  %1331 = vmatprep.mubr.bf16.mxu0 %v541
  %1332 = vmatmul.mubr.bf16.gmra.mrb[0].mxu0 %v540
  %v1333 = vpop.f32.mrb[0].mxu0
  %v1334 = vadd.f32 %v1237, %v1333
  %v1335 = vpop.f32.mrb[0].mxu0
  %v1336 = vpop.f32.mrb[0].mxu0
  %v1337 = vadd.f32 %v1240, %v1336
  %v1338 = vpop.f32.mrb[0].mxu0
  %1339 = vdwg.mxu0
  %1340 = vmatprep.subr.bf16.mxu0 0
  %1341 = vmatpush1.bf16.msra.mxu0 %v953
  %1342 = vmatprep.subr.bf16.mxu0 0
  %1343 = vmatpush1.bf16.msra.mxu0 %v954
  %1344 = vmatprep.subr.bf16.mxu0 0
  %1345 = vmatpush1.bf16.msra.mxu0 %v955
  %1346 = vmatprep.subr.bf16.mxu0 0
  %1347 = vmatpush1.bf16.msra.mxu0 %v956
  %1348 = vmatprep.subr.bf16.mxu0 0
  %1349 = vmatpush1.bf16.msra.mxu0 %v957
  %1350 = vmatprep.subr.bf16.mxu0 0
  %1351 = vmatpush1.bf16.msra.mxu0 %v958
  %1352 = vmatprep.subr.bf16.mxu0 0
  %1353 = vmatpush1.bf16.msra.mxu0 %v959
  %1354 = vmatprep.subr.bf16.mxu0 0
  %1355 = vmatpush1.bf16.msra.mxu0 %v960
  %1356 = vmatprep.subr.bf16.mxu0 0
  %1357 = vmatpush1.bf16.msra.mxu0 %v961
  %1358 = vmatprep.subr.bf16.mxu0 0
  %1359 = vmatpush1.bf16.msra.mxu0 %v962
  %1360 = vmatprep.subr.bf16.mxu0 0
  %1361 = vmatpush1.bf16.msra.mxu0 %v963
  %1362 = vmatprep.subr.bf16.mxu0 0
  %1363 = vmatpush1.bf16.msra.mxu0 %v964
  %1364 = vmatprep.subr.bf16.mxu0 0
  %1365 = vmatpush1.bf16.msra.mxu0 %v965
  %1366 = vmatprep.subr.bf16.mxu0 0
  %1367 = vmatpush1.bf16.msra.mxu0 %v966
  %1368 = vmatprep.subr.bf16.mxu0 0
  %1369 = vmatpush1.bf16.msra.mxu0 %v967
  %1370 = vmatprep.subr.bf16.mxu0 0
  %1371 = vmatpush1.bf16.msra.mxu0 %v968
  %1372 = vmatprep.mubr.bf16.mxu0 %v480
  %1373 = vmatmul.mubr.bf16.gmra.mrb[0].mxu0 %v479
  %v1374 = vpop.f32.mrb[0].mxu0
  %v1375 = vadd.f32 %v1278, %v1374
  %v1376 = vpop.f32.mrb[0].mxu0
  %v1377 = vpop.f32.mrb[0].mxu0
  %v1378 = vadd.f32 %v1281, %v1377
  %v1379 = vpop.f32.mrb[0].mxu0
  %1380 = vmatprep.mubr.bf16.mxu0 %v489
  %1381 = vmatmul.mubr.bf16.gmra.mrb[0].mxu0 %v488
  %v1382 = vpop.f32.mrb[0].mxu0
  %v1383 = vadd.f32 %v1286, %v1382
  %v1384 = vpop.f32.mrb[0].mxu0
  %v1385 = vpop.f32.mrb[0].mxu0
  %v1386 = vadd.f32 %v1289, %v1385
  %v1387 = vpop.f32.mrb[0].mxu0
  %1388 = vmatprep.mubr.bf16.mxu0 %v498
  %1389 = vmatmul.mubr.bf16.gmra.mrb[0].mxu0 %v497
  %v1390 = vpop.f32.mrb[0].mxu0
  %v1391 = vadd.f32 %v1294, %v1390
  %v1392 = vpop.f32.mrb[0].mxu0
  %v1393 = vpop.f32.mrb[0].mxu0
  %v1394 = vadd.f32 %v1297, %v1393
  %v1395 = vpop.f32.mrb[0].mxu0
  %1396 = vmatprep.mubr.bf16.mxu0 %v507
  %1397 = vmatmul.mubr.bf16.gmra.mrb[0].mxu0 %v506
  %v1398 = vpop.f32.mrb[0].mxu0
  %v1399 = vadd.f32 %v1302, %v1398
  %v1400 = vpop.f32.mrb[0].mxu0
  %v1401 = vpop.f32.mrb[0].mxu0
  %v1402 = vadd.f32 %v1305, %v1401
  %v1403 = vpop.f32.mrb[0].mxu0
  %1404 = vmatprep.mubr.bf16.mxu0 %v516
  %1405 = vmatmul.mubr.bf16.gmra.mrb[0].mxu0 %v515
  %v1406 = vpop.f32.mrb[0].mxu0
  %v1407 = vadd.f32 %v1310, %v1406
  %v1408 = vpop.f32.mrb[0].mxu0
  %v1409 = vpop.f32.mrb[0].mxu0
  %v1410 = vadd.f32 %v1313, %v1409
  %v1411 = vpop.f32.mrb[0].mxu0
  %1412 = vmatprep.mubr.bf16.mxu0 %v525
  %1413 = vmatmul.mubr.bf16.gmra.mrb[0].mxu0 %v524
  %v1414 = vpop.f32.mrb[0].mxu0
  %v1415 = vadd.f32 %v1318, %v1414
  %v1416 = vpop.f32.mrb[0].mxu0
  %v1417 = vpop.f32.mrb[0].mxu0
  %v1418 = vadd.f32 %v1321, %v1417
  %v1419 = vpop.f32.mrb[0].mxu0
  %1420 = vmatprep.mubr.bf16.mxu0 %v534
  %1421 = vmatmul.mubr.bf16.gmra.mrb[0].mxu0 %v533
  %v1422 = vpop.f32.mrb[0].mxu0
  %v1423 = vadd.f32 %v1326, %v1422
  %v1424 = vpop.f32.mrb[0].mxu0
  %v1425 = vpop.f32.mrb[0].mxu0
  %v1426 = vadd.f32 %v1329, %v1425
  %v1427 = vpop.f32.mrb[0].mxu0
  %1428 = vmatprep.mubr.bf16.mxu0 %v543
  %1429 = vmatmul.mubr.bf16.gmra.mrb[0].mxu0 %v542
  %v1430 = vpop.f32.mrb[0].mxu0
  %v1431 = vadd.f32 %v1334, %v1430
  %v1432 = vpop.f32.mrb[0].mxu0
  %v1433 = vpop.f32.mrb[0].mxu0
  %v1434 = vadd.f32 %v1337, %v1433
  %v1435 = vpop.f32.mrb[0].mxu0
  %1436 = vdwg.mxu0
  %1437 = vmatprep.subr.bf16.mxu0 0
  %1438 = vmatpush1.bf16.msra.mxu0 %v969
  %1439 = vmatprep.subr.bf16.mxu0 0
  %1440 = vmatpush1.bf16.msra.mxu0 %v970
  %1441 = vmatprep.subr.bf16.mxu0 0
  %1442 = vmatpush1.bf16.msra.mxu0 %v971
  %1443 = vmatprep.subr.bf16.mxu0 0
  %1444 = vmatpush1.bf16.msra.mxu0 %v972
  %1445 = vmatprep.subr.bf16.mxu0 0
  %1446 = vmatpush1.bf16.msra.mxu0 %v973
  %1447 = vmatprep.subr.bf16.mxu0 0
  %1448 = vmatpush1.bf16.msra.mxu0 %v974
  %1449 = vmatprep.subr.bf16.mxu0 0
  %1450 = vmatpush1.bf16.msra.mxu0 %v975
  %1451 = vmatprep.subr.bf16.mxu0 0
  %1452 = vmatpush1.bf16.msra.mxu0 %v976
  %1453 = vmatprep.subr.bf16.mxu0 0
  %1454 = vmatpush1.bf16.msra.mxu0 0
  %1455 = vmatprep.subr.bf16.mxu0 0
  %1456 = vmatpush1.bf16.msra.mxu0 0
  %1457 = vmatprep.subr.bf16.mxu0 0
  %1458 = vmatpush1.bf16.msra.mxu0 0
  %1459 = vmatprep.subr.bf16.mxu0 0
  %1460 = vmatpush1.bf16.msra.mxu0 0
  %1461 = vmatprep.subr.bf16.mxu0 0
  %1462 = vmatpush1.bf16.msra.mxu0 0
  %1463 = vmatprep.subr.bf16.mxu0 0
  %1464 = vmatpush1.bf16.msra.mxu0 0
  %1465 = vmatprep.subr.bf16.mxu0 0
  %1466 = vmatpush1.bf16.msra.mxu0 0
  %1467 = vmatprep.subr.bf16.mxu0 0
  %1468 = vmatpush1.bf16.msra.mxu0 0
  %1469 = vmatprep.mubr.bf16.mxu0 0
  %1470 = vmatmul.mubr.bf16.gmra.mrb[0].mxu0 %v481
  %v1471 = vpop.f32.mrb[0].mxu0
  %v1472 = vadd.f32 %v1375, %v1471
  %v1473 = vpop.f32.mrb[0].mxu0
  %v1474 = vpop.f32.mrb[0].mxu0
  %v1475 = vadd.f32 %v1378, %v1474
  %v1476 = vpop.f32.mrb[0].mxu0
  %1477 = vmatprep.mubr.bf16.mxu0 0
  %1478 = vmatmul.mubr.bf16.gmra.mrb[0].mxu0 %v490
  %v1479 = vpop.f32.mrb[0].mxu0
  %v1480 = vadd.f32 %v1383, %v1479
  %v1481 = vpop.f32.mrb[0].mxu0
  %v1482 = vpop.f32.mrb[0].mxu0
  %v1483 = vadd.f32 %v1386, %v1482
  %v1484 = vpop.f32.mrb[0].mxu0
  %1485 = vmatprep.mubr.bf16.mxu0 0
  %1486 = vmatmul.mubr.bf16.gmra.mrb[0].mxu0 %v499
  %v1487 = vpop.f32.mrb[0].mxu0
  %v1488 = vadd.f32 %v1391, %v1487
  %v1489 = vpop.f32.mrb[0].mxu0
  %v1490 = vpop.f32.mrb[0].mxu0
  %v1491 = vadd.f32 %v1394, %v1490
  %v1492 = vpop.f32.mrb[0].mxu0
  %1493 = vmatprep.mubr.bf16.mxu0 0
  %1494 = vmatmul.mubr.bf16.gmra.mrb[0].mxu0 %v508
  %v1495 = vpop.f32.mrb[0].mxu0
  %v1496 = vadd.f32 %v1399, %v1495
  %v1497 = vpop.f32.mrb[0].mxu0
  %v1498 = vpop.f32.mrb[0].mxu0
  %v1499 = vadd.f32 %v1402, %v1498
  %v1500 = vpop.f32.mrb[0].mxu0
  %1501 = vmatprep.mubr.bf16.mxu0 0
  %1502 = vmatmul.mubr.bf16.gmra.mrb[0].mxu0 %v517
  %v1503 = vpop.f32.mrb[0].mxu0
  %v1504 = vadd.f32 %v1407, %v1503
  %v1505 = vpop.f32.mrb[0].mxu0
  %v1506 = vpop.f32.mrb[0].mxu0
  %v1507 = vadd.f32 %v1410, %v1506
  %v1508 = vpop.f32.mrb[0].mxu0
  %1509 = vmatprep.mubr.bf16.mxu0 0
  %1510 = vmatmul.mubr.bf16.gmra.mrb[0].mxu0 %v526
  %v1511 = vpop.f32.mrb[0].mxu0
  %v1512 = vadd.f32 %v1415, %v1511
  %v1513 = vpop.f32.mrb[0].mxu0
  %v1514 = vpop.f32.mrb[0].mxu0
  %v1515 = vadd.f32 %v1418, %v1514
  %v1516 = vpop.f32.mrb[0].mxu0
  %1517 = vmatprep.mubr.bf16.mxu0 0
  %1518 = vmatmul.mubr.bf16.gmra.mrb[0].mxu0 %v535
  %v1519 = vpop.f32.mrb[0].mxu0
  %v1520 = vadd.f32 %v1423, %v1519
  %v1521 = vpop.f32.mrb[0].mxu0
  %v1522 = vpop.f32.mrb[0].mxu0
  %v1523 = vadd.f32 %v1426, %v1522
  %v1524 = vpop.f32.mrb[0].mxu0
  %1525 = vmatprep.mubr.bf16.mxu0 0
  %1526 = vmatmul.mubr.bf16.gmra.mrb[0].mxu0 %v544
  %v1527 = vpop.f32.mrb[0].mxu0
  %v1528 = vadd.f32 %v1431, %v1527
  %v1529 = vpop.f32.mrb[0].mxu0
  %v1530 = vpop.f32.mrb[0].mxu0
  %v1531 = vadd.f32 %v1434, %v1530
  %v1532 = vpop.f32.mrb[0].mxu0
  %1533 = vdwg.mxu0
  %v1534 = vld [vmem:[%s3] sm:$0xff]
  %v1535 = vld [vmem:[%s3 + $0x8] sm:$0xff]
  %v1536 = vld [vmem:[%s3 + $0x10] sm:$0xff]
  %v1537 = vld [vmem:[%s3 + $0x18] sm:$0xff]
  %v1538 = vld [vmem:[%s3 + $0x20] sm:$0xff]
  %v1539 = vld [vmem:[%s3 + $0x28] sm:$0xff]
  %v1540 = vld [vmem:[%s3 + $0x30] sm:$0xff]
  %v1541 = vld [vmem:[%s3 + $0x38] sm:$0xff]
  %v1542 = vld [vmem:[%s3 + $0x40] sm:$0xff]
  %v1543 = vld [vmem:[%s3 + $0x48] sm:$0xff]
  %v1544 = vld [vmem:[%s3 + $0x50] sm:$0xff]
  %v1545 = vld [vmem:[%s3 + $0x58] sm:$0xff]
  %v1546 = vld [vmem:[%s3 + $0x60] sm:$0xff]
  %v1547 = vld [vmem:[%s3 + $0x68] sm:$0xff]
  %v1548 = vld [vmem:[%s3 + $0x70] sm:$0xff]
  %v1549 = vld [vmem:[%s3 + $0x78] sm:$0xff]
  %v1550 = vadd.f32 %v1472, %v1534
  %v1551 = vadd.f32 %v1475, %v1535
  %v1552 = vadd.f32 %v1480, %v1536
  %v1553 = vadd.f32 %v1483, %v1537
  %v1554 = vadd.f32 %v1488, %v1538
  %v1555 = vadd.f32 %v1491, %v1539
  %v1556 = vadd.f32 %v1496, %v1540
  %v1557 = vadd.f32 %v1499, %v1541
  %v1558 = vadd.f32 %v1504, %v1542
  %v1559 = vadd.f32 %v1507, %v1543
  %v1560 = vadd.f32 %v1512, %v1544
  %v1561 = vadd.f32 %v1515, %v1545
  %v1562 = vadd.f32 %v1520, %v1546
  %v1563 = vadd.f32 %v1523, %v1547
  %v1564 = vadd.f32 %v1528, %v1548
  %v1565 = vadd.f32 %v1531, %v1549
  %v1566 = vmax.f32 %v1550, 0.0
  %v1567 = vmax.f32 %v1551, 0.0
  %v1568 = vmax.f32 %v1552, 0.0
  %v1569 = vmax.f32 %v1553, 0.0
  %v1570 = vmax.f32 %v1554, 0.0
  %v1571 = vmax.f32 %v1555, 0.0
  %v1572 = vmax.f32 %v1556, 0.0
  %v1573 = vmax.f32 %v1557, 0.0
  %v1574 = vmax.f32 %v1558, 0.0
  %v1575 = vmax.f32 %v1559, 0.0
  %v1576 = vmax.f32 %v1560, 0.0
  %v1577 = vmax.f32 %v1561, 0.0
  %v1578 = vmax.f32 %v1562, 0.0
  %v1579 = vmax.f32 %v1563, 0.0
  %v1580 = vmax.f32 %v1564, 0.0
  %v1581 = vmax.f32 %v1565, 0.0
  %v1582 = vpack.c.bf16 %v1567, %v1566
  %v1583 = vpack.c.bf16 %v1569, %v1568
  %v1584 = vpack.c.bf16 %v1571, %v1570
  %v1585 = vpack.c.bf16 %v1573, %v1572
  %v1586 = vpack.c.bf16 %v1575, %v1574
  %v1587 = vpack.c.bf16 %v1577, %v1576
  %v1588 = vpack.c.bf16 %v1579, %v1578
  %v1589 = vpack.c.bf16 %v1581, %v1580
  %v1598 = vunpack.c.l.b16 %v1582
  %v1599 = vunpack.c.h.b16 %v1582
  %v1600 = vunpack.c.l.b16 %v1583
  %v1601 = vunpack.c.h.b16 %v1583
  %v1602 = vunpack.c.l.b16 %v1584
  %v1603 = vunpack.c.h.b16 %v1584
  %v1604 = vunpack.c.l.b16 %v1585
  %v1605 = vunpack.c.h.b16 %v1585
  %v1606 = vunpack.c.l.b16 %v1586
  %v1607 = vunpack.c.h.b16 %v1586
  %v1608 = vunpack.c.l.b16 %v1587
  %v1609 = vunpack.c.h.b16 %v1587
  %v1610 = vunpack.c.l.b16 %v1588
  %v1611 = vunpack.c.h.b16 %v1588
  %v1612 = vunpack.c.l.b16 %v1589
  %v1613 = vunpack.c.h.b16 %v1589
  %v1614 = vpack.c.b16 %v1598, %v1598
  %v1615 = vpack.c.b16 %v1599, %v1599
  %v1616 = vpack.c.b16 %v1600, %v1600
  %v1617 = vpack.c.b16 %v1601, %v1601
  %v1618 = vpack.c.b16 %v1602, %v1602
  %v1619 = vpack.c.b16 %v1603, %v1603
  %v1620 = vpack.c.b16 %v1604, %v1604
  %v1621 = vpack.c.b16 %v1605, %v1605
  %v1622 = vpack.c.b16 %v1606, %v1606
  %v1623 = vpack.c.b16 %v1607, %v1607
  %v1624 = vpack.c.b16 %v1608, %v1608
  %v1625 = vpack.c.b16 %v1609, %v1609
  %v1626 = vpack.c.b16 %v1610, %v1610
  %v1627 = vpack.c.b16 %v1611, %v1611
  %v1628 = vpack.c.b16 %v1612, %v1612
  %v1629 = vpack.c.b16 %v1613, %v1613
  %1646 = vst [vmem:[%s4] sm:$0xf] %v1614
  %1647 = vst [vmem:[%s4 + $0x4] sm:$0xf] %v1615
  %1648 = vst [vmem:[%s4 + $0x8] sm:$0xf] %v1616
  %1649 = vst [vmem:[%s4 + $0xc] sm:$0xf] %v1617
  %1650 = vst [vmem:[%s4 + $0x10] sm:$0xf] %v1618
  %1651 = vst [vmem:[%s4 + $0x14] sm:$0xf] %v1619
  %1652 = vst [vmem:[%s4 + $0x18] sm:$0xf] %v1620
  %1653 = vst [vmem:[%s4 + $0x1c] sm:$0xf] %v1621
  %1654 = vst [vmem:[%s4 + $0x20] sm:$0xf] %v1622
  %1655 = vst [vmem:[%s4 + $0x24] sm:$0xf] %v1623
  %1656 = vst [vmem:[%s4 + $0x28] sm:$0xf] %v1624
  %1657 = vst [vmem:[%s4 + $0x2c] sm:$0xf] %v1625
  %1658 = vst [vmem:[%s4 + $0x30] sm:$0xf] %v1626
  %1659 = vst [vmem:[%s4 + $0x34] sm:$0xf] %v1627
  %1660 = vst [vmem:[%s4 + $0x38] sm:$0xf] %v1628
  %1661 = vst [vmem:[%s4 + $0x3c] sm:$0xf] %v1629
  // Predicated region
  $region18: #{resnet_feature_extractor.7} parent=0 // pred_check
    _
  $region19: #{resnet_feature_extractor.7} parent=0 // pred_check_branch
    %1663 = sbr.rel (0) target = $region21
  $region20: #{resnet_feature_extractor.7} parent=0 // pred_region
    _
  $region21: #{resnet_feature_extractor.7} parent=0 // pred_fallthru
    _
  // Predicated region
  $region22: #{resnet_feature_extractor.7} parent=0 // pred_check
    _
  $region23: #{resnet_feature_extractor.7} parent=0 // pred_check_branch
    %1665 = sbr.rel (0) target = $region25
  $region24: #{resnet_feature_extractor.7} parent=0 // pred_region
    _
  $region25: #{resnet_feature_extractor.7} parent=0 // pred_fallthru
    _

// kernel: resnet_feature_extractor.8
$region0: #{resnet_feature_extractor.8}
  #allocation0 [shape = 'u32[]', space=smem, size = 0x4, offset = 0x4, fixed_abs, tag = 'smem constant byte address 0x4 - core index']
  #allocation1 [shape = 'u32[144,128]{1,0:T(1,128)}', space=vmem, size = 0x12000, scoped, tag = 'internal scratch']
  %s0 = inlined_call_operand.vmem [shape: bf16[32,1152], index: 0, kind: input, shape index: {}]
  %s1 = inlined_call_operand.vmem [shape: bf16[1152,128], index: 1, kind: input, shape index: {}]
  %s2 = inlined_call_operand.vmem [shape: f32[1,128], index: 2, kind: input, shape index: {}]
  %s3 = inlined_call_operand.vmem [shape: bf16[128,128], index: 3, kind: input, shape index: {}]
  %s4 = inlined_call_operand.vmem [shape: f32[1,128], index: 4, kind: input, shape index: {}]
  %s5 = inlined_call_operand.vmem [shape: bf16[32,128], index: 5, kind: output, shape index: {0}]
  %s6 = inlined_call_operand.vmem [shape: f32[32,128], index: 6, kind: output, shape index: {1}]
  %7 = xla_tuple %s5, %s6
  %s8 = sld [smem:[#allocation0]]
  $region38: #{resnet_feature_extractor.8} parent=0
    _
  %s10 = ssub.s32 1, %s8
  %s11 = scalar_select 0, %s10, %s8
  // Predicated region
  $region2: #{resnet_feature_extractor.8} parent=0 // pred_check
    _
  $region3: #{resnet_feature_extractor.8} parent=0 // pred_check_branch
    %13 = sbr.rel (0) target = $region5
  $region4: #{resnet_feature_extractor.8} parent=0 // pred_region
    _
  $region5: #{resnet_feature_extractor.8} parent=0 // pred_fallthru
    _
  // Predicated region
  $region6: #{resnet_feature_extractor.8} parent=0 // pred_check
    _
  $region7: #{resnet_feature_extractor.8} parent=0 // pred_check_branch
    %15 = sbr.rel (0) target = $region9
  $region8: #{resnet_feature_extractor.8} parent=0 // pred_region
    _
  $region9: #{resnet_feature_extractor.8} parent=0 // pred_fallthru
    _
  // Predicated region
  $region10: #{resnet_feature_extractor.8} parent=0 // pred_check
    _
  $region11: #{resnet_feature_extractor.8} parent=0 // pred_check_branch
    %17 = sbr.rel (0) target = $region13
  $region12: #{resnet_feature_extractor.8} parent=0 // pred_region
    _
  $region13: #{resnet_feature_extractor.8} parent=0 // pred_fallthru
    _
  // Predicated region
  $region14: #{resnet_feature_extractor.8} parent=0 // pred_check
    _
  $region15: #{resnet_feature_extractor.8} parent=0 // pred_check_branch
    %19 = sbr.rel (0) target = $region17
  $region16: #{resnet_feature_extractor.8} parent=0 // pred_region
    _
  $region17: #{resnet_feature_extractor.8} parent=0 // pred_fallthru
    _
  // Predicated region
  $region18: #{resnet_feature_extractor.8} parent=0 // pred_check
    _
  $region19: #{resnet_feature_extractor.8} parent=0 // pred_check_branch
    %21 = sbr.rel (0) target = $region21
  $region20: #{resnet_feature_extractor.8} parent=0 // pred_region
    _
  $region21: #{resnet_feature_extractor.8} parent=0 // pred_fallthru
    _
  %v23 = vld [vmem:[%s0] sm:$0xff]
  %v24 = vld [vmem:[%s0 + $0x8] sm:$0xff]
  %v25 = vld [vmem:[%s0 + $0x10] sm:$0xff]
  %v26 = vld [vmem:[%s0 + $0x18] sm:$0xff]
  %v27 = vld [vmem:[%s0 + $0x20] sm:$0xf]
  %v28 = vld [vmem:[%s0 + $0x24] sm:$0xff]
  %v29 = vld [vmem:[%s0 + $0x2c] sm:$0xff]
  %v30 = vld [vmem:[%s0 + $0x34] sm:$0xff]
  %v31 = vld [vmem:[%s0 + $0x3c] sm:$0xff]
  %v32 = vld [vmem:[%s0 + $0x44] sm:$0xf]
  %v33 = vld [vmem:[%s0 + $0x48] sm:$0xff]
  %v34 = vld [vmem:[%s0 + $0x50] sm:$0xff]
  %v35 = vld [vmem:[%s0 + $0x58] sm:$0xff]
  %v36 = vld [vmem:[%s0 + $0x60] sm:$0xff]
  %v37 = vld [vmem:[%s0 + $0x68] sm:$0xf]
  %v38 = vld [vmem:[%s0 + $0x6c] sm:$0xff]
  %v39 = vld [vmem:[%s0 + $0x74] sm:$0xff]
  %v40 = vld [vmem:[%s0 + $0x7c] sm:$0xff]
  %v41 = vld [vmem:[%s0 + $0x84] sm:$0xff]
  %v42 = vld [vmem:[%s0 + $0x8c] sm:$0xf]
  %v43 = vld [vmem:[%s1] sm:$0xf]
  %v44 = vld [vmem:[%s1 + $0x4] sm:$0xf]
  %v45 = vld [vmem:[%s1 + $0x8] sm:$0xf]
  %v46 = vld [vmem:[%s1 + $0xc] sm:$0xf]
  %v47 = vld [vmem:[%s1 + $0x10] sm:$0xf]
  %v48 = vld [vmem:[%s1 + $0x14] sm:$0xf]
  %v49 = vld [vmem:[%s1 + $0x18] sm:$0xf]
  %v50 = vld [vmem:[%s1 + $0x1c] sm:$0xf]
  %v51 = vld [vmem:[%s1 + $0x20] sm:$0xf]
  %v52 = vld [vmem:[%s1 + $0x24] sm:$0xf]
  %v53 = vld [vmem:[%s1 + $0x28] sm:$0xf]
  %v54 = vld [vmem:[%s1 + $0x2c] sm:$0xf]
  %v55 = vld [vmem:[%s1 + $0x30] sm:$0xf]
  %v56 = vld [vmem:[%s1 + $0x34] sm:$0xf]
  %v57 = vld [vmem:[%s1 + $0x38] sm:$0xf]
  %v58 = vld [vmem:[%s1 + $0x3c] sm:$0xf]
  %v59 = vld [vmem:[%s1 + $0x40] sm:$0xf]
  %v60 = vld [vmem:[%s1 + $0x44] sm:$0xf]
  %v61 = vld [vmem:[%s1 + $0x48] sm:$0xf]
  %v62 = vld [vmem:[%s1 + $0x4c] sm:$0xf]
  %v63 = vld [vmem:[%s1 + $0x50] sm:$0xf]
  %v64 = vld [vmem:[%s1 + $0x54] sm:$0xf]
  %v65 = vld [vmem:[%s1 + $0x58] sm:$0xf]
  %v66 = vld [vmem:[%s1 + $0x5c] sm:$0xf]
  %v67 = vld [vmem:[%s1 + $0x60] sm:$0xf]
  %v68 = vld [vmem:[%s1 + $0x64] sm:$0xf]
  %v69 = vld [vmem:[%s1 + $0x68] sm:$0xf]
  %v70 = vld [vmem:[%s1 + $0x6c] sm:$0xf]
  %v71 = vld [vmem:[%s1 + $0x70] sm:$0xf]
  %v72 = vld [vmem:[%s1 + $0x74] sm:$0xf]
  %v73 = vld [vmem:[%s1 + $0x78] sm:$0xf]
  %v74 = vld [vmem:[%s1 + $0x7c] sm:$0xf]
  %v75 = vld [vmem:[%s1 + $0x80] sm:$0xf]
  %v76 = vld [vmem:[%s1 + $0x84] sm:$0xf]
  %v77 = vld [vmem:[%s1 + $0x88] sm:$0xf]
  %v78 = vld [vmem:[%s1 + $0x8c] sm:$0xf]
  %v79 = vld [vmem:[%s1 + $0x90] sm:$0xf]
  %v80 = vld [vmem:[%s1 + $0x94] sm:$0xf]
  %v81 = vld [vmem:[%s1 + $0x98] sm:$0xf]
  %v82 = vld [vmem:[%s1 + $0x9c] sm:$0xf]
  %v83 = vld [vmem:[%s1 + $0xa0] sm:$0xf]
  %v84 = vld [vmem:[%s1 + $0xa4] sm:$0xf]
  %v85 = vld [vmem:[%s1 + $0xa8] sm:$0xf]
  %v86 = vld [vmem:[%s1 + $0xac] sm:$0xf]
  %v87 = vld [vmem:[%s1 + $0xb0] sm:$0xf]
  %v88 = vld [vmem:[%s1 + $0xb4] sm:$0xf]
  %v89 = vld [vmem:[%s1 + $0xb8] sm:$0xf]
  %v90 = vld [vmem:[%s1 + $0xbc] sm:$0xf]
  %v91 = vld [vmem:[%s1 + $0xc0] sm:$0xf]
  %v92 = vld [vmem:[%s1 + $0xc4] sm:$0xf]
  %v93 = vld [vmem:[%s1 + $0xc8] sm:$0xf]
  %v94 = vld [vmem:[%s1 + $0xcc] sm:$0xf]
  %v95 = vld [vmem:[%s1 + $0xd0] sm:$0xf]
  %v96 = vld [vmem:[%s1 + $0xd4] sm:$0xf]
  %v97 = vld [vmem:[%s1 + $0xd8] sm:$0xf]
  %v98 = vld [vmem:[%s1 + $0xdc] sm:$0xf]
  %v99 = vld [vmem:[%s1 + $0xe0] sm:$0xf]
  %v100 = vld [vmem:[%s1 + $0xe4] sm:$0xf]
  %v101 = vld [vmem:[%s1 + $0xe8] sm:$0xf]
  %v102 = vld [vmem:[%s1 + $0xec] sm:$0xf]
  %v103 = vld [vmem:[%s1 + $0xf0] sm:$0xf]
  %v104 = vld [vmem:[%s1 + $0xf4] sm:$0xf]
  %v105 = vld [vmem:[%s1 + $0xf8] sm:$0xf]
  %v106 = vld [vmem:[%s1 + $0xfc] sm:$0xf]
  %v107 = vld [vmem:[%s1 + $0x100] sm:$0xf]
  %v108 = vld [vmem:[%s1 + $0x104] sm:$0xf]
  %v109 = vld [vmem:[%s1 + $0x108] sm:$0xf]
  %v110 = vld [vmem:[%s1 + $0x10c] sm:$0xf]
  %v111 = vld [vmem:[%s1 + $0x110] sm:$0xf]
  %v112 = vld [vmem:[%s1 + $0x114] sm:$0xf]
  %v113 = vld [vmem:[%s1 + $0x118] sm:$0xf]
  %v114 = vld [vmem:[%s1 + $0x11c] sm:$0xf]
  %v115 = vld [vmem:[%s1 + $0x120] sm:$0xf]
  %v116 = vld [vmem:[%s1 + $0x124] sm:$0xf]
  %v117 = vld [vmem:[%s1 + $0x128] sm:$0xf]
  %v118 = vld [vmem:[%s1 + $0x12c] sm:$0xf]
  %v119 = vld [vmem:[%s1 + $0x130] sm:$0xf]
  %v120 = vld [vmem:[%s1 + $0x134] sm:$0xf]
  %v121 = vld [vmem:[%s1 + $0x138] sm:$0xf]
  %v122 = vld [vmem:[%s1 + $0x13c] sm:$0xf]
  %v123 = vld [vmem:[%s1 + $0x140] sm:$0xf]
  %v124 = vld [vmem:[%s1 + $0x144] sm:$0xf]
  %v125 = vld [vmem:[%s1 + $0x148] sm:$0xf]
  %v126 = vld [vmem:[%s1 + $0x14c] sm:$0xf]
  %v127 = vld [vmem:[%s1 + $0x150] sm:$0xf]
  %v128 = vld [vmem:[%s1 + $0x154] sm:$0xf]
  %v129 = vld [vmem:[%s1 + $0x158] sm:$0xf]
  %v130 = vld [vmem:[%s1 + $0x15c] sm:$0xf]
  %v131 = vld [vmem:[%s1 + $0x160] sm:$0xf]
  %v132 = vld [vmem:[%s1 + $0x164] sm:$0xf]
  %v133 = vld [vmem:[%s1 + $0x168] sm:$0xf]
  %v134 = vld [vmem:[%s1 + $0x16c] sm:$0xf]
  %v135 = vld [vmem:[%s1 + $0x170] sm:$0xf]
  %v136 = vld [vmem:[%s1 + $0x174] sm:$0xf]
  %v137 = vld [vmem:[%s1 + $0x178] sm:$0xf]
  %v138 = vld [vmem:[%s1 + $0x17c] sm:$0xf]
  %v139 = vld [vmem:[%s1 + $0x180] sm:$0xf]
  %v140 = vld [vmem:[%s1 + $0x184] sm:$0xf]
  %v141 = vld [vmem:[%s1 + $0x188] sm:$0xf]
  %v142 = vld [vmem:[%s1 + $0x18c] sm:$0xf]
  %v143 = vld [vmem:[%s1 + $0x190] sm:$0xf]
  %v144 = vld [vmem:[%s1 + $0x194] sm:$0xf]
  %v145 = vld [vmem:[%s1 + $0x198] sm:$0xf]
  %v146 = vld [vmem:[%s1 + $0x19c] sm:$0xf]
  %v147 = vld [vmem:[%s1 + $0x1a0] sm:$0xf]
  %v148 = vld [vmem:[%s1 + $0x1a4] sm:$0xf]
  %v149 = vld [vmem:[%s1 + $0x1a8] sm:$0xf]
  %v150 = vld [vmem:[%s1 + $0x1ac] sm:$0xf]
  %v151 = vld [vmem:[%s1 + $0x1b0] sm:$0xf]
  %v152 = vld [vmem:[%s1 + $0x1b4] sm:$0xf]
  %v153 = vld [vmem:[%s1 + $0x1b8] sm:$0xf]
  %v154 = vld [vmem:[%s1 + $0x1bc] sm:$0xf]
  %v155 = vld [vmem:[%s1 + $0x1c0] sm:$0xf]
  %v156 = vld [vmem:[%s1 + $0x1c4] sm:$0xf]
  %v157 = vld [vmem:[%s1 + $0x1c8] sm:$0xf]
  %v158 = vld [vmem:[%s1 + $0x1cc] sm:$0xf]
  %v159 = vld [vmem:[%s1 + $0x1d0] sm:$0xf]
  %v160 = vld [vmem:[%s1 + $0x1d4] sm:$0xf]
  %v161 = vld [vmem:[%s1 + $0x1d8] sm:$0xf]
  %v162 = vld [vmem:[%s1 + $0x1dc] sm:$0xf]
  %v163 = vld [vmem:[%s1 + $0x1e0] sm:$0xf]
  %v164 = vld [vmem:[%s1 + $0x1e4] sm:$0xf]
  %v165 = vld [vmem:[%s1 + $0x1e8] sm:$0xf]
  %v166 = vld [vmem:[%s1 + $0x1ec] sm:$0xf]
  %v167 = vld [vmem:[%s1 + $0x1f0] sm:$0xf]
  %v168 = vld [vmem:[%s1 + $0x1f4] sm:$0xf]
  %v169 = vld [vmem:[%s1 + $0x1f8] sm:$0xf]
  %v170 = vld [vmem:[%s1 + $0x1fc] sm:$0xf]
  %v171 = vld [vmem:[%s1 + $0x200] sm:$0xf]
  %v172 = vld [vmem:[%s1 + $0x204] sm:$0xf]
  %v173 = vld [vmem:[%s1 + $0x208] sm:$0xf]
  %v174 = vld [vmem:[%s1 + $0x20c] sm:$0xf]
  %v175 = vld [vmem:[%s1 + $0x210] sm:$0xf]
  %v176 = vld [vmem:[%s1 + $0x214] sm:$0xf]
  %v177 = vld [vmem:[%s1 + $0x218] sm:$0xf]
  %v178 = vld [vmem:[%s1 + $0x21c] sm:$0xf]
  %v179 = vld [vmem:[%s1 + $0x220] sm:$0xf]
  %v180 = vld [vmem:[%s1 + $0x224] sm:$0xf]
  %v181 = vld [vmem:[%s1 + $0x228] sm:$0xf]
  %v182 = vld [vmem:[%s1 + $0x22c] sm:$0xf]
  %v183 = vld [vmem:[%s1 + $0x230] sm:$0xf]
  %v184 = vld [vmem:[%s1 + $0x234] sm:$0xf]
  %v185 = vld [vmem:[%s1 + $0x238] sm:$0xf]
  %v186 = vld [vmem:[%s1 + $0x23c] sm:$0xf]
  %v187 = vld [vmem:[%s2] sm:$0x1]
  %v189 = vlaneseq
  %v190 = vshrl.u32 %v189, 7
  %v191 = vsub.s32 0, %v190
  %v192 = vrot.slane %v187, %v191
  %v214 = vunpack.c.l.b16 %v23
  %v215 = vunpack.c.h.b16 %v23
  %v216 = vunpack.c.l.b16 %v24
  %v217 = vunpack.c.h.b16 %v24
  %v218 = vunpack.c.l.b16 %v25
  %v219 = vunpack.c.h.b16 %v25
  %v220 = vunpack.c.l.b16 %v26
  %v221 = vunpack.c.h.b16 %v26
  %v222 = vunpack.c.l.b16 %v27
  %v223 = vunpack.c.l.b16 %v28
  %v224 = vunpack.c.h.b16 %v28
  %v225 = vunpack.c.l.b16 %v29
  %v226 = vunpack.c.h.b16 %v29
  %v227 = vunpack.c.l.b16 %v30
  %v228 = vunpack.c.h.b16 %v30
  %v229 = vunpack.c.l.b16 %v31
  %v230 = vunpack.c.h.b16 %v31
  %v231 = vunpack.c.l.b16 %v32
  %v232 = vunpack.c.l.b16 %v33
  %v233 = vunpack.c.h.b16 %v33
  %v234 = vunpack.c.l.b16 %v34
  %v235 = vunpack.c.h.b16 %v34
  %v236 = vunpack.c.l.b16 %v35
  %v237 = vunpack.c.h.b16 %v35
  %v238 = vunpack.c.l.b16 %v36
  %v239 = vunpack.c.h.b16 %v36
  %v240 = vunpack.c.l.b16 %v37
  %v241 = vunpack.c.l.b16 %v38
  %v242 = vunpack.c.h.b16 %v38
  %v243 = vunpack.c.l.b16 %v39
  %v244 = vunpack.c.h.b16 %v39
  %v245 = vunpack.c.l.b16 %v40
  %v246 = vunpack.c.h.b16 %v40
  %v247 = vunpack.c.l.b16 %v41
  %v248 = vunpack.c.h.b16 %v41
  %v249 = vunpack.c.l.b16 %v42
  %v250 = vpack.c.b16 %v223, %v214
  %v251 = vpack.c.b16 %v224, %v215
  %v252 = vpack.c.b16 %v225, %v216
  %v253 = vpack.c.b16 %v226, %v217
  %v254 = vpack.c.b16 %v227, %v218
  %v255 = vpack.c.b16 %v228, %v219
  %v256 = vpack.c.b16 %v229, %v220
  %v257 = vpack.c.b16 %v230, %v221
  %v258 = vpack.c.b16 %v231, %v222
  %v259 = vpack.c.b16 %v241, %v232
  %v260 = vpack.c.b16 %v242, %v233
  %v261 = vpack.c.b16 %v243, %v234
  %v262 = vpack.c.b16 %v244, %v235
  %v263 = vpack.c.b16 %v245, %v236
  %v264 = vpack.c.b16 %v246, %v237
  %v265 = vpack.c.b16 %v247, %v238
  %v266 = vpack.c.b16 %v248, %v239
  %v267 = vpack.c.b16 %v249, %v240
  %v430 = vunpack.c.l.b16 %v43
  %v431 = vunpack.c.l.b16 %v44
  %v432 = vunpack.c.l.b16 %v45
  %v433 = vunpack.c.l.b16 %v46
  %v434 = vunpack.c.l.b16 %v47
  %v435 = vunpack.c.l.b16 %v48
  %v436 = vunpack.c.l.b16 %v49
  %v437 = vunpack.c.l.b16 %v50
  %v438 = vunpack.c.l.b16 %v51
  %v439 = vunpack.c.l.b16 %v52
  %v440 = vunpack.c.l.b16 %v53
  %v441 = vunpack.c.l.b16 %v54
  %v442 = vunpack.c.l.b16 %v55
  %v443 = vunpack.c.l.b16 %v56
  %v444 = vunpack.c.l.b16 %v57
  %v445 = vunpack.c.l.b16 %v58
  %v446 = vunpack.c.l.b16 %v59
  %v447 = vunpack.c.l.b16 %v60
  %v448 = vunpack.c.l.b16 %v61
  %v449 = vunpack.c.l.b16 %v62
  %v450 = vunpack.c.l.b16 %v63
  %v451 = vunpack.c.l.b16 %v64
  %v452 = vunpack.c.l.b16 %v65
  %v453 = vunpack.c.l.b16 %v66
  %v454 = vunpack.c.l.b16 %v67
  %v455 = vunpack.c.l.b16 %v68
  %v456 = vunpack.c.l.b16 %v69
  %v457 = vunpack.c.l.b16 %v70
  %v458 = vunpack.c.l.b16 %v71
  %v459 = vunpack.c.l.b16 %v72
  %v460 = vunpack.c.l.b16 %v73
  %v461 = vunpack.c.l.b16 %v74
  %v462 = vunpack.c.l.b16 %v75
  %v463 = vunpack.c.l.b16 %v76
  %v464 = vunpack.c.l.b16 %v77
  %v465 = vunpack.c.l.b16 %v78
  %v466 = vunpack.c.l.b16 %v79
  %v467 = vunpack.c.l.b16 %v80
  %v468 = vunpack.c.l.b16 %v81
  %v469 = vunpack.c.l.b16 %v82
  %v470 = vunpack.c.l.b16 %v83
  %v471 = vunpack.c.l.b16 %v84
  %v472 = vunpack.c.l.b16 %v85
  %v473 = vunpack.c.l.b16 %v86
  %v474 = vunpack.c.l.b16 %v87
  %v475 = vunpack.c.l.b16 %v88
  %v476 = vunpack.c.l.b16 %v89
  %v477 = vunpack.c.l.b16 %v90
  %v478 = vunpack.c.l.b16 %v91
  %v479 = vunpack.c.l.b16 %v92
  %v480 = vunpack.c.l.b16 %v93
  %v481 = vunpack.c.l.b16 %v94
  %v482 = vunpack.c.l.b16 %v95
  %v483 = vunpack.c.l.b16 %v96
  %v484 = vunpack.c.l.b16 %v97
  %v485 = vunpack.c.l.b16 %v98
  %v486 = vunpack.c.l.b16 %v99
  %v487 = vunpack.c.l.b16 %v100
  %v488 = vunpack.c.l.b16 %v101
  %v489 = vunpack.c.l.b16 %v102
  %v490 = vunpack.c.l.b16 %v103
  %v491 = vunpack.c.l.b16 %v104
  %v492 = vunpack.c.l.b16 %v105
  %v493 = vunpack.c.l.b16 %v106
  %v494 = vunpack.c.l.b16 %v107
  %v495 = vunpack.c.l.b16 %v108
  %v496 = vunpack.c.l.b16 %v109
  %v497 = vunpack.c.l.b16 %v110
  %v498 = vunpack.c.l.b16 %v111
  %v499 = vunpack.c.l.b16 %v112
  %v500 = vunpack.c.l.b16 %v113
  %v501 = vunpack.c.l.b16 %v114
  %v502 = vunpack.c.l.b16 %v115
  %v503 = vunpack.c.l.b16 %v116
  %v504 = vunpack.c.l.b16 %v117
  %v505 = vunpack.c.l.b16 %v118
  %v506 = vunpack.c.l.b16 %v119
  %v507 = vunpack.c.l.b16 %v120
  %v508 = vunpack.c.l.b16 %v121
  %v509 = vunpack.c.l.b16 %v122
  %v510 = vunpack.c.l.b16 %v123
  %v511 = vunpack.c.l.b16 %v124
  %v512 = vunpack.c.l.b16 %v125
  %v513 = vunpack.c.l.b16 %v126
  %v514 = vunpack.c.l.b16 %v127
  %v515 = vunpack.c.l.b16 %v128
  %v516 = vunpack.c.l.b16 %v129
  %v517 = vunpack.c.l.b16 %v130
  %v518 = vunpack.c.l.b16 %v131
  %v519 = vunpack.c.l.b16 %v132
  %v520 = vunpack.c.l.b16 %v133
  %v521 = vunpack.c.l.b16 %v134
  %v522 = vunpack.c.l.b16 %v135
  %v523 = vunpack.c.l.b16 %v136
  %v524 = vunpack.c.l.b16 %v137
  %v525 = vunpack.c.l.b16 %v138
  %v526 = vunpack.c.l.b16 %v139
  %v527 = vunpack.c.l.b16 %v140
  %v528 = vunpack.c.l.b16 %v141
  %v529 = vunpack.c.l.b16 %v142
  %v530 = vunpack.c.l.b16 %v143
  %v531 = vunpack.c.l.b16 %v144
  %v532 = vunpack.c.l.b16 %v145
  %v533 = vunpack.c.l.b16 %v146
  %v534 = vunpack.c.l.b16 %v147
  %v535 = vunpack.c.l.b16 %v148
  %v536 = vunpack.c.l.b16 %v149
  %v537 = vunpack.c.l.b16 %v150
  %v538 = vunpack.c.l.b16 %v151
  %v539 = vunpack.c.l.b16 %v152
  %v540 = vunpack.c.l.b16 %v153
  %v541 = vunpack.c.l.b16 %v154
  %v542 = vunpack.c.l.b16 %v155
  %v543 = vunpack.c.l.b16 %v156
  %v544 = vunpack.c.l.b16 %v157
  %v545 = vunpack.c.l.b16 %v158
  %v546 = vunpack.c.l.b16 %v159
  %v547 = vunpack.c.l.b16 %v160
  %v548 = vunpack.c.l.b16 %v161
  %v549 = vunpack.c.l.b16 %v162
  %v550 = vunpack.c.l.b16 %v163
  %v551 = vunpack.c.l.b16 %v164
  %v552 = vunpack.c.l.b16 %v165
  %v553 = vunpack.c.l.b16 %v166
  %v554 = vunpack.c.l.b16 %v167
  %v555 = vunpack.c.l.b16 %v168
  %v556 = vunpack.c.l.b16 %v169
  %v557 = vunpack.c.l.b16 %v170
  %v558 = vunpack.c.l.b16 %v171
  %v559 = vunpack.c.l.b16 %v172
  %v560 = vunpack.c.l.b16 %v173
  %v561 = vunpack.c.l.b16 %v174
  %v562 = vunpack.c.l.b16 %v175
  %v563 = vunpack.c.l.b16 %v176
  %v564 = vunpack.c.l.b16 %v177
  %v565 = vunpack.c.l.b16 %v178
  %v566 = vunpack.c.l.b16 %v179
  %v567 = vunpack.c.l.b16 %v180
  %v568 = vunpack.c.l.b16 %v181
  %v569 = vunpack.c.l.b16 %v182
  %v570 = vunpack.c.l.b16 %v183
  %v571 = vunpack.c.l.b16 %v184
  %v572 = vunpack.c.l.b16 %v185
  %v573 = vunpack.c.l.b16 %v186
  %v574 = vpack.c.b16 %v431, %v430
  %v575 = vpack.c.b16 %v433, %v432
  %v576 = vpack.c.b16 %v435, %v434
  %v577 = vpack.c.b16 %v437, %v436
  %v578 = vpack.c.b16 %v439, %v438
  %v579 = vpack.c.b16 %v441, %v440
  %v580 = vpack.c.b16 %v443, %v442
  %v581 = vpack.c.b16 %v445, %v444
  %v582 = vpack.c.b16 %v447, %v446
  %v583 = vpack.c.b16 %v449, %v448
  %v584 = vpack.c.b16 %v451, %v450
  %v585 = vpack.c.b16 %v453, %v452
  %v586 = vpack.c.b16 %v455, %v454
  %v587 = vpack.c.b16 %v457, %v456
  %v588 = vpack.c.b16 %v459, %v458
  %v589 = vpack.c.b16 %v461, %v460
  %v590 = vpack.c.b16 %v463, %v462
  %v591 = vpack.c.b16 %v465, %v464
  %v592 = vpack.c.b16 %v467, %v466
  %v593 = vpack.c.b16 %v469, %v468
  %v594 = vpack.c.b16 %v471, %v470
  %v595 = vpack.c.b16 %v473, %v472
  %v596 = vpack.c.b16 %v475, %v474
  %v597 = vpack.c.b16 %v477, %v476
  %v598 = vpack.c.b16 %v479, %v478
  %v599 = vpack.c.b16 %v481, %v480
  %v600 = vpack.c.b16 %v483, %v482
  %v601 = vpack.c.b16 %v485, %v484
  %v602 = vpack.c.b16 %v487, %v486
  %v603 = vpack.c.b16 %v489, %v488
  %v604 = vpack.c.b16 %v491, %v490
  %v605 = vpack.c.b16 %v493, %v492
  %v606 = vpack.c.b16 %v495, %v494
  %v607 = vpack.c.b16 %v497, %v496
  %v608 = vpack.c.b16 %v499, %v498
  %v609 = vpack.c.b16 %v501, %v500
  %v610 = vpack.c.b16 %v503, %v502
  %v611 = vpack.c.b16 %v505, %v504
  %v612 = vpack.c.b16 %v507, %v506
  %v613 = vpack.c.b16 %v509, %v508
  %v614 = vpack.c.b16 %v511, %v510
  %v615 = vpack.c.b16 %v513, %v512
  %v616 = vpack.c.b16 %v515, %v514
  %v617 = vpack.c.b16 %v517, %v516
  %v618 = vpack.c.b16 %v519, %v518
  %v619 = vpack.c.b16 %v521, %v520
  %v620 = vpack.c.b16 %v523, %v522
  %v621 = vpack.c.b16 %v525, %v524
  %v622 = vpack.c.b16 %v527, %v526
  %v623 = vpack.c.b16 %v529, %v528
  %v624 = vpack.c.b16 %v531, %v530
  %v625 = vpack.c.b16 %v533, %v532
  %v626 = vpack.c.b16 %v535, %v534
  %v627 = vpack.c.b16 %v537, %v536
  %v628 = vpack.c.b16 %v539, %v538
  %v629 = vpack.c.b16 %v541, %v540
  %v630 = vpack.c.b16 %v543, %v542
  %v631 = vpack.c.b16 %v545, %v544
  %v632 = vpack.c.b16 %v547, %v546
  %v633 = vpack.c.b16 %v549, %v548
  %v634 = vpack.c.b16 %v551, %v550
  %v635 = vpack.c.b16 %v553, %v552
  %v636 = vpack.c.b16 %v555, %v554
  %v637 = vpack.c.b16 %v557, %v556
  %v638 = vpack.c.b16 %v559, %v558
  %v639 = vpack.c.b16 %v561, %v560
  %v640 = vpack.c.b16 %v563, %v562
  %v641 = vpack.c.b16 %v565, %v564
  %v642 = vpack.c.b16 %v567, %v566
  %v643 = vpack.c.b16 %v569, %v568
  %v644 = vpack.c.b16 %v571, %v570
  %v645 = vpack.c.b16 %v573, %v572
  %718 = vmatprep.subr.bf16.mxu0 0
  %719 = vmatpush1.bf16.msra.mxu0 %v574
  %720 = vmatprep.subr.bf16.mxu0 0
  %721 = vmatpush1.bf16.msra.mxu0 %v575
  %722 = vmatprep.subr.bf16.mxu0 0
  %723 = vmatpush1.bf16.msra.mxu0 %v576
  %724 = vmatprep.subr.bf16.mxu0 0
  %725 = vmatpush1.bf16.msra.mxu0 %v577
  %726 = vmatprep.subr.bf16.mxu0 0
  %727 = vmatpush1.bf16.msra.mxu0 %v578
  %728 = vmatprep.subr.bf16.mxu0 0
  %729 = vmatpush1.bf16.msra.mxu0 %v579
  %730 = vmatprep.subr.bf16.mxu0 0
  %731 = vmatpush1.bf16.msra.mxu0 %v580
  %732 = vmatprep.subr.bf16.mxu0 0
  %733 = vmatpush1.bf16.msra.mxu0 %v581
  %734 = vmatprep.subr.bf16.mxu0 0
  %735 = vmatpush1.bf16.msra.mxu0 %v582
  %736 = vmatprep.subr.bf16.mxu0 0
  %737 = vmatpush1.bf16.msra.mxu0 %v583
  %738 = vmatprep.subr.bf16.mxu0 0
  %739 = vmatpush1.bf16.msra.mxu0 %v584
  %740 = vmatprep.subr.bf16.mxu0 0
  %741 = vmatpush1.bf16.msra.mxu0 %v585
  %742 = vmatprep.subr.bf16.mxu0 0
  %743 = vmatpush1.bf16.msra.mxu0 %v586
  %744 = vmatprep.subr.bf16.mxu0 0
  %745 = vmatpush1.bf16.msra.mxu0 %v587
  %746 = vmatprep.subr.bf16.mxu0 0
  %747 = vmatpush1.bf16.msra.mxu0 %v588
  %748 = vmatprep.subr.bf16.mxu0 0
  %749 = vmatpush1.bf16.msra.mxu0 %v589
  %750 = vmatprep.mubr.bf16.mxu0 %v251
  %751 = vmatmul.mubr.bf16.gmra.mrb[0].mxu0 %v250
  %v752 = vpop.f32.mrb[0].mxu0
  %v753 = vadd.f32 %v192, %v752
  %v754 = vpop.f32.mrb[0].mxu0
  %v755 = vpop.f32.mrb[0].mxu0
  %v756 = vadd.f32 %v192, %v755
  %v757 = vpop.f32.mrb[0].mxu0
  %758 = vmatprep.mubr.bf16.mxu0 %v260
  %759 = vmatmul.mubr.bf16.gmra.mrb[0].mxu0 %v259
  %v760 = vpop.f32.mrb[0].mxu0
  %v761 = vadd.f32 %v192, %v760
  %v762 = vpop.f32.mrb[0].mxu0
  %v763 = vpop.f32.mrb[0].mxu0
  %v764 = vadd.f32 %v192, %v763
  %v765 = vpop.f32.mrb[0].mxu0
  %766 = vdwg.mxu0
  %767 = vmatprep.subr.bf16.mxu0 0
  %768 = vmatpush1.bf16.msra.mxu0 %v590
  %769 = vmatprep.subr.bf16.mxu0 0
  %770 = vmatpush1.bf16.msra.mxu0 %v591
  %771 = vmatprep.subr.bf16.mxu0 0
  %772 = vmatpush1.bf16.msra.mxu0 %v592
  %773 = vmatprep.subr.bf16.mxu0 0
  %774 = vmatpush1.bf16.msra.mxu0 %v593
  %775 = vmatprep.subr.bf16.mxu0 0
  %776 = vmatpush1.bf16.msra.mxu0 %v594
  %777 = vmatprep.subr.bf16.mxu0 0
  %778 = vmatpush1.bf16.msra.mxu0 %v595
  %779 = vmatprep.subr.bf16.mxu0 0
  %780 = vmatpush1.bf16.msra.mxu0 %v596
  %781 = vmatprep.subr.bf16.mxu0 0
  %782 = vmatpush1.bf16.msra.mxu0 %v597
  %783 = vmatprep.subr.bf16.mxu0 0
  %784 = vmatpush1.bf16.msra.mxu0 %v598
  %785 = vmatprep.subr.bf16.mxu0 0
  %786 = vmatpush1.bf16.msra.mxu0 %v599
  %787 = vmatprep.subr.bf16.mxu0 0
  %788 = vmatpush1.bf16.msra.mxu0 %v600
  %789 = vmatprep.subr.bf16.mxu0 0
  %790 = vmatpush1.bf16.msra.mxu0 %v601
  %791 = vmatprep.subr.bf16.mxu0 0
  %792 = vmatpush1.bf16.msra.mxu0 %v602
  %793 = vmatprep.subr.bf16.mxu0 0
  %794 = vmatpush1.bf16.msra.mxu0 %v603
  %795 = vmatprep.subr.bf16.mxu0 0
  %796 = vmatpush1.bf16.msra.mxu0 %v604
  %797 = vmatprep.subr.bf16.mxu0 0
  %798 = vmatpush1.bf16.msra.mxu0 %v605
  %799 = vmatprep.mubr.bf16.mxu0 %v253
  %800 = vmatmul.mubr.bf16.gmra.mrb[0].mxu0 %v252
  %v801 = vpop.f32.mrb[0].mxu0
  %v802 = vadd.f32 %v753, %v801
  %v803 = vpop.f32.mrb[0].mxu0
  %v804 = vpop.f32.mrb[0].mxu0
  %v805 = vadd.f32 %v756, %v804
  %v806 = vpop.f32.mrb[0].mxu0
  %807 = vmatprep.mubr.bf16.mxu0 %v262
  %808 = vmatmul.mubr.bf16.gmra.mrb[0].mxu0 %v261
  %v809 = vpop.f32.mrb[0].mxu0
  %v810 = vadd.f32 %v761, %v809
  %v811 = vpop.f32.mrb[0].mxu0
  %v812 = vpop.f32.mrb[0].mxu0
  %v813 = vadd.f32 %v764, %v812
  %v814 = vpop.f32.mrb[0].mxu0
  %815 = vdwg.mxu0
  %816 = vmatprep.subr.bf16.mxu0 0
  %817 = vmatpush1.bf16.msra.mxu0 %v606
  %818 = vmatprep.subr.bf16.mxu0 0
  %819 = vmatpush1.bf16.msra.mxu0 %v607
  %820 = vmatprep.subr.bf16.mxu0 0
  %821 = vmatpush1.bf16.msra.mxu0 %v608
  %822 = vmatprep.subr.bf16.mxu0 0
  %823 = vmatpush1.bf16.msra.mxu0 %v609
  %824 = vmatprep.subr.bf16.mxu0 0
  %825 = vmatpush1.bf16.msra.mxu0 %v610
  %826 = vmatprep.subr.bf16.mxu0 0
  %827 = vmatpush1.bf16.msra.mxu0 %v611
  %828 = vmatprep.subr.bf16.mxu0 0
  %829 = vmatpush1.bf16.msra.mxu0 %v612
  %830 = vmatprep.subr.bf16.mxu0 0
  %831 = vmatpush1.bf16.msra.mxu0 %v613
  %832 = vmatprep.subr.bf16.mxu0 0
  %833 = vmatpush1.bf16.msra.mxu0 %v614
  %834 = vmatprep.subr.bf16.mxu0 0
  %835 = vmatpush1.bf16.msra.mxu0 %v615
  %836 = vmatprep.subr.bf16.mxu0 0
  %837 = vmatpush1.bf16.msra.mxu0 %v616
  %838 = vmatprep.subr.bf16.mxu0 0
  %839 = vmatpush1.bf16.msra.mxu0 %v617
  %840 = vmatprep.subr.bf16.mxu0 0
  %841 = vmatpush1.bf16.msra.mxu0 %v618
  %842 = vmatprep.subr.bf16.mxu0 0
  %843 = vmatpush1.bf16.msra.mxu0 %v619
  %844 = vmatprep.subr.bf16.mxu0 0
  %845 = vmatpush1.bf16.msra.mxu0 %v620
  %846 = vmatprep.subr.bf16.mxu0 0
  %847 = vmatpush1.bf16.msra.mxu0 %v621
  %848 = vmatprep.mubr.bf16.mxu0 %v255
  %849 = vmatmul.mubr.bf16.gmra.mrb[0].mxu0 %v254
  %v850 = vpop.f32.mrb[0].mxu0
  %v851 = vadd.f32 %v802, %v850
  %v852 = vpop.f32.mrb[0].mxu0
  %v853 = vpop.f32.mrb[0].mxu0
  %v854 = vadd.f32 %v805, %v853
  %v855 = vpop.f32.mrb[0].mxu0
  %856 = vmatprep.mubr.bf16.mxu0 %v264
  %857 = vmatmul.mubr.bf16.gmra.mrb[0].mxu0 %v263
  %v858 = vpop.f32.mrb[0].mxu0
  %v859 = vadd.f32 %v810, %v858
  %v860 = vpop.f32.mrb[0].mxu0
  %v861 = vpop.f32.mrb[0].mxu0
  %v862 = vadd.f32 %v813, %v861
  %v863 = vpop.f32.mrb[0].mxu0
  %864 = vdwg.mxu0
  %865 = vmatprep.subr.bf16.mxu0 0
  %866 = vmatpush1.bf16.msra.mxu0 %v622
  %867 = vmatprep.subr.bf16.mxu0 0
  %868 = vmatpush1.bf16.msra.mxu0 %v623
  %869 = vmatprep.subr.bf16.mxu0 0
  %870 = vmatpush1.bf16.msra.mxu0 %v624
  %871 = vmatprep.subr.bf16.mxu0 0
  %872 = vmatpush1.bf16.msra.mxu0 %v625
  %873 = vmatprep.subr.bf16.mxu0 0
  %874 = vmatpush1.bf16.msra.mxu0 %v626
  %875 = vmatprep.subr.bf16.mxu0 0
  %876 = vmatpush1.bf16.msra.mxu0 %v627
  %877 = vmatprep.subr.bf16.mxu0 0
  %878 = vmatpush1.bf16.msra.mxu0 %v628
  %879 = vmatprep.subr.bf16.mxu0 0
  %880 = vmatpush1.bf16.msra.mxu0 %v629
  %881 = vmatprep.subr.bf16.mxu0 0
  %882 = vmatpush1.bf16.msra.mxu0 %v630
  %883 = vmatprep.subr.bf16.mxu0 0
  %884 = vmatpush1.bf16.msra.mxu0 %v631
  %885 = vmatprep.subr.bf16.mxu0 0
  %886 = vmatpush1.bf16.msra.mxu0 %v632
  %887 = vmatprep.subr.bf16.mxu0 0
  %888 = vmatpush1.bf16.msra.mxu0 %v633
  %889 = vmatprep.subr.bf16.mxu0 0
  %890 = vmatpush1.bf16.msra.mxu0 %v634
  %891 = vmatprep.subr.bf16.mxu0 0
  %892 = vmatpush1.bf16.msra.mxu0 %v635
  %893 = vmatprep.subr.bf16.mxu0 0
  %894 = vmatpush1.bf16.msra.mxu0 %v636
  %895 = vmatprep.subr.bf16.mxu0 0
  %896 = vmatpush1.bf16.msra.mxu0 %v637
  %897 = vmatprep.mubr.bf16.mxu0 %v257
  %898 = vmatmul.mubr.bf16.gmra.mrb[0].mxu0 %v256
  %v899 = vpop.f32.mrb[0].mxu0
  %v900 = vadd.f32 %v851, %v899
  %v901 = vpop.f32.mrb[0].mxu0
  %v902 = vpop.f32.mrb[0].mxu0
  %v903 = vadd.f32 %v854, %v902
  %v904 = vpop.f32.mrb[0].mxu0
  %905 = vmatprep.mubr.bf16.mxu0 %v266
  %906 = vmatmul.mubr.bf16.gmra.mrb[0].mxu0 %v265
  %v907 = vpop.f32.mrb[0].mxu0
  %v908 = vadd.f32 %v859, %v907
  %v909 = vpop.f32.mrb[0].mxu0
  %v910 = vpop.f32.mrb[0].mxu0
  %v911 = vadd.f32 %v862, %v910
  %v912 = vpop.f32.mrb[0].mxu0
  %913 = vdwg.mxu0
  %914 = vmatprep.subr.bf16.mxu0 0
  %915 = vmatpush1.bf16.msra.mxu0 %v638
  %916 = vmatprep.subr.bf16.mxu0 0
  %917 = vmatpush1.bf16.msra.mxu0 %v639
  %918 = vmatprep.subr.bf16.mxu0 0
  %919 = vmatpush1.bf16.msra.mxu0 %v640
  %920 = vmatprep.subr.bf16.mxu0 0
  %921 = vmatpush1.bf16.msra.mxu0 %v641
  %922 = vmatprep.subr.bf16.mxu0 0
  %923 = vmatpush1.bf16.msra.mxu0 %v642
  %924 = vmatprep.subr.bf16.mxu0 0
  %925 = vmatpush1.bf16.msra.mxu0 %v643
  %926 = vmatprep.subr.bf16.mxu0 0
  %927 = vmatpush1.bf16.msra.mxu0 %v644
  %928 = vmatprep.subr.bf16.mxu0 0
  %929 = vmatpush1.bf16.msra.mxu0 %v645
  %930 = vmatprep.subr.bf16.mxu0 0
  %931 = vmatpush1.bf16.msra.mxu0 0
  %932 = vmatprep.subr.bf16.mxu0 0
  %933 = vmatpush1.bf16.msra.mxu0 0
  %934 = vmatprep.subr.bf16.mxu0 0
  %935 = vmatpush1.bf16.msra.mxu0 0
  %936 = vmatprep.subr.bf16.mxu0 0
  %937 = vmatpush1.bf16.msra.mxu0 0
  %938 = vmatprep.subr.bf16.mxu0 0
  %939 = vmatpush1.bf16.msra.mxu0 0
  %940 = vmatprep.subr.bf16.mxu0 0
  %941 = vmatpush1.bf16.msra.mxu0 0
  %942 = vmatprep.subr.bf16.mxu0 0
  %943 = vmatpush1.bf16.msra.mxu0 0
  %944 = vmatprep.subr.bf16.mxu0 0
  %945 = vmatpush1.bf16.msra.mxu0 0
  %946 = vmatprep.mubr.bf16.mxu0 0
  %947 = vmatmul.mubr.bf16.gmra.mrb[0].mxu0 %v258
  %v948 = vpop.f32.mrb[0].mxu0
  %v949 = vadd.f32 %v900, %v948
  %v950 = vpop.f32.mrb[0].mxu0
  %v951 = vpop.f32.mrb[0].mxu0
  %v952 = vadd.f32 %v903, %v951
  %v953 = vpop.f32.mrb[0].mxu0
  %954 = vmatprep.mubr.bf16.mxu0 0
  %955 = vmatmul.mubr.bf16.gmra.mrb[0].mxu0 %v267
  %v956 = vpop.f32.mrb[0].mxu0
  %v957 = vadd.f32 %v908, %v956
  %v958 = vpop.f32.mrb[0].mxu0
  %v959 = vpop.f32.mrb[0].mxu0
  %v960 = vadd.f32 %v911, %v959
  %v961 = vpop.f32.mrb[0].mxu0
  %962 = vdwg.mxu0
  %v963 = vmax.f32 %v949, 0.0
  %v964 = vmax.f32 %v952, 0.0
  %v965 = vmax.f32 %v957, 0.0
  %v966 = vmax.f32 %v960, 0.0
  %v967 = vpack.c.bf16 %v964, %v963
  %v968 = vpack.c.bf16 %v966, %v965
  %v971 = vunpack.c.l.b16 %v967
  %v972 = vunpack.c.h.b16 %v967
  %v973 = vunpack.c.l.b16 %v968
  %v974 = vunpack.c.h.b16 %v968
  %v975 = vpack.c.b16 %v971, %v971
  %v976 = vpack.c.b16 %v972, %v972
  %v977 = vpack.c.b16 %v973, %v973
  %v978 = vpack.c.b16 %v974, %v974
  %983 = vst [vmem:[%s5] sm:$0xf] %v975
  %984 = vst [vmem:[%s5 + $0x4] sm:$0xf] %v976
  %985 = vst [vmem:[%s5 + $0x8] sm:$0xf] %v977
  %986 = vst [vmem:[%s5 + $0xc] sm:$0xf] %v978
  %v987 = vld [vmem:[%s3] sm:$0xf]
  %v988 = vld [vmem:[%s3 + $0x4] sm:$0xf]
  %v989 = vld [vmem:[%s3 + $0x8] sm:$0xf]
  %v990 = vld [vmem:[%s3 + $0xc] sm:$0xf]
  %v991 = vld [vmem:[%s3 + $0x10] sm:$0xf]
  %v992 = vld [vmem:[%s3 + $0x14] sm:$0xf]
  %v993 = vld [vmem:[%s3 + $0x18] sm:$0xf]
  %v994 = vld [vmem:[%s3 + $0x1c] sm:$0xf]
  %v995 = vld [vmem:[%s3 + $0x20] sm:$0xf]
  %v996 = vld [vmem:[%s3 + $0x24] sm:$0xf]
  %v997 = vld [vmem:[%s3 + $0x28] sm:$0xf]
  %v998 = vld [vmem:[%s3 + $0x2c] sm:$0xf]
  %v999 = vld [vmem:[%s3 + $0x30] sm:$0xf]
  %v1000 = vld [vmem:[%s3 + $0x34] sm:$0xf]
  %v1001 = vld [vmem:[%s3 + $0x38] sm:$0xf]
  %v1002 = vld [vmem:[%s3 + $0x3c] sm:$0xf]
  %v1003 = vld [vmem:[%s4] sm:$0x1]
  %v1005 = vlaneseq
  %v1006 = vshrl.u32 %v1005, 7
  %v1007 = vsub.s32 0, %v1006
  %v1008 = vrot.slane %v1003, %v1007
  %v1026 = vunpack.c.l.b16 %v987
  %v1027 = vunpack.c.l.b16 %v988
  %v1028 = vunpack.c.l.b16 %v989
  %v1029 = vunpack.c.l.b16 %v990
  %v1030 = vunpack.c.l.b16 %v991
  %v1031 = vunpack.c.l.b16 %v992
  %v1032 = vunpack.c.l.b16 %v993
  %v1033 = vunpack.c.l.b16 %v994
  %v1034 = vunpack.c.l.b16 %v995
  %v1035 = vunpack.c.l.b16 %v996
  %v1036 = vunpack.c.l.b16 %v997
  %v1037 = vunpack.c.l.b16 %v998
  %v1038 = vunpack.c.l.b16 %v999
  %v1039 = vunpack.c.l.b16 %v1000
  %v1040 = vunpack.c.l.b16 %v1001
  %v1041 = vunpack.c.l.b16 %v1002
  %v1042 = vpack.c.b16 %v1027, %v1026
  %v1043 = vpack.c.b16 %v1029, %v1028
  %v1044 = vpack.c.b16 %v1031, %v1030
  %v1045 = vpack.c.b16 %v1033, %v1032
  %v1046 = vpack.c.b16 %v1035, %v1034
  %v1047 = vpack.c.b16 %v1037, %v1036
  %v1048 = vpack.c.b16 %v1039, %v1038
  %v1049 = vpack.c.b16 %v1041, %v1040
  %1058 = vmatprep.subr.bf16.mxu0 0
  %1059 = vmatpush1.bf16.msra.mxu0 %v1042
  %1060 = vmatprep.subr.bf16.mxu0 0
  %1061 = vmatpush1.bf16.msra.mxu0 %v1043
  %1062 = vmatprep.subr.bf16.mxu0 0
  %1063 = vmatpush1.bf16.msra.mxu0 %v1044
  %1064 = vmatprep.subr.bf16.mxu0 0
  %1065 = vmatpush1.bf16.msra.mxu0 %v1045
  %1066 = vmatprep.subr.bf16.mxu0 0
  %1067 = vmatpush1.bf16.msra.mxu0 %v1046
  %1068 = vmatprep.subr.bf16.mxu0 0
  %1069 = vmatpush1.bf16.msra.mxu0 %v1047
  %1070 = vmatprep.subr.bf16.mxu0 0
  %1071 = vmatpush1.bf16.msra.mxu0 %v1048
  %1072 = vmatprep.subr.bf16.mxu0 0
  %1073 = vmatpush1.bf16.msra.mxu0 %v1049
  %1074 = vmatprep.subr.bf16.mxu0 0
  %1075 = vmatpush1.bf16.msra.mxu0 0
  %1076 = vmatprep.subr.bf16.mxu0 0
  %1077 = vmatpush1.bf16.msra.mxu0 0
  %1078 = vmatprep.subr.bf16.mxu0 0
  %1079 = vmatpush1.bf16.msra.mxu0 0
  %1080 = vmatprep.subr.bf16.mxu0 0
  %1081 = vmatpush1.bf16.msra.mxu0 0
  %1082 = vmatprep.subr.bf16.mxu0 0
  %1083 = vmatpush1.bf16.msra.mxu0 0
  %1084 = vmatprep.subr.bf16.mxu0 0
  %1085 = vmatpush1.bf16.msra.mxu0 0
  %1086 = vmatprep.subr.bf16.mxu0 0
  %1087 = vmatpush1.bf16.msra.mxu0 0
  %1088 = vmatprep.subr.bf16.mxu0 0
  %1089 = vmatpush1.bf16.msra.mxu0 0
  %1090 = vmatprep.mubr.bf16.mxu0 0
  %1091 = vmatmul.mubr.bf16.gmra.mrb[0].mxu0 %v254
  %v1092 = vpop.f32.mrb[0].mxu0
  %v1093 = vadd.f32 %v1008, %v1092
  %v1094 = vpop.f32.mrb[0].mxu0
  %v1095 = vpop.f32.mrb[0].mxu0
  %v1096 = vadd.f32 %v1008, %v1095
  %v1097 = vpop.f32.mrb[0].mxu0
  %1098 = vmatprep.mubr.bf16.mxu0 0
  %1099 = vmatmul.mubr.bf16.gmra.mrb[0].mxu0 %v263
  %v1100 = vpop.f32.mrb[0].mxu0
  %v1101 = vadd.f32 %v1008, %v1100
  %v1102 = vpop.f32.mrb[0].mxu0
  %v1103 = vpop.f32.mrb[0].mxu0
  %v1104 = vadd.f32 %v1008, %v1103
  %v1105 = vpop.f32.mrb[0].mxu0
  %1106 = vdwg.mxu0
  %1107 = vst [vmem:[%s6] sm:$0xff] %v1093
  %1108 = vst [vmem:[%s6 + $0x8] sm:$0xff] %v1096
  %1109 = vst [vmem:[%s6 + $0x10] sm:$0xff] %v1101
  %1110 = vst [vmem:[%s6 + $0x18] sm:$0xff] %v1104
  // Predicated region
  $region22: #{resnet_feature_extractor.8} parent=0 // pred_check
    _
  $region23: #{resnet_feature_extractor.8} parent=0 // pred_check_branch
    %1112 = sbr.rel (0) target = $region25
  $region24: #{resnet_feature_extractor.8} parent=0 // pred_region
    _
  $region25: #{resnet_feature_extractor.8} parent=0 // pred_fallthru
    _
  // Predicated region
  $region26: #{resnet_feature_extractor.8} parent=0 // pred_check
    _
  $region27: #{resnet_feature_extractor.8} parent=0 // pred_check_branch
    %1114 = sbr.rel (0) target = $region29
  $region28: #{resnet_feature_extractor.8} parent=0 // pred_region
    _
  $region29: #{resnet_feature_extractor.8} parent=0 // pred_fallthru
    _
  // Predicated region
  $region30: #{resnet_feature_extractor.8} parent=0 // pred_check
    _
  $region31: #{resnet_feature_extractor.8} parent=0 // pred_check_branch
    %1116 = sbr.rel (0) target = $region33
  $region32: #{resnet_feature_extractor.8} parent=0 // pred_region
    _
  $region33: #{resnet_feature_extractor.8} parent=0 // pred_fallthru
    _
  // Predicated region
  $region34: #{resnet_feature_extractor.8} parent=0 // pred_check
    _
  $region35: #{resnet_feature_extractor.8} parent=0 // pred_check_branch
    %1118 = sbr.rel (0) target = $region37
  $region36: #{resnet_feature_extractor.8} parent=0 // pred_region
    _
  $region37: #{resnet_feature_extractor.8} parent=0 // pred_fallthru
    _

// kernel: resnet_feature_extractor.9
$region0: #{resnet_feature_extractor.9}
  #allocation0 [shape = 'u32[]', space=smem, size = 0x4, offset = 0x4, fixed_abs, tag = 'smem constant byte address 0x4 - core index']
  #allocation1 [shape = 'u32[144,128]{1,0:T(1,128)}', space=vmem, size = 0x12000, scoped, tag = 'internal scratch']
  %s0 = inlined_call_operand.vmem [shape: bf16[32,1152], index: 0, kind: input, shape index: {}]
  %s1 = inlined_call_operand.vmem [shape: bf16[1152,128], index: 1, kind: input, shape index: {}]
  %s2 = inlined_call_operand.vmem [shape: f32[1,128], index: 2, kind: input, shape index: {}]
  %s3 = inlined_call_operand.vmem [shape: f32[32,128], index: 3, kind: input, shape index: {}]
  %s4 = inlined_call_operand.vmem [shape: bf16[32,128], index: 4, kind: output, shape index: {}]
  %s5 = sld [smem:[#allocation0]]
  $region26: #{resnet_feature_extractor.9} parent=0
    _
  %s7 = ssub.s32 1, %s5
  %s8 = scalar_select 0, %s7, %s5
  // Predicated region
  $region2: #{resnet_feature_extractor.9} parent=0 // pred_check
    _
  $region3: #{resnet_feature_extractor.9} parent=0 // pred_check_branch
    %10 = sbr.rel (0) target = $region5
  $region4: #{resnet_feature_extractor.9} parent=0 // pred_region
    _
  $region5: #{resnet_feature_extractor.9} parent=0 // pred_fallthru
    _
  // Predicated region
  $region6: #{resnet_feature_extractor.9} parent=0 // pred_check
    _
  $region7: #{resnet_feature_extractor.9} parent=0 // pred_check_branch
    %12 = sbr.rel (0) target = $region9
  $region8: #{resnet_feature_extractor.9} parent=0 // pred_region
    _
  $region9: #{resnet_feature_extractor.9} parent=0 // pred_fallthru
    _
  // Predicated region
  $region10: #{resnet_feature_extractor.9} parent=0 // pred_check
    _
  $region11: #{resnet_feature_extractor.9} parent=0 // pred_check_branch
    %14 = sbr.rel (0) target = $region13
  $region12: #{resnet_feature_extractor.9} parent=0 // pred_region
    _
  $region13: #{resnet_feature_extractor.9} parent=0 // pred_fallthru
    _
  // Predicated region
  $region14: #{resnet_feature_extractor.9} parent=0 // pred_check
    _
  $region15: #{resnet_feature_extractor.9} parent=0 // pred_check_branch
    %16 = sbr.rel (0) target = $region17
  $region16: #{resnet_feature_extractor.9} parent=0 // pred_region
    _
  $region17: #{resnet_feature_extractor.9} parent=0 // pred_fallthru
    _
  %v18 = vld [vmem:[%s0] sm:$0xff]
  %v19 = vld [vmem:[%s0 + $0x8] sm:$0xff]
  %v20 = vld [vmem:[%s0 + $0x10] sm:$0xff]
  %v21 = vld [vmem:[%s0 + $0x18] sm:$0xff]
  %v22 = vld [vmem:[%s0 + $0x20] sm:$0xf]
  %v23 = vld [vmem:[%s0 + $0x24] sm:$0xff]
  %v24 = vld [vmem:[%s0 + $0x2c] sm:$0xff]
  %v25 = vld [vmem:[%s0 + $0x34] sm:$0xff]
  %v26 = vld [vmem:[%s0 + $0x3c] sm:$0xff]
  %v27 = vld [vmem:[%s0 + $0x44] sm:$0xf]
  %v28 = vld [vmem:[%s0 + $0x48] sm:$0xff]
  %v29 = vld [vmem:[%s0 + $0x50] sm:$0xff]
  %v30 = vld [vmem:[%s0 + $0x58] sm:$0xff]
  %v31 = vld [vmem:[%s0 + $0x60] sm:$0xff]
  %v32 = vld [vmem:[%s0 + $0x68] sm:$0xf]
  %v33 = vld [vmem:[%s0 + $0x6c] sm:$0xff]
  %v34 = vld [vmem:[%s0 + $0x74] sm:$0xff]
  %v35 = vld [vmem:[%s0 + $0x7c] sm:$0xff]
  %v36 = vld [vmem:[%s0 + $0x84] sm:$0xff]
  %v37 = vld [vmem:[%s0 + $0x8c] sm:$0xf]
  %v38 = vld [vmem:[%s1] sm:$0xf]
  %v39 = vld [vmem:[%s1 + $0x4] sm:$0xf]
  %v40 = vld [vmem:[%s1 + $0x8] sm:$0xf]
  %v41 = vld [vmem:[%s1 + $0xc] sm:$0xf]
  %v42 = vld [vmem:[%s1 + $0x10] sm:$0xf]
  %v43 = vld [vmem:[%s1 + $0x14] sm:$0xf]
  %v44 = vld [vmem:[%s1 + $0x18] sm:$0xf]
  %v45 = vld [vmem:[%s1 + $0x1c] sm:$0xf]
  %v46 = vld [vmem:[%s1 + $0x20] sm:$0xf]
  %v47 = vld [vmem:[%s1 + $0x24] sm:$0xf]
  %v48 = vld [vmem:[%s1 + $0x28] sm:$0xf]
  %v49 = vld [vmem:[%s1 + $0x2c] sm:$0xf]
  %v50 = vld [vmem:[%s1 + $0x30] sm:$0xf]
  %v51 = vld [vmem:[%s1 + $0x34] sm:$0xf]
  %v52 = vld [vmem:[%s1 + $0x38] sm:$0xf]
  %v53 = vld [vmem:[%s1 + $0x3c] sm:$0xf]
  %v54 = vld [vmem:[%s1 + $0x40] sm:$0xf]
  %v55 = vld [vmem:[%s1 + $0x44] sm:$0xf]
  %v56 = vld [vmem:[%s1 + $0x48] sm:$0xf]
  %v57 = vld [vmem:[%s1 + $0x4c] sm:$0xf]
  %v58 = vld [vmem:[%s1 + $0x50] sm:$0xf]
  %v59 = vld [vmem:[%s1 + $0x54] sm:$0xf]
  %v60 = vld [vmem:[%s1 + $0x58] sm:$0xf]
  %v61 = vld [vmem:[%s1 + $0x5c] sm:$0xf]
  %v62 = vld [vmem:[%s1 + $0x60] sm:$0xf]
  %v63 = vld [vmem:[%s1 + $0x64] sm:$0xf]
  %v64 = vld [vmem:[%s1 + $0x68] sm:$0xf]
  %v65 = vld [vmem:[%s1 + $0x6c] sm:$0xf]
  %v66 = vld [vmem:[%s1 + $0x70] sm:$0xf]
  %v67 = vld [vmem:[%s1 + $0x74] sm:$0xf]
  %v68 = vld [vmem:[%s1 + $0x78] sm:$0xf]
  %v69 = vld [vmem:[%s1 + $0x7c] sm:$0xf]
  %v70 = vld [vmem:[%s1 + $0x80] sm:$0xf]
  %v71 = vld [vmem:[%s1 + $0x84] sm:$0xf]
  %v72 = vld [vmem:[%s1 + $0x88] sm:$0xf]
  %v73 = vld [vmem:[%s1 + $0x8c] sm:$0xf]
  %v74 = vld [vmem:[%s1 + $0x90] sm:$0xf]
  %v75 = vld [vmem:[%s1 + $0x94] sm:$0xf]
  %v76 = vld [vmem:[%s1 + $0x98] sm:$0xf]
  %v77 = vld [vmem:[%s1 + $0x9c] sm:$0xf]
  %v78 = vld [vmem:[%s1 + $0xa0] sm:$0xf]
  %v79 = vld [vmem:[%s1 + $0xa4] sm:$0xf]
  %v80 = vld [vmem:[%s1 + $0xa8] sm:$0xf]
  %v81 = vld [vmem:[%s1 + $0xac] sm:$0xf]
  %v82 = vld [vmem:[%s1 + $0xb0] sm:$0xf]
  %v83 = vld [vmem:[%s1 + $0xb4] sm:$0xf]
  %v84 = vld [vmem:[%s1 + $0xb8] sm:$0xf]
  %v85 = vld [vmem:[%s1 + $0xbc] sm:$0xf]
  %v86 = vld [vmem:[%s1 + $0xc0] sm:$0xf]
  %v87 = vld [vmem:[%s1 + $0xc4] sm:$0xf]
  %v88 = vld [vmem:[%s1 + $0xc8] sm:$0xf]
  %v89 = vld [vmem:[%s1 + $0xcc] sm:$0xf]
  %v90 = vld [vmem:[%s1 + $0xd0] sm:$0xf]
  %v91 = vld [vmem:[%s1 + $0xd4] sm:$0xf]
  %v92 = vld [vmem:[%s1 + $0xd8] sm:$0xf]
  %v93 = vld [vmem:[%s1 + $0xdc] sm:$0xf]
  %v94 = vld [vmem:[%s1 + $0xe0] sm:$0xf]
  %v95 = vld [vmem:[%s1 + $0xe4] sm:$0xf]
  %v96 = vld [vmem:[%s1 + $0xe8] sm:$0xf]
  %v97 = vld [vmem:[%s1 + $0xec] sm:$0xf]
  %v98 = vld [vmem:[%s1 + $0xf0] sm:$0xf]
  %v99 = vld [vmem:[%s1 + $0xf4] sm:$0xf]
  %v100 = vld [vmem:[%s1 + $0xf8] sm:$0xf]
  %v101 = vld [vmem:[%s1 + $0xfc] sm:$0xf]
  %v102 = vld [vmem:[%s1 + $0x100] sm:$0xf]
  %v103 = vld [vmem:[%s1 + $0x104] sm:$0xf]
  %v104 = vld [vmem:[%s1 + $0x108] sm:$0xf]
  %v105 = vld [vmem:[%s1 + $0x10c] sm:$0xf]
  %v106 = vld [vmem:[%s1 + $0x110] sm:$0xf]
  %v107 = vld [vmem:[%s1 + $0x114] sm:$0xf]
  %v108 = vld [vmem:[%s1 + $0x118] sm:$0xf]
  %v109 = vld [vmem:[%s1 + $0x11c] sm:$0xf]
  %v110 = vld [vmem:[%s1 + $0x120] sm:$0xf]
  %v111 = vld [vmem:[%s1 + $0x124] sm:$0xf]
  %v112 = vld [vmem:[%s1 + $0x128] sm:$0xf]
  %v113 = vld [vmem:[%s1 + $0x12c] sm:$0xf]
  %v114 = vld [vmem:[%s1 + $0x130] sm:$0xf]
  %v115 = vld [vmem:[%s1 + $0x134] sm:$0xf]
  %v116 = vld [vmem:[%s1 + $0x138] sm:$0xf]
  %v117 = vld [vmem:[%s1 + $0x13c] sm:$0xf]
  %v118 = vld [vmem:[%s1 + $0x140] sm:$0xf]
  %v119 = vld [vmem:[%s1 + $0x144] sm:$0xf]
  %v120 = vld [vmem:[%s1 + $0x148] sm:$0xf]
  %v121 = vld [vmem:[%s1 + $0x14c] sm:$0xf]
  %v122 = vld [vmem:[%s1 + $0x150] sm:$0xf]
  %v123 = vld [vmem:[%s1 + $0x154] sm:$0xf]
  %v124 = vld [vmem:[%s1 + $0x158] sm:$0xf]
  %v125 = vld [vmem:[%s1 + $0x15c] sm:$0xf]
  %v126 = vld [vmem:[%s1 + $0x160] sm:$0xf]
  %v127 = vld [vmem:[%s1 + $0x164] sm:$0xf]
  %v128 = vld [vmem:[%s1 + $0x168] sm:$0xf]
  %v129 = vld [vmem:[%s1 + $0x16c] sm:$0xf]
  %v130 = vld [vmem:[%s1 + $0x170] sm:$0xf]
  %v131 = vld [vmem:[%s1 + $0x174] sm:$0xf]
  %v132 = vld [vmem:[%s1 + $0x178] sm:$0xf]
  %v133 = vld [vmem:[%s1 + $0x17c] sm:$0xf]
  %v134 = vld [vmem:[%s1 + $0x180] sm:$0xf]
  %v135 = vld [vmem:[%s1 + $0x184] sm:$0xf]
  %v136 = vld [vmem:[%s1 + $0x188] sm:$0xf]
  %v137 = vld [vmem:[%s1 + $0x18c] sm:$0xf]
  %v138 = vld [vmem:[%s1 + $0x190] sm:$0xf]
  %v139 = vld [vmem:[%s1 + $0x194] sm:$0xf]
  %v140 = vld [vmem:[%s1 + $0x198] sm:$0xf]
  %v141 = vld [vmem:[%s1 + $0x19c] sm:$0xf]
  %v142 = vld [vmem:[%s1 + $0x1a0] sm:$0xf]
  %v143 = vld [vmem:[%s1 + $0x1a4] sm:$0xf]
  %v144 = vld [vmem:[%s1 + $0x1a8] sm:$0xf]
  %v145 = vld [vmem:[%s1 + $0x1ac] sm:$0xf]
  %v146 = vld [vmem:[%s1 + $0x1b0] sm:$0xf]
  %v147 = vld [vmem:[%s1 + $0x1b4] sm:$0xf]
  %v148 = vld [vmem:[%s1 + $0x1b8] sm:$0xf]
  %v149 = vld [vmem:[%s1 + $0x1bc] sm:$0xf]
  %v150 = vld [vmem:[%s1 + $0x1c0] sm:$0xf]
  %v151 = vld [vmem:[%s1 + $0x1c4] sm:$0xf]
  %v152 = vld [vmem:[%s1 + $0x1c8] sm:$0xf]
  %v153 = vld [vmem:[%s1 + $0x1cc] sm:$0xf]
  %v154 = vld [vmem:[%s1 + $0x1d0] sm:$0xf]
  %v155 = vld [vmem:[%s1 + $0x1d4] sm:$0xf]
  %v156 = vld [vmem:[%s1 + $0x1d8] sm:$0xf]
  %v157 = vld [vmem:[%s1 + $0x1dc] sm:$0xf]
  %v158 = vld [vmem:[%s1 + $0x1e0] sm:$0xf]
  %v159 = vld [vmem:[%s1 + $0x1e4] sm:$0xf]
  %v160 = vld [vmem:[%s1 + $0x1e8] sm:$0xf]
  %v161 = vld [vmem:[%s1 + $0x1ec] sm:$0xf]
  %v162 = vld [vmem:[%s1 + $0x1f0] sm:$0xf]
  %v163 = vld [vmem:[%s1 + $0x1f4] sm:$0xf]
  %v164 = vld [vmem:[%s1 + $0x1f8] sm:$0xf]
  %v165 = vld [vmem:[%s1 + $0x1fc] sm:$0xf]
  %v166 = vld [vmem:[%s1 + $0x200] sm:$0xf]
  %v167 = vld [vmem:[%s1 + $0x204] sm:$0xf]
  %v168 = vld [vmem:[%s1 + $0x208] sm:$0xf]
  %v169 = vld [vmem:[%s1 + $0x20c] sm:$0xf]
  %v170 = vld [vmem:[%s1 + $0x210] sm:$0xf]
  %v171 = vld [vmem:[%s1 + $0x214] sm:$0xf]
  %v172 = vld [vmem:[%s1 + $0x218] sm:$0xf]
  %v173 = vld [vmem:[%s1 + $0x21c] sm:$0xf]
  %v174 = vld [vmem:[%s1 + $0x220] sm:$0xf]
  %v175 = vld [vmem:[%s1 + $0x224] sm:$0xf]
  %v176 = vld [vmem:[%s1 + $0x228] sm:$0xf]
  %v177 = vld [vmem:[%s1 + $0x22c] sm:$0xf]
  %v178 = vld [vmem:[%s1 + $0x230] sm:$0xf]
  %v179 = vld [vmem:[%s1 + $0x234] sm:$0xf]
  %v180 = vld [vmem:[%s1 + $0x238] sm:$0xf]
  %v181 = vld [vmem:[%s1 + $0x23c] sm:$0xf]
  %v182 = vld [vmem:[%s2] sm:$0x1]
  %v184 = vlaneseq
  %v185 = vshrl.u32 %v184, 7
  %v186 = vsub.s32 0, %v185
  %v187 = vrot.slane %v182, %v186
  %v209 = vunpack.c.l.b16 %v18
  %v210 = vunpack.c.h.b16 %v18
  %v211 = vunpack.c.l.b16 %v19
  %v212 = vunpack.c.h.b16 %v19
  %v213 = vunpack.c.l.b16 %v20
  %v214 = vunpack.c.h.b16 %v20
  %v215 = vunpack.c.l.b16 %v21
  %v216 = vunpack.c.h.b16 %v21
  %v217 = vunpack.c.l.b16 %v22
  %v218 = vunpack.c.l.b16 %v23
  %v219 = vunpack.c.h.b16 %v23
  %v220 = vunpack.c.l.b16 %v24
  %v221 = vunpack.c.h.b16 %v24
  %v222 = vunpack.c.l.b16 %v25
  %v223 = vunpack.c.h.b16 %v25
  %v224 = vunpack.c.l.b16 %v26
  %v225 = vunpack.c.h.b16 %v26
  %v226 = vunpack.c.l.b16 %v27
  %v227 = vunpack.c.l.b16 %v28
  %v228 = vunpack.c.h.b16 %v28
  %v229 = vunpack.c.l.b16 %v29
  %v230 = vunpack.c.h.b16 %v29
  %v231 = vunpack.c.l.b16 %v30
  %v232 = vunpack.c.h.b16 %v30
  %v233 = vunpack.c.l.b16 %v31
  %v234 = vunpack.c.h.b16 %v31
  %v235 = vunpack.c.l.b16 %v32
  %v236 = vunpack.c.l.b16 %v33
  %v237 = vunpack.c.h.b16 %v33
  %v238 = vunpack.c.l.b16 %v34
  %v239 = vunpack.c.h.b16 %v34
  %v240 = vunpack.c.l.b16 %v35
  %v241 = vunpack.c.h.b16 %v35
  %v242 = vunpack.c.l.b16 %v36
  %v243 = vunpack.c.h.b16 %v36
  %v244 = vunpack.c.l.b16 %v37
  %v245 = vpack.c.b16 %v218, %v209
  %v246 = vpack.c.b16 %v219, %v210
  %v247 = vpack.c.b16 %v220, %v211
  %v248 = vpack.c.b16 %v221, %v212
  %v249 = vpack.c.b16 %v222, %v213
  %v250 = vpack.c.b16 %v223, %v214
  %v251 = vpack.c.b16 %v224, %v215
  %v252 = vpack.c.b16 %v225, %v216
  %v253 = vpack.c.b16 %v226, %v217
  %v254 = vpack.c.b16 %v236, %v227
  %v255 = vpack.c.b16 %v237, %v228
  %v256 = vpack.c.b16 %v238, %v229
  %v257 = vpack.c.b16 %v239, %v230
  %v258 = vpack.c.b16 %v240, %v231
  %v259 = vpack.c.b16 %v241, %v232
  %v260 = vpack.c.b16 %v242, %v233
  %v261 = vpack.c.b16 %v243, %v234
  %v262 = vpack.c.b16 %v244, %v235
  %v425 = vunpack.c.l.b16 %v38
  %v426 = vunpack.c.l.b16 %v39
  %v427 = vunpack.c.l.b16 %v40
  %v428 = vunpack.c.l.b16 %v41
  %v429 = vunpack.c.l.b16 %v42
  %v430 = vunpack.c.l.b16 %v43
  %v431 = vunpack.c.l.b16 %v44
  %v432 = vunpack.c.l.b16 %v45
  %v433 = vunpack.c.l.b16 %v46
  %v434 = vunpack.c.l.b16 %v47
  %v435 = vunpack.c.l.b16 %v48
  %v436 = vunpack.c.l.b16 %v49
  %v437 = vunpack.c.l.b16 %v50
  %v438 = vunpack.c.l.b16 %v51
  %v439 = vunpack.c.l.b16 %v52
  %v440 = vunpack.c.l.b16 %v53
  %v441 = vunpack.c.l.b16 %v54
  %v442 = vunpack.c.l.b16 %v55
  %v443 = vunpack.c.l.b16 %v56
  %v444 = vunpack.c.l.b16 %v57
  %v445 = vunpack.c.l.b16 %v58
  %v446 = vunpack.c.l.b16 %v59
  %v447 = vunpack.c.l.b16 %v60
  %v448 = vunpack.c.l.b16 %v61
  %v449 = vunpack.c.l.b16 %v62
  %v450 = vunpack.c.l.b16 %v63
  %v451 = vunpack.c.l.b16 %v64
  %v452 = vunpack.c.l.b16 %v65
  %v453 = vunpack.c.l.b16 %v66
  %v454 = vunpack.c.l.b16 %v67
  %v455 = vunpack.c.l.b16 %v68
  %v456 = vunpack.c.l.b16 %v69
  %v457 = vunpack.c.l.b16 %v70
  %v458 = vunpack.c.l.b16 %v71
  %v459 = vunpack.c.l.b16 %v72
  %v460 = vunpack.c.l.b16 %v73
  %v461 = vunpack.c.l.b16 %v74
  %v462 = vunpack.c.l.b16 %v75
  %v463 = vunpack.c.l.b16 %v76
  %v464 = vunpack.c.l.b16 %v77
  %v465 = vunpack.c.l.b16 %v78
  %v466 = vunpack.c.l.b16 %v79
  %v467 = vunpack.c.l.b16 %v80
  %v468 = vunpack.c.l.b16 %v81
  %v469 = vunpack.c.l.b16 %v82
  %v470 = vunpack.c.l.b16 %v83
  %v471 = vunpack.c.l.b16 %v84
  %v472 = vunpack.c.l.b16 %v85
  %v473 = vunpack.c.l.b16 %v86
  %v474 = vunpack.c.l.b16 %v87
  %v475 = vunpack.c.l.b16 %v88
  %v476 = vunpack.c.l.b16 %v89
  %v477 = vunpack.c.l.b16 %v90
  %v478 = vunpack.c.l.b16 %v91
  %v479 = vunpack.c.l.b16 %v92
  %v480 = vunpack.c.l.b16 %v93
  %v481 = vunpack.c.l.b16 %v94
  %v482 = vunpack.c.l.b16 %v95
  %v483 = vunpack.c.l.b16 %v96
  %v484 = vunpack.c.l.b16 %v97
  %v485 = vunpack.c.l.b16 %v98
  %v486 = vunpack.c.l.b16 %v99
  %v487 = vunpack.c.l.b16 %v100
  %v488 = vunpack.c.l.b16 %v101
  %v489 = vunpack.c.l.b16 %v102
  %v490 = vunpack.c.l.b16 %v103
  %v491 = vunpack.c.l.b16 %v104
  %v492 = vunpack.c.l.b16 %v105
  %v493 = vunpack.c.l.b16 %v106
  %v494 = vunpack.c.l.b16 %v107
  %v495 = vunpack.c.l.b16 %v108
  %v496 = vunpack.c.l.b16 %v109
  %v497 = vunpack.c.l.b16 %v110
  %v498 = vunpack.c.l.b16 %v111
  %v499 = vunpack.c.l.b16 %v112
  %v500 = vunpack.c.l.b16 %v113
  %v501 = vunpack.c.l.b16 %v114
  %v502 = vunpack.c.l.b16 %v115
  %v503 = vunpack.c.l.b16 %v116
  %v504 = vunpack.c.l.b16 %v117
  %v505 = vunpack.c.l.b16 %v118
  %v506 = vunpack.c.l.b16 %v119
  %v507 = vunpack.c.l.b16 %v120
  %v508 = vunpack.c.l.b16 %v121
  %v509 = vunpack.c.l.b16 %v122
  %v510 = vunpack.c.l.b16 %v123
  %v511 = vunpack.c.l.b16 %v124
  %v512 = vunpack.c.l.b16 %v125
  %v513 = vunpack.c.l.b16 %v126
  %v514 = vunpack.c.l.b16 %v127
  %v515 = vunpack.c.l.b16 %v128
  %v516 = vunpack.c.l.b16 %v129
  %v517 = vunpack.c.l.b16 %v130
  %v518 = vunpack.c.l.b16 %v131
  %v519 = vunpack.c.l.b16 %v132
  %v520 = vunpack.c.l.b16 %v133
  %v521 = vunpack.c.l.b16 %v134
  %v522 = vunpack.c.l.b16 %v135
  %v523 = vunpack.c.l.b16 %v136
  %v524 = vunpack.c.l.b16 %v137
  %v525 = vunpack.c.l.b16 %v138
  %v526 = vunpack.c.l.b16 %v139
  %v527 = vunpack.c.l.b16 %v140
  %v528 = vunpack.c.l.b16 %v141
  %v529 = vunpack.c.l.b16 %v142
  %v530 = vunpack.c.l.b16 %v143
  %v531 = vunpack.c.l.b16 %v144
  %v532 = vunpack.c.l.b16 %v145
  %v533 = vunpack.c.l.b16 %v146
  %v534 = vunpack.c.l.b16 %v147
  %v535 = vunpack.c.l.b16 %v148
  %v536 = vunpack.c.l.b16 %v149
  %v537 = vunpack.c.l.b16 %v150
  %v538 = vunpack.c.l.b16 %v151
  %v539 = vunpack.c.l.b16 %v152
  %v540 = vunpack.c.l.b16 %v153
  %v541 = vunpack.c.l.b16 %v154
  %v542 = vunpack.c.l.b16 %v155
  %v543 = vunpack.c.l.b16 %v156
  %v544 = vunpack.c.l.b16 %v157
  %v545 = vunpack.c.l.b16 %v158
  %v546 = vunpack.c.l.b16 %v159
  %v547 = vunpack.c.l.b16 %v160
  %v548 = vunpack.c.l.b16 %v161
  %v549 = vunpack.c.l.b16 %v162
  %v550 = vunpack.c.l.b16 %v163
  %v551 = vunpack.c.l.b16 %v164
  %v552 = vunpack.c.l.b16 %v165
  %v553 = vunpack.c.l.b16 %v166
  %v554 = vunpack.c.l.b16 %v167
  %v555 = vunpack.c.l.b16 %v168
  %v556 = vunpack.c.l.b16 %v169
  %v557 = vunpack.c.l.b16 %v170
  %v558 = vunpack.c.l.b16 %v171
  %v559 = vunpack.c.l.b16 %v172
  %v560 = vunpack.c.l.b16 %v173
  %v561 = vunpack.c.l.b16 %v174
  %v562 = vunpack.c.l.b16 %v175
  %v563 = vunpack.c.l.b16 %v176
  %v564 = vunpack.c.l.b16 %v177
  %v565 = vunpack.c.l.b16 %v178
  %v566 = vunpack.c.l.b16 %v179
  %v567 = vunpack.c.l.b16 %v180
  %v568 = vunpack.c.l.b16 %v181
  %v569 = vpack.c.b16 %v426, %v425
  %v570 = vpack.c.b16 %v428, %v427
  %v571 = vpack.c.b16 %v430, %v429
  %v572 = vpack.c.b16 %v432, %v431
  %v573 = vpack.c.b16 %v434, %v433
  %v574 = vpack.c.b16 %v436, %v435
  %v575 = vpack.c.b16 %v438, %v437
  %v576 = vpack.c.b16 %v440, %v439
  %v577 = vpack.c.b16 %v442, %v441
  %v578 = vpack.c.b16 %v444, %v443
  %v579 = vpack.c.b16 %v446, %v445
  %v580 = vpack.c.b16 %v448, %v447
  %v581 = vpack.c.b16 %v450, %v449
  %v582 = vpack.c.b16 %v452, %v451
  %v583 = vpack.c.b16 %v454, %v453
  %v584 = vpack.c.b16 %v456, %v455
  %v585 = vpack.c.b16 %v458, %v457
  %v586 = vpack.c.b16 %v460, %v459
  %v587 = vpack.c.b16 %v462, %v461
  %v588 = vpack.c.b16 %v464, %v463
  %v589 = vpack.c.b16 %v466, %v465
  %v590 = vpack.c.b16 %v468, %v467
  %v591 = vpack.c.b16 %v470, %v469
  %v592 = vpack.c.b16 %v472, %v471
  %v593 = vpack.c.b16 %v474, %v473
  %v594 = vpack.c.b16 %v476, %v475
  %v595 = vpack.c.b16 %v478, %v477
  %v596 = vpack.c.b16 %v480, %v479
  %v597 = vpack.c.b16 %v482, %v481
  %v598 = vpack.c.b16 %v484, %v483
  %v599 = vpack.c.b16 %v486, %v485
  %v600 = vpack.c.b16 %v488, %v487
  %v601 = vpack.c.b16 %v490, %v489
  %v602 = vpack.c.b16 %v492, %v491
  %v603 = vpack.c.b16 %v494, %v493
  %v604 = vpack.c.b16 %v496, %v495
  %v605 = vpack.c.b16 %v498, %v497
  %v606 = vpack.c.b16 %v500, %v499
  %v607 = vpack.c.b16 %v502, %v501
  %v608 = vpack.c.b16 %v504, %v503
  %v609 = vpack.c.b16 %v506, %v505
  %v610 = vpack.c.b16 %v508, %v507
  %v611 = vpack.c.b16 %v510, %v509
  %v612 = vpack.c.b16 %v512, %v511
  %v613 = vpack.c.b16 %v514, %v513
  %v614 = vpack.c.b16 %v516, %v515
  %v615 = vpack.c.b16 %v518, %v517
  %v616 = vpack.c.b16 %v520, %v519
  %v617 = vpack.c.b16 %v522, %v521
  %v618 = vpack.c.b16 %v524, %v523
  %v619 = vpack.c.b16 %v526, %v525
  %v620 = vpack.c.b16 %v528, %v527
  %v621 = vpack.c.b16 %v530, %v529
  %v622 = vpack.c.b16 %v532, %v531
  %v623 = vpack.c.b16 %v534, %v533
  %v624 = vpack.c.b16 %v536, %v535
  %v625 = vpack.c.b16 %v538, %v537
  %v626 = vpack.c.b16 %v540, %v539
  %v627 = vpack.c.b16 %v542, %v541
  %v628 = vpack.c.b16 %v544, %v543
  %v629 = vpack.c.b16 %v546, %v545
  %v630 = vpack.c.b16 %v548, %v547
  %v631 = vpack.c.b16 %v550, %v549
  %v632 = vpack.c.b16 %v552, %v551
  %v633 = vpack.c.b16 %v554, %v553
  %v634 = vpack.c.b16 %v556, %v555
  %v635 = vpack.c.b16 %v558, %v557
  %v636 = vpack.c.b16 %v560, %v559
  %v637 = vpack.c.b16 %v562, %v561
  %v638 = vpack.c.b16 %v564, %v563
  %v639 = vpack.c.b16 %v566, %v565
  %v640 = vpack.c.b16 %v568, %v567
  %713 = vmatprep.subr.bf16.mxu0 0
  %714 = vmatpush1.bf16.msra.mxu0 %v569
  %715 = vmatprep.subr.bf16.mxu0 0
  %716 = vmatpush1.bf16.msra.mxu0 %v570
  %717 = vmatprep.subr.bf16.mxu0 0
  %718 = vmatpush1.bf16.msra.mxu0 %v571
  %719 = vmatprep.subr.bf16.mxu0 0
  %720 = vmatpush1.bf16.msra.mxu0 %v572
  %721 = vmatprep.subr.bf16.mxu0 0
  %722 = vmatpush1.bf16.msra.mxu0 %v573
  %723 = vmatprep.subr.bf16.mxu0 0
  %724 = vmatpush1.bf16.msra.mxu0 %v574
  %725 = vmatprep.subr.bf16.mxu0 0
  %726 = vmatpush1.bf16.msra.mxu0 %v575
  %727 = vmatprep.subr.bf16.mxu0 0
  %728 = vmatpush1.bf16.msra.mxu0 %v576
  %729 = vmatprep.subr.bf16.mxu0 0
  %730 = vmatpush1.bf16.msra.mxu0 %v577
  %731 = vmatprep.subr.bf16.mxu0 0
  %732 = vmatpush1.bf16.msra.mxu0 %v578
  %733 = vmatprep.subr.bf16.mxu0 0
  %734 = vmatpush1.bf16.msra.mxu0 %v579
  %735 = vmatprep.subr.bf16.mxu0 0
  %736 = vmatpush1.bf16.msra.mxu0 %v580
  %737 = vmatprep.subr.bf16.mxu0 0
  %738 = vmatpush1.bf16.msra.mxu0 %v581
  %739 = vmatprep.subr.bf16.mxu0 0
  %740 = vmatpush1.bf16.msra.mxu0 %v582
  %741 = vmatprep.subr.bf16.mxu0 0
  %742 = vmatpush1.bf16.msra.mxu0 %v583
  %743 = vmatprep.subr.bf16.mxu0 0
  %744 = vmatpush1.bf16.msra.mxu0 %v584
  %745 = vmatprep.mubr.bf16.mxu0 %v246
  %746 = vmatmul.mubr.bf16.gmra.mrb[0].mxu0 %v245
  %v747 = vpop.f32.mrb[0].mxu0
  %v748 = vadd.f32 %v187, %v747
  %v749 = vpop.f32.mrb[0].mxu0
  %v750 = vpop.f32.mrb[0].mxu0
  %v751 = vadd.f32 %v187, %v750
  %v752 = vpop.f32.mrb[0].mxu0
  %753 = vmatprep.mubr.bf16.mxu0 %v255
  %754 = vmatmul.mubr.bf16.gmra.mrb[0].mxu0 %v254
  %v755 = vpop.f32.mrb[0].mxu0
  %v756 = vadd.f32 %v187, %v755
  %v757 = vpop.f32.mrb[0].mxu0
  %v758 = vpop.f32.mrb[0].mxu0
  %v759 = vadd.f32 %v187, %v758
  %v760 = vpop.f32.mrb[0].mxu0
  %761 = vdwg.mxu0
  %762 = vmatprep.subr.bf16.mxu0 0
  %763 = vmatpush1.bf16.msra.mxu0 %v585
  %764 = vmatprep.subr.bf16.mxu0 0
  %765 = vmatpush1.bf16.msra.mxu0 %v586
  %766 = vmatprep.subr.bf16.mxu0 0
  %767 = vmatpush1.bf16.msra.mxu0 %v587
  %768 = vmatprep.subr.bf16.mxu0 0
  %769 = vmatpush1.bf16.msra.mxu0 %v588
  %770 = vmatprep.subr.bf16.mxu0 0
  %771 = vmatpush1.bf16.msra.mxu0 %v589
  %772 = vmatprep.subr.bf16.mxu0 0
  %773 = vmatpush1.bf16.msra.mxu0 %v590
  %774 = vmatprep.subr.bf16.mxu0 0
  %775 = vmatpush1.bf16.msra.mxu0 %v591
  %776 = vmatprep.subr.bf16.mxu0 0
  %777 = vmatpush1.bf16.msra.mxu0 %v592
  %778 = vmatprep.subr.bf16.mxu0 0
  %779 = vmatpush1.bf16.msra.mxu0 %v593
  %780 = vmatprep.subr.bf16.mxu0 0
  %781 = vmatpush1.bf16.msra.mxu0 %v594
  %782 = vmatprep.subr.bf16.mxu0 0
  %783 = vmatpush1.bf16.msra.mxu0 %v595
  %784 = vmatprep.subr.bf16.mxu0 0
  %785 = vmatpush1.bf16.msra.mxu0 %v596
  %786 = vmatprep.subr.bf16.mxu0 0
  %787 = vmatpush1.bf16.msra.mxu0 %v597
  %788 = vmatprep.subr.bf16.mxu0 0
  %789 = vmatpush1.bf16.msra.mxu0 %v598
  %790 = vmatprep.subr.bf16.mxu0 0
  %791 = vmatpush1.bf16.msra.mxu0 %v599
  %792 = vmatprep.subr.bf16.mxu0 0
  %793 = vmatpush1.bf16.msra.mxu0 %v600
  %794 = vmatprep.mubr.bf16.mxu0 %v248
  %795 = vmatmul.mubr.bf16.gmra.mrb[0].mxu0 %v247
  %v796 = vpop.f32.mrb[0].mxu0
  %v797 = vadd.f32 %v748, %v796
  %v798 = vpop.f32.mrb[0].mxu0
  %v799 = vpop.f32.mrb[0].mxu0
  %v800 = vadd.f32 %v751, %v799
  %v801 = vpop.f32.mrb[0].mxu0
  %802 = vmatprep.mubr.bf16.mxu0 %v257
  %803 = vmatmul.mubr.bf16.gmra.mrb[0].mxu0 %v256
  %v804 = vpop.f32.mrb[0].mxu0
  %v805 = vadd.f32 %v756, %v804
  %v806 = vpop.f32.mrb[0].mxu0
  %v807 = vpop.f32.mrb[0].mxu0
  %v808 = vadd.f32 %v759, %v807
  %v809 = vpop.f32.mrb[0].mxu0
  %810 = vdwg.mxu0
  %811 = vmatprep.subr.bf16.mxu0 0
  %812 = vmatpush1.bf16.msra.mxu0 %v601
  %813 = vmatprep.subr.bf16.mxu0 0
  %814 = vmatpush1.bf16.msra.mxu0 %v602
  %815 = vmatprep.subr.bf16.mxu0 0
  %816 = vmatpush1.bf16.msra.mxu0 %v603
  %817 = vmatprep.subr.bf16.mxu0 0
  %818 = vmatpush1.bf16.msra.mxu0 %v604
  %819 = vmatprep.subr.bf16.mxu0 0
  %820 = vmatpush1.bf16.msra.mxu0 %v605
  %821 = vmatprep.subr.bf16.mxu0 0
  %822 = vmatpush1.bf16.msra.mxu0 %v606
  %823 = vmatprep.subr.bf16.mxu0 0
  %824 = vmatpush1.bf16.msra.mxu0 %v607
  %825 = vmatprep.subr.bf16.mxu0 0
  %826 = vmatpush1.bf16.msra.mxu0 %v608
  %827 = vmatprep.subr.bf16.mxu0 0
  %828 = vmatpush1.bf16.msra.mxu0 %v609
  %829 = vmatprep.subr.bf16.mxu0 0
  %830 = vmatpush1.bf16.msra.mxu0 %v610
  %831 = vmatprep.subr.bf16.mxu0 0
  %832 = vmatpush1.bf16.msra.mxu0 %v611
  %833 = vmatprep.subr.bf16.mxu0 0
  %834 = vmatpush1.bf16.msra.mxu0 %v612
  %835 = vmatprep.subr.bf16.mxu0 0
  %836 = vmatpush1.bf16.msra.mxu0 %v613
  %837 = vmatprep.subr.bf16.mxu0 0
  %838 = vmatpush1.bf16.msra.mxu0 %v614
  %839 = vmatprep.subr.bf16.mxu0 0
  %840 = vmatpush1.bf16.msra.mxu0 %v615
  %841 = vmatprep.subr.bf16.mxu0 0
  %842 = vmatpush1.bf16.msra.mxu0 %v616
  %843 = vmatprep.mubr.bf16.mxu0 %v250
  %844 = vmatmul.mubr.bf16.gmra.mrb[0].mxu0 %v249
  %v845 = vpop.f32.mrb[0].mxu0
  %v846 = vadd.f32 %v797, %v845
  %v847 = vpop.f32.mrb[0].mxu0
  %v848 = vpop.f32.mrb[0].mxu0
  %v849 = vadd.f32 %v800, %v848
  %v850 = vpop.f32.mrb[0].mxu0
  %851 = vmatprep.mubr.bf16.mxu0 %v259
  %852 = vmatmul.mubr.bf16.gmra.mrb[0].mxu0 %v258
  %v853 = vpop.f32.mrb[0].mxu0
  %v854 = vadd.f32 %v805, %v853
  %v855 = vpop.f32.mrb[0].mxu0
  %v856 = vpop.f32.mrb[0].mxu0
  %v857 = vadd.f32 %v808, %v856
  %v858 = vpop.f32.mrb[0].mxu0
  %859 = vdwg.mxu0
  %860 = vmatprep.subr.bf16.mxu0 0
  %861 = vmatpush1.bf16.msra.mxu0 %v617
  %862 = vmatprep.subr.bf16.mxu0 0
  %863 = vmatpush1.bf16.msra.mxu0 %v618
  %864 = vmatprep.subr.bf16.mxu0 0
  %865 = vmatpush1.bf16.msra.mxu0 %v619
  %866 = vmatprep.subr.bf16.mxu0 0
  %867 = vmatpush1.bf16.msra.mxu0 %v620
  %868 = vmatprep.subr.bf16.mxu0 0
  %869 = vmatpush1.bf16.msra.mxu0 %v621
  %870 = vmatprep.subr.bf16.mxu0 0
  %871 = vmatpush1.bf16.msra.mxu0 %v622
  %872 = vmatprep.subr.bf16.mxu0 0
  %873 = vmatpush1.bf16.msra.mxu0 %v623
  %874 = vmatprep.subr.bf16.mxu0 0
  %875 = vmatpush1.bf16.msra.mxu0 %v624
  %876 = vmatprep.subr.bf16.mxu0 0
  %877 = vmatpush1.bf16.msra.mxu0 %v625
  %878 = vmatprep.subr.bf16.mxu0 0
  %879 = vmatpush1.bf16.msra.mxu0 %v626
  %880 = vmatprep.subr.bf16.mxu0 0
  %881 = vmatpush1.bf16.msra.mxu0 %v627
  %882 = vmatprep.subr.bf16.mxu0 0
  %883 = vmatpush1.bf16.msra.mxu0 %v628
  %884 = vmatprep.subr.bf16.mxu0 0
  %885 = vmatpush1.bf16.msra.mxu0 %v629
  %886 = vmatprep.subr.bf16.mxu0 0
  %887 = vmatpush1.bf16.msra.mxu0 %v630
  %888 = vmatprep.subr.bf16.mxu0 0
  %889 = vmatpush1.bf16.msra.mxu0 %v631
  %890 = vmatprep.subr.bf16.mxu0 0
  %891 = vmatpush1.bf16.msra.mxu0 %v632
  %892 = vmatprep.mubr.bf16.mxu0 %v252
  %893 = vmatmul.mubr.bf16.gmra.mrb[0].mxu0 %v251
  %v894 = vpop.f32.mrb[0].mxu0
  %v895 = vadd.f32 %v846, %v894
  %v896 = vpop.f32.mrb[0].mxu0
  %v897 = vpop.f32.mrb[0].mxu0
  %v898 = vadd.f32 %v849, %v897
  %v899 = vpop.f32.mrb[0].mxu0
  %900 = vmatprep.mubr.bf16.mxu0 %v261
  %901 = vmatmul.mubr.bf16.gmra.mrb[0].mxu0 %v260
  %v902 = vpop.f32.mrb[0].mxu0
  %v903 = vadd.f32 %v854, %v902
  %v904 = vpop.f32.mrb[0].mxu0
  %v905 = vpop.f32.mrb[0].mxu0
  %v906 = vadd.f32 %v857, %v905
  %v907 = vpop.f32.mrb[0].mxu0
  %908 = vdwg.mxu0
  %909 = vmatprep.subr.bf16.mxu0 0
  %910 = vmatpush1.bf16.msra.mxu0 %v633
  %911 = vmatprep.subr.bf16.mxu0 0
  %912 = vmatpush1.bf16.msra.mxu0 %v634
  %913 = vmatprep.subr.bf16.mxu0 0
  %914 = vmatpush1.bf16.msra.mxu0 %v635
  %915 = vmatprep.subr.bf16.mxu0 0
  %916 = vmatpush1.bf16.msra.mxu0 %v636
  %917 = vmatprep.subr.bf16.mxu0 0
  %918 = vmatpush1.bf16.msra.mxu0 %v637
  %919 = vmatprep.subr.bf16.mxu0 0
  %920 = vmatpush1.bf16.msra.mxu0 %v638
  %921 = vmatprep.subr.bf16.mxu0 0
  %922 = vmatpush1.bf16.msra.mxu0 %v639
  %923 = vmatprep.subr.bf16.mxu0 0
  %924 = vmatpush1.bf16.msra.mxu0 %v640
  %925 = vmatprep.subr.bf16.mxu0 0
  %926 = vmatpush1.bf16.msra.mxu0 0
  %927 = vmatprep.subr.bf16.mxu0 0
  %928 = vmatpush1.bf16.msra.mxu0 0
  %929 = vmatprep.subr.bf16.mxu0 0
  %930 = vmatpush1.bf16.msra.mxu0 0
  %931 = vmatprep.subr.bf16.mxu0 0
  %932 = vmatpush1.bf16.msra.mxu0 0
  %933 = vmatprep.subr.bf16.mxu0 0
  %934 = vmatpush1.bf16.msra.mxu0 0
  %935 = vmatprep.subr.bf16.mxu0 0
  %936 = vmatpush1.bf16.msra.mxu0 0
  %937 = vmatprep.subr.bf16.mxu0 0
  %938 = vmatpush1.bf16.msra.mxu0 0
  %939 = vmatprep.subr.bf16.mxu0 0
  %940 = vmatpush1.bf16.msra.mxu0 0
  %941 = vmatprep.mubr.bf16.mxu0 0
  %942 = vmatmul.mubr.bf16.gmra.mrb[0].mxu0 %v253
  %v943 = vpop.f32.mrb[0].mxu0
  %v944 = vadd.f32 %v895, %v943
  %v945 = vpop.f32.mrb[0].mxu0
  %v946 = vpop.f32.mrb[0].mxu0
  %v947 = vadd.f32 %v898, %v946
  %v948 = vpop.f32.mrb[0].mxu0
  %949 = vmatprep.mubr.bf16.mxu0 0
  %950 = vmatmul.mubr.bf16.gmra.mrb[0].mxu0 %v262
  %v951 = vpop.f32.mrb[0].mxu0
  %v952 = vadd.f32 %v903, %v951
  %v953 = vpop.f32.mrb[0].mxu0
  %v954 = vpop.f32.mrb[0].mxu0
  %v955 = vadd.f32 %v906, %v954
  %v956 = vpop.f32.mrb[0].mxu0
  %957 = vdwg.mxu0
  %v958 = vld [vmem:[%s3] sm:$0xff]
  %v959 = vld [vmem:[%s3 + $0x8] sm:$0xff]
  %v960 = vld [vmem:[%s3 + $0x10] sm:$0xff]
  %v961 = vld [vmem:[%s3 + $0x18] sm:$0xff]
  %v962 = vadd.f32 %v944, %v958
  %v963 = vadd.f32 %v947, %v959
  %v964 = vadd.f32 %v952, %v960
  %v965 = vadd.f32 %v955, %v961
  %v966 = vmax.f32 %v962, 0.0
  %v967 = vmax.f32 %v963, 0.0
  %v968 = vmax.f32 %v964, 0.0
  %v969 = vmax.f32 %v965, 0.0
  %v970 = vpack.c.bf16 %v967, %v966
  %v971 = vpack.c.bf16 %v969, %v968
  %v974 = vunpack.c.l.b16 %v970
  %v975 = vunpack.c.h.b16 %v970
  %v976 = vunpack.c.l.b16 %v971
  %v977 = vunpack.c.h.b16 %v971
  %v978 = vpack.c.b16 %v974, %v974
  %v979 = vpack.c.b16 %v975, %v975
  %v980 = vpack.c.b16 %v976, %v976
  %v981 = vpack.c.b16 %v977, %v977
  %986 = vst [vmem:[%s4] sm:$0xf] %v978
  %987 = vst [vmem:[%s4 + $0x4] sm:$0xf] %v979
  %988 = vst [vmem:[%s4 + $0x8] sm:$0xf] %v980
  %989 = vst [vmem:[%s4 + $0xc] sm:$0xf] %v981
  // Predicated region
  $region18: #{resnet_feature_extractor.9} parent=0 // pred_check
    _
  $region19: #{resnet_feature_extractor.9} parent=0 // pred_check_branch
    %991 = sbr.rel (0) target = $region21
  $region20: #{resnet_feature_extractor.9} parent=0 // pred_region
    _
  $region21: #{resnet_feature_extractor.9} parent=0 // pred_fallthru
    _
  // Predicated region
  $region22: #{resnet_feature_extractor.9} parent=0 // pred_check
    _
  $region23: #{resnet_feature_extractor.9} parent=0 // pred_check_branch
    %993 = sbr.rel (0) target = $region25
  $region24: #{resnet_feature_extractor.9} parent=0 // pred_region
    _
  $region25: #{resnet_feature_extractor.9} parent=0 // pred_fallthru
    _

// kernel: resnet_feature_extractor.10
$region0: #{resnet_feature_extractor.10}
  #allocation0 [shape = 'u32[]', space=smem, size = 0x4, offset = 0x4, fixed_abs, tag = 'smem constant byte address 0x4 - core index']
  #allocation1 [shape = 'u32[144,128]{1,0:T(1,128)}', space=vmem, size = 0x12000, scoped, tag = 'internal scratch']
  %s0 = inlined_call_operand.vmem [shape: bf16[8,1152], index: 0, kind: input, shape index: {}]
  %s1 = inlined_call_operand.vmem [shape: bf16[1152,256], index: 1, kind: input, shape index: {}]
  %s2 = inlined_call_operand.vmem [shape: f32[1,256], index: 2, kind: input, shape index: {}]
  %s3 = inlined_call_operand.vmem [shape: bf16[128,256], index: 3, kind: input, shape index: {}]
  %s4 = inlined_call_operand.vmem [shape: f32[1,256], index: 4, kind: input, shape index: {}]
  %s5 = inlined_call_operand.vmem [shape: bf16[8,256], index: 5, kind: output, shape index: {0}]
  %s6 = inlined_call_operand.vmem [shape: f32[8,256], index: 6, kind: output, shape index: {1}]
  %7 = xla_tuple %s5, %s6
  %s8 = sld [smem:[#allocation0]]
  $region38: #{resnet_feature_extractor.10} parent=0
    _
  %s10 = ssub.s32 1, %s8
  %s11 = scalar_select 0, %s10, %s8
  // Predicated region
  $region2: #{resnet_feature_extractor.10} parent=0 // pred_check
    _
  $region3: #{resnet_feature_extractor.10} parent=0 // pred_check_branch
    %13 = sbr.rel (0) target = $region5
  $region4: #{resnet_feature_extractor.10} parent=0 // pred_region
    _
  $region5: #{resnet_feature_extractor.10} parent=0 // pred_fallthru
    _
  // Predicated region
  $region6: #{resnet_feature_extractor.10} parent=0 // pred_check
    _
  $region7: #{resnet_feature_extractor.10} parent=0 // pred_check_branch
    %15 = sbr.rel (0) target = $region9
  $region8: #{resnet_feature_extractor.10} parent=0 // pred_region
    _
  $region9: #{resnet_feature_extractor.10} parent=0 // pred_fallthru
    _
  // Predicated region
  $region10: #{resnet_feature_extractor.10} parent=0 // pred_check
    _
  $region11: #{resnet_feature_extractor.10} parent=0 // pred_check_branch
    %17 = sbr.rel (0) target = $region13
  $region12: #{resnet_feature_extractor.10} parent=0 // pred_region
    _
  $region13: #{resnet_feature_extractor.10} parent=0 // pred_fallthru
    _
  // Predicated region
  $region14: #{resnet_feature_extractor.10} parent=0 // pred_check
    _
  $region15: #{resnet_feature_extractor.10} parent=0 // pred_check_branch
    %19 = sbr.rel (0) target = $region17
  $region16: #{resnet_feature_extractor.10} parent=0 // pred_region
    _
  $region17: #{resnet_feature_extractor.10} parent=0 // pred_fallthru
    _
  // Predicated region
  $region18: #{resnet_feature_extractor.10} parent=0 // pred_check
    _
  $region19: #{resnet_feature_extractor.10} parent=0 // pred_check_branch
    %21 = sbr.rel (0) target = $region21
  $region20: #{resnet_feature_extractor.10} parent=0 // pred_region
    _
  $region21: #{resnet_feature_extractor.10} parent=0 // pred_fallthru
    _
  %v23 = vld [vmem:[%s0] sm:$0xff]
  %v24 = vld [vmem:[%s0 + $0x8] sm:$0xff]
  %v25 = vld [vmem:[%s0 + $0x10] sm:$0xff]
  %v26 = vld [vmem:[%s0 + $0x18] sm:$0xff]
  %v27 = vld [vmem:[%s0 + $0x20] sm:$0xf]
  %v28 = vld [vmem:[%s1] sm:$0xff]
  %v29 = vld [vmem:[%s1 + $0x8] sm:$0xff]
  %v30 = vld [vmem:[%s1 + $0x10] sm:$0xff]
  %v31 = vld [vmem:[%s1 + $0x18] sm:$0xff]
  %v32 = vld [vmem:[%s1 + $0x20] sm:$0xff]
  %v33 = vld [vmem:[%s1 + $0x28] sm:$0xff]
  %v34 = vld [vmem:[%s1 + $0x30] sm:$0xff]
  %v35 = vld [vmem:[%s1 + $0x38] sm:$0xff]
  %v36 = vld [vmem:[%s1 + $0x40] sm:$0xff]
  %v37 = vld [vmem:[%s1 + $0x48] sm:$0xff]
  %v38 = vld [vmem:[%s1 + $0x50] sm:$0xff]
  %v39 = vld [vmem:[%s1 + $0x58] sm:$0xff]
  %v40 = vld [vmem:[%s1 + $0x60] sm:$0xff]
  %v41 = vld [vmem:[%s1 + $0x68] sm:$0xff]
  %v42 = vld [vmem:[%s1 + $0x70] sm:$0xff]
  %v43 = vld [vmem:[%s1 + $0x78] sm:$0xff]
  %v44 = vld [vmem:[%s1 + $0x80] sm:$0xff]
  %v45 = vld [vmem:[%s1 + $0x88] sm:$0xff]
  %v46 = vld [vmem:[%s1 + $0x90] sm:$0xff]
  %v47 = vld [vmem:[%s1 + $0x98] sm:$0xff]
  %v48 = vld [vmem:[%s1 + $0xa0] sm:$0xff]
  %v49 = vld [vmem:[%s1 + $0xa8] sm:$0xff]
  %v50 = vld [vmem:[%s1 + $0xb0] sm:$0xff]
  %v51 = vld [vmem:[%s1 + $0xb8] sm:$0xff]
  %v52 = vld [vmem:[%s1 + $0xc0] sm:$0xff]
  %v53 = vld [vmem:[%s1 + $0xc8] sm:$0xff]
  %v54 = vld [vmem:[%s1 + $0xd0] sm:$0xff]
  %v55 = vld [vmem:[%s1 + $0xd8] sm:$0xff]
  %v56 = vld [vmem:[%s1 + $0xe0] sm:$0xff]
  %v57 = vld [vmem:[%s1 + $0xe8] sm:$0xff]
  %v58 = vld [vmem:[%s1 + $0xf0] sm:$0xff]
  %v59 = vld [vmem:[%s1 + $0xf8] sm:$0xff]
  %v60 = vld [vmem:[%s1 + $0x100] sm:$0xff]
  %v61 = vld [vmem:[%s1 + $0x108] sm:$0xff]
  %v62 = vld [vmem:[%s1 + $0x110] sm:$0xff]
  %v63 = vld [vmem:[%s1 + $0x118] sm:$0xff]
  %v64 = vld [vmem:[%s1 + $0x120] sm:$0xff]
  %v65 = vld [vmem:[%s1 + $0x128] sm:$0xff]
  %v66 = vld [vmem:[%s1 + $0x130] sm:$0xff]
  %v67 = vld [vmem:[%s1 + $0x138] sm:$0xff]
  %v68 = vld [vmem:[%s1 + $0x140] sm:$0xff]
  %v69 = vld [vmem:[%s1 + $0x148] sm:$0xff]
  %v70 = vld [vmem:[%s1 + $0x150] sm:$0xff]
  %v71 = vld [vmem:[%s1 + $0x158] sm:$0xff]
  %v72 = vld [vmem:[%s1 + $0x160] sm:$0xff]
  %v73 = vld [vmem:[%s1 + $0x168] sm:$0xff]
  %v74 = vld [vmem:[%s1 + $0x170] sm:$0xff]
  %v75 = vld [vmem:[%s1 + $0x178] sm:$0xff]
  %v76 = vld [vmem:[%s1 + $0x180] sm:$0xff]
  %v77 = vld [vmem:[%s1 + $0x188] sm:$0xff]
  %v78 = vld [vmem:[%s1 + $0x190] sm:$0xff]
  %v79 = vld [vmem:[%s1 + $0x198] sm:$0xff]
  %v80 = vld [vmem:[%s1 + $0x1a0] sm:$0xff]
  %v81 = vld [vmem:[%s1 + $0x1a8] sm:$0xff]
  %v82 = vld [vmem:[%s1 + $0x1b0] sm:$0xff]
  %v83 = vld [vmem:[%s1 + $0x1b8] sm:$0xff]
  %v84 = vld [vmem:[%s1 + $0x1c0] sm:$0xff]
  %v85 = vld [vmem:[%s1 + $0x1c8] sm:$0xff]
  %v86 = vld [vmem:[%s1 + $0x1d0] sm:$0xff]
  %v87 = vld [vmem:[%s1 + $0x1d8] sm:$0xff]
  %v88 = vld [vmem:[%s1 + $0x1e0] sm:$0xff]
  %v89 = vld [vmem:[%s1 + $0x1e8] sm:$0xff]
  %v90 = vld [vmem:[%s1 + $0x1f0] sm:$0xff]
  %v91 = vld [vmem:[%s1 + $0x1f8] sm:$0xff]
  %v92 = vld [vmem:[%s1 + $0x200] sm:$0xff]
  %v93 = vld [vmem:[%s1 + $0x208] sm:$0xff]
  %v94 = vld [vmem:[%s1 + $0x210] sm:$0xff]
  %v95 = vld [vmem:[%s1 + $0x218] sm:$0xff]
  %v96 = vld [vmem:[%s1 + $0x220] sm:$0xff]
  %v97 = vld [vmem:[%s1 + $0x228] sm:$0xff]
  %v98 = vld [vmem:[%s1 + $0x230] sm:$0xff]
  %v99 = vld [vmem:[%s1 + $0x238] sm:$0xff]
  %v100 = vld [vmem:[%s1 + $0x240] sm:$0xff]
  %v101 = vld [vmem:[%s1 + $0x248] sm:$0xff]
  %v102 = vld [vmem:[%s1 + $0x250] sm:$0xff]
  %v103 = vld [vmem:[%s1 + $0x258] sm:$0xff]
  %v104 = vld [vmem:[%s1 + $0x260] sm:$0xff]
  %v105 = vld [vmem:[%s1 + $0x268] sm:$0xff]
  %v106 = vld [vmem:[%s1 + $0x270] sm:$0xff]
  %v107 = vld [vmem:[%s1 + $0x278] sm:$0xff]
  %v108 = vld [vmem:[%s1 + $0x280] sm:$0xff]
  %v109 = vld [vmem:[%s1 + $0x288] sm:$0xff]
  %v110 = vld [vmem:[%s1 + $0x290] sm:$0xff]
  %v111 = vld [vmem:[%s1 + $0x298] sm:$0xff]
  %v112 = vld [vmem:[%s1 + $0x2a0] sm:$0xff]
  %v113 = vld [vmem:[%s1 + $0x2a8] sm:$0xff]
  %v114 = vld [vmem:[%s1 + $0x2b0] sm:$0xff]
  %v115 = vld [vmem:[%s1 + $0x2b8] sm:$0xff]
  %v116 = vld [vmem:[%s1 + $0x2c0] sm:$0xff]
  %v117 = vld [vmem:[%s1 + $0x2c8] sm:$0xff]
  %v118 = vld [vmem:[%s1 + $0x2d0] sm:$0xff]
  %v119 = vld [vmem:[%s1 + $0x2d8] sm:$0xff]
  %v120 = vld [vmem:[%s1 + $0x2e0] sm:$0xff]
  %v121 = vld [vmem:[%s1 + $0x2e8] sm:$0xff]
  %v122 = vld [vmem:[%s1 + $0x2f0] sm:$0xff]
  %v123 = vld [vmem:[%s1 + $0x2f8] sm:$0xff]
  %v124 = vld [vmem:[%s1 + $0x300] sm:$0xff]
  %v125 = vld [vmem:[%s1 + $0x308] sm:$0xff]
  %v126 = vld [vmem:[%s1 + $0x310] sm:$0xff]
  %v127 = vld [vmem:[%s1 + $0x318] sm:$0xff]
  %v128 = vld [vmem:[%s1 + $0x320] sm:$0xff]
  %v129 = vld [vmem:[%s1 + $0x328] sm:$0xff]
  %v130 = vld [vmem:[%s1 + $0x330] sm:$0xff]
  %v131 = vld [vmem:[%s1 + $0x338] sm:$0xff]
  %v132 = vld [vmem:[%s1 + $0x340] sm:$0xff]
  %v133 = vld [vmem:[%s1 + $0x348] sm:$0xff]
  %v134 = vld [vmem:[%s1 + $0x350] sm:$0xff]
  %v135 = vld [vmem:[%s1 + $0x358] sm:$0xff]
  %v136 = vld [vmem:[%s1 + $0x360] sm:$0xff]
  %v137 = vld [vmem:[%s1 + $0x368] sm:$0xff]
  %v138 = vld [vmem:[%s1 + $0x370] sm:$0xff]
  %v139 = vld [vmem:[%s1 + $0x378] sm:$0xff]
  %v140 = vld [vmem:[%s1 + $0x380] sm:$0xff]
  %v141 = vld [vmem:[%s1 + $0x388] sm:$0xff]
  %v142 = vld [vmem:[%s1 + $0x390] sm:$0xff]
  %v143 = vld [vmem:[%s1 + $0x398] sm:$0xff]
  %v144 = vld [vmem:[%s1 + $0x3a0] sm:$0xff]
  %v145 = vld [vmem:[%s1 + $0x3a8] sm:$0xff]
  %v146 = vld [vmem:[%s1 + $0x3b0] sm:$0xff]
  %v147 = vld [vmem:[%s1 + $0x3b8] sm:$0xff]
  %v148 = vld [vmem:[%s1 + $0x3c0] sm:$0xff]
  %v149 = vld [vmem:[%s1 + $0x3c8] sm:$0xff]
  %v150 = vld [vmem:[%s1 + $0x3d0] sm:$0xff]
  %v151 = vld [vmem:[%s1 + $0x3d8] sm:$0xff]
  %v152 = vld [vmem:[%s1 + $0x3e0] sm:$0xff]
  %v153 = vld [vmem:[%s1 + $0x3e8] sm:$0xff]
  %v154 = vld [vmem:[%s1 + $0x3f0] sm:$0xff]
  %v155 = vld [vmem:[%s1 + $0x3f8] sm:$0xff]
  %v156 = vld [vmem:[%s1 + $0x400] sm:$0xff]
  %v157 = vld [vmem:[%s1 + $0x408] sm:$0xff]
  %v158 = vld [vmem:[%s1 + $0x410] sm:$0xff]
  %v159 = vld [vmem:[%s1 + $0x418] sm:$0xff]
  %v160 = vld [vmem:[%s1 + $0x420] sm:$0xff]
  %v161 = vld [vmem:[%s1 + $0x428] sm:$0xff]
  %v162 = vld [vmem:[%s1 + $0x430] sm:$0xff]
  %v163 = vld [vmem:[%s1 + $0x438] sm:$0xff]
  %v164 = vld [vmem:[%s1 + $0x440] sm:$0xff]
  %v165 = vld [vmem:[%s1 + $0x448] sm:$0xff]
  %v166 = vld [vmem:[%s1 + $0x450] sm:$0xff]
  %v167 = vld [vmem:[%s1 + $0x458] sm:$0xff]
  %v168 = vld [vmem:[%s1 + $0x460] sm:$0xff]
  %v169 = vld [vmem:[%s1 + $0x468] sm:$0xff]
  %v170 = vld [vmem:[%s1 + $0x470] sm:$0xff]
  %v171 = vld [vmem:[%s1 + $0x478] sm:$0xff]
  %v172 = vld [vmem:[%s2] sm:$0x3]
  %v174 = vlaneseq
  %v175 = vshrl.u32 %v174, 7
  %v176 = vsub.s32 0, %v175
  %v177 = vrot.slane %v172, %v176
  %v178 = vlaneseq
  %v179 = vshrl.u32 %v178, 7
  %v180 = vsub.s32 1, %v179
  %v181 = vrot.slane %v172, %v180
  %v189 = vunpack.c.l.b16 %v23
  %v190 = vunpack.c.h.b16 %v23
  %v191 = vunpack.c.l.b16 %v24
  %v192 = vunpack.c.h.b16 %v24
  %v193 = vunpack.c.l.b16 %v25
  %v194 = vunpack.c.h.b16 %v25
  %v195 = vunpack.c.l.b16 %v26
  %v196 = vunpack.c.h.b16 %v26
  %v197 = vunpack.c.l.b16 %v27
  %v198 = vpack.c.b16 %v189, %v189
  %v199 = vpack.c.b16 %v190, %v190
  %v200 = vpack.c.b16 %v191, %v191
  %v201 = vpack.c.b16 %v192, %v192
  %v202 = vpack.c.b16 %v193, %v193
  %v203 = vpack.c.b16 %v194, %v194
  %v204 = vpack.c.b16 %v195, %v195
  %v205 = vpack.c.b16 %v196, %v196
  %v206 = vpack.c.b16 %v197, %v197
  %v360 = vunpack.c.l.b16 %v28
  %v361 = vunpack.c.h.b16 %v28
  %v362 = vunpack.c.l.b16 %v29
  %v363 = vunpack.c.h.b16 %v29
  %v364 = vunpack.c.l.b16 %v30
  %v365 = vunpack.c.h.b16 %v30
  %v366 = vunpack.c.l.b16 %v31
  %v367 = vunpack.c.h.b16 %v31
  %v368 = vunpack.c.l.b16 %v32
  %v369 = vunpack.c.h.b16 %v32
  %v370 = vunpack.c.l.b16 %v33
  %v371 = vunpack.c.h.b16 %v33
  %v372 = vunpack.c.l.b16 %v34
  %v373 = vunpack.c.h.b16 %v34
  %v374 = vunpack.c.l.b16 %v35
  %v375 = vunpack.c.h.b16 %v35
  %v376 = vunpack.c.l.b16 %v36
  %v377 = vunpack.c.h.b16 %v36
  %v378 = vunpack.c.l.b16 %v37
  %v379 = vunpack.c.h.b16 %v37
  %v380 = vunpack.c.l.b16 %v38
  %v381 = vunpack.c.h.b16 %v38
  %v382 = vunpack.c.l.b16 %v39
  %v383 = vunpack.c.h.b16 %v39
  %v384 = vunpack.c.l.b16 %v40
  %v385 = vunpack.c.h.b16 %v40
  %v386 = vunpack.c.l.b16 %v41
  %v387 = vunpack.c.h.b16 %v41
  %v388 = vunpack.c.l.b16 %v42
  %v389 = vunpack.c.h.b16 %v42
  %v390 = vunpack.c.l.b16 %v43
  %v391 = vunpack.c.h.b16 %v43
  %v392 = vunpack.c.l.b16 %v44
  %v393 = vunpack.c.h.b16 %v44
  %v394 = vunpack.c.l.b16 %v45
  %v395 = vunpack.c.h.b16 %v45
  %v396 = vunpack.c.l.b16 %v46
  %v397 = vunpack.c.h.b16 %v46
  %v398 = vunpack.c.l.b16 %v47
  %v399 = vunpack.c.h.b16 %v47
  %v400 = vunpack.c.l.b16 %v48
  %v401 = vunpack.c.h.b16 %v48
  %v402 = vunpack.c.l.b16 %v49
  %v403 = vunpack.c.h.b16 %v49
  %v404 = vunpack.c.l.b16 %v50
  %v405 = vunpack.c.h.b16 %v50
  %v406 = vunpack.c.l.b16 %v51
  %v407 = vunpack.c.h.b16 %v51
  %v408 = vunpack.c.l.b16 %v52
  %v409 = vunpack.c.h.b16 %v52
  %v410 = vunpack.c.l.b16 %v53
  %v411 = vunpack.c.h.b16 %v53
  %v412 = vunpack.c.l.b16 %v54
  %v413 = vunpack.c.h.b16 %v54
  %v414 = vunpack.c.l.b16 %v55
  %v415 = vunpack.c.h.b16 %v55
  %v416 = vunpack.c.l.b16 %v56
  %v417 = vunpack.c.h.b16 %v56
  %v418 = vunpack.c.l.b16 %v57
  %v419 = vunpack.c.h.b16 %v57
  %v420 = vunpack.c.l.b16 %v58
  %v421 = vunpack.c.h.b16 %v58
  %v422 = vunpack.c.l.b16 %v59
  %v423 = vunpack.c.h.b16 %v59
  %v424 = vunpack.c.l.b16 %v60
  %v425 = vunpack.c.h.b16 %v60
  %v426 = vunpack.c.l.b16 %v61
  %v427 = vunpack.c.h.b16 %v61
  %v428 = vunpack.c.l.b16 %v62
  %v429 = vunpack.c.h.b16 %v62
  %v430 = vunpack.c.l.b16 %v63
  %v431 = vunpack.c.h.b16 %v63
  %v432 = vunpack.c.l.b16 %v64
  %v433 = vunpack.c.h.b16 %v64
  %v434 = vunpack.c.l.b16 %v65
  %v435 = vunpack.c.h.b16 %v65
  %v436 = vunpack.c.l.b16 %v66
  %v437 = vunpack.c.h.b16 %v66
  %v438 = vunpack.c.l.b16 %v67
  %v439 = vunpack.c.h.b16 %v67
  %v440 = vunpack.c.l.b16 %v68
  %v441 = vunpack.c.h.b16 %v68
  %v442 = vunpack.c.l.b16 %v69
  %v443 = vunpack.c.h.b16 %v69
  %v444 = vunpack.c.l.b16 %v70
  %v445 = vunpack.c.h.b16 %v70
  %v446 = vunpack.c.l.b16 %v71
  %v447 = vunpack.c.h.b16 %v71
  %v448 = vunpack.c.l.b16 %v72
  %v449 = vunpack.c.h.b16 %v72
  %v450 = vunpack.c.l.b16 %v73
  %v451 = vunpack.c.h.b16 %v73
  %v452 = vunpack.c.l.b16 %v74
  %v453 = vunpack.c.h.b16 %v74
  %v454 = vunpack.c.l.b16 %v75
  %v455 = vunpack.c.h.b16 %v75
  %v456 = vunpack.c.l.b16 %v76
  %v457 = vunpack.c.h.b16 %v76
  %v458 = vunpack.c.l.b16 %v77
  %v459 = vunpack.c.h.b16 %v77
  %v460 = vunpack.c.l.b16 %v78
  %v461 = vunpack.c.h.b16 %v78
  %v462 = vunpack.c.l.b16 %v79
  %v463 = vunpack.c.h.b16 %v79
  %v464 = vunpack.c.l.b16 %v80
  %v465 = vunpack.c.h.b16 %v80
  %v466 = vunpack.c.l.b16 %v81
  %v467 = vunpack.c.h.b16 %v81
  %v468 = vunpack.c.l.b16 %v82
  %v469 = vunpack.c.h.b16 %v82
  %v470 = vunpack.c.l.b16 %v83
  %v471 = vunpack.c.h.b16 %v83
  %v472 = vunpack.c.l.b16 %v84
  %v473 = vunpack.c.h.b16 %v84
  %v474 = vunpack.c.l.b16 %v85
  %v475 = vunpack.c.h.b16 %v85
  %v476 = vunpack.c.l.b16 %v86
  %v477 = vunpack.c.h.b16 %v86
  %v478 = vunpack.c.l.b16 %v87
  %v479 = vunpack.c.h.b16 %v87
  %v480 = vunpack.c.l.b16 %v88
  %v481 = vunpack.c.h.b16 %v88
  %v482 = vunpack.c.l.b16 %v89
  %v483 = vunpack.c.h.b16 %v89
  %v484 = vunpack.c.l.b16 %v90
  %v485 = vunpack.c.h.b16 %v90
  %v486 = vunpack.c.l.b16 %v91
  %v487 = vunpack.c.h.b16 %v91
  %v488 = vunpack.c.l.b16 %v92
  %v489 = vunpack.c.h.b16 %v92
  %v490 = vunpack.c.l.b16 %v93
  %v491 = vunpack.c.h.b16 %v93
  %v492 = vunpack.c.l.b16 %v94
  %v493 = vunpack.c.h.b16 %v94
  %v494 = vunpack.c.l.b16 %v95
  %v495 = vunpack.c.h.b16 %v95
  %v496 = vunpack.c.l.b16 %v96
  %v497 = vunpack.c.h.b16 %v96
  %v498 = vunpack.c.l.b16 %v97
  %v499 = vunpack.c.h.b16 %v97
  %v500 = vunpack.c.l.b16 %v98
  %v501 = vunpack.c.h.b16 %v98
  %v502 = vunpack.c.l.b16 %v99
  %v503 = vunpack.c.h.b16 %v99
  %v504 = vunpack.c.l.b16 %v100
  %v505 = vunpack.c.h.b16 %v100
  %v506 = vunpack.c.l.b16 %v101
  %v507 = vunpack.c.h.b16 %v101
  %v508 = vunpack.c.l.b16 %v102
  %v509 = vunpack.c.h.b16 %v102
  %v510 = vunpack.c.l.b16 %v103
  %v511 = vunpack.c.h.b16 %v103
  %v512 = vunpack.c.l.b16 %v104
  %v513 = vunpack.c.h.b16 %v104
  %v514 = vunpack.c.l.b16 %v105
  %v515 = vunpack.c.h.b16 %v105
  %v516 = vunpack.c.l.b16 %v106
  %v517 = vunpack.c.h.b16 %v106
  %v518 = vunpack.c.l.b16 %v107
  %v519 = vunpack.c.h.b16 %v107
  %v520 = vunpack.c.l.b16 %v108
  %v521 = vunpack.c.h.b16 %v108
  %v522 = vunpack.c.l.b16 %v109
  %v523 = vunpack.c.h.b16 %v109
  %v524 = vunpack.c.l.b16 %v110
  %v525 = vunpack.c.h.b16 %v110
  %v526 = vunpack.c.l.b16 %v111
  %v527 = vunpack.c.h.b16 %v111
  %v528 = vunpack.c.l.b16 %v112
  %v529 = vunpack.c.h.b16 %v112
  %v530 = vunpack.c.l.b16 %v113
  %v531 = vunpack.c.h.b16 %v113
  %v532 = vunpack.c.l.b16 %v114
  %v533 = vunpack.c.h.b16 %v114
  %v534 = vunpack.c.l.b16 %v115
  %v535 = vunpack.c.h.b16 %v115
  %v536 = vunpack.c.l.b16 %v116
  %v537 = vunpack.c.h.b16 %v116
  %v538 = vunpack.c.l.b16 %v117
  %v539 = vunpack.c.h.b16 %v117
  %v540 = vunpack.c.l.b16 %v118
  %v541 = vunpack.c.h.b16 %v118
  %v542 = vunpack.c.l.b16 %v119
  %v543 = vunpack.c.h.b16 %v119
  %v544 = vunpack.c.l.b16 %v120
  %v545 = vunpack.c.h.b16 %v120
  %v546 = vunpack.c.l.b16 %v121
  %v547 = vunpack.c.h.b16 %v121
  %v548 = vunpack.c.l.b16 %v122
  %v549 = vunpack.c.h.b16 %v122
  %v550 = vunpack.c.l.b16 %v123
  %v551 = vunpack.c.h.b16 %v123
  %v552 = vunpack.c.l.b16 %v124
  %v553 = vunpack.c.h.b16 %v124
  %v554 = vunpack.c.l.b16 %v125
  %v555 = vunpack.c.h.b16 %v125
  %v556 = vunpack.c.l.b16 %v126
  %v557 = vunpack.c.h.b16 %v126
  %v558 = vunpack.c.l.b16 %v127
  %v559 = vunpack.c.h.b16 %v127
  %v560 = vunpack.c.l.b16 %v128
  %v561 = vunpack.c.h.b16 %v128
  %v562 = vunpack.c.l.b16 %v129
  %v563 = vunpack.c.h.b16 %v129
  %v564 = vunpack.c.l.b16 %v130
  %v565 = vunpack.c.h.b16 %v130
  %v566 = vunpack.c.l.b16 %v131
  %v567 = vunpack.c.h.b16 %v131
  %v568 = vunpack.c.l.b16 %v132
  %v569 = vunpack.c.h.b16 %v132
  %v570 = vunpack.c.l.b16 %v133
  %v571 = vunpack.c.h.b16 %v133
  %v572 = vunpack.c.l.b16 %v134
  %v573 = vunpack.c.h.b16 %v134
  %v574 = vunpack.c.l.b16 %v135
  %v575 = vunpack.c.h.b16 %v135
  %v576 = vunpack.c.l.b16 %v136
  %v577 = vunpack.c.h.b16 %v136
  %v578 = vunpack.c.l.b16 %v137
  %v579 = vunpack.c.h.b16 %v137
  %v580 = vunpack.c.l.b16 %v138
  %v581 = vunpack.c.h.b16 %v138
  %v582 = vunpack.c.l.b16 %v139
  %v583 = vunpack.c.h.b16 %v139
  %v584 = vunpack.c.l.b16 %v140
  %v585 = vunpack.c.h.b16 %v140
  %v586 = vunpack.c.l.b16 %v141
  %v587 = vunpack.c.h.b16 %v141
  %v588 = vunpack.c.l.b16 %v142
  %v589 = vunpack.c.h.b16 %v142
  %v590 = vunpack.c.l.b16 %v143
  %v591 = vunpack.c.h.b16 %v143
  %v592 = vunpack.c.l.b16 %v144
  %v593 = vunpack.c.h.b16 %v144
  %v594 = vunpack.c.l.b16 %v145
  %v595 = vunpack.c.h.b16 %v145
  %v596 = vunpack.c.l.b16 %v146
  %v597 = vunpack.c.h.b16 %v146
  %v598 = vunpack.c.l.b16 %v147
  %v599 = vunpack.c.h.b16 %v147
  %v600 = vunpack.c.l.b16 %v148
  %v601 = vunpack.c.h.b16 %v148
  %v602 = vunpack.c.l.b16 %v149
  %v603 = vunpack.c.h.b16 %v149
  %v604 = vunpack.c.l.b16 %v150
  %v605 = vunpack.c.h.b16 %v150
  %v606 = vunpack.c.l.b16 %v151
  %v607 = vunpack.c.h.b16 %v151
  %v608 = vunpack.c.l.b16 %v152
  %v609 = vunpack.c.h.b16 %v152
  %v610 = vunpack.c.l.b16 %v153
  %v611 = vunpack.c.h.b16 %v153
  %v612 = vunpack.c.l.b16 %v154
  %v613 = vunpack.c.h.b16 %v154
  %v614 = vunpack.c.l.b16 %v155
  %v615 = vunpack.c.h.b16 %v155
  %v616 = vunpack.c.l.b16 %v156
  %v617 = vunpack.c.h.b16 %v156
  %v618 = vunpack.c.l.b16 %v157
  %v619 = vunpack.c.h.b16 %v157
  %v620 = vunpack.c.l.b16 %v158
  %v621 = vunpack.c.h.b16 %v158
  %v622 = vunpack.c.l.b16 %v159
  %v623 = vunpack.c.h.b16 %v159
  %v624 = vunpack.c.l.b16 %v160
  %v625 = vunpack.c.h.b16 %v160
  %v626 = vunpack.c.l.b16 %v161
  %v627 = vunpack.c.h.b16 %v161
  %v628 = vunpack.c.l.b16 %v162
  %v629 = vunpack.c.h.b16 %v162
  %v630 = vunpack.c.l.b16 %v163
  %v631 = vunpack.c.h.b16 %v163
  %v632 = vunpack.c.l.b16 %v164
  %v633 = vunpack.c.h.b16 %v164
  %v634 = vunpack.c.l.b16 %v165
  %v635 = vunpack.c.h.b16 %v165
  %v636 = vunpack.c.l.b16 %v166
  %v637 = vunpack.c.h.b16 %v166
  %v638 = vunpack.c.l.b16 %v167
  %v639 = vunpack.c.h.b16 %v167
  %v640 = vunpack.c.l.b16 %v168
  %v641 = vunpack.c.h.b16 %v168
  %v642 = vunpack.c.l.b16 %v169
  %v643 = vunpack.c.h.b16 %v169
  %v644 = vunpack.c.l.b16 %v170
  %v645 = vunpack.c.h.b16 %v170
  %v646 = vunpack.c.l.b16 %v171
  %v647 = vunpack.c.h.b16 %v171
  %v648 = vpack.c.b16 %v362, %v360
  %v649 = vpack.c.b16 %v363, %v361
  %v650 = vpack.c.b16 %v366, %v364
  %v651 = vpack.c.b16 %v367, %v365
  %v652 = vpack.c.b16 %v370, %v368
  %v653 = vpack.c.b16 %v371, %v369
  %v654 = vpack.c.b16 %v374, %v372
  %v655 = vpack.c.b16 %v375, %v373
  %v656 = vpack.c.b16 %v378, %v376
  %v657 = vpack.c.b16 %v379, %v377
  %v658 = vpack.c.b16 %v382, %v380
  %v659 = vpack.c.b16 %v383, %v381
  %v660 = vpack.c.b16 %v386, %v384
  %v661 = vpack.c.b16 %v387, %v385
  %v662 = vpack.c.b16 %v390, %v388
  %v663 = vpack.c.b16 %v391, %v389
  %v664 = vpack.c.b16 %v394, %v392
  %v665 = vpack.c.b16 %v395, %v393
  %v666 = vpack.c.b16 %v398, %v396
  %v667 = vpack.c.b16 %v399, %v397
  %v668 = vpack.c.b16 %v402, %v400
  %v669 = vpack.c.b16 %v403, %v401
  %v670 = vpack.c.b16 %v406, %v404
  %v671 = vpack.c.b16 %v407, %v405
  %v672 = vpack.c.b16 %v410, %v408
  %v673 = vpack.c.b16 %v411, %v409
  %v674 = vpack.c.b16 %v414, %v412
  %v675 = vpack.c.b16 %v415, %v413
  %v676 = vpack.c.b16 %v418, %v416
  %v677 = vpack.c.b16 %v419, %v417
  %v678 = vpack.c.b16 %v422, %v420
  %v679 = vpack.c.b16 %v423, %v421
  %v680 = vpack.c.b16 %v426, %v424
  %v681 = vpack.c.b16 %v427, %v425
  %v682 = vpack.c.b16 %v430, %v428
  %v683 = vpack.c.b16 %v431, %v429
  %v684 = vpack.c.b16 %v434, %v432
  %v685 = vpack.c.b16 %v435, %v433
  %v686 = vpack.c.b16 %v438, %v436
  %v687 = vpack.c.b16 %v439, %v437
  %v688 = vpack.c.b16 %v442, %v440
  %v689 = vpack.c.b16 %v443, %v441
  %v690 = vpack.c.b16 %v446, %v444
  %v691 = vpack.c.b16 %v447, %v445
  %v692 = vpack.c.b16 %v450, %v448
  %v693 = vpack.c.b16 %v451, %v449
  %v694 = vpack.c.b16 %v454, %v452
  %v695 = vpack.c.b16 %v455, %v453
  %v696 = vpack.c.b16 %v458, %v456
  %v697 = vpack.c.b16 %v459, %v457
  %v698 = vpack.c.b16 %v462, %v460
  %v699 = vpack.c.b16 %v463, %v461
  %v700 = vpack.c.b16 %v466, %v464
  %v701 = vpack.c.b16 %v467, %v465
  %v702 = vpack.c.b16 %v470, %v468
  %v703 = vpack.c.b16 %v471, %v469
  %v704 = vpack.c.b16 %v474, %v472
  %v705 = vpack.c.b16 %v475, %v473
  %v706 = vpack.c.b16 %v478, %v476
  %v707 = vpack.c.b16 %v479, %v477
  %v708 = vpack.c.b16 %v482, %v480
  %v709 = vpack.c.b16 %v483, %v481
  %v710 = vpack.c.b16 %v486, %v484
  %v711 = vpack.c.b16 %v487, %v485
  %v712 = vpack.c.b16 %v490, %v488
  %v713 = vpack.c.b16 %v491, %v489
  %v714 = vpack.c.b16 %v494, %v492
  %v715 = vpack.c.b16 %v495, %v493
  %v716 = vpack.c.b16 %v498, %v496
  %v717 = vpack.c.b16 %v499, %v497
  %v718 = vpack.c.b16 %v502, %v500
  %v719 = vpack.c.b16 %v503, %v501
  %v720 = vpack.c.b16 %v506, %v504
  %v721 = vpack.c.b16 %v507, %v505
  %v722 = vpack.c.b16 %v510, %v508
  %v723 = vpack.c.b16 %v511, %v509
  %v724 = vpack.c.b16 %v514, %v512
  %v725 = vpack.c.b16 %v515, %v513
  %v726 = vpack.c.b16 %v518, %v516
  %v727 = vpack.c.b16 %v519, %v517
  %v728 = vpack.c.b16 %v522, %v520
  %v729 = vpack.c.b16 %v523, %v521
  %v730 = vpack.c.b16 %v526, %v524
  %v731 = vpack.c.b16 %v527, %v525
  %v732 = vpack.c.b16 %v530, %v528
  %v733 = vpack.c.b16 %v531, %v529
  %v734 = vpack.c.b16 %v534, %v532
  %v735 = vpack.c.b16 %v535, %v533
  %v736 = vpack.c.b16 %v538, %v536
  %v737 = vpack.c.b16 %v539, %v537
  %v738 = vpack.c.b16 %v542, %v540
  %v739 = vpack.c.b16 %v543, %v541
  %v740 = vpack.c.b16 %v546, %v544
  %v741 = vpack.c.b16 %v547, %v545
  %v742 = vpack.c.b16 %v550, %v548
  %v743 = vpack.c.b16 %v551, %v549
  %v744 = vpack.c.b16 %v554, %v552
  %v745 = vpack.c.b16 %v555, %v553
  %v746 = vpack.c.b16 %v558, %v556
  %v747 = vpack.c.b16 %v559, %v557
  %v748 = vpack.c.b16 %v562, %v560
  %v749 = vpack.c.b16 %v563, %v561
  %v750 = vpack.c.b16 %v566, %v564
  %v751 = vpack.c.b16 %v567, %v565
  %v752 = vpack.c.b16 %v570, %v568
  %v753 = vpack.c.b16 %v571, %v569
  %v754 = vpack.c.b16 %v574, %v572
  %v755 = vpack.c.b16 %v575, %v573
  %v756 = vpack.c.b16 %v578, %v576
  %v757 = vpack.c.b16 %v579, %v577
  %v758 = vpack.c.b16 %v582, %v580
  %v759 = vpack.c.b16 %v583, %v581
  %v760 = vpack.c.b16 %v586, %v584
  %v761 = vpack.c.b16 %v587, %v585
  %v762 = vpack.c.b16 %v590, %v588
  %v763 = vpack.c.b16 %v591, %v589
  %v764 = vpack.c.b16 %v594, %v592
  %v765 = vpack.c.b16 %v595, %v593
  %v766 = vpack.c.b16 %v598, %v596
  %v767 = vpack.c.b16 %v599, %v597
  %v768 = vpack.c.b16 %v602, %v600
  %v769 = vpack.c.b16 %v603, %v601
  %v770 = vpack.c.b16 %v606, %v604
  %v771 = vpack.c.b16 %v607, %v605
  %v772 = vpack.c.b16 %v610, %v608
  %v773 = vpack.c.b16 %v611, %v609
  %v774 = vpack.c.b16 %v614, %v612
  %v775 = vpack.c.b16 %v615, %v613
  %v776 = vpack.c.b16 %v618, %v616
  %v777 = vpack.c.b16 %v619, %v617
  %v778 = vpack.c.b16 %v622, %v620
  %v779 = vpack.c.b16 %v623, %v621
  %v780 = vpack.c.b16 %v626, %v624
  %v781 = vpack.c.b16 %v627, %v625
  %v782 = vpack.c.b16 %v630, %v628
  %v783 = vpack.c.b16 %v631, %v629
  %v784 = vpack.c.b16 %v634, %v632
  %v785 = vpack.c.b16 %v635, %v633
  %v786 = vpack.c.b16 %v638, %v636
  %v787 = vpack.c.b16 %v639, %v637
  %v788 = vpack.c.b16 %v642, %v640
  %v789 = vpack.c.b16 %v643, %v641
  %v790 = vpack.c.b16 %v646, %v644
  %v791 = vpack.c.b16 %v647, %v645
  %936 = vmatprep.subr.bf16.mxu0 %v649
  %937 = vmatpush1.bf16.msra.mxu0 %v648
  %938 = vmatprep.subr.bf16.mxu0 %v651
  %939 = vmatpush1.bf16.msra.mxu0 %v650
  %940 = vmatprep.subr.bf16.mxu0 %v653
  %941 = vmatpush1.bf16.msra.mxu0 %v652
  %942 = vmatprep.subr.bf16.mxu0 %v655
  %943 = vmatpush1.bf16.msra.mxu0 %v654
  %944 = vmatprep.subr.bf16.mxu0 %v657
  %945 = vmatpush1.bf16.msra.mxu0 %v656
  %946 = vmatprep.subr.bf16.mxu0 %v659
  %947 = vmatpush1.bf16.msra.mxu0 %v658
  %948 = vmatprep.subr.bf16.mxu0 %v661
  %949 = vmatpush1.bf16.msra.mxu0 %v660
  %950 = vmatprep.subr.bf16.mxu0 %v663
  %951 = vmatpush1.bf16.msra.mxu0 %v662
  %952 = vmatprep.subr.bf16.mxu0 %v665
  %953 = vmatpush1.bf16.msra.mxu0 %v664
  %954 = vmatprep.subr.bf16.mxu0 %v667
  %955 = vmatpush1.bf16.msra.mxu0 %v666
  %956 = vmatprep.subr.bf16.mxu0 %v669
  %957 = vmatpush1.bf16.msra.mxu0 %v668
  %958 = vmatprep.subr.bf16.mxu0 %v671
  %959 = vmatpush1.bf16.msra.mxu0 %v670
  %960 = vmatprep.subr.bf16.mxu0 %v673
  %961 = vmatpush1.bf16.msra.mxu0 %v672
  %962 = vmatprep.subr.bf16.mxu0 %v675
  %963 = vmatpush1.bf16.msra.mxu0 %v674
  %964 = vmatprep.subr.bf16.mxu0 %v677
  %965 = vmatpush1.bf16.msra.mxu0 %v676
  %966 = vmatprep.subr.bf16.mxu0 %v679
  %967 = vmatpush1.bf16.msra.mxu0 %v678
  %968 = vmatprep.mubr.bf16.mxu0 %v199
  %969 = vmatmul.mubr.bf16.gmra.mrb[0].mxu0 %v198
  %v970 = vpop.f32.mrb[0].mxu0
  %v971 = vadd.f32 %v177, %v970
  %v972 = vpop.f32.mrb[0].mxu0
  %v973 = vadd.f32 %v181, %v972
  %v974 = vpop.f32.mrb[0].mxu0
  %v975 = vpop.f32.mrb[0].mxu0
  %976 = vdwg.mxu0
  %977 = vmatprep.subr.bf16.mxu0 %v681
  %978 = vmatpush1.bf16.msra.mxu0 %v680
  %979 = vmatprep.subr.bf16.mxu0 %v683
  %980 = vmatpush1.bf16.msra.mxu0 %v682
  %981 = vmatprep.subr.bf16.mxu0 %v685
  %982 = vmatpush1.bf16.msra.mxu0 %v684
  %983 = vmatprep.subr.bf16.mxu0 %v687
  %984 = vmatpush1.bf16.msra.mxu0 %v686
  %985 = vmatprep.subr.bf16.mxu0 %v689
  %986 = vmatpush1.bf16.msra.mxu0 %v688
  %987 = vmatprep.subr.bf16.mxu0 %v691
  %988 = vmatpush1.bf16.msra.mxu0 %v690
  %989 = vmatprep.subr.bf16.mxu0 %v693
  %990 = vmatpush1.bf16.msra.mxu0 %v692
  %991 = vmatprep.subr.bf16.mxu0 %v695
  %992 = vmatpush1.bf16.msra.mxu0 %v694
  %993 = vmatprep.subr.bf16.mxu0 %v697
  %994 = vmatpush1.bf16.msra.mxu0 %v696
  %995 = vmatprep.subr.bf16.mxu0 %v699
  %996 = vmatpush1.bf16.msra.mxu0 %v698
  %997 = vmatprep.subr.bf16.mxu0 %v701
  %998 = vmatpush1.bf16.msra.mxu0 %v700
  %999 = vmatprep.subr.bf16.mxu0 %v703
  %1000 = vmatpush1.bf16.msra.mxu0 %v702
  %1001 = vmatprep.subr.bf16.mxu0 %v705
  %1002 = vmatpush1.bf16.msra.mxu0 %v704
  %1003 = vmatprep.subr.bf16.mxu0 %v707
  %1004 = vmatpush1.bf16.msra.mxu0 %v706
  %1005 = vmatprep.subr.bf16.mxu0 %v709
  %1006 = vmatpush1.bf16.msra.mxu0 %v708
  %1007 = vmatprep.subr.bf16.mxu0 %v711
  %1008 = vmatpush1.bf16.msra.mxu0 %v710
  %1009 = vmatprep.mubr.bf16.mxu0 %v201
  %1010 = vmatmul.mubr.bf16.gmra.mrb[0].mxu0 %v200
  %v1011 = vpop.f32.mrb[0].mxu0
  %v1012 = vadd.f32 %v971, %v1011
  %v1013 = vpop.f32.mrb[0].mxu0
  %v1014 = vadd.f32 %v973, %v1013
  %v1015 = vpop.f32.mrb[0].mxu0
  %v1016 = vpop.f32.mrb[0].mxu0
  %1017 = vdwg.mxu0
  %1018 = vmatprep.subr.bf16.mxu0 %v713
  %1019 = vmatpush1.bf16.msra.mxu0 %v712
  %1020 = vmatprep.subr.bf16.mxu0 %v715
  %1021 = vmatpush1.bf16.msra.mxu0 %v714
  %1022 = vmatprep.subr.bf16.mxu0 %v717
  %1023 = vmatpush1.bf16.msra.mxu0 %v716
  %1024 = vmatprep.subr.bf16.mxu0 %v719
  %1025 = vmatpush1.bf16.msra.mxu0 %v718
  %1026 = vmatprep.subr.bf16.mxu0 %v721
  %1027 = vmatpush1.bf16.msra.mxu0 %v720
  %1028 = vmatprep.subr.bf16.mxu0 %v723
  %1029 = vmatpush1.bf16.msra.mxu0 %v722
  %1030 = vmatprep.subr.bf16.mxu0 %v725
  %1031 = vmatpush1.bf16.msra.mxu0 %v724
  %1032 = vmatprep.subr.bf16.mxu0 %v727
  %1033 = vmatpush1.bf16.msra.mxu0 %v726
  %1034 = vmatprep.subr.bf16.mxu0 %v729
  %1035 = vmatpush1.bf16.msra.mxu0 %v728
  %1036 = vmatprep.subr.bf16.mxu0 %v731
  %1037 = vmatpush1.bf16.msra.mxu0 %v730
  %1038 = vmatprep.subr.bf16.mxu0 %v733
  %1039 = vmatpush1.bf16.msra.mxu0 %v732
  %1040 = vmatprep.subr.bf16.mxu0 %v735
  %1041 = vmatpush1.bf16.msra.mxu0 %v734
  %1042 = vmatprep.subr.bf16.mxu0 %v737
  %1043 = vmatpush1.bf16.msra.mxu0 %v736
  %1044 = vmatprep.subr.bf16.mxu0 %v739
  %1045 = vmatpush1.bf16.msra.mxu0 %v738
  %1046 = vmatprep.subr.bf16.mxu0 %v741
  %1047 = vmatpush1.bf16.msra.mxu0 %v740
  %1048 = vmatprep.subr.bf16.mxu0 %v743
  %1049 = vmatpush1.bf16.msra.mxu0 %v742
  %1050 = vmatprep.mubr.bf16.mxu0 %v203
  %1051 = vmatmul.mubr.bf16.gmra.mrb[0].mxu0 %v202
  %v1052 = vpop.f32.mrb[0].mxu0
  %v1053 = vadd.f32 %v1012, %v1052
  %v1054 = vpop.f32.mrb[0].mxu0
  %v1055 = vadd.f32 %v1014, %v1054
  %v1056 = vpop.f32.mrb[0].mxu0
  %v1057 = vpop.f32.mrb[0].mxu0
  %1058 = vdwg.mxu0
  %1059 = vmatprep.subr.bf16.mxu0 %v745
  %1060 = vmatpush1.bf16.msra.mxu0 %v744
  %1061 = vmatprep.subr.bf16.mxu0 %v747
  %1062 = vmatpush1.bf16.msra.mxu0 %v746
  %1063 = vmatprep.subr.bf16.mxu0 %v749
  %1064 = vmatpush1.bf16.msra.mxu0 %v748
  %1065 = vmatprep.subr.bf16.mxu0 %v751
  %1066 = vmatpush1.bf16.msra.mxu0 %v750
  %1067 = vmatprep.subr.bf16.mxu0 %v753
  %1068 = vmatpush1.bf16.msra.mxu0 %v752
  %1069 = vmatprep.subr.bf16.mxu0 %v755
  %1070 = vmatpush1.bf16.msra.mxu0 %v754
  %1071 = vmatprep.subr.bf16.mxu0 %v757
  %1072 = vmatpush1.bf16.msra.mxu0 %v756
  %1073 = vmatprep.subr.bf16.mxu0 %v759
  %1074 = vmatpush1.bf16.msra.mxu0 %v758
  %1075 = vmatprep.subr.bf16.mxu0 %v761
  %1076 = vmatpush1.bf16.msra.mxu0 %v760
  %1077 = vmatprep.subr.bf16.mxu0 %v763
  %1078 = vmatpush1.bf16.msra.mxu0 %v762
  %1079 = vmatprep.subr.bf16.mxu0 %v765
  %1080 = vmatpush1.bf16.msra.mxu0 %v764
  %1081 = vmatprep.subr.bf16.mxu0 %v767
  %1082 = vmatpush1.bf16.msra.mxu0 %v766
  %1083 = vmatprep.subr.bf16.mxu0 %v769
  %1084 = vmatpush1.bf16.msra.mxu0 %v768
  %1085 = vmatprep.subr.bf16.mxu0 %v771
  %1086 = vmatpush1.bf16.msra.mxu0 %v770
  %1087 = vmatprep.subr.bf16.mxu0 %v773
  %1088 = vmatpush1.bf16.msra.mxu0 %v772
  %1089 = vmatprep.subr.bf16.mxu0 %v775
  %1090 = vmatpush1.bf16.msra.mxu0 %v774
  %1091 = vmatprep.mubr.bf16.mxu0 %v205
  %1092 = vmatmul.mubr.bf16.gmra.mrb[0].mxu0 %v204
  %v1093 = vpop.f32.mrb[0].mxu0
  %v1094 = vadd.f32 %v1053, %v1093
  %v1095 = vpop.f32.mrb[0].mxu0
  %v1096 = vadd.f32 %v1055, %v1095
  %v1097 = vpop.f32.mrb[0].mxu0
  %v1098 = vpop.f32.mrb[0].mxu0
  %1099 = vdwg.mxu0
  %1100 = vmatprep.subr.bf16.mxu0 %v777
  %1101 = vmatpush1.bf16.msra.mxu0 %v776
  %1102 = vmatprep.subr.bf16.mxu0 %v779
  %1103 = vmatpush1.bf16.msra.mxu0 %v778
  %1104 = vmatprep.subr.bf16.mxu0 %v781
  %1105 = vmatpush1.bf16.msra.mxu0 %v780
  %1106 = vmatprep.subr.bf16.mxu0 %v783
  %1107 = vmatpush1.bf16.msra.mxu0 %v782
  %1108 = vmatprep.subr.bf16.mxu0 %v785
  %1109 = vmatpush1.bf16.msra.mxu0 %v784
  %1110 = vmatprep.subr.bf16.mxu0 %v787
  %1111 = vmatpush1.bf16.msra.mxu0 %v786
  %1112 = vmatprep.subr.bf16.mxu0 %v789
  %1113 = vmatpush1.bf16.msra.mxu0 %v788
  %1114 = vmatprep.subr.bf16.mxu0 %v791
  %1115 = vmatpush1.bf16.msra.mxu0 %v790
  %1116 = vmatprep.subr.bf16.mxu0 0
  %1117 = vmatpush1.bf16.msra.mxu0 0
  %1118 = vmatprep.subr.bf16.mxu0 0
  %1119 = vmatpush1.bf16.msra.mxu0 0
  %1120 = vmatprep.subr.bf16.mxu0 0
  %1121 = vmatpush1.bf16.msra.mxu0 0
  %1122 = vmatprep.subr.bf16.mxu0 0
  %1123 = vmatpush1.bf16.msra.mxu0 0
  %1124 = vmatprep.subr.bf16.mxu0 0
  %1125 = vmatpush1.bf16.msra.mxu0 0
  %1126 = vmatprep.subr.bf16.mxu0 0
  %1127 = vmatpush1.bf16.msra.mxu0 0
  %1128 = vmatprep.subr.bf16.mxu0 0
  %1129 = vmatpush1.bf16.msra.mxu0 0
  %1130 = vmatprep.subr.bf16.mxu0 0
  %1131 = vmatpush1.bf16.msra.mxu0 0
  %1132 = vmatprep.mubr.bf16.mxu0 0
  %1133 = vmatmul.mubr.bf16.gmra.mrb[0].mxu0 %v206
  %v1134 = vpop.f32.mrb[0].mxu0
  %v1135 = vadd.f32 %v1094, %v1134
  %v1136 = vpop.f32.mrb[0].mxu0
  %v1137 = vadd.f32 %v1096, %v1136
  %v1138 = vpop.f32.mrb[0].mxu0
  %v1139 = vpop.f32.mrb[0].mxu0
  %1140 = vdwg.mxu0
  %v1141 = vmax.f32 %v1135, 0.0
  %v1142 = vmax.f32 %v1137, 0.0
  %v1143 = vpack.c.bf16 %v1141, %v1141
  %v1144 = vpack.c.bf16 %v1142, %v1142
  %v1147 = vunpack.c.l.b16 %v1143
  %v1148 = vunpack.c.l.b16 %v1144
  %v1149 = vpack.c.b16 %v1148, %v1147
  %1151 = vst [vmem:[%s5] sm:$0xff] %v1149
  %v1152 = vld [vmem:[%s3] sm:$0xff]
  %v1153 = vld [vmem:[%s3 + $0x8] sm:$0xff]
  %v1154 = vld [vmem:[%s3 + $0x10] sm:$0xff]
  %v1155 = vld [vmem:[%s3 + $0x18] sm:$0xff]
  %v1156 = vld [vmem:[%s3 + $0x20] sm:$0xff]
  %v1157 = vld [vmem:[%s3 + $0x28] sm:$0xff]
  %v1158 = vld [vmem:[%s3 + $0x30] sm:$0xff]
  %v1159 = vld [vmem:[%s3 + $0x38] sm:$0xff]
  %v1160 = vld [vmem:[%s3 + $0x40] sm:$0xff]
  %v1161 = vld [vmem:[%s3 + $0x48] sm:$0xff]
  %v1162 = vld [vmem:[%s3 + $0x50] sm:$0xff]
  %v1163 = vld [vmem:[%s3 + $0x58] sm:$0xff]
  %v1164 = vld [vmem:[%s3 + $0x60] sm:$0xff]
  %v1165 = vld [vmem:[%s3 + $0x68] sm:$0xff]
  %v1166 = vld [vmem:[%s3 + $0x70] sm:$0xff]
  %v1167 = vld [vmem:[%s3 + $0x78] sm:$0xff]
  %v1168 = vld [vmem:[%s4] sm:$0x3]
  %v1170 = vlaneseq
  %v1171 = vshrl.u32 %v1170, 7
  %v1172 = vsub.s32 0, %v1171
  %v1173 = vrot.slane %v1168, %v1172
  %v1174 = vlaneseq
  %v1175 = vshrl.u32 %v1174, 7
  %v1176 = vsub.s32 1, %v1175
  %v1177 = vrot.slane %v1168, %v1176
  %v1196 = vunpack.c.l.b16 %v1152
  %v1197 = vunpack.c.h.b16 %v1152
  %v1198 = vunpack.c.l.b16 %v1153
  %v1199 = vunpack.c.h.b16 %v1153
  %v1200 = vunpack.c.l.b16 %v1154
  %v1201 = vunpack.c.h.b16 %v1154
  %v1202 = vunpack.c.l.b16 %v1155
  %v1203 = vunpack.c.h.b16 %v1155
  %v1204 = vunpack.c.l.b16 %v1156
  %v1205 = vunpack.c.h.b16 %v1156
  %v1206 = vunpack.c.l.b16 %v1157
  %v1207 = vunpack.c.h.b16 %v1157
  %v1208 = vunpack.c.l.b16 %v1158
  %v1209 = vunpack.c.h.b16 %v1158
  %v1210 = vunpack.c.l.b16 %v1159
  %v1211 = vunpack.c.h.b16 %v1159
  %v1212 = vunpack.c.l.b16 %v1160
  %v1213 = vunpack.c.h.b16 %v1160
  %v1214 = vunpack.c.l.b16 %v1161
  %v1215 = vunpack.c.h.b16 %v1161
  %v1216 = vunpack.c.l.b16 %v1162
  %v1217 = vunpack.c.h.b16 %v1162
  %v1218 = vunpack.c.l.b16 %v1163
  %v1219 = vunpack.c.h.b16 %v1163
  %v1220 = vunpack.c.l.b16 %v1164
  %v1221 = vunpack.c.h.b16 %v1164
  %v1222 = vunpack.c.l.b16 %v1165
  %v1223 = vunpack.c.h.b16 %v1165
  %v1224 = vunpack.c.l.b16 %v1166
  %v1225 = vunpack.c.h.b16 %v1166
  %v1226 = vunpack.c.l.b16 %v1167
  %v1227 = vunpack.c.h.b16 %v1167
  %v1228 = vpack.c.b16 %v1198, %v1196
  %v1229 = vpack.c.b16 %v1199, %v1197
  %v1230 = vpack.c.b16 %v1202, %v1200
  %v1231 = vpack.c.b16 %v1203, %v1201
  %v1232 = vpack.c.b16 %v1206, %v1204
  %v1233 = vpack.c.b16 %v1207, %v1205
  %v1234 = vpack.c.b16 %v1210, %v1208
  %v1235 = vpack.c.b16 %v1211, %v1209
  %v1236 = vpack.c.b16 %v1214, %v1212
  %v1237 = vpack.c.b16 %v1215, %v1213
  %v1238 = vpack.c.b16 %v1218, %v1216
  %v1239 = vpack.c.b16 %v1219, %v1217
  %v1240 = vpack.c.b16 %v1222, %v1220
  %v1241 = vpack.c.b16 %v1223, %v1221
  %v1242 = vpack.c.b16 %v1226, %v1224
  %v1243 = vpack.c.b16 %v1227, %v1225
  %1260 = vmatprep.subr.bf16.mxu0 %v1229
  %1261 = vmatpush1.bf16.msra.mxu0 %v1228
  %1262 = vmatprep.subr.bf16.mxu0 %v1231
  %1263 = vmatpush1.bf16.msra.mxu0 %v1230
  %1264 = vmatprep.subr.bf16.mxu0 %v1233
  %1265 = vmatpush1.bf16.msra.mxu0 %v1232
  %1266 = vmatprep.subr.bf16.mxu0 %v1235
  %1267 = vmatpush1.bf16.msra.mxu0 %v1234
  %1268 = vmatprep.subr.bf16.mxu0 %v1237
  %1269 = vmatpush1.bf16.msra.mxu0 %v1236
  %1270 = vmatprep.subr.bf16.mxu0 %v1239
  %1271 = vmatpush1.bf16.msra.mxu0 %v1238
  %1272 = vmatprep.subr.bf16.mxu0 %v1241
  %1273 = vmatpush1.bf16.msra.mxu0 %v1240
  %1274 = vmatprep.subr.bf16.mxu0 %v1243
  %1275 = vmatpush1.bf16.msra.mxu0 %v1242
  %1276 = vmatprep.subr.bf16.mxu0 0
  %1277 = vmatpush1.bf16.msra.mxu0 0
  %1278 = vmatprep.subr.bf16.mxu0 0
  %1279 = vmatpush1.bf16.msra.mxu0 0
  %1280 = vmatprep.subr.bf16.mxu0 0
  %1281 = vmatpush1.bf16.msra.mxu0 0
  %1282 = vmatprep.subr.bf16.mxu0 0
  %1283 = vmatpush1.bf16.msra.mxu0 0
  %1284 = vmatprep.subr.bf16.mxu0 0
  %1285 = vmatpush1.bf16.msra.mxu0 0
  %1286 = vmatprep.subr.bf16.mxu0 0
  %1287 = vmatpush1.bf16.msra.mxu0 0
  %1288 = vmatprep.subr.bf16.mxu0 0
  %1289 = vmatpush1.bf16.msra.mxu0 0
  %1290 = vmatprep.subr.bf16.mxu0 0
  %1291 = vmatpush1.bf16.msra.mxu0 0
  %1292 = vmatprep.mubr.bf16.mxu0 0
  %1293 = vmatmul.mubr.bf16.gmra.mrb[0].mxu0 %v25
  %v1294 = vpop.f32.mrb[0].mxu0
  %v1295 = vadd.f32 %v1173, %v1294
  %v1296 = vpop.f32.mrb[0].mxu0
  %v1297 = vadd.f32 %v1177, %v1296
  %v1298 = vpop.f32.mrb[0].mxu0
  %v1299 = vpop.f32.mrb[0].mxu0
  %1300 = vdwg.mxu0
  %1301 = vst [vmem:[%s6] sm:$0xff] %v1295
  %1302 = vst [vmem:[%s6 + $0x8] sm:$0xff] %v1297
  // Predicated region
  $region22: #{resnet_feature_extractor.10} parent=0 // pred_check
    _
  $region23: #{resnet_feature_extractor.10} parent=0 // pred_check_branch
    %1304 = sbr.rel (0) target = $region25
  $region24: #{resnet_feature_extractor.10} parent=0 // pred_region
    _
  $region25: #{resnet_feature_extractor.10} parent=0 // pred_fallthru
    _
  // Predicated region
  $region26: #{resnet_feature_extractor.10} parent=0 // pred_check
    _
  $region27: #{resnet_feature_extractor.10} parent=0 // pred_check_branch
    %1306 = sbr.rel (0) target = $region29
  $region28: #{resnet_feature_extractor.10} parent=0 // pred_region
    _
  $region29: #{resnet_feature_extractor.10} parent=0 // pred_fallthru
    _
  // Predicated region
  $region30: #{resnet_feature_extractor.10} parent=0 // pred_check
    _
  $region31: #{resnet_feature_extractor.10} parent=0 // pred_check_branch
    %1308 = sbr.rel (0) target = $region33
  $region32: #{resnet_feature_extractor.10} parent=0 // pred_region
    _
  $region33: #{resnet_feature_extractor.10} parent=0 // pred_fallthru
    _
  // Predicated region
  $region34: #{resnet_feature_extractor.10} parent=0 // pred_check
    _
  $region35: #{resnet_feature_extractor.10} parent=0 // pred_check_branch
    %1310 = sbr.rel (0) target = $region37
  $region36: #{resnet_feature_extractor.10} parent=0 // pred_region
    _
  $region37: #{resnet_feature_extractor.10} parent=0 // pred_fallthru
    _

// kernel: resnet_feature_extractor.11
$region0: #{resnet_feature_extractor.11}
  #allocation0 [shape = 'u32[]', space=smem, size = 0x4, offset = 0x4, fixed_abs, tag = 'smem constant byte address 0x4 - core index']
  #allocation1 [shape = 'u32[144,128]{1,0:T(1,128)}', space=vmem, size = 0x12000, scoped, tag = 'internal scratch']
  #allocation2 [shape = 'f32[8,256]{1,0:T(8,128)}', space=vmem, size = 0x2000, scoped, tag = 'scratch operand']
  %s0 = inlined_call_operand.vmem [shape: bf16[2,8,2304], index: 0, kind: input, shape index: {}]
  %s1 = inlined_call_operand.vmem [shape: bf16[2304,256], index: 1, kind: input, shape index: {}]
  %s2 = inlined_call_operand.vmem [shape: f32[1,256], index: 2, kind: input, shape index: {}]
  %s3 = inlined_call_operand.vmem [shape: f32[2,8,256], index: 3, kind: input, shape index: {}]
  %s4 = inlined_call_operand.vmem [shape: f32[2,8,256], index: 4, kind: output, shape index: {}]
  %s5 = sld [smem:[#allocation0]]
  $region57: #{resnet_feature_extractor.11} parent=0
    _
  %s7 = ssub.s32 1, %s5
  %s8 = scalar_select 0, %s7, %s5
  loop: start=0, step=1, limit=4
  $region2: #{resnet_feature_extractor.11} parent=0 // loop_pre_header
    _
  $region3: #{resnet_feature_extractor.11} parent=0 // loop_header
    %s10 = sphi 0, %s14
    %p11 = scmp.ge.s32.totalorder %s10, 4
    %s17 = sphi 0, %s29
    %s18 = sphi 0, %s25
    %s19 = sphi 0, %s17
    %s20 = sphi 0, %s18
    %s21 = sphi 0, %s19
    %s22 = sphi 0, %s20
    %s34 = sphi 0, %s36
    %s37 = sphi 0, %s34
    %s38 = sphi 0, %s37
    %s54 = sphi 0, %s38
    %s58 = sphi 0, %s58
    %s60 = sphi 0, %s58
    %s61 = sphi 0, %s60
    %s75 = sphi 0, %s61
    %s79 = sphi 0, %s79
    %s81 = sphi 0, %s79
    %s82 = sphi 0, %s81
    %s96 = sphi 0, %s82
    %s104 = sphi 0, %s106
    %s107 = sphi 0, %s104
    %s108 = sphi 0, %s107
    %s124 = sphi 0, %s108
    %s130 = sphi 0, %s132
    %s133 = sphi 0, %s130
    %s134 = sphi 0, %s133
    %s150 = sphi 0, %s134
  $region4: #{resnet_feature_extractor.11} parent=0 // loop_header_branch
    %13 = sbr.rel (%p11) target = $region8
  $region5: #{resnet_feature_extractor.11} parent=0 // loop_body
    %s15 = ssub.s32 %s10, 1
    %s16 = ssub.s32 %s10, 2
    %s23 = sadd.s32 1, %s18
    %p24 = scmp.ge.s32.totalorder %s23, 1
    %s25 = scalar_select %p24, 0, %s23
    %s26 = sadd.s32 1, %s17
    %s27 = scalar_select %p24, %s26, %s17
    %p28 = scmp.ge.s32.totalorder %s27, 2
    %s29 = scalar_select %p28, 0, %s27
    %s30 = ssub.s32 %s17, %s29
    %s31 = ssub.s32 %s18, %s25
    %s32 = sor.u32 %s30, %s31
    %p33 = scmp.eq.s32.totalorder %s32, 0
    %s35 = sadd.s32 %s34, 1
    %s36 = scalar_select %p33, %s34, %s35
    %p39 = pneg %p33
    %p40 = scmp.eq.s32.totalorder %s10, 1
    %p41 = por %p39, %p40
    %p42 = scmp.ne.s32.totalorder %s34, %s37
    %p43 = scmp.eq.s32.totalorder %s10, 0
    %p44 = por %p42, %p43
    %p45 = scmp.ne.s32.totalorder %s34, %s37
    %p46 = scmp.eq.s32.totalorder %s15, 1
    %p47 = por %p45, %p46
    %p48 = scmp.ne.s32.totalorder %s37, %s38
    %p49 = scmp.eq.s32.totalorder %s15, 0
    %p50 = por %p48, %p49
    %p51 = scmp.ne.s32.totalorder %s37, %s38
    %p52 = scmp.eq.s32.totalorder %s16, 1
    %p53 = por %p51, %p52
    %p55 = scmp.ne.s32.totalorder %s38, %s54
    %p56 = scmp.eq.s32.totalorder %s16, 0
    %p57 = por %p55, %p56
    %s59 = sadd.s32 %s58, 1
    %p62 = scmp.eq.s32.totalorder %s10, 1
    %p63 = scmp.ne.s32.totalorder %s58, %s60
    %p64 = scmp.eq.s32.totalorder %s10, 0
    %p65 = por %p63, %p64
    %p66 = scmp.ne.s32.totalorder %s58, %s60
    %p67 = scmp.eq.s32.totalorder %s15, 1
    %p68 = por %p66, %p67
    %p69 = scmp.ne.s32.totalorder %s60, %s61
    %p70 = scmp.eq.s32.totalorder %s15, 0
    %p71 = por %p69, %p70
    %p72 = scmp.ne.s32.totalorder %s60, %s61
    %p73 = scmp.eq.s32.totalorder %s16, 1
    %p74 = por %p72, %p73
    %p76 = scmp.ne.s32.totalorder %s61, %s75
    %p77 = scmp.eq.s32.totalorder %s16, 0
    %p78 = por %p76, %p77
    %s80 = sadd.s32 %s79, 1
    %p83 = scmp.eq.s32.totalorder %s10, 1
    %p84 = scmp.ne.s32.totalorder %s79, %s81
    %p85 = scmp.eq.s32.totalorder %s10, 0
    %p86 = por %p84, %p85
    %p87 = scmp.ne.s32.totalorder %s79, %s81
    %p88 = scmp.eq.s32.totalorder %s15, 1
    %p89 = por %p87, %p88
    %p90 = scmp.ne.s32.totalorder %s81, %s82
    %p91 = scmp.eq.s32.totalorder %s15, 0
    %p92 = por %p90, %p91
    %p93 = scmp.ne.s32.totalorder %s81, %s82
    %p94 = scmp.eq.s32.totalorder %s16, 1
    %p95 = por %p93, %p94
    %p97 = scmp.ne.s32.totalorder %s82, %s96
    %p98 = scmp.eq.s32.totalorder %s16, 0
    %p99 = por %p97, %p98
    %s100 = ssub.s32 %s17, %s29
    %s101 = ssub.s32 %s18, %s25
    %s102 = sor.u32 %s100, %s101
    %p103 = scmp.eq.s32.totalorder %s102, 0
    %s105 = sadd.s32 %s104, 1
    %s106 = scalar_select %p103, %s104, %s105
    %p109 = pneg %p103
    %p110 = scmp.eq.s32.totalorder %s10, 1
    %p111 = por %p109, %p110
    %p112 = scmp.ne.s32.totalorder %s104, %s107
    %p113 = scmp.eq.s32.totalorder %s10, 0
    %p114 = por %p112, %p113
    %p115 = scmp.ne.s32.totalorder %s104, %s107
    %p116 = scmp.eq.s32.totalorder %s15, 1
    %p117 = por %p115, %p116
    %p118 = scmp.ne.s32.totalorder %s107, %s108
    %p119 = scmp.eq.s32.totalorder %s15, 0
    %p120 = por %p118, %p119
    %p121 = scmp.ne.s32.totalorder %s107, %s108
    %p122 = scmp.eq.s32.totalorder %s16, 1
    %p123 = por %p121, %p122
    %p125 = scmp.ne.s32.totalorder %s108, %s124
    %p126 = scmp.eq.s32.totalorder %s16, 0
    %p127 = por %p125, %p126
    %s128 = ssub.s32 %s17, %s29
    %p129 = scmp.eq.s32.totalorder %s128, 0
    %s131 = sadd.s32 %s130, 1
    %s132 = scalar_select %p129, %s130, %s131
    %p135 = pneg %p129
    %p136 = scmp.eq.s32.totalorder %s10, 1
    %p137 = por %p135, %p136
    %p138 = scmp.ne.s32.totalorder %s130, %s133
    %p139 = scmp.eq.s32.totalorder %s10, 0
    %p140 = por %p138, %p139
    %p141 = scmp.ne.s32.totalorder %s130, %s133
    %p142 = scmp.eq.s32.totalorder %s15, 1
    %p143 = por %p141, %p142
    %p144 = scmp.ne.s32.totalorder %s133, %s134
    %p145 = scmp.eq.s32.totalorder %s15, 0
    %p146 = por %p144, %p145
    %p147 = scmp.ne.s32.totalorder %s133, %s134
    %p148 = scmp.eq.s32.totalorder %s16, 1
    %p149 = por %p147, %p148
    %p151 = scmp.ne.s32.totalorder %s134, %s150
    %p152 = scmp.eq.s32.totalorder %s16, 0
    %p153 = por %p151, %p152
    %p154 = scmp.le.s32.totalorder 1, %s10
    %p155 = scmp.lt.s32.totalorder %s10, 3
    %p156 = pnand %p154, %p155
    %p157 = pneg %p156
    // Predicated region
    $region9: #{resnet_feature_extractor.11} parent=5 // pred_check
      _
    $region10: #{resnet_feature_extractor.11} parent=5 // pred_check_branch
      %159 = sbr.rel (%p156) target = $region12
    $region11: #{resnet_feature_extractor.11} parent=5 // pred_region
      %s160 = ssub.s32 %s10, 1
      // Predicated region
      $region13: #{resnet_feature_extractor.11} parent=11 // pred_check
        %p161 = pneg %p71
      $region14: #{resnet_feature_extractor.11} parent=11 // pred_check_branch
        %163 = sbr.rel (%p161) target = $region16
      $region15: #{resnet_feature_extractor.11} parent=11 // pred_region
        _
      $region16: #{resnet_feature_extractor.11} parent=11 // pred_fallthru
        _
      // Predicated region
      $region17: #{resnet_feature_extractor.11} parent=11 // pred_check
        %p164 = pneg %p92
      $region18: #{resnet_feature_extractor.11} parent=11 // pred_check_branch
        %166 = sbr.rel (%p164) target = $region20
      $region19: #{resnet_feature_extractor.11} parent=11 // pred_region
        _
      $region20: #{resnet_feature_extractor.11} parent=11 // pred_fallthru
        _
    $region12: #{resnet_feature_extractor.11} parent=5 // pred_fallthru
      _
    %p167 = scmp.lt.s32.totalorder %s10, 2
    // Predicated region
    $region21: #{resnet_feature_extractor.11} parent=5 // pred_check
      %p168 = pneg %p167
    $region22: #{resnet_feature_extractor.11} parent=5 // pred_check_branch
      %170 = sbr.rel (%p168) target = $region24
    $region23: #{resnet_feature_extractor.11} parent=5 // pred_region
      // Predicated region
      $region25: #{resnet_feature_extractor.11} parent=23 // pred_check
        %p171 = pneg %p44
      $region26: #{resnet_feature_extractor.11} parent=23 // pred_check_branch
        %173 = sbr.rel (%p171) target = $region28
      $region27: #{resnet_feature_extractor.11} parent=23 // pred_region
        %p174 = scmp.lt.s32.totalorder %s17, 1
        %s175 = scalar_select %p174, %s17, 1
        %p176 = scmp.lt.s32.totalorder %s18, 0
        %s177 = scalar_select %p176, %s18, 0
        %s178 = smul.addr %s177, 18
        %s179 = smul.addr %s175, 18
        %s180 = sadd.s32 %s178, %s179
        %s181 = smul.addr %s180, 4
        %s182 = scalar_lea.vmem %s0, %s181
      $region28: #{resnet_feature_extractor.11} parent=23 // pred_fallthru
        _
      // Predicated region
      $region29: #{resnet_feature_extractor.11} parent=23 // pred_check
        %p183 = pneg %p114
      $region30: #{resnet_feature_extractor.11} parent=23 // pred_check_branch
        %185 = sbr.rel (%p183) target = $region32
      $region31: #{resnet_feature_extractor.11} parent=23 // pred_region
        %p186 = scmp.lt.s32.totalorder %s17, 1
        %s187 = scalar_select %p186, %s17, 1
        %p188 = scmp.lt.s32.totalorder %s18, 0
        %s189 = scalar_select %p188, %s18, 0
        %s190 = smul.addr %s189, 2
        %s191 = smul.addr %s187, 2
        %s192 = sadd.s32 %s190, %s191
        %s193 = smul.addr %s192, 8
        %s194 = scalar_lea.vmem %s3, %s193
      $region32: #{resnet_feature_extractor.11} parent=23 // pred_fallthru
        _
    $region24: #{resnet_feature_extractor.11} parent=5 // pred_fallthru
      _
    %p195 = scmp.le.s32.totalorder 1, %s10
    %p196 = scmp.lt.s32.totalorder %s10, 3
    %p197 = pnand %p195, %p196
    %p198 = pneg %p197
    // Predicated region
    $region33: #{resnet_feature_extractor.11} parent=5 // pred_check
      _
    $region34: #{resnet_feature_extractor.11} parent=5 // pred_check_branch
      %200 = sbr.rel (%p197) target = $region36
    $region35: #{resnet_feature_extractor.11} parent=5 // pred_region
      %s201 = ssub.s32 %s10, 1
      %p202 = scmp.lt.s32.totalorder %s19, 1
      %s203 = scalar_select %p202, %s19, 1
      %p204 = scmp.lt.s32.totalorder %s20, 0
      %s205 = scalar_select %p204, %s20, 0
      %s206 = smul.addr %s205, 18
      %s207 = smul.addr %s203, 18
      %s208 = sadd.s32 %s206, %s207
      %s209 = smul.addr %s208, 4
      %s210 = scalar_lea.vmem %s0, %s209
      %p211 = pneg %p50
      %p212 = pneg %p47
      %p213 = pneg %p71
      %p214 = pneg %p68
      %p215 = pneg %p92
      %p216 = pneg %p89
      %p217 = scmp.lt.s32.totalorder %s19, 1
      %s218 = scalar_select %p217, %s19, 1
      %p219 = scmp.lt.s32.totalorder %s20, 0
      %s220 = scalar_select %p219, %s20, 0
      %s221 = smul.addr %s220, 2
      %s222 = smul.addr %s218, 2
      %s223 = sadd.s32 %s221, %s222
      %s224 = smul.addr %s223, 8
      %s225 = scalar_lea.vmem %s3, %s224
      %p226 = pneg %p120
      %p227 = pneg %p117
      %p228 = pneg %p146
      %p229 = pneg %p143
      %p230 = scmp.lt.s32.totalorder %s19, 1
      %s231 = scalar_select %p230, %s19, 1
      %s232 = smul.addr %s231, 2
      %s233 = smul.addr %s232, 8
      %s234 = scalar_lea.vmem %s4, %s233
      %p235 = scmp.lt.s32.totalorder %s19, 1
      %s236 = scalar_select %p235, %s19, 1
      %p237 = scmp.lt.s32.totalorder %s20, 0
      %s238 = scalar_select %p237, %s20, 0
      %s239 = smul.addr %s238, 18
      %s240 = smul.addr %s236, 18
      %s241 = sadd.s32 %s239, %s240
      %s242 = smul.addr %s241, 4
      %s243 = scalar_lea.vmem %s0, %s242
      %p244 = scmp.lt.s32.totalorder %s19, 1
      %s245 = scalar_select %p244, %s19, 1
      %p246 = scmp.lt.s32.totalorder %s20, 0
      %s247 = scalar_select %p246, %s20, 0
      %s248 = smul.addr %s247, 2
      %s249 = smul.addr %s245, 2
      %s250 = sadd.s32 %s248, %s249
      %s251 = smul.addr %s250, 8
      %s252 = scalar_lea.vmem %s3, %s251
      %p253 = scmp.lt.s32.totalorder %s19, 1
      %s254 = scalar_select %p253, %s19, 1
      %s255 = smul.addr %s254, 2
      %s256 = smul.addr %s255, 8
      %s257 = scalar_lea.vmem %s4, %s256
      %p258 = scmp.eq.s32.totalorder %s20, 0
      // Predicated region
      $region37: #{resnet_feature_extractor.11} parent=35 // pred_check
        %p259 = pneg %p258
      $region38: #{resnet_feature_extractor.11} parent=35 // pred_check_branch
        %261 = sbr.rel (%p259) target = $region40
      $region39: #{resnet_feature_extractor.11} parent=35 // pred_region
        %262 = vst [vmem:[#allocation2] sm:$0xff] 0.0
        %263 = vst [vmem:[#allocation2 + $0x8] sm:$0xff] 0.0
      $region40: #{resnet_feature_extractor.11} parent=35 // pred_fallthru
        _
      %v264 = vld [vmem:[%s243] sm:$0xff]
      %v265 = vld [vmem:[%s243 + $0x8] sm:$0xff]
      %v266 = vld [vmem:[%s243 + $0x10] sm:$0xff]
      %v267 = vld [vmem:[%s243 + $0x18] sm:$0xff]
      %v268 = vld [vmem:[%s243 + $0x20] sm:$0xff]
      %v269 = vld [vmem:[%s243 + $0x28] sm:$0xff]
      %v270 = vld [vmem:[%s243 + $0x30] sm:$0xff]
      %v271 = vld [vmem:[%s243 + $0x38] sm:$0xff]
      %v272 = vld [vmem:[%s243 + $0x40] sm:$0xff]
      %v273 = vld [vmem:[%s1] sm:$0xff]
      %v274 = vld [vmem:[%s1 + $0x8] sm:$0xff]
      %v275 = vld [vmem:[%s1 + $0x10] sm:$0xff]
      %v276 = vld [vmem:[%s1 + $0x18] sm:$0xff]
      %v277 = vld [vmem:[%s1 + $0x20] sm:$0xff]
      %v278 = vld [vmem:[%s1 + $0x28] sm:$0xff]
      %v279 = vld [vmem:[%s1 + $0x30] sm:$0xff]
      %v280 = vld [vmem:[%s1 + $0x38] sm:$0xff]
      %v281 = vld [vmem:[%s1 + $0x40] sm:$0xff]
      %v282 = vld [vmem:[%s1 + $0x48] sm:$0xff]
      %v283 = vld [vmem:[%s1 + $0x50] sm:$0xff]
      %v284 = vld [vmem:[%s1 + $0x58] sm:$0xff]
      %v285 = vld [vmem:[%s1 + $0x60] sm:$0xff]
      %v286 = vld [vmem:[%s1 + $0x68] sm:$0xff]
      %v287 = vld [vmem:[%s1 + $0x70] sm:$0xff]
      %v288 = vld [vmem:[%s1 + $0x78] sm:$0xff]
      %v289 = vld [vmem:[%s1 + $0x80] sm:$0xff]
      %v290 = vld [vmem:[%s1 + $0x88] sm:$0xff]
      %v291 = vld [vmem:[%s1 + $0x90] sm:$0xff]
      %v292 = vld [vmem:[%s1 + $0x98] sm:$0xff]
      %v293 = vld [vmem:[%s1 + $0xa0] sm:$0xff]
      %v294 = vld [vmem:[%s1 + $0xa8] sm:$0xff]
      %v295 = vld [vmem:[%s1 + $0xb0] sm:$0xff]
      %v296 = vld [vmem:[%s1 + $0xb8] sm:$0xff]
      %v297 = vld [vmem:[%s1 + $0xc0] sm:$0xff]
      %v298 = vld [vmem:[%s1 + $0xc8] sm:$0xff]
      %v299 = vld [vmem:[%s1 + $0xd0] sm:$0xff]
      %v300 = vld [vmem:[%s1 + $0xd8] sm:$0xff]
      %v301 = vld [vmem:[%s1 + $0xe0] sm:$0xff]
      %v302 = vld [vmem:[%s1 + $0xe8] sm:$0xff]
      %v303 = vld [vmem:[%s1 + $0xf0] sm:$0xff]
      %v304 = vld [vmem:[%s1 + $0xf8] sm:$0xff]
      %v305 = vld [vmem:[%s1 + $0x100] sm:$0xff]
      %v306 = vld [vmem:[%s1 + $0x108] sm:$0xff]
      %v307 = vld [vmem:[%s1 + $0x110] sm:$0xff]
      %v308 = vld [vmem:[%s1 + $0x118] sm:$0xff]
      %v309 = vld [vmem:[%s1 + $0x120] sm:$0xff]
      %v310 = vld [vmem:[%s1 + $0x128] sm:$0xff]
      %v311 = vld [vmem:[%s1 + $0x130] sm:$0xff]
      %v312 = vld [vmem:[%s1 + $0x138] sm:$0xff]
      %v313 = vld [vmem:[%s1 + $0x140] sm:$0xff]
      %v314 = vld [vmem:[%s1 + $0x148] sm:$0xff]
      %v315 = vld [vmem:[%s1 + $0x150] sm:$0xff]
      %v316 = vld [vmem:[%s1 + $0x158] sm:$0xff]
      %v317 = vld [vmem:[%s1 + $0x160] sm:$0xff]
      %v318 = vld [vmem:[%s1 + $0x168] sm:$0xff]
      %v319 = vld [vmem:[%s1 + $0x170] sm:$0xff]
      %v320 = vld [vmem:[%s1 + $0x178] sm:$0xff]
      %v321 = vld [vmem:[%s1 + $0x180] sm:$0xff]
      %v322 = vld [vmem:[%s1 + $0x188] sm:$0xff]
      %v323 = vld [vmem:[%s1 + $0x190] sm:$0xff]
      %v324 = vld [vmem:[%s1 + $0x198] sm:$0xff]
      %v325 = vld [vmem:[%s1 + $0x1a0] sm:$0xff]
      %v326 = vld [vmem:[%s1 + $0x1a8] sm:$0xff]
      %v327 = vld [vmem:[%s1 + $0x1b0] sm:$0xff]
      %v328 = vld [vmem:[%s1 + $0x1b8] sm:$0xff]
      %v329 = vld [vmem:[%s1 + $0x1c0] sm:$0xff]
      %v330 = vld [vmem:[%s1 + $0x1c8] sm:$0xff]
      %v331 = vld [vmem:[%s1 + $0x1d0] sm:$0xff]
      %v332 = vld [vmem:[%s1 + $0x1d8] sm:$0xff]
      %v333 = vld [vmem:[%s1 + $0x1e0] sm:$0xff]
      %v334 = vld [vmem:[%s1 + $0x1e8] sm:$0xff]
      %v335 = vld [vmem:[%s1 + $0x1f0] sm:$0xff]
      %v336 = vld [vmem:[%s1 + $0x1f8] sm:$0xff]
      %v337 = vld [vmem:[%s1 + $0x200] sm:$0xff]
      %v338 = vld [vmem:[%s1 + $0x208] sm:$0xff]
      %v339 = vld [vmem:[%s1 + $0x210] sm:$0xff]
      %v340 = vld [vmem:[%s1 + $0x218] sm:$0xff]
      %v341 = vld [vmem:[%s1 + $0x220] sm:$0xff]
      %v342 = vld [vmem:[%s1 + $0x228] sm:$0xff]
      %v343 = vld [vmem:[%s1 + $0x230] sm:$0xff]
      %v344 = vld [vmem:[%s1 + $0x238] sm:$0xff]
      %v345 = vld [vmem:[%s1 + $0x240] sm:$0xff]
      %v346 = vld [vmem:[%s1 + $0x248] sm:$0xff]
      %v347 = vld [vmem:[%s1 + $0x250] sm:$0xff]
      %v348 = vld [vmem:[%s1 + $0x258] sm:$0xff]
      %v349 = vld [vmem:[%s1 + $0x260] sm:$0xff]
      %v350 = vld [vmem:[%s1 + $0x268] sm:$0xff]
      %v351 = vld [vmem:[%s1 + $0x270] sm:$0xff]
      %v352 = vld [vmem:[%s1 + $0x278] sm:$0xff]
      %v353 = vld [vmem:[%s1 + $0x280] sm:$0xff]
      %v354 = vld [vmem:[%s1 + $0x288] sm:$0xff]
      %v355 = vld [vmem:[%s1 + $0x290] sm:$0xff]
      %v356 = vld [vmem:[%s1 + $0x298] sm:$0xff]
      %v357 = vld [vmem:[%s1 + $0x2a0] sm:$0xff]
      %v358 = vld [vmem:[%s1 + $0x2a8] sm:$0xff]
      %v359 = vld [vmem:[%s1 + $0x2b0] sm:$0xff]
      %v360 = vld [vmem:[%s1 + $0x2b8] sm:$0xff]
      %v361 = vld [vmem:[%s1 + $0x2c0] sm:$0xff]
      %v362 = vld [vmem:[%s1 + $0x2c8] sm:$0xff]
      %v363 = vld [vmem:[%s1 + $0x2d0] sm:$0xff]
      %v364 = vld [vmem:[%s1 + $0x2d8] sm:$0xff]
      %v365 = vld [vmem:[%s1 + $0x2e0] sm:$0xff]
      %v366 = vld [vmem:[%s1 + $0x2e8] sm:$0xff]
      %v367 = vld [vmem:[%s1 + $0x2f0] sm:$0xff]
      %v368 = vld [vmem:[%s1 + $0x2f8] sm:$0xff]
      %v369 = vld [vmem:[%s1 + $0x300] sm:$0xff]
      %v370 = vld [vmem:[%s1 + $0x308] sm:$0xff]
      %v371 = vld [vmem:[%s1 + $0x310] sm:$0xff]
      %v372 = vld [vmem:[%s1 + $0x318] sm:$0xff]
      %v373 = vld [vmem:[%s1 + $0x320] sm:$0xff]
      %v374 = vld [vmem:[%s1 + $0x328] sm:$0xff]
      %v375 = vld [vmem:[%s1 + $0x330] sm:$0xff]
      %v376 = vld [vmem:[%s1 + $0x338] sm:$0xff]
      %v377 = vld [vmem:[%s1 + $0x340] sm:$0xff]
      %v378 = vld [vmem:[%s1 + $0x348] sm:$0xff]
      %v379 = vld [vmem:[%s1 + $0x350] sm:$0xff]
      %v380 = vld [vmem:[%s1 + $0x358] sm:$0xff]
      %v381 = vld [vmem:[%s1 + $0x360] sm:$0xff]
      %v382 = vld [vmem:[%s1 + $0x368] sm:$0xff]
      %v383 = vld [vmem:[%s1 + $0x370] sm:$0xff]
      %v384 = vld [vmem:[%s1 + $0x378] sm:$0xff]
      %v385 = vld [vmem:[%s1 + $0x380] sm:$0xff]
      %v386 = vld [vmem:[%s1 + $0x388] sm:$0xff]
      %v387 = vld [vmem:[%s1 + $0x390] sm:$0xff]
      %v388 = vld [vmem:[%s1 + $0x398] sm:$0xff]
      %v389 = vld [vmem:[%s1 + $0x3a0] sm:$0xff]
      %v390 = vld [vmem:[%s1 + $0x3a8] sm:$0xff]
      %v391 = vld [vmem:[%s1 + $0x3b0] sm:$0xff]
      %v392 = vld [vmem:[%s1 + $0x3b8] sm:$0xff]
      %v393 = vld [vmem:[%s1 + $0x3c0] sm:$0xff]
      %v394 = vld [vmem:[%s1 + $0x3c8] sm:$0xff]
      %v395 = vld [vmem:[%s1 + $0x3d0] sm:$0xff]
      %v396 = vld [vmem:[%s1 + $0x3d8] sm:$0xff]
      %v397 = vld [vmem:[%s1 + $0x3e0] sm:$0xff]
      %v398 = vld [vmem:[%s1 + $0x3e8] sm:$0xff]
      %v399 = vld [vmem:[%s1 + $0x3f0] sm:$0xff]
      %v400 = vld [vmem:[%s1 + $0x3f8] sm:$0xff]
      %v401 = vld [vmem:[%s1 + $0x400] sm:$0xff]
      %v402 = vld [vmem:[%s1 + $0x408] sm:$0xff]
      %v403 = vld [vmem:[%s1 + $0x410] sm:$0xff]
      %v404 = vld [vmem:[%s1 + $0x418] sm:$0xff]
      %v405 = vld [vmem:[%s1 + $0x420] sm:$0xff]
      %v406 = vld [vmem:[%s1 + $0x428] sm:$0xff]
      %v407 = vld [vmem:[%s1 + $0x430] sm:$0xff]
      %v408 = vld [vmem:[%s1 + $0x438] sm:$0xff]
      %v409 = vld [vmem:[%s1 + $0x440] sm:$0xff]
      %v410 = vld [vmem:[%s1 + $0x448] sm:$0xff]
      %v411 = vld [vmem:[%s1 + $0x450] sm:$0xff]
      %v412 = vld [vmem:[%s1 + $0x458] sm:$0xff]
      %v413 = vld [vmem:[%s1 + $0x460] sm:$0xff]
      %v414 = vld [vmem:[%s1 + $0x468] sm:$0xff]
      %v415 = vld [vmem:[%s1 + $0x470] sm:$0xff]
      %v416 = vld [vmem:[%s1 + $0x478] sm:$0xff]
      %v417 = vld [vmem:[%s1 + $0x480] sm:$0xff]
      %v418 = vld [vmem:[%s1 + $0x488] sm:$0xff]
      %v419 = vld [vmem:[%s1 + $0x490] sm:$0xff]
      %v420 = vld [vmem:[%s1 + $0x498] sm:$0xff]
      %v421 = vld [vmem:[%s1 + $0x4a0] sm:$0xff]
      %v422 = vld [vmem:[%s1 + $0x4a8] sm:$0xff]
      %v423 = vld [vmem:[%s1 + $0x4b0] sm:$0xff]
      %v424 = vld [vmem:[%s1 + $0x4b8] sm:$0xff]
      %v425 = vld [vmem:[%s1 + $0x4c0] sm:$0xff]
      %v426 = vld [vmem:[%s1 + $0x4c8] sm:$0xff]
      %v427 = vld [vmem:[%s1 + $0x4d0] sm:$0xff]
      %v428 = vld [vmem:[%s1 + $0x4d8] sm:$0xff]
      %v429 = vld [vmem:[%s1 + $0x4e0] sm:$0xff]
      %v430 = vld [vmem:[%s1 + $0x4e8] sm:$0xff]
      %v431 = vld [vmem:[%s1 + $0x4f0] sm:$0xff]
      %v432 = vld [vmem:[%s1 + $0x4f8] sm:$0xff]
      %v433 = vld [vmem:[%s1 + $0x500] sm:$0xff]
      %v434 = vld [vmem:[%s1 + $0x508] sm:$0xff]
      %v435 = vld [vmem:[%s1 + $0x510] sm:$0xff]
      %v436 = vld [vmem:[%s1 + $0x518] sm:$0xff]
      %v437 = vld [vmem:[%s1 + $0x520] sm:$0xff]
      %v438 = vld [vmem:[%s1 + $0x528] sm:$0xff]
      %v439 = vld [vmem:[%s1 + $0x530] sm:$0xff]
      %v440 = vld [vmem:[%s1 + $0x538] sm:$0xff]
      %v441 = vld [vmem:[%s1 + $0x540] sm:$0xff]
      %v442 = vld [vmem:[%s1 + $0x548] sm:$0xff]
      %v443 = vld [vmem:[%s1 + $0x550] sm:$0xff]
      %v444 = vld [vmem:[%s1 + $0x558] sm:$0xff]
      %v445 = vld [vmem:[%s1 + $0x560] sm:$0xff]
      %v446 = vld [vmem:[%s1 + $0x568] sm:$0xff]
      %v447 = vld [vmem:[%s1 + $0x570] sm:$0xff]
      %v448 = vld [vmem:[%s1 + $0x578] sm:$0xff]
      %v449 = vld [vmem:[%s1 + $0x580] sm:$0xff]
      %v450 = vld [vmem:[%s1 + $0x588] sm:$0xff]
      %v451 = vld [vmem:[%s1 + $0x590] sm:$0xff]
      %v452 = vld [vmem:[%s1 + $0x598] sm:$0xff]
      %v453 = vld [vmem:[%s1 + $0x5a0] sm:$0xff]
      %v454 = vld [vmem:[%s1 + $0x5a8] sm:$0xff]
      %v455 = vld [vmem:[%s1 + $0x5b0] sm:$0xff]
      %v456 = vld [vmem:[%s1 + $0x5b8] sm:$0xff]
      %v457 = vld [vmem:[%s1 + $0x5c0] sm:$0xff]
      %v458 = vld [vmem:[%s1 + $0x5c8] sm:$0xff]
      %v459 = vld [vmem:[%s1 + $0x5d0] sm:$0xff]
      %v460 = vld [vmem:[%s1 + $0x5d8] sm:$0xff]
      %v461 = vld [vmem:[%s1 + $0x5e0] sm:$0xff]
      %v462 = vld [vmem:[%s1 + $0x5e8] sm:$0xff]
      %v463 = vld [vmem:[%s1 + $0x5f0] sm:$0xff]
      %v464 = vld [vmem:[%s1 + $0x5f8] sm:$0xff]
      %v465 = vld [vmem:[%s1 + $0x600] sm:$0xff]
      %v466 = vld [vmem:[%s1 + $0x608] sm:$0xff]
      %v467 = vld [vmem:[%s1 + $0x610] sm:$0xff]
      %v468 = vld [vmem:[%s1 + $0x618] sm:$0xff]
      %v469 = vld [vmem:[%s1 + $0x620] sm:$0xff]
      %v470 = vld [vmem:[%s1 + $0x628] sm:$0xff]
      %v471 = vld [vmem:[%s1 + $0x630] sm:$0xff]
      %v472 = vld [vmem:[%s1 + $0x638] sm:$0xff]
      %v473 = vld [vmem:[%s1 + $0x640] sm:$0xff]
      %v474 = vld [vmem:[%s1 + $0x648] sm:$0xff]
      %v475 = vld [vmem:[%s1 + $0x650] sm:$0xff]
      %v476 = vld [vmem:[%s1 + $0x658] sm:$0xff]
      %v477 = vld [vmem:[%s1 + $0x660] sm:$0xff]
      %v478 = vld [vmem:[%s1 + $0x668] sm:$0xff]
      %v479 = vld [vmem:[%s1 + $0x670] sm:$0xff]
      %v480 = vld [vmem:[%s1 + $0x678] sm:$0xff]
      %v481 = vld [vmem:[%s1 + $0x680] sm:$0xff]
      %v482 = vld [vmem:[%s1 + $0x688] sm:$0xff]
      %v483 = vld [vmem:[%s1 + $0x690] sm:$0xff]
      %v484 = vld [vmem:[%s1 + $0x698] sm:$0xff]
      %v485 = vld [vmem:[%s1 + $0x6a0] sm:$0xff]
      %v486 = vld [vmem:[%s1 + $0x6a8] sm:$0xff]
      %v487 = vld [vmem:[%s1 + $0x6b0] sm:$0xff]
      %v488 = vld [vmem:[%s1 + $0x6b8] sm:$0xff]
      %v489 = vld [vmem:[%s1 + $0x6c0] sm:$0xff]
      %v490 = vld [vmem:[%s1 + $0x6c8] sm:$0xff]
      %v491 = vld [vmem:[%s1 + $0x6d0] sm:$0xff]
      %v492 = vld [vmem:[%s1 + $0x6d8] sm:$0xff]
      %v493 = vld [vmem:[%s1 + $0x6e0] sm:$0xff]
      %v494 = vld [vmem:[%s1 + $0x6e8] sm:$0xff]
      %v495 = vld [vmem:[%s1 + $0x6f0] sm:$0xff]
      %v496 = vld [vmem:[%s1 + $0x6f8] sm:$0xff]
      %v497 = vld [vmem:[%s1 + $0x700] sm:$0xff]
      %v498 = vld [vmem:[%s1 + $0x708] sm:$0xff]
      %v499 = vld [vmem:[%s1 + $0x710] sm:$0xff]
      %v500 = vld [vmem:[%s1 + $0x718] sm:$0xff]
      %v501 = vld [vmem:[%s1 + $0x720] sm:$0xff]
      %v502 = vld [vmem:[%s1 + $0x728] sm:$0xff]
      %v503 = vld [vmem:[%s1 + $0x730] sm:$0xff]
      %v504 = vld [vmem:[%s1 + $0x738] sm:$0xff]
      %v505 = vld [vmem:[%s1 + $0x740] sm:$0xff]
      %v506 = vld [vmem:[%s1 + $0x748] sm:$0xff]
      %v507 = vld [vmem:[%s1 + $0x750] sm:$0xff]
      %v508 = vld [vmem:[%s1 + $0x758] sm:$0xff]
      %v509 = vld [vmem:[%s1 + $0x760] sm:$0xff]
      %v510 = vld [vmem:[%s1 + $0x768] sm:$0xff]
      %v511 = vld [vmem:[%s1 + $0x770] sm:$0xff]
      %v512 = vld [vmem:[%s1 + $0x778] sm:$0xff]
      %v513 = vld [vmem:[%s1 + $0x780] sm:$0xff]
      %v514 = vld [vmem:[%s1 + $0x788] sm:$0xff]
      %v515 = vld [vmem:[%s1 + $0x790] sm:$0xff]
      %v516 = vld [vmem:[%s1 + $0x798] sm:$0xff]
      %v517 = vld [vmem:[%s1 + $0x7a0] sm:$0xff]
      %v518 = vld [vmem:[%s1 + $0x7a8] sm:$0xff]
      %v519 = vld [vmem:[%s1 + $0x7b0] sm:$0xff]
      %v520 = vld [vmem:[%s1 + $0x7b8] sm:$0xff]
      %v521 = vld [vmem:[%s1 + $0x7c0] sm:$0xff]
      %v522 = vld [vmem:[%s1 + $0x7c8] sm:$0xff]
      %v523 = vld [vmem:[%s1 + $0x7d0] sm:$0xff]
      %v524 = vld [vmem:[%s1 + $0x7d8] sm:$0xff]
      %v525 = vld [vmem:[%s1 + $0x7e0] sm:$0xff]
      %v526 = vld [vmem:[%s1 + $0x7e8] sm:$0xff]
      %v527 = vld [vmem:[%s1 + $0x7f0] sm:$0xff]
      %v528 = vld [vmem:[%s1 + $0x7f8] sm:$0xff]
      %v529 = vld [vmem:[%s1 + $0x800] sm:$0xff]
      %v530 = vld [vmem:[%s1 + $0x808] sm:$0xff]
      %v531 = vld [vmem:[%s1 + $0x810] sm:$0xff]
      %v532 = vld [vmem:[%s1 + $0x818] sm:$0xff]
      %v533 = vld [vmem:[%s1 + $0x820] sm:$0xff]
      %v534 = vld [vmem:[%s1 + $0x828] sm:$0xff]
      %v535 = vld [vmem:[%s1 + $0x830] sm:$0xff]
      %v536 = vld [vmem:[%s1 + $0x838] sm:$0xff]
      %v537 = vld [vmem:[%s1 + $0x840] sm:$0xff]
      %v538 = vld [vmem:[%s1 + $0x848] sm:$0xff]
      %v539 = vld [vmem:[%s1 + $0x850] sm:$0xff]
      %v540 = vld [vmem:[%s1 + $0x858] sm:$0xff]
      %v541 = vld [vmem:[%s1 + $0x860] sm:$0xff]
      %v542 = vld [vmem:[%s1 + $0x868] sm:$0xff]
      %v543 = vld [vmem:[%s1 + $0x870] sm:$0xff]
      %v544 = vld [vmem:[%s1 + $0x878] sm:$0xff]
      %v545 = vld [vmem:[%s1 + $0x880] sm:$0xff]
      %v546 = vld [vmem:[%s1 + $0x888] sm:$0xff]
      %v547 = vld [vmem:[%s1 + $0x890] sm:$0xff]
      %v548 = vld [vmem:[%s1 + $0x898] sm:$0xff]
      %v549 = vld [vmem:[%s1 + $0x8a0] sm:$0xff]
      %v550 = vld [vmem:[%s1 + $0x8a8] sm:$0xff]
      %v551 = vld [vmem:[%s1 + $0x8b0] sm:$0xff]
      %v552 = vld [vmem:[%s1 + $0x8b8] sm:$0xff]
      %v553 = vld [vmem:[%s1 + $0x8c0] sm:$0xff]
      %v554 = vld [vmem:[%s1 + $0x8c8] sm:$0xff]
      %v555 = vld [vmem:[%s1 + $0x8d0] sm:$0xff]
      %v556 = vld [vmem:[%s1 + $0x8d8] sm:$0xff]
      %v557 = vld [vmem:[%s1 + $0x8e0] sm:$0xff]
      %v558 = vld [vmem:[%s1 + $0x8e8] sm:$0xff]
      %v559 = vld [vmem:[%s1 + $0x8f0] sm:$0xff]
      %v560 = vld [vmem:[%s1 + $0x8f8] sm:$0xff]
      %v561 = vld [vmem:[%s2] sm:$0x3]
      %v563 = vlaneseq
      %v564 = vshrl.u32 %v563, 7
      %v565 = vsub.s32 0, %v564
      %v566 = vrot.slane %v561, %v565
      %v567 = vlaneseq
      %v568 = vshrl.u32 %v567, 7
      %v569 = vsub.s32 1, %v568
      %v570 = vrot.slane %v561, %v569
      %v582 = vunpack.c.l.b16 %v264
      %v583 = vunpack.c.h.b16 %v264
      %v584 = vunpack.c.l.b16 %v265
      %v585 = vunpack.c.h.b16 %v265
      %v586 = vunpack.c.l.b16 %v266
      %v587 = vunpack.c.h.b16 %v266
      %v588 = vunpack.c.l.b16 %v267
      %v589 = vunpack.c.h.b16 %v267
      %v590 = vunpack.c.l.b16 %v268
      %v591 = vunpack.c.h.b16 %v268
      %v592 = vunpack.c.l.b16 %v269
      %v593 = vunpack.c.h.b16 %v269
      %v594 = vunpack.c.l.b16 %v270
      %v595 = vunpack.c.h.b16 %v270
      %v596 = vunpack.c.l.b16 %v271
      %v597 = vunpack.c.h.b16 %v271
      %v598 = vunpack.c.l.b16 %v272
      %v599 = vunpack.c.h.b16 %v272
      %v600 = vpack.c.b16 %v582, %v582
      %v601 = vpack.c.b16 %v583, %v583
      %v602 = vpack.c.b16 %v584, %v584
      %v603 = vpack.c.b16 %v585, %v585
      %v604 = vpack.c.b16 %v586, %v586
      %v605 = vpack.c.b16 %v587, %v587
      %v606 = vpack.c.b16 %v588, %v588
      %v607 = vpack.c.b16 %v589, %v589
      %v608 = vpack.c.b16 %v590, %v590
      %v609 = vpack.c.b16 %v591, %v591
      %v610 = vpack.c.b16 %v592, %v592
      %v611 = vpack.c.b16 %v593, %v593
      %v612 = vpack.c.b16 %v594, %v594
      %v613 = vpack.c.b16 %v595, %v595
      %v614 = vpack.c.b16 %v596, %v596
      %v615 = vpack.c.b16 %v597, %v597
      %v616 = vpack.c.b16 %v598, %v598
      %v617 = vpack.c.b16 %v599, %v599
      %v924 = vunpack.c.l.b16 %v273
      %v925 = vunpack.c.h.b16 %v273
      %v926 = vunpack.c.l.b16 %v274
      %v927 = vunpack.c.h.b16 %v274
      %v928 = vunpack.c.l.b16 %v275
      %v929 = vunpack.c.h.b16 %v275
      %v930 = vunpack.c.l.b16 %v276
      %v931 = vunpack.c.h.b16 %v276
      %v932 = vunpack.c.l.b16 %v277
      %v933 = vunpack.c.h.b16 %v277
      %v934 = vunpack.c.l.b16 %v278
      %v935 = vunpack.c.h.b16 %v278
      %v936 = vunpack.c.l.b16 %v279
      %v937 = vunpack.c.h.b16 %v279
      %v938 = vunpack.c.l.b16 %v280
      %v939 = vunpack.c.h.b16 %v280
      %v940 = vunpack.c.l.b16 %v281
      %v941 = vunpack.c.h.b16 %v281
      %v942 = vunpack.c.l.b16 %v282
      %v943 = vunpack.c.h.b16 %v282
      %v944 = vunpack.c.l.b16 %v283
      %v945 = vunpack.c.h.b16 %v283
      %v946 = vunpack.c.l.b16 %v284
      %v947 = vunpack.c.h.b16 %v284
      %v948 = vunpack.c.l.b16 %v285
      %v949 = vunpack.c.h.b16 %v285
      %v950 = vunpack.c.l.b16 %v286
      %v951 = vunpack.c.h.b16 %v286
      %v952 = vunpack.c.l.b16 %v287
      %v953 = vunpack.c.h.b16 %v287
      %v954 = vunpack.c.l.b16 %v288
      %v955 = vunpack.c.h.b16 %v288
      %v956 = vunpack.c.l.b16 %v289
      %v957 = vunpack.c.h.b16 %v289
      %v958 = vunpack.c.l.b16 %v290
      %v959 = vunpack.c.h.b16 %v290
      %v960 = vunpack.c.l.b16 %v291
      %v961 = vunpack.c.h.b16 %v291
      %v962 = vunpack.c.l.b16 %v292
      %v963 = vunpack.c.h.b16 %v292
      %v964 = vunpack.c.l.b16 %v293
      %v965 = vunpack.c.h.b16 %v293
      %v966 = vunpack.c.l.b16 %v294
      %v967 = vunpack.c.h.b16 %v294
      %v968 = vunpack.c.l.b16 %v295
      %v969 = vunpack.c.h.b16 %v295
      %v970 = vunpack.c.l.b16 %v296
      %v971 = vunpack.c.h.b16 %v296
      %v972 = vunpack.c.l.b16 %v297
      %v973 = vunpack.c.h.b16 %v297
      %v974 = vunpack.c.l.b16 %v298
      %v975 = vunpack.c.h.b16 %v298
      %v976 = vunpack.c.l.b16 %v299
      %v977 = vunpack.c.h.b16 %v299
      %v978 = vunpack.c.l.b16 %v300
      %v979 = vunpack.c.h.b16 %v300
      %v980 = vunpack.c.l.b16 %v301
      %v981 = vunpack.c.h.b16 %v301
      %v982 = vunpack.c.l.b16 %v302
      %v983 = vunpack.c.h.b16 %v302
      %v984 = vunpack.c.l.b16 %v303
      %v985 = vunpack.c.h.b16 %v303
      %v986 = vunpack.c.l.b16 %v304
      %v987 = vunpack.c.h.b16 %v304
      %v988 = vunpack.c.l.b16 %v305
      %v989 = vunpack.c.h.b16 %v305
      %v990 = vunpack.c.l.b16 %v306
      %v991 = vunpack.c.h.b16 %v306
      %v992 = vunpack.c.l.b16 %v307
      %v993 = vunpack.c.h.b16 %v307
      %v994 = vunpack.c.l.b16 %v308
      %v995 = vunpack.c.h.b16 %v308
      %v996 = vunpack.c.l.b16 %v309
      %v997 = vunpack.c.h.b16 %v309
      %v998 = vunpack.c.l.b16 %v310
      %v999 = vunpack.c.h.b16 %v310
      %v1000 = vunpack.c.l.b16 %v311
      %v1001 = vunpack.c.h.b16 %v311
      %v1002 = vunpack.c.l.b16 %v312
      %v1003 = vunpack.c.h.b16 %v312
      %v1004 = vunpack.c.l.b16 %v313
      %v1005 = vunpack.c.h.b16 %v313
      %v1006 = vunpack.c.l.b16 %v314
      %v1007 = vunpack.c.h.b16 %v314
      %v1008 = vunpack.c.l.b16 %v315
      %v1009 = vunpack.c.h.b16 %v315
      %v1010 = vunpack.c.l.b16 %v316
      %v1011 = vunpack.c.h.b16 %v316
      %v1012 = vunpack.c.l.b16 %v317
      %v1013 = vunpack.c.h.b16 %v317
      %v1014 = vunpack.c.l.b16 %v318
      %v1015 = vunpack.c.h.b16 %v318
      %v1016 = vunpack.c.l.b16 %v319
      %v1017 = vunpack.c.h.b16 %v319
      %v1018 = vunpack.c.l.b16 %v320
      %v1019 = vunpack.c.h.b16 %v320
      %v1020 = vunpack.c.l.b16 %v321
      %v1021 = vunpack.c.h.b16 %v321
      %v1022 = vunpack.c.l.b16 %v322
      %v1023 = vunpack.c.h.b16 %v322
      %v1024 = vunpack.c.l.b16 %v323
      %v1025 = vunpack.c.h.b16 %v323
      %v1026 = vunpack.c.l.b16 %v324
      %v1027 = vunpack.c.h.b16 %v324
      %v1028 = vunpack.c.l.b16 %v325
      %v1029 = vunpack.c.h.b16 %v325
      %v1030 = vunpack.c.l.b16 %v326
      %v1031 = vunpack.c.h.b16 %v326
      %v1032 = vunpack.c.l.b16 %v327
      %v1033 = vunpack.c.h.b16 %v327
      %v1034 = vunpack.c.l.b16 %v328
      %v1035 = vunpack.c.h.b16 %v328
      %v1036 = vunpack.c.l.b16 %v329
      %v1037 = vunpack.c.h.b16 %v329
      %v1038 = vunpack.c.l.b16 %v330
      %v1039 = vunpack.c.h.b16 %v330
      %v1040 = vunpack.c.l.b16 %v331
      %v1041 = vunpack.c.h.b16 %v331
      %v1042 = vunpack.c.l.b16 %v332
      %v1043 = vunpack.c.h.b16 %v332
      %v1044 = vunpack.c.l.b16 %v333
      %v1045 = vunpack.c.h.b16 %v333
      %v1046 = vunpack.c.l.b16 %v334
      %v1047 = vunpack.c.h.b16 %v334
      %v1048 = vunpack.c.l.b16 %v335
      %v1049 = vunpack.c.h.b16 %v335
      %v1050 = vunpack.c.l.b16 %v336
      %v1051 = vunpack.c.h.b16 %v336
      %v1052 = vunpack.c.l.b16 %v337
      %v1053 = vunpack.c.h.b16 %v337
      %v1054 = vunpack.c.l.b16 %v338
      %v1055 = vunpack.c.h.b16 %v338
      %v1056 = vunpack.c.l.b16 %v339
      %v1057 = vunpack.c.h.b16 %v339
      %v1058 = vunpack.c.l.b16 %v340
      %v1059 = vunpack.c.h.b16 %v340
      %v1060 = vunpack.c.l.b16 %v341
      %v1061 = vunpack.c.h.b16 %v341
      %v1062 = vunpack.c.l.b16 %v342
      %v1063 = vunpack.c.h.b16 %v342
      %v1064 = vunpack.c.l.b16 %v343
      %v1065 = vunpack.c.h.b16 %v343
      %v1066 = vunpack.c.l.b16 %v344
      %v1067 = vunpack.c.h.b16 %v344
      %v1068 = vunpack.c.l.b16 %v345
      %v1069 = vunpack.c.h.b16 %v345
      %v1070 = vunpack.c.l.b16 %v346
      %v1071 = vunpack.c.h.b16 %v346
      %v1072 = vunpack.c.l.b16 %v347
      %v1073 = vunpack.c.h.b16 %v347
      %v1074 = vunpack.c.l.b16 %v348
      %v1075 = vunpack.c.h.b16 %v348
      %v1076 = vunpack.c.l.b16 %v349
      %v1077 = vunpack.c.h.b16 %v349
      %v1078 = vunpack.c.l.b16 %v350
      %v1079 = vunpack.c.h.b16 %v350
      %v1080 = vunpack.c.l.b16 %v351
      %v1081 = vunpack.c.h.b16 %v351
      %v1082 = vunpack.c.l.b16 %v352
      %v1083 = vunpack.c.h.b16 %v352
      %v1084 = vunpack.c.l.b16 %v353
      %v1085 = vunpack.c.h.b16 %v353
      %v1086 = vunpack.c.l.b16 %v354
      %v1087 = vunpack.c.h.b16 %v354
      %v1088 = vunpack.c.l.b16 %v355
      %v1089 = vunpack.c.h.b16 %v355
      %v1090 = vunpack.c.l.b16 %v356
      %v1091 = vunpack.c.h.b16 %v356
      %v1092 = vunpack.c.l.b16 %v357
      %v1093 = vunpack.c.h.b16 %v357
      %v1094 = vunpack.c.l.b16 %v358
      %v1095 = vunpack.c.h.b16 %v358
      %v1096 = vunpack.c.l.b16 %v359
      %v1097 = vunpack.c.h.b16 %v359
      %v1098 = vunpack.c.l.b16 %v360
      %v1099 = vunpack.c.h.b16 %v360
      %v1100 = vunpack.c.l.b16 %v361
      %v1101 = vunpack.c.h.b16 %v361
      %v1102 = vunpack.c.l.b16 %v362
      %v1103 = vunpack.c.h.b16 %v362
      %v1104 = vunpack.c.l.b16 %v363
      %v1105 = vunpack.c.h.b16 %v363
      %v1106 = vunpack.c.l.b16 %v364
      %v1107 = vunpack.c.h.b16 %v364
      %v1108 = vunpack.c.l.b16 %v365
      %v1109 = vunpack.c.h.b16 %v365
      %v1110 = vunpack.c.l.b16 %v366
      %v1111 = vunpack.c.h.b16 %v366
      %v1112 = vunpack.c.l.b16 %v367
      %v1113 = vunpack.c.h.b16 %v367
      %v1114 = vunpack.c.l.b16 %v368
      %v1115 = vunpack.c.h.b16 %v368
      %v1116 = vunpack.c.l.b16 %v369
      %v1117 = vunpack.c.h.b16 %v369
      %v1118 = vunpack.c.l.b16 %v370
      %v1119 = vunpack.c.h.b16 %v370
      %v1120 = vunpack.c.l.b16 %v371
      %v1121 = vunpack.c.h.b16 %v371
      %v1122 = vunpack.c.l.b16 %v372
      %v1123 = vunpack.c.h.b16 %v372
      %v1124 = vunpack.c.l.b16 %v373
      %v1125 = vunpack.c.h.b16 %v373
      %v1126 = vunpack.c.l.b16 %v374
      %v1127 = vunpack.c.h.b16 %v374
      %v1128 = vunpack.c.l.b16 %v375
      %v1129 = vunpack.c.h.b16 %v375
      %v1130 = vunpack.c.l.b16 %v376
      %v1131 = vunpack.c.h.b16 %v376
      %v1132 = vunpack.c.l.b16 %v377
      %v1133 = vunpack.c.h.b16 %v377
      %v1134 = vunpack.c.l.b16 %v378
      %v1135 = vunpack.c.h.b16 %v378
      %v1136 = vunpack.c.l.b16 %v379
      %v1137 = vunpack.c.h.b16 %v379
      %v1138 = vunpack.c.l.b16 %v380
      %v1139 = vunpack.c.h.b16 %v380
      %v1140 = vunpack.c.l.b16 %v381
      %v1141 = vunpack.c.h.b16 %v381
      %v1142 = vunpack.c.l.b16 %v382
      %v1143 = vunpack.c.h.b16 %v382
      %v1144 = vunpack.c.l.b16 %v383
      %v1145 = vunpack.c.h.b16 %v383
      %v1146 = vunpack.c.l.b16 %v384
      %v1147 = vunpack.c.h.b16 %v384
      %v1148 = vunpack.c.l.b16 %v385
      %v1149 = vunpack.c.h.b16 %v385
      %v1150 = vunpack.c.l.b16 %v386
      %v1151 = vunpack.c.h.b16 %v386
      %v1152 = vunpack.c.l.b16 %v387
      %v1153 = vunpack.c.h.b16 %v387
      %v1154 = vunpack.c.l.b16 %v388
      %v1155 = vunpack.c.h.b16 %v388
      %v1156 = vunpack.c.l.b16 %v389
      %v1157 = vunpack.c.h.b16 %v389
      %v1158 = vunpack.c.l.b16 %v390
      %v1159 = vunpack.c.h.b16 %v390
      %v1160 = vunpack.c.l.b16 %v391
      %v1161 = vunpack.c.h.b16 %v391
      %v1162 = vunpack.c.l.b16 %v392
      %v1163 = vunpack.c.h.b16 %v392
      %v1164 = vunpack.c.l.b16 %v393
      %v1165 = vunpack.c.h.b16 %v393
      %v1166 = vunpack.c.l.b16 %v394
      %v1167 = vunpack.c.h.b16 %v394
      %v1168 = vunpack.c.l.b16 %v395
      %v1169 = vunpack.c.h.b16 %v395
      %v1170 = vunpack.c.l.b16 %v396
      %v1171 = vunpack.c.h.b16 %v396
      %v1172 = vunpack.c.l.b16 %v397
      %v1173 = vunpack.c.h.b16 %v397
      %v1174 = vunpack.c.l.b16 %v398
      %v1175 = vunpack.c.h.b16 %v398
      %v1176 = vunpack.c.l.b16 %v399
      %v1177 = vunpack.c.h.b16 %v399
      %v1178 = vunpack.c.l.b16 %v400
      %v1179 = vunpack.c.h.b16 %v400
      %v1180 = vunpack.c.l.b16 %v401
      %v1181 = vunpack.c.h.b16 %v401
      %v1182 = vunpack.c.l.b16 %v402
      %v1183 = vunpack.c.h.b16 %v402
      %v1184 = vunpack.c.l.b16 %v403
      %v1185 = vunpack.c.h.b16 %v403
      %v1186 = vunpack.c.l.b16 %v404
      %v1187 = vunpack.c.h.b16 %v404
      %v1188 = vunpack.c.l.b16 %v405
      %v1189 = vunpack.c.h.b16 %v405
      %v1190 = vunpack.c.l.b16 %v406
      %v1191 = vunpack.c.h.b16 %v406
      %v1192 = vunpack.c.l.b16 %v407
      %v1193 = vunpack.c.h.b16 %v407
      %v1194 = vunpack.c.l.b16 %v408
      %v1195 = vunpack.c.h.b16 %v408
      %v1196 = vunpack.c.l.b16 %v409
      %v1197 = vunpack.c.h.b16 %v409
      %v1198 = vunpack.c.l.b16 %v410
      %v1199 = vunpack.c.h.b16 %v410
      %v1200 = vunpack.c.l.b16 %v411
      %v1201 = vunpack.c.h.b16 %v411
      %v1202 = vunpack.c.l.b16 %v412
      %v1203 = vunpack.c.h.b16 %v412
      %v1204 = vunpack.c.l.b16 %v413
      %v1205 = vunpack.c.h.b16 %v413
      %v1206 = vunpack.c.l.b16 %v414
      %v1207 = vunpack.c.h.b16 %v414
      %v1208 = vunpack.c.l.b16 %v415
      %v1209 = vunpack.c.h.b16 %v415
      %v1210 = vunpack.c.l.b16 %v416
      %v1211 = vunpack.c.h.b16 %v416
      %v1212 = vunpack.c.l.b16 %v417
      %v1213 = vunpack.c.h.b16 %v417
      %v1214 = vunpack.c.l.b16 %v418
      %v1215 = vunpack.c.h.b16 %v418
      %v1216 = vunpack.c.l.b16 %v419
      %v1217 = vunpack.c.h.b16 %v419
      %v1218 = vunpack.c.l.b16 %v420
      %v1219 = vunpack.c.h.b16 %v420
      %v1220 = vunpack.c.l.b16 %v421
      %v1221 = vunpack.c.h.b16 %v421
      %v1222 = vunpack.c.l.b16 %v422
      %v1223 = vunpack.c.h.b16 %v422
      %v1224 = vunpack.c.l.b16 %v423
      %v1225 = vunpack.c.h.b16 %v423
      %v1226 = vunpack.c.l.b16 %v424
      %v1227 = vunpack.c.h.b16 %v424
      %v1228 = vunpack.c.l.b16 %v425
      %v1229 = vunpack.c.h.b16 %v425
      %v1230 = vunpack.c.l.b16 %v426
      %v1231 = vunpack.c.h.b16 %v426
      %v1232 = vunpack.c.l.b16 %v427
      %v1233 = vunpack.c.h.b16 %v427
      %v1234 = vunpack.c.l.b16 %v428
      %v1235 = vunpack.c.h.b16 %v428
      %v1236 = vunpack.c.l.b16 %v429
      %v1237 = vunpack.c.h.b16 %v429
      %v1238 = vunpack.c.l.b16 %v430
      %v1239 = vunpack.c.h.b16 %v430
      %v1240 = vunpack.c.l.b16 %v431
      %v1241 = vunpack.c.h.b16 %v431
      %v1242 = vunpack.c.l.b16 %v432
      %v1243 = vunpack.c.h.b16 %v432
      %v1244 = vunpack.c.l.b16 %v433
      %v1245 = vunpack.c.h.b16 %v433
      %v1246 = vunpack.c.l.b16 %v434
      %v1247 = vunpack.c.h.b16 %v434
      %v1248 = vunpack.c.l.b16 %v435
      %v1249 = vunpack.c.h.b16 %v435
      %v1250 = vunpack.c.l.b16 %v436
      %v1251 = vunpack.c.h.b16 %v436
      %v1252 = vunpack.c.l.b16 %v437
      %v1253 = vunpack.c.h.b16 %v437
      %v1254 = vunpack.c.l.b16 %v438
      %v1255 = vunpack.c.h.b16 %v438
      %v1256 = vunpack.c.l.b16 %v439
      %v1257 = vunpack.c.h.b16 %v439
      %v1258 = vunpack.c.l.b16 %v440
      %v1259 = vunpack.c.h.b16 %v440
      %v1260 = vunpack.c.l.b16 %v441
      %v1261 = vunpack.c.h.b16 %v441
      %v1262 = vunpack.c.l.b16 %v442
      %v1263 = vunpack.c.h.b16 %v442
      %v1264 = vunpack.c.l.b16 %v443
      %v1265 = vunpack.c.h.b16 %v443
      %v1266 = vunpack.c.l.b16 %v444
      %v1267 = vunpack.c.h.b16 %v444
      %v1268 = vunpack.c.l.b16 %v445
      %v1269 = vunpack.c.h.b16 %v445
      %v1270 = vunpack.c.l.b16 %v446
      %v1271 = vunpack.c.h.b16 %v446
      %v1272 = vunpack.c.l.b16 %v447
      %v1273 = vunpack.c.h.b16 %v447
      %v1274 = vunpack.c.l.b16 %v448
      %v1275 = vunpack.c.h.b16 %v448
      %v1276 = vunpack.c.l.b16 %v449
      %v1277 = vunpack.c.h.b16 %v449
      %v1278 = vunpack.c.l.b16 %v450
      %v1279 = vunpack.c.h.b16 %v450
      %v1280 = vunpack.c.l.b16 %v451
      %v1281 = vunpack.c.h.b16 %v451
      %v1282 = vunpack.c.l.b16 %v452
      %v1283 = vunpack.c.h.b16 %v452
      %v1284 = vunpack.c.l.b16 %v453
      %v1285 = vunpack.c.h.b16 %v453
      %v1286 = vunpack.c.l.b16 %v454
      %v1287 = vunpack.c.h.b16 %v454
      %v1288 = vunpack.c.l.b16 %v455
      %v1289 = vunpack.c.h.b16 %v455
      %v1290 = vunpack.c.l.b16 %v456
      %v1291 = vunpack.c.h.b16 %v456
      %v1292 = vunpack.c.l.b16 %v457
      %v1293 = vunpack.c.h.b16 %v457
      %v1294 = vunpack.c.l.b16 %v458
      %v1295 = vunpack.c.h.b16 %v458
      %v1296 = vunpack.c.l.b16 %v459
      %v1297 = vunpack.c.h.b16 %v459
      %v1298 = vunpack.c.l.b16 %v460
      %v1299 = vunpack.c.h.b16 %v460
      %v1300 = vunpack.c.l.b16 %v461
      %v1301 = vunpack.c.h.b16 %v461
      %v1302 = vunpack.c.l.b16 %v462
      %v1303 = vunpack.c.h.b16 %v462
      %v1304 = vunpack.c.l.b16 %v463
      %v1305 = vunpack.c.h.b16 %v463
      %v1306 = vunpack.c.l.b16 %v464
      %v1307 = vunpack.c.h.b16 %v464
      %v1308 = vunpack.c.l.b16 %v465
      %v1309 = vunpack.c.h.b16 %v465
      %v1310 = vunpack.c.l.b16 %v466
      %v1311 = vunpack.c.h.b16 %v466
      %v1312 = vunpack.c.l.b16 %v467
      %v1313 = vunpack.c.h.b16 %v467
      %v1314 = vunpack.c.l.b16 %v468
      %v1315 = vunpack.c.h.b16 %v468
      %v1316 = vunpack.c.l.b16 %v469
      %v1317 = vunpack.c.h.b16 %v469
      %v1318 = vunpack.c.l.b16 %v470
      %v1319 = vunpack.c.h.b16 %v470
      %v1320 = vunpack.c.l.b16 %v471
      %v1321 = vunpack.c.h.b16 %v471
      %v1322 = vunpack.c.l.b16 %v472
      %v1323 = vunpack.c.h.b16 %v472
      %v1324 = vunpack.c.l.b16 %v473
      %v1325 = vunpack.c.h.b16 %v473
      %v1326 = vunpack.c.l.b16 %v474
      %v1327 = vunpack.c.h.b16 %v474
      %v1328 = vunpack.c.l.b16 %v475
      %v1329 = vunpack.c.h.b16 %v475
      %v1330 = vunpack.c.l.b16 %v476
      %v1331 = vunpack.c.h.b16 %v476
      %v1332 = vunpack.c.l.b16 %v477
      %v1333 = vunpack.c.h.b16 %v477
      %v1334 = vunpack.c.l.b16 %v478
      %v1335 = vunpack.c.h.b16 %v478
      %v1336 = vunpack.c.l.b16 %v479
      %v1337 = vunpack.c.h.b16 %v479
      %v1338 = vunpack.c.l.b16 %v480
      %v1339 = vunpack.c.h.b16 %v480
      %v1340 = vunpack.c.l.b16 %v481
      %v1341 = vunpack.c.h.b16 %v481
      %v1342 = vunpack.c.l.b16 %v482
      %v1343 = vunpack.c.h.b16 %v482
      %v1344 = vunpack.c.l.b16 %v483
      %v1345 = vunpack.c.h.b16 %v483
      %v1346 = vunpack.c.l.b16 %v484
      %v1347 = vunpack.c.h.b16 %v484
      %v1348 = vunpack.c.l.b16 %v485
      %v1349 = vunpack.c.h.b16 %v485
      %v1350 = vunpack.c.l.b16 %v486
      %v1351 = vunpack.c.h.b16 %v486
      %v1352 = vunpack.c.l.b16 %v487
      %v1353 = vunpack.c.h.b16 %v487
      %v1354 = vunpack.c.l.b16 %v488
      %v1355 = vunpack.c.h.b16 %v488
      %v1356 = vunpack.c.l.b16 %v489
      %v1357 = vunpack.c.h.b16 %v489
      %v1358 = vunpack.c.l.b16 %v490
      %v1359 = vunpack.c.h.b16 %v490
      %v1360 = vunpack.c.l.b16 %v491
      %v1361 = vunpack.c.h.b16 %v491
      %v1362 = vunpack.c.l.b16 %v492
      %v1363 = vunpack.c.h.b16 %v492
      %v1364 = vunpack.c.l.b16 %v493
      %v1365 = vunpack.c.h.b16 %v493
      %v1366 = vunpack.c.l.b16 %v494
      %v1367 = vunpack.c.h.b16 %v494
      %v1368 = vunpack.c.l.b16 %v495
      %v1369 = vunpack.c.h.b16 %v495
      %v1370 = vunpack.c.l.b16 %v496
      %v1371 = vunpack.c.h.b16 %v496
      %v1372 = vunpack.c.l.b16 %v497
      %v1373 = vunpack.c.h.b16 %v497
      %v1374 = vunpack.c.l.b16 %v498
      %v1375 = vunpack.c.h.b16 %v498
      %v1376 = vunpack.c.l.b16 %v499
      %v1377 = vunpack.c.h.b16 %v499
      %v1378 = vunpack.c.l.b16 %v500
      %v1379 = vunpack.c.h.b16 %v500
      %v1380 = vunpack.c.l.b16 %v501
      %v1381 = vunpack.c.h.b16 %v501
      %v1382 = vunpack.c.l.b16 %v502
      %v1383 = vunpack.c.h.b16 %v502
      %v1384 = vunpack.c.l.b16 %v503
      %v1385 = vunpack.c.h.b16 %v503
      %v1386 = vunpack.c.l.b16 %v504
      %v1387 = vunpack.c.h.b16 %v504
      %v1388 = vunpack.c.l.b16 %v505
      %v1389 = vunpack.c.h.b16 %v505
      %v1390 = vunpack.c.l.b16 %v506
      %v1391 = vunpack.c.h.b16 %v506
      %v1392 = vunpack.c.l.b16 %v507
      %v1393 = vunpack.c.h.b16 %v507
      %v1394 = vunpack.c.l.b16 %v508
      %v1395 = vunpack.c.h.b16 %v508
      %v1396 = vunpack.c.l.b16 %v509
      %v1397 = vunpack.c.h.b16 %v509
      %v1398 = vunpack.c.l.b16 %v510
      %v1399 = vunpack.c.h.b16 %v510
      %v1400 = vunpack.c.l.b16 %v511
      %v1401 = vunpack.c.h.b16 %v511
      %v1402 = vunpack.c.l.b16 %v512
      %v1403 = vunpack.c.h.b16 %v512
      %v1404 = vunpack.c.l.b16 %v513
      %v1405 = vunpack.c.h.b16 %v513
      %v1406 = vunpack.c.l.b16 %v514
      %v1407 = vunpack.c.h.b16 %v514
      %v1408 = vunpack.c.l.b16 %v515
      %v1409 = vunpack.c.h.b16 %v515
      %v1410 = vunpack.c.l.b16 %v516
      %v1411 = vunpack.c.h.b16 %v516
      %v1412 = vunpack.c.l.b16 %v517
      %v1413 = vunpack.c.h.b16 %v517
      %v1414 = vunpack.c.l.b16 %v518
      %v1415 = vunpack.c.h.b16 %v518
      %v1416 = vunpack.c.l.b16 %v519
      %v1417 = vunpack.c.h.b16 %v519
      %v1418 = vunpack.c.l.b16 %v520
      %v1419 = vunpack.c.h.b16 %v520
      %v1420 = vunpack.c.l.b16 %v521
      %v1421 = vunpack.c.h.b16 %v521
      %v1422 = vunpack.c.l.b16 %v522
      %v1423 = vunpack.c.h.b16 %v522
      %v1424 = vunpack.c.l.b16 %v523
      %v1425 = vunpack.c.h.b16 %v523
      %v1426 = vunpack.c.l.b16 %v524
      %v1427 = vunpack.c.h.b16 %v524
      %v1428 = vunpack.c.l.b16 %v525
      %v1429 = vunpack.c.h.b16 %v525
      %v1430 = vunpack.c.l.b16 %v526
      %v1431 = vunpack.c.h.b16 %v526
      %v1432 = vunpack.c.l.b16 %v527
      %v1433 = vunpack.c.h.b16 %v527
      %v1434 = vunpack.c.l.b16 %v528
      %v1435 = vunpack.c.h.b16 %v528
      %v1436 = vunpack.c.l.b16 %v529
      %v1437 = vunpack.c.h.b16 %v529
      %v1438 = vunpack.c.l.b16 %v530
      %v1439 = vunpack.c.h.b16 %v530
      %v1440 = vunpack.c.l.b16 %v531
      %v1441 = vunpack.c.h.b16 %v531
      %v1442 = vunpack.c.l.b16 %v532
      %v1443 = vunpack.c.h.b16 %v532
      %v1444 = vunpack.c.l.b16 %v533
      %v1445 = vunpack.c.h.b16 %v533
      %v1446 = vunpack.c.l.b16 %v534
      %v1447 = vunpack.c.h.b16 %v534
      %v1448 = vunpack.c.l.b16 %v535
      %v1449 = vunpack.c.h.b16 %v535
      %v1450 = vunpack.c.l.b16 %v536
      %v1451 = vunpack.c.h.b16 %v536
      %v1452 = vunpack.c.l.b16 %v537
      %v1453 = vunpack.c.h.b16 %v537
      %v1454 = vunpack.c.l.b16 %v538
      %v1455 = vunpack.c.h.b16 %v538
      %v1456 = vunpack.c.l.b16 %v539
      %v1457 = vunpack.c.h.b16 %v539
      %v1458 = vunpack.c.l.b16 %v540
      %v1459 = vunpack.c.h.b16 %v540
      %v1460 = vunpack.c.l.b16 %v541
      %v1461 = vunpack.c.h.b16 %v541
      %v1462 = vunpack.c.l.b16 %v542
      %v1463 = vunpack.c.h.b16 %v542
      %v1464 = vunpack.c.l.b16 %v543
      %v1465 = vunpack.c.h.b16 %v543
      %v1466 = vunpack.c.l.b16 %v544
      %v1467 = vunpack.c.h.b16 %v544
      %v1468 = vunpack.c.l.b16 %v545
      %v1469 = vunpack.c.h.b16 %v545
      %v1470 = vunpack.c.l.b16 %v546
      %v1471 = vunpack.c.h.b16 %v546
      %v1472 = vunpack.c.l.b16 %v547
      %v1473 = vunpack.c.h.b16 %v547
      %v1474 = vunpack.c.l.b16 %v548
      %v1475 = vunpack.c.h.b16 %v548
      %v1476 = vunpack.c.l.b16 %v549
      %v1477 = vunpack.c.h.b16 %v549
      %v1478 = vunpack.c.l.b16 %v550
      %v1479 = vunpack.c.h.b16 %v550
      %v1480 = vunpack.c.l.b16 %v551
      %v1481 = vunpack.c.h.b16 %v551
      %v1482 = vunpack.c.l.b16 %v552
      %v1483 = vunpack.c.h.b16 %v552
      %v1484 = vunpack.c.l.b16 %v553
      %v1485 = vunpack.c.h.b16 %v553
      %v1486 = vunpack.c.l.b16 %v554
      %v1487 = vunpack.c.h.b16 %v554
      %v1488 = vunpack.c.l.b16 %v555
      %v1489 = vunpack.c.h.b16 %v555
      %v1490 = vunpack.c.l.b16 %v556
      %v1491 = vunpack.c.h.b16 %v556
      %v1492 = vunpack.c.l.b16 %v557
      %v1493 = vunpack.c.h.b16 %v557
      %v1494 = vunpack.c.l.b16 %v558
      %v1495 = vunpack.c.h.b16 %v558
      %v1496 = vunpack.c.l.b16 %v559
      %v1497 = vunpack.c.h.b16 %v559
      %v1498 = vunpack.c.l.b16 %v560
      %v1499 = vunpack.c.h.b16 %v560
      %v1500 = vpack.c.b16 %v926, %v924
      %v1501 = vpack.c.b16 %v927, %v925
      %v1502 = vpack.c.b16 %v930, %v928
      %v1503 = vpack.c.b16 %v931, %v929
      %v1504 = vpack.c.b16 %v934, %v932
      %v1505 = vpack.c.b16 %v935, %v933
      %v1506 = vpack.c.b16 %v938, %v936
      %v1507 = vpack.c.b16 %v939, %v937
      %v1508 = vpack.c.b16 %v942, %v940
      %v1509 = vpack.c.b16 %v943, %v941
      %v1510 = vpack.c.b16 %v946, %v944
      %v1511 = vpack.c.b16 %v947, %v945
      %v1512 = vpack.c.b16 %v950, %v948
      %v1513 = vpack.c.b16 %v951, %v949
      %v1514 = vpack.c.b16 %v954, %v952
      %v1515 = vpack.c.b16 %v955, %v953
      %v1516 = vpack.c.b16 %v958, %v956
      %v1517 = vpack.c.b16 %v959, %v957
      %v1518 = vpack.c.b16 %v962, %v960
      %v1519 = vpack.c.b16 %v963, %v961
      %v1520 = vpack.c.b16 %v966, %v964
      %v1521 = vpack.c.b16 %v967, %v965
      %v1522 = vpack.c.b16 %v970, %v968
      %v1523 = vpack.c.b16 %v971, %v969
      %v1524 = vpack.c.b16 %v974, %v972
      %v1525 = vpack.c.b16 %v975, %v973
      %v1526 = vpack.c.b16 %v978, %v976
      %v1527 = vpack.c.b16 %v979, %v977
      %v1528 = vpack.c.b16 %v982, %v980
      %v1529 = vpack.c.b16 %v983, %v981
      %v1530 = vpack.c.b16 %v986, %v984
      %v1531 = vpack.c.b16 %v987, %v985
      %v1532 = vpack.c.b16 %v990, %v988
      %v1533 = vpack.c.b16 %v991, %v989
      %v1534 = vpack.c.b16 %v994, %v992
      %v1535 = vpack.c.b16 %v995, %v993
      %v1536 = vpack.c.b16 %v998, %v996
      %v1537 = vpack.c.b16 %v999, %v997
      %v1538 = vpack.c.b16 %v1002, %v1000
      %v1539 = vpack.c.b16 %v1003, %v1001
      %v1540 = vpack.c.b16 %v1006, %v1004
      %v1541 = vpack.c.b16 %v1007, %v1005
      %v1542 = vpack.c.b16 %v1010, %v1008
      %v1543 = vpack.c.b16 %v1011, %v1009
      %v1544 = vpack.c.b16 %v1014, %v1012
      %v1545 = vpack.c.b16 %v1015, %v1013
      %v1546 = vpack.c.b16 %v1018, %v1016
      %v1547 = vpack.c.b16 %v1019, %v1017
      %v1548 = vpack.c.b16 %v1022, %v1020
      %v1549 = vpack.c.b16 %v1023, %v1021
      %v1550 = vpack.c.b16 %v1026, %v1024
      %v1551 = vpack.c.b16 %v1027, %v1025
      %v1552 = vpack.c.b16 %v1030, %v1028
      %v1553 = vpack.c.b16 %v1031, %v1029
      %v1554 = vpack.c.b16 %v1034, %v1032
      %v1555 = vpack.c.b16 %v1035, %v1033
      %v1556 = vpack.c.b16 %v1038, %v1036
      %v1557 = vpack.c.b16 %v1039, %v1037
      %v1558 = vpack.c.b16 %v1042, %v1040
      %v1559 = vpack.c.b16 %v1043, %v1041
      %v1560 = vpack.c.b16 %v1046, %v1044
      %v1561 = vpack.c.b16 %v1047, %v1045
      %v1562 = vpack.c.b16 %v1050, %v1048
      %v1563 = vpack.c.b16 %v1051, %v1049
      %v1564 = vpack.c.b16 %v1054, %v1052
      %v1565 = vpack.c.b16 %v1055, %v1053
      %v1566 = vpack.c.b16 %v1058, %v1056
      %v1567 = vpack.c.b16 %v1059, %v1057
      %v1568 = vpack.c.b16 %v1062, %v1060
      %v1569 = vpack.c.b16 %v1063, %v1061
      %v1570 = vpack.c.b16 %v1066, %v1064
      %v1571 = vpack.c.b16 %v1067, %v1065
      %v1572 = vpack.c.b16 %v1070, %v1068
      %v1573 = vpack.c.b16 %v1071, %v1069
      %v1574 = vpack.c.b16 %v1074, %v1072
      %v1575 = vpack.c.b16 %v1075, %v1073
      %v1576 = vpack.c.b16 %v1078, %v1076
      %v1577 = vpack.c.b16 %v1079, %v1077
      %v1578 = vpack.c.b16 %v1082, %v1080
      %v1579 = vpack.c.b16 %v1083, %v1081
      %v1580 = vpack.c.b16 %v1086, %v1084
      %v1581 = vpack.c.b16 %v1087, %v1085
      %v1582 = vpack.c.b16 %v1090, %v1088
      %v1583 = vpack.c.b16 %v1091, %v1089
      %v1584 = vpack.c.b16 %v1094, %v1092
      %v1585 = vpack.c.b16 %v1095, %v1093
      %v1586 = vpack.c.b16 %v1098, %v1096
      %v1587 = vpack.c.b16 %v1099, %v1097
      %v1588 = vpack.c.b16 %v1102, %v1100
      %v1589 = vpack.c.b16 %v1103, %v1101
      %v1590 = vpack.c.b16 %v1106, %v1104
      %v1591 = vpack.c.b16 %v1107, %v1105
      %v1592 = vpack.c.b16 %v1110, %v1108
      %v1593 = vpack.c.b16 %v1111, %v1109
      %v1594 = vpack.c.b16 %v1114, %v1112
      %v1595 = vpack.c.b16 %v1115, %v1113
      %v1596 = vpack.c.b16 %v1118, %v1116
      %v1597 = vpack.c.b16 %v1119, %v1117
      %v1598 = vpack.c.b16 %v1122, %v1120
      %v1599 = vpack.c.b16 %v1123, %v1121
      %v1600 = vpack.c.b16 %v1126, %v1124
      %v1601 = vpack.c.b16 %v1127, %v1125
      %v1602 = vpack.c.b16 %v1130, %v1128
      %v1603 = vpack.c.b16 %v1131, %v1129
      %v1604 = vpack.c.b16 %v1134, %v1132
      %v1605 = vpack.c.b16 %v1135, %v1133
      %v1606 = vpack.c.b16 %v1138, %v1136
      %v1607 = vpack.c.b16 %v1139, %v1137
      %v1608 = vpack.c.b16 %v1142, %v1140
      %v1609 = vpack.c.b16 %v1143, %v1141
      %v1610 = vpack.c.b16 %v1146, %v1144
      %v1611 = vpack.c.b16 %v1147, %v1145
      %v1612 = vpack.c.b16 %v1150, %v1148
      %v1613 = vpack.c.b16 %v1151, %v1149
      %v1614 = vpack.c.b16 %v1154, %v1152
      %v1615 = vpack.c.b16 %v1155, %v1153
      %v1616 = vpack.c.b16 %v1158, %v1156
      %v1617 = vpack.c.b16 %v1159, %v1157
      %v1618 = vpack.c.b16 %v1162, %v1160
      %v1619 = vpack.c.b16 %v1163, %v1161
      %v1620 = vpack.c.b16 %v1166, %v1164
      %v1621 = vpack.c.b16 %v1167, %v1165
      %v1622 = vpack.c.b16 %v1170, %v1168
      %v1623 = vpack.c.b16 %v1171, %v1169
      %v1624 = vpack.c.b16 %v1174, %v1172
      %v1625 = vpack.c.b16 %v1175, %v1173
      %v1626 = vpack.c.b16 %v1178, %v1176
      %v1627 = vpack.c.b16 %v1179, %v1177
      %v1628 = vpack.c.b16 %v1182, %v1180
      %v1629 = vpack.c.b16 %v1183, %v1181
      %v1630 = vpack.c.b16 %v1186, %v1184
      %v1631 = vpack.c.b16 %v1187, %v1185
      %v1632 = vpack.c.b16 %v1190, %v1188
      %v1633 = vpack.c.b16 %v1191, %v1189
      %v1634 = vpack.c.b16 %v1194, %v1192
      %v1635 = vpack.c.b16 %v1195, %v1193
      %v1636 = vpack.c.b16 %v1198, %v1196
      %v1637 = vpack.c.b16 %v1199, %v1197
      %v1638 = vpack.c.b16 %v1202, %v1200
      %v1639 = vpack.c.b16 %v1203, %v1201
      %v1640 = vpack.c.b16 %v1206, %v1204
      %v1641 = vpack.c.b16 %v1207, %v1205
      %v1642 = vpack.c.b16 %v1210, %v1208
      %v1643 = vpack.c.b16 %v1211, %v1209
      %v1644 = vpack.c.b16 %v1214, %v1212
      %v1645 = vpack.c.b16 %v1215, %v1213
      %v1646 = vpack.c.b16 %v1218, %v1216
      %v1647 = vpack.c.b16 %v1219, %v1217
      %v1648 = vpack.c.b16 %v1222, %v1220
      %v1649 = vpack.c.b16 %v1223, %v1221
      %v1650 = vpack.c.b16 %v1226, %v1224
      %v1651 = vpack.c.b16 %v1227, %v1225
      %v1652 = vpack.c.b16 %v1230, %v1228
      %v1653 = vpack.c.b16 %v1231, %v1229
      %v1654 = vpack.c.b16 %v1234, %v1232
      %v1655 = vpack.c.b16 %v1235, %v1233
      %v1656 = vpack.c.b16 %v1238, %v1236
      %v1657 = vpack.c.b16 %v1239, %v1237
      %v1658 = vpack.c.b16 %v1242, %v1240
      %v1659 = vpack.c.b16 %v1243, %v1241
      %v1660 = vpack.c.b16 %v1246, %v1244
      %v1661 = vpack.c.b16 %v1247, %v1245
      %v1662 = vpack.c.b16 %v1250, %v1248
      %v1663 = vpack.c.b16 %v1251, %v1249
      %v1664 = vpack.c.b16 %v1254, %v1252
      %v1665 = vpack.c.b16 %v1255, %v1253
      %v1666 = vpack.c.b16 %v1258, %v1256
      %v1667 = vpack.c.b16 %v1259, %v1257
      %v1668 = vpack.c.b16 %v1262, %v1260
      %v1669 = vpack.c.b16 %v1263, %v1261
      %v1670 = vpack.c.b16 %v1266, %v1264
      %v1671 = vpack.c.b16 %v1267, %v1265
      %v1672 = vpack.c.b16 %v1270, %v1268
      %v1673 = vpack.c.b16 %v1271, %v1269
      %v1674 = vpack.c.b16 %v1274, %v1272
      %v1675 = vpack.c.b16 %v1275, %v1273
      %v1676 = vpack.c.b16 %v1278, %v1276
      %v1677 = vpack.c.b16 %v1279, %v1277
      %v1678 = vpack.c.b16 %v1282, %v1280
      %v1679 = vpack.c.b16 %v1283, %v1281
      %v1680 = vpack.c.b16 %v1286, %v1284
      %v1681 = vpack.c.b16 %v1287, %v1285
      %v1682 = vpack.c.b16 %v1290, %v1288
      %v1683 = vpack.c.b16 %v1291, %v1289
      %v1684 = vpack.c.b16 %v1294, %v1292
      %v1685 = vpack.c.b16 %v1295, %v1293
      %v1686 = vpack.c.b16 %v1298, %v1296
      %v1687 = vpack.c.b16 %v1299, %v1297
      %v1688 = vpack.c.b16 %v1302, %v1300
      %v1689 = vpack.c.b16 %v1303, %v1301
      %v1690 = vpack.c.b16 %v1306, %v1304
      %v1691 = vpack.c.b16 %v1307, %v1305
      %v1692 = vpack.c.b16 %v1310, %v1308
      %v1693 = vpack.c.b16 %v1311, %v1309
      %v1694 = vpack.c.b16 %v1314, %v1312
      %v1695 = vpack.c.b16 %v1315, %v1313
      %v1696 = vpack.c.b16 %v1318, %v1316
      %v1697 = vpack.c.b16 %v1319, %v1317
      %v1698 = vpack.c.b16 %v1322, %v1320
      %v1699 = vpack.c.b16 %v1323, %v1321
      %v1700 = vpack.c.b16 %v1326, %v1324
      %v1701 = vpack.c.b16 %v1327, %v1325
      %v1702 = vpack.c.b16 %v1330, %v1328
      %v1703 = vpack.c.b16 %v1331, %v1329
      %v1704 = vpack.c.b16 %v1334, %v1332
      %v1705 = vpack.c.b16 %v1335, %v1333
      %v1706 = vpack.c.b16 %v1338, %v1336
      %v1707 = vpack.c.b16 %v1339, %v1337
      %v1708 = vpack.c.b16 %v1342, %v1340
      %v1709 = vpack.c.b16 %v1343, %v1341
      %v1710 = vpack.c.b16 %v1346, %v1344
      %v1711 = vpack.c.b16 %v1347, %v1345
      %v1712 = vpack.c.b16 %v1350, %v1348
      %v1713 = vpack.c.b16 %v1351, %v1349
      %v1714 = vpack.c.b16 %v1354, %v1352
      %v1715 = vpack.c.b16 %v1355, %v1353
      %v1716 = vpack.c.b16 %v1358, %v1356
      %v1717 = vpack.c.b16 %v1359, %v1357
      %v1718 = vpack.c.b16 %v1362, %v1360
      %v1719 = vpack.c.b16 %v1363, %v1361
      %v1720 = vpack.c.b16 %v1366, %v1364
      %v1721 = vpack.c.b16 %v1367, %v1365
      %v1722 = vpack.c.b16 %v1370, %v1368
      %v1723 = vpack.c.b16 %v1371, %v1369
      %v1724 = vpack.c.b16 %v1374, %v1372
      %v1725 = vpack.c.b16 %v1375, %v1373
      %v1726 = vpack.c.b16 %v1378, %v1376
      %v1727 = vpack.c.b16 %v1379, %v1377
      %v1728 = vpack.c.b16 %v1382, %v1380
      %v1729 = vpack.c.b16 %v1383, %v1381
      %v1730 = vpack.c.b16 %v1386, %v1384
      %v1731 = vpack.c.b16 %v1387, %v1385
      %v1732 = vpack.c.b16 %v1390, %v1388
      %v1733 = vpack.c.b16 %v1391, %v1389
      %v1734 = vpack.c.b16 %v1394, %v1392
      %v1735 = vpack.c.b16 %v1395, %v1393
      %v1736 = vpack.c.b16 %v1398, %v1396
      %v1737 = vpack.c.b16 %v1399, %v1397
      %v1738 = vpack.c.b16 %v1402, %v1400
      %v1739 = vpack.c.b16 %v1403, %v1401
      %v1740 = vpack.c.b16 %v1406, %v1404
      %v1741 = vpack.c.b16 %v1407, %v1405
      %v1742 = vpack.c.b16 %v1410, %v1408
      %v1743 = vpack.c.b16 %v1411, %v1409
      %v1744 = vpack.c.b16 %v1414, %v1412
      %v1745 = vpack.c.b16 %v1415, %v1413
      %v1746 = vpack.c.b16 %v1418, %v1416
      %v1747 = vpack.c.b16 %v1419, %v1417
      %v1748 = vpack.c.b16 %v1422, %v1420
      %v1749 = vpack.c.b16 %v1423, %v1421
      %v1750 = vpack.c.b16 %v1426, %v1424
      %v1751 = vpack.c.b16 %v1427, %v1425
      %v1752 = vpack.c.b16 %v1430, %v1428
      %v1753 = vpack.c.b16 %v1431, %v1429
      %v1754 = vpack.c.b16 %v1434, %v1432
      %v1755 = vpack.c.b16 %v1435, %v1433
      %v1756 = vpack.c.b16 %v1438, %v1436
      %v1757 = vpack.c.b16 %v1439, %v1437
      %v1758 = vpack.c.b16 %v1442, %v1440
      %v1759 = vpack.c.b16 %v1443, %v1441
      %v1760 = vpack.c.b16 %v1446, %v1444
      %v1761 = vpack.c.b16 %v1447, %v1445
      %v1762 = vpack.c.b16 %v1450, %v1448
      %v1763 = vpack.c.b16 %v1451, %v1449
      %v1764 = vpack.c.b16 %v1454, %v1452
      %v1765 = vpack.c.b16 %v1455, %v1453
      %v1766 = vpack.c.b16 %v1458, %v1456
      %v1767 = vpack.c.b16 %v1459, %v1457
      %v1768 = vpack.c.b16 %v1462, %v1460
      %v1769 = vpack.c.b16 %v1463, %v1461
      %v1770 = vpack.c.b16 %v1466, %v1464
      %v1771 = vpack.c.b16 %v1467, %v1465
      %v1772 = vpack.c.b16 %v1470, %v1468
      %v1773 = vpack.c.b16 %v1471, %v1469
      %v1774 = vpack.c.b16 %v1474, %v1472
      %v1775 = vpack.c.b16 %v1475, %v1473
      %v1776 = vpack.c.b16 %v1478, %v1476
      %v1777 = vpack.c.b16 %v1479, %v1477
      %v1778 = vpack.c.b16 %v1482, %v1480
      %v1779 = vpack.c.b16 %v1483, %v1481
      %v1780 = vpack.c.b16 %v1486, %v1484
      %v1781 = vpack.c.b16 %v1487, %v1485
      %v1782 = vpack.c.b16 %v1490, %v1488
      %v1783 = vpack.c.b16 %v1491, %v1489
      %v1784 = vpack.c.b16 %v1494, %v1492
      %v1785 = vpack.c.b16 %v1495, %v1493
      %v1786 = vpack.c.b16 %v1498, %v1496
      %v1787 = vpack.c.b16 %v1499, %v1497
      %2076 = vmatprep.subr.bf16.mxu0 %v1501
      %2077 = vmatpush1.bf16.msra.mxu0 %v1500
      %2078 = vmatprep.subr.bf16.mxu0 %v1503
      %2079 = vmatpush1.bf16.msra.mxu0 %v1502
      %2080 = vmatprep.subr.bf16.mxu0 %v1505
      %2081 = vmatpush1.bf16.msra.mxu0 %v1504
      %2082 = vmatprep.subr.bf16.mxu0 %v1507
      %2083 = vmatpush1.bf16.msra.mxu0 %v1506
      %2084 = vmatprep.subr.bf16.mxu0 %v1509
      %2085 = vmatpush1.bf16.msra.mxu0 %v1508
      %2086 = vmatprep.subr.bf16.mxu0 %v1511
      %2087 = vmatpush1.bf16.msra.mxu0 %v1510
      %2088 = vmatprep.subr.bf16.mxu0 %v1513
      %2089 = vmatpush1.bf16.msra.mxu0 %v1512
      %2090 = vmatprep.subr.bf16.mxu0 %v1515
      %2091 = vmatpush1.bf16.msra.mxu0 %v1514
      %2092 = vmatprep.subr.bf16.mxu0 %v1517
      %2093 = vmatpush1.bf16.msra.mxu0 %v1516
      %2094 = vmatprep.subr.bf16.mxu0 %v1519
      %2095 = vmatpush1.bf16.msra.mxu0 %v1518
      %2096 = vmatprep.subr.bf16.mxu0 %v1521
      %2097 = vmatpush1.bf16.msra.mxu0 %v1520
      %2098 = vmatprep.subr.bf16.mxu0 %v1523
      %2099 = vmatpush1.bf16.msra.mxu0 %v1522
      %2100 = vmatprep.subr.bf16.mxu0 %v1525
      %2101 = vmatpush1.bf16.msra.mxu0 %v1524
      %2102 = vmatprep.subr.bf16.mxu0 %v1527
      %2103 = vmatpush1.bf16.msra.mxu0 %v1526
      %2104 = vmatprep.subr.bf16.mxu0 %v1529
      %2105 = vmatpush1.bf16.msra.mxu0 %v1528
      %2106 = vmatprep.subr.bf16.mxu0 %v1531
      %2107 = vmatpush1.bf16.msra.mxu0 %v1530
      %2108 = vmatprep.mubr.bf16.mxu0 %v601
      %2109 = vmatmul.mubr.bf16.gmra.mrb[0].mxu0 %v600
      %v2110 = vpop.f32.mrb[0].mxu0
      %v2111 = vadd.f32 %v566, %v2110
      %v2112 = vpop.f32.mrb[0].mxu0
      %v2113 = vadd.f32 %v570, %v2112
      %v2114 = vpop.f32.mrb[0].mxu0
      %v2115 = vpop.f32.mrb[0].mxu0
      %2116 = vdwg.mxu0
      %2117 = vmatprep.subr.bf16.mxu0 %v1533
      %2118 = vmatpush1.bf16.msra.mxu0 %v1532
      %2119 = vmatprep.subr.bf16.mxu0 %v1535
      %2120 = vmatpush1.bf16.msra.mxu0 %v1534
      %2121 = vmatprep.subr.bf16.mxu0 %v1537
      %2122 = vmatpush1.bf16.msra.mxu0 %v1536
      %2123 = vmatprep.subr.bf16.mxu0 %v1539
      %2124 = vmatpush1.bf16.msra.mxu0 %v1538
      %2125 = vmatprep.subr.bf16.mxu0 %v1541
      %2126 = vmatpush1.bf16.msra.mxu0 %v1540
      %2127 = vmatprep.subr.bf16.mxu0 %v1543
      %2128 = vmatpush1.bf16.msra.mxu0 %v1542
      %2129 = vmatprep.subr.bf16.mxu0 %v1545
      %2130 = vmatpush1.bf16.msra.mxu0 %v1544
      %2131 = vmatprep.subr.bf16.mxu0 %v1547
      %2132 = vmatpush1.bf16.msra.mxu0 %v1546
      %2133 = vmatprep.subr.bf16.mxu0 %v1549
      %2134 = vmatpush1.bf16.msra.mxu0 %v1548
      %2135 = vmatprep.subr.bf16.mxu0 %v1551
      %2136 = vmatpush1.bf16.msra.mxu0 %v1550
      %2137 = vmatprep.subr.bf16.mxu0 %v1553
      %2138 = vmatpush1.bf16.msra.mxu0 %v1552
      %2139 = vmatprep.subr.bf16.mxu0 %v1555
      %2140 = vmatpush1.bf16.msra.mxu0 %v1554
      %2141 = vmatprep.subr.bf16.mxu0 %v1557
      %2142 = vmatpush1.bf16.msra.mxu0 %v1556
      %2143 = vmatprep.subr.bf16.mxu0 %v1559
      %2144 = vmatpush1.bf16.msra.mxu0 %v1558
      %2145 = vmatprep.subr.bf16.mxu0 %v1561
      %2146 = vmatpush1.bf16.msra.mxu0 %v1560
      %2147 = vmatprep.subr.bf16.mxu0 %v1563
      %2148 = vmatpush1.bf16.msra.mxu0 %v1562
      %2149 = vmatprep.mubr.bf16.mxu0 %v603
      %2150 = vmatmul.mubr.bf16.gmra.mrb[0].mxu0 %v602
      %v2151 = vpop.f32.mrb[0].mxu0
      %v2152 = vadd.f32 %v2111, %v2151
      %v2153 = vpop.f32.mrb[0].mxu0
      %v2154 = vadd.f32 %v2113, %v2153
      %v2155 = vpop.f32.mrb[0].mxu0
      %v2156 = vpop.f32.mrb[0].mxu0
      %2157 = vdwg.mxu0
      %2158 = vmatprep.subr.bf16.mxu0 %v1565
      %2159 = vmatpush1.bf16.msra.mxu0 %v1564
      %2160 = vmatprep.subr.bf16.mxu0 %v1567
      %2161 = vmatpush1.bf16.msra.mxu0 %v1566
      %2162 = vmatprep.subr.bf16.mxu0 %v1569
      %2163 = vmatpush1.bf16.msra.mxu0 %v1568
      %2164 = vmatprep.subr.bf16.mxu0 %v1571
      %2165 = vmatpush1.bf16.msra.mxu0 %v1570
      %2166 = vmatprep.subr.bf16.mxu0 %v1573
      %2167 = vmatpush1.bf16.msra.mxu0 %v1572
      %2168 = vmatprep.subr.bf16.mxu0 %v1575
      %2169 = vmatpush1.bf16.msra.mxu0 %v1574
      %2170 = vmatprep.subr.bf16.mxu0 %v1577
      %2171 = vmatpush1.bf16.msra.mxu0 %v1576
      %2172 = vmatprep.subr.bf16.mxu0 %v1579
      %2173 = vmatpush1.bf16.msra.mxu0 %v1578
      %2174 = vmatprep.subr.bf16.mxu0 %v1581
      %2175 = vmatpush1.bf16.msra.mxu0 %v1580
      %2176 = vmatprep.subr.bf16.mxu0 %v1583
      %2177 = vmatpush1.bf16.msra.mxu0 %v1582
      %2178 = vmatprep.subr.bf16.mxu0 %v1585
      %2179 = vmatpush1.bf16.msra.mxu0 %v1584
      %2180 = vmatprep.subr.bf16.mxu0 %v1587
      %2181 = vmatpush1.bf16.msra.mxu0 %v1586
      %2182 = vmatprep.subr.bf16.mxu0 %v1589
      %2183 = vmatpush1.bf16.msra.mxu0 %v1588
      %2184 = vmatprep.subr.bf16.mxu0 %v1591
      %2185 = vmatpush1.bf16.msra.mxu0 %v1590
      %2186 = vmatprep.subr.bf16.mxu0 %v1593
      %2187 = vmatpush1.bf16.msra.mxu0 %v1592
      %2188 = vmatprep.subr.bf16.mxu0 %v1595
      %2189 = vmatpush1.bf16.msra.mxu0 %v1594
      %2190 = vmatprep.mubr.bf16.mxu0 %v605
      %2191 = vmatmul.mubr.bf16.gmra.mrb[0].mxu0 %v604
      %v2192 = vpop.f32.mrb[0].mxu0
      %v2193 = vadd.f32 %v2152, %v2192
      %v2194 = vpop.f32.mrb[0].mxu0
      %v2195 = vadd.f32 %v2154, %v2194
      %v2196 = vpop.f32.mrb[0].mxu0
      %v2197 = vpop.f32.mrb[0].mxu0
      %2198 = vdwg.mxu0
      %2199 = vmatprep.subr.bf16.mxu0 %v1597
      %2200 = vmatpush1.bf16.msra.mxu0 %v1596
      %2201 = vmatprep.subr.bf16.mxu0 %v1599
      %2202 = vmatpush1.bf16.msra.mxu0 %v1598
      %2203 = vmatprep.subr.bf16.mxu0 %v1601
      %2204 = vmatpush1.bf16.msra.mxu0 %v1600
      %2205 = vmatprep.subr.bf16.mxu0 %v1603
      %2206 = vmatpush1.bf16.msra.mxu0 %v1602
      %2207 = vmatprep.subr.bf16.mxu0 %v1605
      %2208 = vmatpush1.bf16.msra.mxu0 %v1604
      %2209 = vmatprep.subr.bf16.mxu0 %v1607
      %2210 = vmatpush1.bf16.msra.mxu0 %v1606
      %2211 = vmatprep.subr.bf16.mxu0 %v1609
      %2212 = vmatpush1.bf16.msra.mxu0 %v1608
      %2213 = vmatprep.subr.bf16.mxu0 %v1611
      %2214 = vmatpush1.bf16.msra.mxu0 %v1610
      %2215 = vmatprep.subr.bf16.mxu0 %v1613
      %2216 = vmatpush1.bf16.msra.mxu0 %v1612
      %2217 = vmatprep.subr.bf16.mxu0 %v1615
      %2218 = vmatpush1.bf16.msra.mxu0 %v1614
      %2219 = vmatprep.subr.bf16.mxu0 %v1617
      %2220 = vmatpush1.bf16.msra.mxu0 %v1616
      %2221 = vmatprep.subr.bf16.mxu0 %v1619
      %2222 = vmatpush1.bf16.msra.mxu0 %v1618
      %2223 = vmatprep.subr.bf16.mxu0 %v1621
      %2224 = vmatpush1.bf16.msra.mxu0 %v1620
      %2225 = vmatprep.subr.bf16.mxu0 %v1623
      %2226 = vmatpush1.bf16.msra.mxu0 %v1622
      %2227 = vmatprep.subr.bf16.mxu0 %v1625
      %2228 = vmatpush1.bf16.msra.mxu0 %v1624
      %2229 = vmatprep.subr.bf16.mxu0 %v1627
      %2230 = vmatpush1.bf16.msra.mxu0 %v1626
      %2231 = vmatprep.mubr.bf16.mxu0 %v607
      %2232 = vmatmul.mubr.bf16.gmra.mrb[0].mxu0 %v606
      %v2233 = vpop.f32.mrb[0].mxu0
      %v2234 = vadd.f32 %v2193, %v2233
      %v2235 = vpop.f32.mrb[0].mxu0
      %v2236 = vadd.f32 %v2195, %v2235
      %v2237 = vpop.f32.mrb[0].mxu0
      %v2238 = vpop.f32.mrb[0].mxu0
      %2239 = vdwg.mxu0
      %2240 = vmatprep.subr.bf16.mxu0 %v1629
      %2241 = vmatpush1.bf16.msra.mxu0 %v1628
      %2242 = vmatprep.subr.bf16.mxu0 %v1631
      %2243 = vmatpush1.bf16.msra.mxu0 %v1630
      %2244 = vmatprep.subr.bf16.mxu0 %v1633
      %2245 = vmatpush1.bf16.msra.mxu0 %v1632
      %2246 = vmatprep.subr.bf16.mxu0 %v1635
      %2247 = vmatpush1.bf16.msra.mxu0 %v1634
      %2248 = vmatprep.subr.bf16.mxu0 %v1637
      %2249 = vmatpush1.bf16.msra.mxu0 %v1636
      %2250 = vmatprep.subr.bf16.mxu0 %v1639
      %2251 = vmatpush1.bf16.msra.mxu0 %v1638
      %2252 = vmatprep.subr.bf16.mxu0 %v1641
      %2253 = vmatpush1.bf16.msra.mxu0 %v1640
      %2254 = vmatprep.subr.bf16.mxu0 %v1643
      %2255 = vmatpush1.bf16.msra.mxu0 %v1642
      %2256 = vmatprep.subr.bf16.mxu0 %v1645
      %2257 = vmatpush1.bf16.msra.mxu0 %v1644
      %2258 = vmatprep.subr.bf16.mxu0 %v1647
      %2259 = vmatpush1.bf16.msra.mxu0 %v1646
      %2260 = vmatprep.subr.bf16.mxu0 %v1649
      %2261 = vmatpush1.bf16.msra.mxu0 %v1648
      %2262 = vmatprep.subr.bf16.mxu0 %v1651
      %2263 = vmatpush1.bf16.msra.mxu0 %v1650
      %2264 = vmatprep.subr.bf16.mxu0 %v1653
      %2265 = vmatpush1.bf16.msra.mxu0 %v1652
      %2266 = vmatprep.subr.bf16.mxu0 %v1655
      %2267 = vmatpush1.bf16.msra.mxu0 %v1654
      %2268 = vmatprep.subr.bf16.mxu0 %v1657
      %2269 = vmatpush1.bf16.msra.mxu0 %v1656
      %2270 = vmatprep.subr.bf16.mxu0 %v1659
      %2271 = vmatpush1.bf16.msra.mxu0 %v1658
      %2272 = vmatprep.mubr.bf16.mxu0 %v609
      %2273 = vmatmul.mubr.bf16.gmra.mrb[0].mxu0 %v608
      %v2274 = vpop.f32.mrb[0].mxu0
      %v2275 = vadd.f32 %v2234, %v2274
      %v2276 = vpop.f32.mrb[0].mxu0
      %v2277 = vadd.f32 %v2236, %v2276
      %v2278 = vpop.f32.mrb[0].mxu0
      %v2279 = vpop.f32.mrb[0].mxu0
      %2280 = vdwg.mxu0
      %2281 = vmatprep.subr.bf16.mxu0 %v1661
      %2282 = vmatpush1.bf16.msra.mxu0 %v1660
      %2283 = vmatprep.subr.bf16.mxu0 %v1663
      %2284 = vmatpush1.bf16.msra.mxu0 %v1662
      %2285 = vmatprep.subr.bf16.mxu0 %v1665
      %2286 = vmatpush1.bf16.msra.mxu0 %v1664
      %2287 = vmatprep.subr.bf16.mxu0 %v1667
      %2288 = vmatpush1.bf16.msra.mxu0 %v1666
      %2289 = vmatprep.subr.bf16.mxu0 %v1669
      %2290 = vmatpush1.bf16.msra.mxu0 %v1668
      %2291 = vmatprep.subr.bf16.mxu0 %v1671
      %2292 = vmatpush1.bf16.msra.mxu0 %v1670
      %2293 = vmatprep.subr.bf16.mxu0 %v1673
      %2294 = vmatpush1.bf16.msra.mxu0 %v1672
      %2295 = vmatprep.subr.bf16.mxu0 %v1675
      %2296 = vmatpush1.bf16.msra.mxu0 %v1674
      %2297 = vmatprep.subr.bf16.mxu0 %v1677
      %2298 = vmatpush1.bf16.msra.mxu0 %v1676
      %2299 = vmatprep.subr.bf16.mxu0 %v1679
      %2300 = vmatpush1.bf16.msra.mxu0 %v1678
      %2301 = vmatprep.subr.bf16.mxu0 %v1681
      %2302 = vmatpush1.bf16.msra.mxu0 %v1680
      %2303 = vmatprep.subr.bf16.mxu0 %v1683
      %2304 = vmatpush1.bf16.msra.mxu0 %v1682
      %2305 = vmatprep.subr.bf16.mxu0 %v1685
      %2306 = vmatpush1.bf16.msra.mxu0 %v1684
      %2307 = vmatprep.subr.bf16.mxu0 %v1687
      %2308 = vmatpush1.bf16.msra.mxu0 %v1686
      %2309 = vmatprep.subr.bf16.mxu0 %v1689
      %2310 = vmatpush1.bf16.msra.mxu0 %v1688
      %2311 = vmatprep.subr.bf16.mxu0 %v1691
      %2312 = vmatpush1.bf16.msra.mxu0 %v1690
      %2313 = vmatprep.mubr.bf16.mxu0 %v611
      %2314 = vmatmul.mubr.bf16.gmra.mrb[0].mxu0 %v610
      %v2315 = vpop.f32.mrb[0].mxu0
      %v2316 = vadd.f32 %v2275, %v2315
      %v2317 = vpop.f32.mrb[0].mxu0
      %v2318 = vadd.f32 %v2277, %v2317
      %v2319 = vpop.f32.mrb[0].mxu0
      %v2320 = vpop.f32.mrb[0].mxu0
      %2321 = vdwg.mxu0
      %2322 = vmatprep.subr.bf16.mxu0 %v1693
      %2323 = vmatpush1.bf16.msra.mxu0 %v1692
      %2324 = vmatprep.subr.bf16.mxu0 %v1695
      %2325 = vmatpush1.bf16.msra.mxu0 %v1694
      %2326 = vmatprep.subr.bf16.mxu0 %v1697
      %2327 = vmatpush1.bf16.msra.mxu0 %v1696
      %2328 = vmatprep.subr.bf16.mxu0 %v1699
      %2329 = vmatpush1.bf16.msra.mxu0 %v1698
      %2330 = vmatprep.subr.bf16.mxu0 %v1701
      %2331 = vmatpush1.bf16.msra.mxu0 %v1700
      %2332 = vmatprep.subr.bf16.mxu0 %v1703
      %2333 = vmatpush1.bf16.msra.mxu0 %v1702
      %2334 = vmatprep.subr.bf16.mxu0 %v1705
      %2335 = vmatpush1.bf16.msra.mxu0 %v1704
      %2336 = vmatprep.subr.bf16.mxu0 %v1707
      %2337 = vmatpush1.bf16.msra.mxu0 %v1706
      %2338 = vmatprep.subr.bf16.mxu0 %v1709
      %2339 = vmatpush1.bf16.msra.mxu0 %v1708
      %2340 = vmatprep.subr.bf16.mxu0 %v1711
      %2341 = vmatpush1.bf16.msra.mxu0 %v1710
      %2342 = vmatprep.subr.bf16.mxu0 %v1713
      %2343 = vmatpush1.bf16.msra.mxu0 %v1712
      %2344 = vmatprep.subr.bf16.mxu0 %v1715
      %2345 = vmatpush1.bf16.msra.mxu0 %v1714
      %2346 = vmatprep.subr.bf16.mxu0 %v1717
      %2347 = vmatpush1.bf16.msra.mxu0 %v1716
      %2348 = vmatprep.subr.bf16.mxu0 %v1719
      %2349 = vmatpush1.bf16.msra.mxu0 %v1718
      %2350 = vmatprep.subr.bf16.mxu0 %v1721
      %2351 = vmatpush1.bf16.msra.mxu0 %v1720
      %2352 = vmatprep.subr.bf16.mxu0 %v1723
      %2353 = vmatpush1.bf16.msra.mxu0 %v1722
      %2354 = vmatprep.mubr.bf16.mxu0 %v613
      %2355 = vmatmul.mubr.bf16.gmra.mrb[0].mxu0 %v612
      %v2356 = vpop.f32.mrb[0].mxu0
      %v2357 = vadd.f32 %v2316, %v2356
      %v2358 = vpop.f32.mrb[0].mxu0
      %v2359 = vadd.f32 %v2318, %v2358
      %v2360 = vpop.f32.mrb[0].mxu0
      %v2361 = vpop.f32.mrb[0].mxu0
      %2362 = vdwg.mxu0
      %2363 = vmatprep.subr.bf16.mxu0 %v1725
      %2364 = vmatpush1.bf16.msra.mxu0 %v1724
      %2365 = vmatprep.subr.bf16.mxu0 %v1727
      %2366 = vmatpush1.bf16.msra.mxu0 %v1726
      %2367 = vmatprep.subr.bf16.mxu0 %v1729
      %2368 = vmatpush1.bf16.msra.mxu0 %v1728
      %2369 = vmatprep.subr.bf16.mxu0 %v1731
      %2370 = vmatpush1.bf16.msra.mxu0 %v1730
      %2371 = vmatprep.subr.bf16.mxu0 %v1733
      %2372 = vmatpush1.bf16.msra.mxu0 %v1732
      %2373 = vmatprep.subr.bf16.mxu0 %v1735
      %2374 = vmatpush1.bf16.msra.mxu0 %v1734
      %2375 = vmatprep.subr.bf16.mxu0 %v1737
      %2376 = vmatpush1.bf16.msra.mxu0 %v1736
      %2377 = vmatprep.subr.bf16.mxu0 %v1739
      %2378 = vmatpush1.bf16.msra.mxu0 %v1738
      %2379 = vmatprep.subr.bf16.mxu0 %v1741
      %2380 = vmatpush1.bf16.msra.mxu0 %v1740
      %2381 = vmatprep.subr.bf16.mxu0 %v1743
      %2382 = vmatpush1.bf16.msra.mxu0 %v1742
      %2383 = vmatprep.subr.bf16.mxu0 %v1745
      %2384 = vmatpush1.bf16.msra.mxu0 %v1744
      %2385 = vmatprep.subr.bf16.mxu0 %v1747
      %2386 = vmatpush1.bf16.msra.mxu0 %v1746
      %2387 = vmatprep.subr.bf16.mxu0 %v1749
      %2388 = vmatpush1.bf16.msra.mxu0 %v1748
      %2389 = vmatprep.subr.bf16.mxu0 %v1751
      %2390 = vmatpush1.bf16.msra.mxu0 %v1750
      %2391 = vmatprep.subr.bf16.mxu0 %v1753
      %2392 = vmatpush1.bf16.msra.mxu0 %v1752
      %2393 = vmatprep.subr.bf16.mxu0 %v1755
      %2394 = vmatpush1.bf16.msra.mxu0 %v1754
      %2395 = vmatprep.mubr.bf16.mxu0 %v615
      %2396 = vmatmul.mubr.bf16.gmra.mrb[0].mxu0 %v614
      %v2397 = vpop.f32.mrb[0].mxu0
      %v2398 = vadd.f32 %v2357, %v2397
      %v2399 = vpop.f32.mrb[0].mxu0
      %v2400 = vadd.f32 %v2359, %v2399
      %v2401 = vpop.f32.mrb[0].mxu0
      %v2402 = vpop.f32.mrb[0].mxu0
      %2403 = vdwg.mxu0
      %2404 = vmatprep.subr.bf16.mxu0 %v1757
      %2405 = vmatpush1.bf16.msra.mxu0 %v1756
      %2406 = vmatprep.subr.bf16.mxu0 %v1759
      %2407 = vmatpush1.bf16.msra.mxu0 %v1758
      %2408 = vmatprep.subr.bf16.mxu0 %v1761
      %2409 = vmatpush1.bf16.msra.mxu0 %v1760
      %2410 = vmatprep.subr.bf16.mxu0 %v1763
      %2411 = vmatpush1.bf16.msra.mxu0 %v1762
      %2412 = vmatprep.subr.bf16.mxu0 %v1765
      %2413 = vmatpush1.bf16.msra.mxu0 %v1764
      %2414 = vmatprep.subr.bf16.mxu0 %v1767
      %2415 = vmatpush1.bf16.msra.mxu0 %v1766
      %2416 = vmatprep.subr.bf16.mxu0 %v1769
      %2417 = vmatpush1.bf16.msra.mxu0 %v1768
      %2418 = vmatprep.subr.bf16.mxu0 %v1771
      %2419 = vmatpush1.bf16.msra.mxu0 %v1770
      %2420 = vmatprep.subr.bf16.mxu0 %v1773
      %2421 = vmatpush1.bf16.msra.mxu0 %v1772
      %2422 = vmatprep.subr.bf16.mxu0 %v1775
      %2423 = vmatpush1.bf16.msra.mxu0 %v1774
      %2424 = vmatprep.subr.bf16.mxu0 %v1777
      %2425 = vmatpush1.bf16.msra.mxu0 %v1776
      %2426 = vmatprep.subr.bf16.mxu0 %v1779
      %2427 = vmatpush1.bf16.msra.mxu0 %v1778
      %2428 = vmatprep.subr.bf16.mxu0 %v1781
      %2429 = vmatpush1.bf16.msra.mxu0 %v1780
      %2430 = vmatprep.subr.bf16.mxu0 %v1783
      %2431 = vmatpush1.bf16.msra.mxu0 %v1782
      %2432 = vmatprep.subr.bf16.mxu0 %v1785
      %2433 = vmatpush1.bf16.msra.mxu0 %v1784
      %2434 = vmatprep.subr.bf16.mxu0 %v1787
      %2435 = vmatpush1.bf16.msra.mxu0 %v1786
      %2436 = vmatprep.mubr.bf16.mxu0 %v617
      %2437 = vmatmul.mubr.bf16.gmra.mrb[0].mxu0 %v616
      %v2438 = vpop.f32.mrb[0].mxu0
      %v2439 = vadd.f32 %v2398, %v2438
      %v2440 = vpop.f32.mrb[0].mxu0
      %v2441 = vadd.f32 %v2400, %v2440
      %v2442 = vpop.f32.mrb[0].mxu0
      %v2443 = vpop.f32.mrb[0].mxu0
      %2444 = vdwg.mxu0
      %v2445 = vld [vmem:[%s252] sm:$0xff]
      %v2446 = vld [vmem:[%s252 + $0x8] sm:$0xff]
      %v2447 = vadd.f32 %v2439, %v2445
      %v2448 = vadd.f32 %v2441, %v2446
      %v2449 = vmax.f32 %v2447, 0.0
      %v2450 = vmax.f32 %v2448, 0.0
      %v2451 = vlaneseq
      %v2452 = vshrl.u32 %v2451, 7
      %s2453 = smul.u32 %s20, 8
      %v2454 = vstv %s2453
      %v2455 = vadd.s32 %v2452, %v2454
      %vm2456 = vcmp.lt.s32.totalorder %v2455, 4
      %v2457 = vsel %vm2456, %v2449, 0.0
      %v2458 = vsel %vm2456, %v2450, 0.0
      %v2459 = vld [vmem:[#allocation2] sm:$0xff]
      %v2460 = vld [vmem:[#allocation2 + $0x8] sm:$0xff]
      %v2461 = vrot.slane %v2457, 4
      %v2462 = vadd.f32 %v2457, %v2461
      %v2463 = vrot.slane %v2462, 2
      %v2464 = vadd.f32 %v2462, %v2463
      %v2465 = vrot.slane %v2464, 1
      %v2466 = vadd.f32 %v2464, %v2465
      %v2467 = vrot.slane %v2458, 4
      %v2468 = vadd.f32 %v2458, %v2467
      %v2469 = vrot.slane %v2468, 2
      %v2470 = vadd.f32 %v2468, %v2469
      %v2471 = vrot.slane %v2470, 1
      %v2472 = vadd.f32 %v2470, %v2471
      %v2473 = vadd.f32 %v2459, %v2466
      %v2474 = vadd.f32 %v2460, %v2472
      %2475 = vst [vmem:[#allocation2] sm:$0xff] %v2473
      %2476 = vst [vmem:[#allocation2 + $0x8] sm:$0xff] %v2474
      // Predicated region
      $region41: #{resnet_feature_extractor.11} parent=35 // pred_check
        %p2477 = pneg %p258
      $region42: #{resnet_feature_extractor.11} parent=35 // pred_check_branch
        %2479 = sbr.rel (%p2477) target = $region44
      $region43: #{resnet_feature_extractor.11} parent=35 // pred_region
        %v2480 = vld [vmem:[#allocation2] sm:$0xff]
        %v2481 = vld [vmem:[#allocation2 + $0x8] sm:$0xff]
        %v2482 = vmul.f32 %v2480, 0.25
        %v2483 = vmul.f32 %v2481, 0.25
        %2484 = vst [vmem:[%s257] sm:$0xff] %v2482
        %2485 = vst [vmem:[%s257 + $0x8] sm:$0xff] %v2483
      $region44: #{resnet_feature_extractor.11} parent=35 // pred_fallthru
        _
      %p2486 = scmp.lt.s32.totalorder %s19, 1
      %s2487 = scalar_select %p2486, %s19, 1
      %s2488 = smul.addr %s2487, 2
      %s2489 = smul.addr %s2488, 8
      %s2490 = scalar_lea.vmem %s4, %s2489
      // Predicated region
      $region45: #{resnet_feature_extractor.11} parent=35 // pred_check
        %p2491 = pneg %p143
      $region46: #{resnet_feature_extractor.11} parent=35 // pred_check_branch
        %2493 = sbr.rel (%p2491) target = $region48
      $region47: #{resnet_feature_extractor.11} parent=35 // pred_region
        _
      $region48: #{resnet_feature_extractor.11} parent=35 // pred_fallthru
        _
    $region36: #{resnet_feature_extractor.11} parent=5 // pred_fallthru
      _
    %p2494 = scmp.le.s32.totalorder 2, %s10
    // Predicated region
    $region49: #{resnet_feature_extractor.11} parent=5 // pred_check
      %p2495 = pneg %p2494
    $region50: #{resnet_feature_extractor.11} parent=5 // pred_check_branch
      %2497 = sbr.rel (%p2495) target = $region52
    $region51: #{resnet_feature_extractor.11} parent=5 // pred_region
      %s2498 = ssub.s32 %s10, 2
      // Predicated region
      $region53: #{resnet_feature_extractor.11} parent=51 // pred_check
        %p2499 = pneg %p149
      $region54: #{resnet_feature_extractor.11} parent=51 // pred_check_branch
        %2501 = sbr.rel (%p2499) target = $region56
      $region55: #{resnet_feature_extractor.11} parent=51 // pred_region
        %p2502 = scmp.lt.s32.totalorder %s21, 1
        %s2503 = scalar_select %p2502, %s21, 1
        %s2504 = smul.addr %s2503, 2
        %s2505 = smul.addr %s2504, 8
        %s2506 = scalar_lea.vmem %s4, %s2505
      $region56: #{resnet_feature_extractor.11} parent=51 // pred_fallthru
        _
    $region52: #{resnet_feature_extractor.11} parent=5 // pred_fallthru
      _
  $region6: #{resnet_feature_extractor.11} parent=0 // loop_footer
    %s14 = sadd.s32 1, %s10
  $region7: #{resnet_feature_extractor.11} parent=0 // loop_footer_branch
    %9 = sbr.rel target = $region3
  $region8: #{resnet_feature_extractor.11} parent=0 // loop_exit
    _

</llo_original>
